<compile_context>
chip_gen: v7x
topology: tpu7x:2x2x1
jax: 0.10.0
libtpu: 0.0.40
codegen_flags: <defaults>
</compile_context>

<pallas_src>
import numpy as np
import jax
import jax.numpy as jnp
from jax import lax
from jax.experimental import pallas as pl
from jax.experimental.pallas import tpu as pltpu


# ---------------- fused Conv(5x5, VALID) + bias + ReLU + MaxPool(2x2) ----------------

def _pack_pool_conv_weights(w_oihw):
    """(Cout, Cin, KH, KW) -> (KH+1, (KW+1)*Cin, 4*Cout) bf16.

    wq[u, j*Cin+ci, (dr*2+dc)*Cout+c] = w[u-dr, j-dc, ci, c] (zero outside range),
    so that   sum_u patch(row=2*ph+u) @ wq[u]   yields conv[2*ph+dr, 2*pw+dc, c]
    for all four pool taps (dr, dc) at once.
    """
    Cout, Cin, KH, KW = w_oihw.shape
    w = jnp.transpose(w_oihw, (2, 3, 1, 0))                       # (KH, KW, Cin, Cout)
    blocks = []
    for dr in (0, 1):
        for dc in (0, 1):
            blocks.append(jnp.pad(w, ((dr, 1 - dr), (dc, 1 - dc), (0, 0), (0, 0))))
    wq = jnp.stack(blocks, axis=-2)                               # (KH+1, KW+1, Cin, 4, Cout)
    wq = wq.reshape(KH + 1, (KW + 1) * Cin, 4 * Cout)
    return wq.astype(jnp.bfloat16)


def _make_conv_relu_pool_kernel(KH, KW, Cin, Cout, PH, PW):
    KU = KH + 1                     # row taps: kh + pool dr
    NA = (KW + 1) // 2              # column-pair slices (W pairs folded into channels)

    def kernel(x_ref, wq_ref, b_ref, o_ref):
        # x_ref:  (H, W//2, 2*Cin) bf16   one image, W pairs folded into channels
        # wq_ref: (KH+1, (KW+1)*Cin, 4*Cout) bf16
        # b_ref:  (1, Cout) f32
        # o_ref:  (PH, PW, Cout)
        bias = b_ref[...]                                         # hoisted, loop-invariant

        def pool_row(po, carry):
            acc = jnp.zeros((PW, 4 * Cout), jnp.float32)
            for u in range(KU):                                   # static, 6 dots
                r = 2 * po + u
                # patch[pw, (2a+d)*Cin + ci] = x[r, 2*pw + 2a + d, ci]
                patch = jnp.concatenate(
                    [x_ref[r, a:a + PW, :] for a in range(NA)], axis=-1)
                acc = acc + jnp.dot(patch, wq_ref[u],
                                    preferred_element_type=jnp.float32)
            # acc[:, q*Cout:(q+1)*Cout] == conv[2*po+dr, 2*pw+dc, :]  (q = dr*2+dc)
            m = jnp.maximum(
                jnp.maximum(acc[:, 0:Cout], acc[:, Cout:2 * Cout]),
                jnp.maximum(acc[:, 2 * Cout:3 * Cout], acc[:, 3 * Cout:4 * Cout]))
            # relu(max(conv)+b) == max(relu(conv+b)) (monotone), so bias/ReLU after pool.
            m = jnp.maximum(m + bias, 0.0)
            o_ref[po] = m.astype(o_ref.dtype)
            return carry

        lax.fori_loop(0, PH, pool_row, 0)

    return kernel


def conv_relu_pool(x_nhwc, w_oihw, b, out_dtype):
    """x_nhwc: (B,H,W,Cin) bf16; w_oihw: (Cout,Cin,KH,KW) f32; b: (Cout,) f32."""
    B, H, W, Cin = x_nhwc.shape
    Cout, _, KH, KW = w_oihw.shape
    OH, OW = H - KH + 1, W - KW + 1
    assert KW % 2 == 1 and W % 2 == 0 and OH % 2 == 0 and OW % 2 == 0
    PH, PW = OH // 2, OW // 2

    xf = x_nhwc.reshape(B, H, W // 2, 2 * Cin)      # free row-major-compatible fold
    wq = _pack_pool_conv_weights(w_oihw)
    kernel = _make_conv_relu_pool_kernel(KH, KW, Cin, Cout, PH, PW)

    return pl.pallas_call(
        kernel,
        out_shape=jax.ShapeDtypeStruct((B, PH, PW, Cout), out_dtype),
        grid=(B,),
        in_specs=[
            pl.BlockSpec((None, H, W // 2, 2 * Cin), lambda bi: (bi, 0, 0, 0)),
            pl.BlockSpec((KH + 1, (KW + 1) * Cin, 4 * Cout), lambda bi: (0, 0, 0)),
            pl.BlockSpec((1, Cout), lambda bi: (0, 0)),
        ],
        out_specs=pl.BlockSpec((None, PH, PW, Cout), lambda bi: (bi, 0, 0, 0)),
        compiler_params=pltpu.CompilerParams(
            dimension_semantics=("parallel",),
            vmem_limit_bytes=32 * 1024 * 1024),
    )(xf, wq, b.reshape(1, Cout).astype(jnp.float32))


# ---------------- attention + classifier + sigmoid head ----------------

def _head_kernel(x_ref, w1_ref, b1_ref, w2_ref, b2_ref, wc_ref, bc_ref, o_ref):
    # a = tanh(x @ W1 + b1) @ w2 + b2              (w2 passed as a (1, Hd) row)
    # A_new = a.expand(bs, bs)  =>  M = A_new @ x == a * colsum(x)
    # logits = M @ wc + bc      ==  a * sum(x * wc) + bc   (wc passed as (1, F) row)
    x = x_ref[...]                                                      # (B, F) f32
    h = jnp.tanh(jnp.dot(x.astype(jnp.bfloat16), w1_ref[...],
                         preferred_element_type=jnp.float32) + b1_ref[...])   # (B, Hd)
    a = jnp.sum(h * w2_ref[...], axis=1, keepdims=True) + b2_ref[...]   # (B, 1)
    t = jnp.sum(jnp.sum(x * wc_ref[...], axis=1, keepdims=True),
                axis=0, keepdims=True)                                  # (1, 1)
    o_ref[...] = jax.nn.sigmoid(a * t + bc_ref[...])


def attention_head(feat, w1_bf16, b1, w2_row, b2, wc_row, bc):
    B, F = feat.shape
    Hd = w1_bf16.shape[1]
    return pl.pallas_call(
        _head_kernel,
        out_shape=jax.ShapeDtypeStruct((B, 1), jnp.float32),
        grid=(1,),
        in_specs=[
            pl.BlockSpec((B, F), lambda i: (0, 0)),
            pl.BlockSpec((F, Hd), lambda i: (0, 0)),
            pl.BlockSpec((1, Hd), lambda i: (0, 0)),
            pl.BlockSpec((1, Hd), lambda i: (0, 0)),
            pl.BlockSpec((1, 1), lambda i: (0, 0)),
            pl.BlockSpec((1, F), lambda i: (0, 0)),
            pl.BlockSpec((1, 1), lambda i: (0, 0)),
        ],
        out_specs=pl.BlockSpec((B, 1), lambda i: (0, 0)),
        compiler_params=pltpu.CompilerParams(vmem_limit_bytes=32 * 1024 * 1024),
    )(feat, w1_bf16, b1, w2_row, b2, wc_row, bc)


# ---------------- full forward (Pallas kernels + glue) ----------------

def gaf_attn_net_forward(x_nchw, p):
    # x_nchw: (B, 29, 144, 144) float32 (PyTorch layout)
    x = jnp.transpose(x_nchw, (0, 2, 3, 1)).astype(jnp.bfloat16)        # NHWC bf16
    y1 = conv_relu_pool(x, p["conv1_w"], p["conv1_b"], jnp.bfloat16)    # (B,70,70,12)
    y2 = conv_relu_pool(y1, p["conv2_w"], p["conv2_b"], jnp.float32)    # (B,33,33,6)
    # channel-major flatten to match torch.nn.Flatten on NCHW (tiny tensor)
    feat = jnp.transpose(y2, (0, 3, 1, 2)).reshape(y2.shape[0], -1)     # (B, 6534) f32
    return attention_head(
        feat,
        p["attn1_w"].T.astype(jnp.bfloat16),        # (6534, 256) bf16
        p["attn1_b"].reshape(1, -1),                # (1, 256) f32
        p["attn2_w"].reshape(1, -1),                # (1, 256) row (no transpose)
        p["attn2_b"].reshape(1, 1),
        p["clf_w"].reshape(1, -1),                  # (1, 6534) row
        p["clf_b"].reshape(1, 1))


# ---------------- plain-JAX reference for verification ----------------

def reference_forward(x_nchw, p):
    hp = lax.Precision.HIGHEST
    dn1 = lax.conv_dimension_numbers(x_nchw.shape, p["conv1_w"].shape,
                                     ("NCHW", "OIHW", "NCHW"))
    y = lax.conv_general_dilated(x_nchw, p["conv1_w"], (1, 1), "VALID",
                                 dimension_numbers=dn1, precision=hp)
    y = jax.nn.relu(y + p["conv1_b"][None, :, None, None])
    y = lax.reduce_window(y, -jnp.inf, lax.max, (1, 1, 2, 2), (1, 1, 2, 2), "VALID")
    dn2 = lax.conv_dimension_numbers(y.shape, p["conv2_w"].shape,
                                     ("NCHW", "OIHW", "NCHW"))
    y = lax.conv_general_dilated(y, p["conv2_w"], (1, 1), "VALID",
                                 dimension_numbers=dn2, precision=hp)
    y = jax.nn.relu(y + p["conv2_b"][None, :, None, None])
    y = lax.reduce_window(y, -jnp.inf, lax.max, (1, 1, 2, 2), (1, 1, 2, 2), "VALID")
    feat = y.reshape(y.shape[0], -1)
    a = jnp.tanh(jnp.dot(feat, p["attn1_w"].T, precision=hp) + p["attn1_b"])
    a = jnp.dot(a, p["attn2_w"].T, precision=hp) + p["attn2_b"]
    bs = a.shape[0]
    a_new = jnp.broadcast_to(a, (bs, bs))
    m = jnp.dot(a_new, feat, precision=hp)
    logits = jnp.dot(m, p["clf_w"].T, precision=hp) + p["clf_b"]
    return jax.nn.sigmoid(logits)


# ---------------- deterministic parameter init (PyTorch shapes) ----------------

def init_params(key):
    ks = jax.random.split(key, 10)

    def u(k, shape, fan_in):
        bound = 1.0 / np.sqrt(fan_in)
        return jax.random.uniform(k, shape, jnp.float32, -bound, bound)

    return {
        "conv1_w": u(ks[0], (12, 29, 5, 5), 29 * 25),   # OIHW
        "conv1_b": u(ks[1], (12,), 29 * 25),
        "conv2_w": u(ks[2], (6, 12, 5, 5), 12 * 25),
        "conv2_b": u(ks[3], (6,), 12 * 25),
        "attn1_w": u(ks[4], (256, 6534), 6534),         # (out, in)
        "attn1_b": u(ks[5], (256,), 6534),
        "attn2_w": u(ks[6], (1, 256), 256),
        "attn2_b": u(ks[7], (1,), 256),
        "clf_w":   u(ks[8], (1, 6534), 6534),
        "clf_b":   u(ks[9], (1,), 6534),
    }


if __name__ == "__main__":
    key = jax.random.PRNGKey(0)
    pkey, xkey = jax.random.split(key)
    params = init_params(pkey)

    # Spatial size 144 is implied by the hard-coded 6534 feature dim (6*33*33).
    B = 2
    x = jax.random.normal(xkey, (B, 29, 144, 144), jnp.float32)   # NCHW input

    fwd = jax.jit(gaf_attn_net_forward)
    out = jax.block_until_ready(fwd(x, params))
    assert out.shape == (B, 1) and out.dtype == jnp.float32

    ref = jax.block_until_ready(reference_forward(x, params))
    np.testing.assert_allclose(np.asarray(out), np.asarray(ref), rtol=5e-2, atol=5e-2)

    print("KERNEL_OK")
</pallas_src>

<mosaic_0001>
module attributes {stable_mosaic.version = 11 : i64} {
  func.func @kernel(%arg0: i32, %arg1: memref<1x144x72x58xbf16, #tpu.memory_space<vmem>>, %arg2: memref<6x174x48xbf16, #tpu.memory_space<vmem>>, %arg3: memref<1x12xf32, #tpu.memory_space<vmem>>, %arg4: memref<1x70x70x12xbf16, #tpu.memory_space<vmem>>) attributes {dimension_semantics = [#tpu.dimension_semantics<parallel>], iteration_bounds = array<i64: 2>, scalar_prefetch = 0 : i64, scratch_operands = 0 : i64, tpu.core_type = #tpu.core_type<tc>, window_params = [{transform_indices = @transform_0, window_bounds = array<i64: 1, 144, 72, 58>}, {pipeline_mode = #tpu.pipeline_mode<synchronous>, transform_indices = @transform_1, window_bounds = array<i64: 6, 174, 48>}, {pipeline_mode = #tpu.pipeline_mode<synchronous>, transform_indices = @transform_2, window_bounds = array<i64: 1, 12>}, {transform_indices = @transform_3, window_bounds = array<i64: 1, 70, 70, 12>}]} {
    %c0 = arith.constant 0 : index
    %c0_0 = arith.constant 0 : index
    %0 = vector.load %arg3[%c0, %c0_0] : memref<1x12xf32, #tpu.memory_space<vmem>>, vector<1x12xf32>
    %c0_i32 = arith.constant 0 : i32
    %c70_i32 = arith.constant 70 : i32
    %1 = arith.addi %c0_i32, %c70_i32 : i32
    %c1_i32 = arith.constant 1 : i32
    scf.for %arg5 = %c0_i32 to %1 step %c1_i32  : i32 {
      %cst = arith.constant 0.000000e+00 : f32
      %2 = vector.broadcast %cst : f32 to vector<70x48xf32>
      %c2_i32 = arith.constant 2 : i32
      %3 = arith.muli %c2_i32, %arg5 : i32
      %c0_i32_2 = arith.constant 0 : i32
      %4 = arith.addi %3, %c0_i32_2 : i32
      %c0_3 = arith.constant 0 : index
      %5 = arith.index_cast %4 : i32 to index
      %c0_4 = arith.constant 0 : index
      %c0_5 = arith.constant 0 : index
      %6 = vector.load %arg1[%c0_3, %5, %c0_4, %c0_5] : memref<1x144x72x58xbf16, #tpu.memory_space<vmem>>, vector<1x1x70x58xbf16>
      %7 = vector.shape_cast %6 : vector<1x1x70x58xbf16> to vector<70x58xbf16>
      %c0_6 = arith.constant 0 : index
      %8 = arith.index_cast %4 : i32 to index
      %c1 = arith.constant 1 : index
      %c0_7 = arith.constant 0 : index
      %9 = vector.load %arg1[%c0_6, %8, %c1, %c0_7] : memref<1x144x72x58xbf16, #tpu.memory_space<vmem>>, vector<1x1x70x58xbf16>
      %10 = vector.shape_cast %9 : vector<1x1x70x58xbf16> to vector<70x58xbf16>
      %c0_8 = arith.constant 0 : index
      %11 = arith.index_cast %4 : i32 to index
      %c2 = arith.constant 2 : index
      %c0_9 = arith.constant 0 : index
      %12 = vector.load %arg1[%c0_8, %11, %c2, %c0_9] : memref<1x144x72x58xbf16, #tpu.memory_space<vmem>>, vector<1x1x70x58xbf16>
      %13 = vector.shape_cast %12 : vector<1x1x70x58xbf16> to vector<70x58xbf16>
      %14 = tpu.concatenate %7, %10, %13 in 1 : vector<70x58xbf16>, vector<70x58xbf16>, vector<70x58xbf16> -> vector<70x174xbf16>
      %c0_10 = arith.constant 0 : index
      %c0_11 = arith.constant 0 : index
      %c0_12 = arith.constant 0 : index
      %15 = vector.load %arg2[%c0_10, %c0_11, %c0_12] : memref<6x174x48xbf16, #tpu.memory_space<vmem>>, vector<1x174x48xbf16>
      %16 = vector.shape_cast %15 : vector<1x174x48xbf16> to vector<174x48xbf16>
      %cst_13 = arith.constant dense<0.000000e+00> : vector<70x48xf32>
      %17 = tpu.matmul %14, %16, %cst_13 {dimension_numbers = #tpu.dot_dimension_numbers<[1], [0], [0], [1], [0, 0, 1, 1], [], []>} : vector<70x174xbf16>, vector<174x48xbf16>, vector<70x48xf32> -> vector<70x48xf32>
      %18 = arith.addf %2, %17 : vector<70x48xf32>
      %c2_i32_14 = arith.constant 2 : i32
      %19 = arith.muli %c2_i32_14, %arg5 : i32
      %c1_i32_15 = arith.constant 1 : i32
      %20 = arith.addi %19, %c1_i32_15 : i32
      %c0_16 = arith.constant 0 : index
      %21 = arith.index_cast %20 : i32 to index
      %c0_17 = arith.constant 0 : index
      %c0_18 = arith.constant 0 : index
      %22 = vector.load %arg1[%c0_16, %21, %c0_17, %c0_18] : memref<1x144x72x58xbf16, #tpu.memory_space<vmem>>, vector<1x1x70x58xbf16>
      %23 = vector.shape_cast %22 : vector<1x1x70x58xbf16> to vector<70x58xbf16>
      %c0_19 = arith.constant 0 : index
      %24 = arith.index_cast %20 : i32 to index
      %c1_20 = arith.constant 1 : index
      %c0_21 = arith.constant 0 : index
      %25 = vector.load %arg1[%c0_19, %24, %c1_20, %c0_21] : memref<1x144x72x58xbf16, #tpu.memory_space<vmem>>, vector<1x1x70x58xbf16>
      %26 = vector.shape_cast %25 : vector<1x1x70x58xbf16> to vector<70x58xbf16>
      %c0_22 = arith.constant 0 : index
      %27 = arith.index_cast %20 : i32 to index
      %c2_23 = arith.constant 2 : index
      %c0_24 = arith.constant 0 : index
      %28 = vector.load %arg1[%c0_22, %27, %c2_23, %c0_24] : memref<1x144x72x58xbf16, #tpu.memory_space<vmem>>, vector<1x1x70x58xbf16>
      %29 = vector.shape_cast %28 : vector<1x1x70x58xbf16> to vector<70x58xbf16>
      %30 = tpu.concatenate %23, %26, %29 in 1 : vector<70x58xbf16>, vector<70x58xbf16>, vector<70x58xbf16> -> vector<70x174xbf16>
      %c1_25 = arith.constant 1 : index
      %c0_26 = arith.constant 0 : index
      %c0_27 = arith.constant 0 : index
      %31 = vector.load %arg2[%c1_25, %c0_26, %c0_27] : memref<6x174x48xbf16, #tpu.memory_space<vmem>>, vector<1x174x48xbf16>
      %32 = vector.shape_cast %31 : vector<1x174x48xbf16> to vector<174x48xbf16>
      %cst_28 = arith.constant dense<0.000000e+00> : vector<70x48xf32>
      %33 = tpu.matmul %30, %32, %cst_28 {dimension_numbers = #tpu.dot_dimension_numbers<[1], [0], [0], [1], [0, 0, 1, 1], [], []>} : vector<70x174xbf16>, vector<174x48xbf16>, vector<70x48xf32> -> vector<70x48xf32>
      %34 = arith.addf %18, %33 : vector<70x48xf32>
      %c2_i32_29 = arith.constant 2 : i32
      %35 = arith.muli %c2_i32_29, %arg5 : i32
      %c2_i32_30 = arith.constant 2 : i32
      %36 = arith.addi %35, %c2_i32_30 : i32
      %c0_31 = arith.constant 0 : index
      %37 = arith.index_cast %36 : i32 to index
      %c0_32 = arith.constant 0 : index
      %c0_33 = arith.constant 0 : index
      %38 = vector.load %arg1[%c0_31, %37, %c0_32, %c0_33] : memref<1x144x72x58xbf16, #tpu.memory_space<vmem>>, vector<1x1x70x58xbf16>
      %39 = vector.shape_cast %38 : vector<1x1x70x58xbf16> to vector<70x58xbf16>
      %c0_34 = arith.constant 0 : index
      %40 = arith.index_cast %36 : i32 to index
      %c1_35 = arith.constant 1 : index
      %c0_36 = arith.constant 0 : index
      %41 = vector.load %arg1[%c0_34, %40, %c1_35, %c0_36] : memref<1x144x72x58xbf16, #tpu.memory_space<vmem>>, vector<1x1x70x58xbf16>
      %42 = vector.shape_cast %41 : vector<1x1x70x58xbf16> to vector<70x58xbf16>
      %c0_37 = arith.constant 0 : index
      %43 = arith.index_cast %36 : i32 to index
      %c2_38 = arith.constant 2 : index
      %c0_39 = arith.constant 0 : index
      %44 = vector.load %arg1[%c0_37, %43, %c2_38, %c0_39] : memref<1x144x72x58xbf16, #tpu.memory_space<vmem>>, vector<1x1x70x58xbf16>
      %45 = vector.shape_cast %44 : vector<1x1x70x58xbf16> to vector<70x58xbf16>
      %46 = tpu.concatenate %39, %42, %45 in 1 : vector<70x58xbf16>, vector<70x58xbf16>, vector<70x58xbf16> -> vector<70x174xbf16>
      %c2_40 = arith.constant 2 : index
      %c0_41 = arith.constant 0 : index
      %c0_42 = arith.constant 0 : index
      %47 = vector.load %arg2[%c2_40, %c0_41, %c0_42] : memref<6x174x48xbf16, #tpu.memory_space<vmem>>, vector<1x174x48xbf16>
      %48 = vector.shape_cast %47 : vector<1x174x48xbf16> to vector<174x48xbf16>
      %cst_43 = arith.constant dense<0.000000e+00> : vector<70x48xf32>
      %49 = tpu.matmul %46, %48, %cst_43 {dimension_numbers = #tpu.dot_dimension_numbers<[1], [0], [0], [1], [0, 0, 1, 1], [], []>} : vector<70x174xbf16>, vector<174x48xbf16>, vector<70x48xf32> -> vector<70x48xf32>
      %50 = arith.addf %34, %49 : vector<70x48xf32>
      %c2_i32_44 = arith.constant 2 : i32
      %51 = arith.muli %c2_i32_44, %arg5 : i32
      %c3_i32 = arith.constant 3 : i32
      %52 = arith.addi %51, %c3_i32 : i32
      %c0_45 = arith.constant 0 : index
      %53 = arith.index_cast %52 : i32 to index
      %c0_46 = arith.constant 0 : index
      %c0_47 = arith.constant 0 : index
      %54 = vector.load %arg1[%c0_45, %53, %c0_46, %c0_47] : memref<1x144x72x58xbf16, #tpu.memory_space<vmem>>, vector<1x1x70x58xbf16>
      %55 = vector.shape_cast %54 : vector<1x1x70x58xbf16> to vector<70x58xbf16>
      %c0_48 = arith.constant 0 : index
      %56 = arith.index_cast %52 : i32 to index
      %c1_49 = arith.constant 1 : index
      %c0_50 = arith.constant 0 : index
      %57 = vector.load %arg1[%c0_48, %56, %c1_49, %c0_50] : memref<1x144x72x58xbf16, #tpu.memory_space<vmem>>, vector<1x1x70x58xbf16>
      %58 = vector.shape_cast %57 : vector<1x1x70x58xbf16> to vector<70x58xbf16>
      %c0_51 = arith.constant 0 : index
      %59 = arith.index_cast %52 : i32 to index
      %c2_52 = arith.constant 2 : index
      %c0_53 = arith.constant 0 : index
      %60 = vector.load %arg1[%c0_51, %59, %c2_52, %c0_53] : memref<1x144x72x58xbf16, #tpu.memory_space<vmem>>, vector<1x1x70x58xbf16>
      %61 = vector.shape_cast %60 : vector<1x1x70x58xbf16> to vector<70x58xbf16>
      %62 = tpu.concatenate %55, %58, %61 in 1 : vector<70x58xbf16>, vector<70x58xbf16>, vector<70x58xbf16> -> vector<70x174xbf16>
      %c3 = arith.constant 3 : index
      %c0_54 = arith.constant 0 : index
      %c0_55 = arith.constant 0 : index
      %63 = vector.load %arg2[%c3, %c0_54, %c0_55] : memref<6x174x48xbf16, #tpu.memory_space<vmem>>, vector<1x174x48xbf16>
      %64 = vector.shape_cast %63 : vector<1x174x48xbf16> to vector<174x48xbf16>
      %cst_56 = arith.constant dense<0.000000e+00> : vector<70x48xf32>
      %65 = tpu.matmul %62, %64, %cst_56 {dimension_numbers = #tpu.dot_dimension_numbers<[1], [0], [0], [1], [0, 0, 1, 1], [], []>} : vector<70x174xbf16>, vector<174x48xbf16>, vector<70x48xf32> -> vector<70x48xf32>
      %66 = arith.addf %50, %65 : vector<70x48xf32>
      %c2_i32_57 = arith.constant 2 : i32
      %67 = arith.muli %c2_i32_57, %arg5 : i32
      %c4_i32 = arith.constant 4 : i32
      %68 = arith.addi %67, %c4_i32 : i32
      %c0_58 = arith.constant 0 : index
      %69 = arith.index_cast %68 : i32 to index
      %c0_59 = arith.constant 0 : index
      %c0_60 = arith.constant 0 : index
      %70 = vector.load %arg1[%c0_58, %69, %c0_59, %c0_60] : memref<1x144x72x58xbf16, #tpu.memory_space<vmem>>, vector<1x1x70x58xbf16>
      %71 = vector.shape_cast %70 : vector<1x1x70x58xbf16> to vector<70x58xbf16>
      %c0_61 = arith.constant 0 : index
      %72 = arith.index_cast %68 : i32 to index
      %c1_62 = arith.constant 1 : index
      %c0_63 = arith.constant 0 : index
      %73 = vector.load %arg1[%c0_61, %72, %c1_62, %c0_63] : memref<1x144x72x58xbf16, #tpu.memory_space<vmem>>, vector<1x1x70x58xbf16>
      %74 = vector.shape_cast %73 : vector<1x1x70x58xbf16> to vector<70x58xbf16>
      %c0_64 = arith.constant 0 : index
      %75 = arith.index_cast %68 : i32 to index
      %c2_65 = arith.constant 2 : index
      %c0_66 = arith.constant 0 : index
      %76 = vector.load %arg1[%c0_64, %75, %c2_65, %c0_66] : memref<1x144x72x58xbf16, #tpu.memory_space<vmem>>, vector<1x1x70x58xbf16>
      %77 = vector.shape_cast %76 : vector<1x1x70x58xbf16> to vector<70x58xbf16>
      %78 = tpu.concatenate %71, %74, %77 in 1 : vector<70x58xbf16>, vector<70x58xbf16>, vector<70x58xbf16> -> vector<70x174xbf16>
      %c4 = arith.constant 4 : index
      %c0_67 = arith.constant 0 : index
      %c0_68 = arith.constant 0 : index
      %79 = vector.load %arg2[%c4, %c0_67, %c0_68] : memref<6x174x48xbf16, #tpu.memory_space<vmem>>, vector<1x174x48xbf16>
      %80 = vector.shape_cast %79 : vector<1x174x48xbf16> to vector<174x48xbf16>
      %cst_69 = arith.constant dense<0.000000e+00> : vector<70x48xf32>
      %81 = tpu.matmul %78, %80, %cst_69 {dimension_numbers = #tpu.dot_dimension_numbers<[1], [0], [0], [1], [0, 0, 1, 1], [], []>} : vector<70x174xbf16>, vector<174x48xbf16>, vector<70x48xf32> -> vector<70x48xf32>
      %82 = arith.addf %66, %81 : vector<70x48xf32>
      %c2_i32_70 = arith.constant 2 : i32
      %83 = arith.muli %c2_i32_70, %arg5 : i32
      %c5_i32 = arith.constant 5 : i32
      %84 = arith.addi %83, %c5_i32 : i32
      %c0_71 = arith.constant 0 : index
      %85 = arith.index_cast %84 : i32 to index
      %c0_72 = arith.constant 0 : index
      %c0_73 = arith.constant 0 : index
      %86 = vector.load %arg1[%c0_71, %85, %c0_72, %c0_73] : memref<1x144x72x58xbf16, #tpu.memory_space<vmem>>, vector<1x1x70x58xbf16>
      %87 = vector.shape_cast %86 : vector<1x1x70x58xbf16> to vector<70x58xbf16>
      %c0_74 = arith.constant 0 : index
      %88 = arith.index_cast %84 : i32 to index
      %c1_75 = arith.constant 1 : index
      %c0_76 = arith.constant 0 : index
      %89 = vector.load %arg1[%c0_74, %88, %c1_75, %c0_76] : memref<1x144x72x58xbf16, #tpu.memory_space<vmem>>, vector<1x1x70x58xbf16>
      %90 = vector.shape_cast %89 : vector<1x1x70x58xbf16> to vector<70x58xbf16>
      %c0_77 = arith.constant 0 : index
      %91 = arith.index_cast %84 : i32 to index
      %c2_78 = arith.constant 2 : index
      %c0_79 = arith.constant 0 : index
      %92 = vector.load %arg1[%c0_77, %91, %c2_78, %c0_79] : memref<1x144x72x58xbf16, #tpu.memory_space<vmem>>, vector<1x1x70x58xbf16>
      %93 = vector.shape_cast %92 : vector<1x1x70x58xbf16> to vector<70x58xbf16>
      %94 = tpu.concatenate %87, %90, %93 in 1 : vector<70x58xbf16>, vector<70x58xbf16>, vector<70x58xbf16> -> vector<70x174xbf16>
      %c5 = arith.constant 5 : index
      %c0_80 = arith.constant 0 : index
      %c0_81 = arith.constant 0 : index
      %95 = vector.load %arg2[%c5, %c0_80, %c0_81] : memref<6x174x48xbf16, #tpu.memory_space<vmem>>, vector<1x174x48xbf16>
      %96 = vector.shape_cast %95 : vector<1x174x48xbf16> to vector<174x48xbf16>
      %cst_82 = arith.constant dense<0.000000e+00> : vector<70x48xf32>
      %97 = tpu.matmul %94, %96, %cst_82 {dimension_numbers = #tpu.dot_dimension_numbers<[1], [0], [0], [1], [0, 0, 1, 1], [], []>} : vector<70x174xbf16>, vector<174x48xbf16>, vector<70x48xf32> -> vector<70x48xf32>
      %98 = arith.addf %82, %97 : vector<70x48xf32>
      %99 = vector.extract_strided_slice %98 {offsets = [0, 0], sizes = [70, 12], strides = [1, 1]} : vector<70x48xf32> to vector<70x12xf32>
      %100 = vector.extract_strided_slice %98 {offsets = [0, 12], sizes = [70, 12], strides = [1, 1]} : vector<70x48xf32> to vector<70x12xf32>
      %101 = arith.maximumf %99, %100 : vector<70x12xf32>
      %102 = vector.extract_strided_slice %98 {offsets = [0, 24], sizes = [70, 12], strides = [1, 1]} : vector<70x48xf32> to vector<70x12xf32>
      %103 = vector.extract_strided_slice %98 {offsets = [0, 36], sizes = [70, 12], strides = [1, 1]} : vector<70x48xf32> to vector<70x12xf32>
      %104 = arith.maximumf %102, %103 : vector<70x12xf32>
      %105 = arith.maximumf %101, %104 : vector<70x12xf32>
      %106 = vector.broadcast %0 : vector<1x12xf32> to vector<70x12xf32>
      %107 = arith.addf %105, %106 : vector<70x12xf32>
      %cst_83 = arith.constant 0.000000e+00 : f32
      %108 = vector.broadcast %cst_83 : f32 to vector<70x12xf32>
      %109 = arith.maximumf %107, %108 : vector<70x12xf32>
      %110 = arith.truncf %109 : vector<70x12xf32> to vector<70x12xbf16>
      %c0_84 = arith.constant 0 : index
      %111 = arith.index_cast %arg5 : i32 to index
      %c0_85 = arith.constant 0 : index
      %c0_86 = arith.constant 0 : index
      %112 = vector.load %arg4[%c0_84, %111, %c0_85, %c0_86] : memref<1x70x70x12xbf16, #tpu.memory_space<vmem>>, vector<1x1x70x12xbf16>
      %113 = vector.shape_cast %112 : vector<1x1x70x12xbf16> to vector<70x12xbf16>
      %114 = vector.shape_cast %110 : vector<70x12xbf16> to vector<1x1x70x12xbf16>
      tpu.vector_store %arg4[%c0_84, %111, %c0_85, %c0_86], %114 {strides = array<i32>} : memref<1x70x70x12xbf16, #tpu.memory_space<vmem>>, vector<1x1x70x12xbf16>,
    }
    %c70_i32_1 = arith.constant 70 : i32
    return
  }
  func.func @transform_0(%arg0: i32) -> (i32, i32, i32, i32) {
    %c0_i32 = arith.constant 0 : i32
    %c0_i32_0 = arith.constant 0 : i32
    %c0_i32_1 = arith.constant 0 : i32
    %c0_i32_2 = arith.constant 0 : i32
    return %arg0, %c0_i32, %c0_i32_0, %c0_i32_1 : i32, i32, i32, i32
  }
  func.func @transform_1(%arg0: i32) -> (i32, i32, i32) {
    %c0_i32 = arith.constant 0 : i32
    %c0_i32_0 = arith.constant 0 : i32
    %c0_i32_1 = arith.constant 0 : i32
    %c0_i32_2 = arith.constant 0 : i32
    return %c0_i32, %c0_i32_0, %c0_i32_1 : i32, i32, i32
  }
  func.func @transform_2(%arg0: i32) -> (i32, i32) {
    %c0_i32 = arith.constant 0 : i32
    %c0_i32_0 = arith.constant 0 : i32
    %c0_i32_1 = arith.constant 0 : i32
    return %c0_i32, %c0_i32_0 : i32, i32
  }
  func.func @transform_3(%arg0: i32) -> (i32, i32, i32, i32) {
    %c0_i32 = arith.constant 0 : i32
    %c0_i32_0 = arith.constant 0 : i32
    %c0_i32_1 = arith.constant 0 : i32
    %c0_i32_2 = arith.constant 0 : i32
    return %arg0, %c0_i32, %c0_i32_0, %c0_i32_1 : i32, i32, i32, i32
  }
}

module attributes {stable_mosaic.version = 11 : i64} {
  func.func @kernel(%arg0: i32, %arg1: memref<1x70x35x24xbf16, #tpu.memory_space<vmem>>, %arg2: memref<6x72x24xbf16, #tpu.memory_space<vmem>>, %arg3: memref<1x6xf32, #tpu.memory_space<vmem>>, %arg4: memref<1x33x33x6xf32, #tpu.memory_space<vmem>>) attributes {dimension_semantics = [#tpu.dimension_semantics<parallel>], iteration_bounds = array<i64: 2>, scalar_prefetch = 0 : i64, scratch_operands = 0 : i64, tpu.core_type = #tpu.core_type<tc>, window_params = [{transform_indices = @transform_0, window_bounds = array<i64: 1, 70, 35, 24>}, {pipeline_mode = #tpu.pipeline_mode<synchronous>, transform_indices = @transform_1, window_bounds = array<i64: 6, 72, 24>}, {pipeline_mode = #tpu.pipeline_mode<synchronous>, transform_indices = @transform_2, window_bounds = array<i64: 1, 6>}, {transform_indices = @transform_3, window_bounds = array<i64: 1, 33, 33, 6>}]} {
    %c0 = arith.constant 0 : index
    %c0_0 = arith.constant 0 : index
    %0 = vector.load %arg3[%c0, %c0_0] : memref<1x6xf32, #tpu.memory_space<vmem>>, vector<1x6xf32>
    %c0_i32 = arith.constant 0 : i32
    %c33_i32 = arith.constant 33 : i32
    %1 = arith.addi %c0_i32, %c33_i32 : i32
    %c1_i32 = arith.constant 1 : i32
    scf.for %arg5 = %c0_i32 to %1 step %c1_i32  : i32 {
      %cst = arith.constant 0.000000e+00 : f32
      %2 = vector.broadcast %cst : f32 to vector<33x24xf32>
      %c2_i32 = arith.constant 2 : i32
      %3 = arith.muli %c2_i32, %arg5 : i32
      %c0_i32_2 = arith.constant 0 : i32
      %4 = arith.addi %3, %c0_i32_2 : i32
      %c0_3 = arith.constant 0 : index
      %5 = arith.index_cast %4 : i32 to index
      %c0_4 = arith.constant 0 : index
      %c0_5 = arith.constant 0 : index
      %6 = vector.load %arg1[%c0_3, %5, %c0_4, %c0_5] : memref<1x70x35x24xbf16, #tpu.memory_space<vmem>>, vector<1x1x33x24xbf16>
      %7 = vector.shape_cast %6 : vector<1x1x33x24xbf16> to vector<33x24xbf16>
      %c0_6 = arith.constant 0 : index
      %8 = arith.index_cast %4 : i32 to index
      %c1 = arith.constant 1 : index
      %c0_7 = arith.constant 0 : index
      %9 = vector.load %arg1[%c0_6, %8, %c1, %c0_7] : memref<1x70x35x24xbf16, #tpu.memory_space<vmem>>, vector<1x1x33x24xbf16>
      %10 = vector.shape_cast %9 : vector<1x1x33x24xbf16> to vector<33x24xbf16>
      %c0_8 = arith.constant 0 : index
      %11 = arith.index_cast %4 : i32 to index
      %c2 = arith.constant 2 : index
      %c0_9 = arith.constant 0 : index
      %12 = vector.load %arg1[%c0_8, %11, %c2, %c0_9] : memref<1x70x35x24xbf16, #tpu.memory_space<vmem>>, vector<1x1x33x24xbf16>
      %13 = vector.shape_cast %12 : vector<1x1x33x24xbf16> to vector<33x24xbf16>
      %14 = tpu.concatenate %7, %10, %13 in 1 : vector<33x24xbf16>, vector<33x24xbf16>, vector<33x24xbf16> -> vector<33x72xbf16>
      %c0_10 = arith.constant 0 : index
      %c0_11 = arith.constant 0 : index
      %c0_12 = arith.constant 0 : index
      %15 = vector.load %arg2[%c0_10, %c0_11, %c0_12] : memref<6x72x24xbf16, #tpu.memory_space<vmem>>, vector<1x72x24xbf16>
      %16 = vector.shape_cast %15 : vector<1x72x24xbf16> to vector<72x24xbf16>
      %cst_13 = arith.constant dense<0.000000e+00> : vector<33x24xf32>
      %17 = tpu.matmul %14, %16, %cst_13 {dimension_numbers = #tpu.dot_dimension_numbers<[1], [0], [0], [1], [0, 0, 1, 1], [], []>} : vector<33x72xbf16>, vector<72x24xbf16>, vector<33x24xf32> -> vector<33x24xf32>
      %18 = arith.addf %2, %17 : vector<33x24xf32>
      %c2_i32_14 = arith.constant 2 : i32
      %19 = arith.muli %c2_i32_14, %arg5 : i32
      %c1_i32_15 = arith.constant 1 : i32
      %20 = arith.addi %19, %c1_i32_15 : i32
      %c0_16 = arith.constant 0 : index
      %21 = arith.index_cast %20 : i32 to index
      %c0_17 = arith.constant 0 : index
      %c0_18 = arith.constant 0 : index
      %22 = vector.load %arg1[%c0_16, %21, %c0_17, %c0_18] : memref<1x70x35x24xbf16, #tpu.memory_space<vmem>>, vector<1x1x33x24xbf16>
      %23 = vector.shape_cast %22 : vector<1x1x33x24xbf16> to vector<33x24xbf16>
      %c0_19 = arith.constant 0 : index
      %24 = arith.index_cast %20 : i32 to index
      %c1_20 = arith.constant 1 : index
      %c0_21 = arith.constant 0 : index
      %25 = vector.load %arg1[%c0_19, %24, %c1_20, %c0_21] : memref<1x70x35x24xbf16, #tpu.memory_space<vmem>>, vector<1x1x33x24xbf16>
      %26 = vector.shape_cast %25 : vector<1x1x33x24xbf16> to vector<33x24xbf16>
      %c0_22 = arith.constant 0 : index
      %27 = arith.index_cast %20 : i32 to index
      %c2_23 = arith.constant 2 : index
      %c0_24 = arith.constant 0 : index
      %28 = vector.load %arg1[%c0_22, %27, %c2_23, %c0_24] : memref<1x70x35x24xbf16, #tpu.memory_space<vmem>>, vector<1x1x33x24xbf16>
      %29 = vector.shape_cast %28 : vector<1x1x33x24xbf16> to vector<33x24xbf16>
      %30 = tpu.concatenate %23, %26, %29 in 1 : vector<33x24xbf16>, vector<33x24xbf16>, vector<33x24xbf16> -> vector<33x72xbf16>
      %c1_25 = arith.constant 1 : index
      %c0_26 = arith.constant 0 : index
      %c0_27 = arith.constant 0 : index
      %31 = vector.load %arg2[%c1_25, %c0_26, %c0_27] : memref<6x72x24xbf16, #tpu.memory_space<vmem>>, vector<1x72x24xbf16>
      %32 = vector.shape_cast %31 : vector<1x72x24xbf16> to vector<72x24xbf16>
      %cst_28 = arith.constant dense<0.000000e+00> : vector<33x24xf32>
      %33 = tpu.matmul %30, %32, %cst_28 {dimension_numbers = #tpu.dot_dimension_numbers<[1], [0], [0], [1], [0, 0, 1, 1], [], []>} : vector<33x72xbf16>, vector<72x24xbf16>, vector<33x24xf32> -> vector<33x24xf32>
      %34 = arith.addf %18, %33 : vector<33x24xf32>
      %c2_i32_29 = arith.constant 2 : i32
      %35 = arith.muli %c2_i32_29, %arg5 : i32
      %c2_i32_30 = arith.constant 2 : i32
      %36 = arith.addi %35, %c2_i32_30 : i32
      %c0_31 = arith.constant 0 : index
      %37 = arith.index_cast %36 : i32 to index
      %c0_32 = arith.constant 0 : index
      %c0_33 = arith.constant 0 : index
      %38 = vector.load %arg1[%c0_31, %37, %c0_32, %c0_33] : memref<1x70x35x24xbf16, #tpu.memory_space<vmem>>, vector<1x1x33x24xbf16>
      %39 = vector.shape_cast %38 : vector<1x1x33x24xbf16> to vector<33x24xbf16>
      %c0_34 = arith.constant 0 : index
      %40 = arith.index_cast %36 : i32 to index
      %c1_35 = arith.constant 1 : index
      %c0_36 = arith.constant 0 : index
      %41 = vector.load %arg1[%c0_34, %40, %c1_35, %c0_36] : memref<1x70x35x24xbf16, #tpu.memory_space<vmem>>, vector<1x1x33x24xbf16>
      %42 = vector.shape_cast %41 : vector<1x1x33x24xbf16> to vector<33x24xbf16>
      %c0_37 = arith.constant 0 : index
      %43 = arith.index_cast %36 : i32 to index
      %c2_38 = arith.constant 2 : index
      %c0_39 = arith.constant 0 : index
      %44 = vector.load %arg1[%c0_37, %43, %c2_38, %c0_39] : memref<1x70x35x24xbf16, #tpu.memory_space<vmem>>, vector<1x1x33x24xbf16>
      %45 = vector.shape_cast %44 : vector<1x1x33x24xbf16> to vector<33x24xbf16>
      %46 = tpu.concatenate %39, %42, %45 in 1 : vector<33x24xbf16>, vector<33x24xbf16>, vector<33x24xbf16> -> vector<33x72xbf16>
      %c2_40 = arith.constant 2 : index
      %c0_41 = arith.constant 0 : index
      %c0_42 = arith.constant 0 : index
      %47 = vector.load %arg2[%c2_40, %c0_41, %c0_42] : memref<6x72x24xbf16, #tpu.memory_space<vmem>>, vector<1x72x24xbf16>
      %48 = vector.shape_cast %47 : vector<1x72x24xbf16> to vector<72x24xbf16>
      %cst_43 = arith.constant dense<0.000000e+00> : vector<33x24xf32>
      %49 = tpu.matmul %46, %48, %cst_43 {dimension_numbers = #tpu.dot_dimension_numbers<[1], [0], [0], [1], [0, 0, 1, 1], [], []>} : vector<33x72xbf16>, vector<72x24xbf16>, vector<33x24xf32> -> vector<33x24xf32>
      %50 = arith.addf %34, %49 : vector<33x24xf32>
      %c2_i32_44 = arith.constant 2 : i32
      %51 = arith.muli %c2_i32_44, %arg5 : i32
      %c3_i32 = arith.constant 3 : i32
      %52 = arith.addi %51, %c3_i32 : i32
      %c0_45 = arith.constant 0 : index
      %53 = arith.index_cast %52 : i32 to index
      %c0_46 = arith.constant 0 : index
      %c0_47 = arith.constant 0 : index
      %54 = vector.load %arg1[%c0_45, %53, %c0_46, %c0_47] : memref<1x70x35x24xbf16, #tpu.memory_space<vmem>>, vector<1x1x33x24xbf16>
      %55 = vector.shape_cast %54 : vector<1x1x33x24xbf16> to vector<33x24xbf16>
      %c0_48 = arith.constant 0 : index
      %56 = arith.index_cast %52 : i32 to index
      %c1_49 = arith.constant 1 : index
      %c0_50 = arith.constant 0 : index
      %57 = vector.load %arg1[%c0_48, %56, %c1_49, %c0_50] : memref<1x70x35x24xbf16, #tpu.memory_space<vmem>>, vector<1x1x33x24xbf16>
      %58 = vector.shape_cast %57 : vector<1x1x33x24xbf16> to vector<33x24xbf16>
      %c0_51 = arith.constant 0 : index
      %59 = arith.index_cast %52 : i32 to index
      %c2_52 = arith.constant 2 : index
      %c0_53 = arith.constant 0 : index
      %60 = vector.load %arg1[%c0_51, %59, %c2_52, %c0_53] : memref<1x70x35x24xbf16, #tpu.memory_space<vmem>>, vector<1x1x33x24xbf16>
      %61 = vector.shape_cast %60 : vector<1x1x33x24xbf16> to vector<33x24xbf16>
      %62 = tpu.concatenate %55, %58, %61 in 1 : vector<33x24xbf16>, vector<33x24xbf16>, vector<33x24xbf16> -> vector<33x72xbf16>
      %c3 = arith.constant 3 : index
      %c0_54 = arith.constant 0 : index
      %c0_55 = arith.constant 0 : index
      %63 = vector.load %arg2[%c3, %c0_54, %c0_55] : memref<6x72x24xbf16, #tpu.memory_space<vmem>>, vector<1x72x24xbf16>
      %64 = vector.shape_cast %63 : vector<1x72x24xbf16> to vector<72x24xbf16>
      %cst_56 = arith.constant dense<0.000000e+00> : vector<33x24xf32>
      %65 = tpu.matmul %62, %64, %cst_56 {dimension_numbers = #tpu.dot_dimension_numbers<[1], [0], [0], [1], [0, 0, 1, 1], [], []>} : vector<33x72xbf16>, vector<72x24xbf16>, vector<33x24xf32> -> vector<33x24xf32>
      %66 = arith.addf %50, %65 : vector<33x24xf32>
      %c2_i32_57 = arith.constant 2 : i32
      %67 = arith.muli %c2_i32_57, %arg5 : i32
      %c4_i32 = arith.constant 4 : i32
      %68 = arith.addi %67, %c4_i32 : i32
      %c0_58 = arith.constant 0 : index
      %69 = arith.index_cast %68 : i32 to index
      %c0_59 = arith.constant 0 : index
      %c0_60 = arith.constant 0 : index
      %70 = vector.load %arg1[%c0_58, %69, %c0_59, %c0_60] : memref<1x70x35x24xbf16, #tpu.memory_space<vmem>>, vector<1x1x33x24xbf16>
      %71 = vector.shape_cast %70 : vector<1x1x33x24xbf16> to vector<33x24xbf16>
      %c0_61 = arith.constant 0 : index
      %72 = arith.index_cast %68 : i32 to index
      %c1_62 = arith.constant 1 : index
      %c0_63 = arith.constant 0 : index
      %73 = vector.load %arg1[%c0_61, %72, %c1_62, %c0_63] : memref<1x70x35x24xbf16, #tpu.memory_space<vmem>>, vector<1x1x33x24xbf16>
      %74 = vector.shape_cast %73 : vector<1x1x33x24xbf16> to vector<33x24xbf16>
      %c0_64 = arith.constant 0 : index
      %75 = arith.index_cast %68 : i32 to index
      %c2_65 = arith.constant 2 : index
      %c0_66 = arith.constant 0 : index
      %76 = vector.load %arg1[%c0_64, %75, %c2_65, %c0_66] : memref<1x70x35x24xbf16, #tpu.memory_space<vmem>>, vector<1x1x33x24xbf16>
      %77 = vector.shape_cast %76 : vector<1x1x33x24xbf16> to vector<33x24xbf16>
      %78 = tpu.concatenate %71, %74, %77 in 1 : vector<33x24xbf16>, vector<33x24xbf16>, vector<33x24xbf16> -> vector<33x72xbf16>
      %c4 = arith.constant 4 : index
      %c0_67 = arith.constant 0 : index
      %c0_68 = arith.constant 0 : index
      %79 = vector.load %arg2[%c4, %c0_67, %c0_68] : memref<6x72x24xbf16, #tpu.memory_space<vmem>>, vector<1x72x24xbf16>
      %80 = vector.shape_cast %79 : vector<1x72x24xbf16> to vector<72x24xbf16>
      %cst_69 = arith.constant dense<0.000000e+00> : vector<33x24xf32>
      %81 = tpu.matmul %78, %80, %cst_69 {dimension_numbers = #tpu.dot_dimension_numbers<[1], [0], [0], [1], [0, 0, 1, 1], [], []>} : vector<33x72xbf16>, vector<72x24xbf16>, vector<33x24xf32> -> vector<33x24xf32>
      %82 = arith.addf %66, %81 : vector<33x24xf32>
      %c2_i32_70 = arith.constant 2 : i32
      %83 = arith.muli %c2_i32_70, %arg5 : i32
      %c5_i32 = arith.constant 5 : i32
      %84 = arith.addi %83, %c5_i32 : i32
      %c0_71 = arith.constant 0 : index
      %85 = arith.index_cast %84 : i32 to index
      %c0_72 = arith.constant 0 : index
      %c0_73 = arith.constant 0 : index
      %86 = vector.load %arg1[%c0_71, %85, %c0_72, %c0_73] : memref<1x70x35x24xbf16, #tpu.memory_space<vmem>>, vector<1x1x33x24xbf16>
      %87 = vector.shape_cast %86 : vector<1x1x33x24xbf16> to vector<33x24xbf16>
      %c0_74 = arith.constant 0 : index
      %88 = arith.index_cast %84 : i32 to index
      %c1_75 = arith.constant 1 : index
      %c0_76 = arith.constant 0 : index
      %89 = vector.load %arg1[%c0_74, %88, %c1_75, %c0_76] : memref<1x70x35x24xbf16, #tpu.memory_space<vmem>>, vector<1x1x33x24xbf16>
      %90 = vector.shape_cast %89 : vector<1x1x33x24xbf16> to vector<33x24xbf16>
      %c0_77 = arith.constant 0 : index
      %91 = arith.index_cast %84 : i32 to index
      %c2_78 = arith.constant 2 : index
      %c0_79 = arith.constant 0 : index
      %92 = vector.load %arg1[%c0_77, %91, %c2_78, %c0_79] : memref<1x70x35x24xbf16, #tpu.memory_space<vmem>>, vector<1x1x33x24xbf16>
      %93 = vector.shape_cast %92 : vector<1x1x33x24xbf16> to vector<33x24xbf16>
      %94 = tpu.concatenate %87, %90, %93 in 1 : vector<33x24xbf16>, vector<33x24xbf16>, vector<33x24xbf16> -> vector<33x72xbf16>
      %c5 = arith.constant 5 : index
      %c0_80 = arith.constant 0 : index
      %c0_81 = arith.constant 0 : index
      %95 = vector.load %arg2[%c5, %c0_80, %c0_81] : memref<6x72x24xbf16, #tpu.memory_space<vmem>>, vector<1x72x24xbf16>
      %96 = vector.shape_cast %95 : vector<1x72x24xbf16> to vector<72x24xbf16>
      %cst_82 = arith.constant dense<0.000000e+00> : vector<33x24xf32>
      %97 = tpu.matmul %94, %96, %cst_82 {dimension_numbers = #tpu.dot_dimension_numbers<[1], [0], [0], [1], [0, 0, 1, 1], [], []>} : vector<33x72xbf16>, vector<72x24xbf16>, vector<33x24xf32> -> vector<33x24xf32>
      %98 = arith.addf %82, %97 : vector<33x24xf32>
      %99 = vector.extract_strided_slice %98 {offsets = [0, 0], sizes = [33, 6], strides = [1, 1]} : vector<33x24xf32> to vector<33x6xf32>
      %100 = vector.extract_strided_slice %98 {offsets = [0, 6], sizes = [33, 6], strides = [1, 1]} : vector<33x24xf32> to vector<33x6xf32>
      %101 = arith.maximumf %99, %100 : vector<33x6xf32>
      %102 = vector.extract_strided_slice %98 {offsets = [0, 12], sizes = [33, 6], strides = [1, 1]} : vector<33x24xf32> to vector<33x6xf32>
      %103 = vector.extract_strided_slice %98 {offsets = [0, 18], sizes = [33, 6], strides = [1, 1]} : vector<33x24xf32> to vector<33x6xf32>
      %104 = arith.maximumf %102, %103 : vector<33x6xf32>
      %105 = arith.maximumf %101, %104 : vector<33x6xf32>
      %106 = vector.broadcast %0 : vector<1x6xf32> to vector<33x6xf32>
      %107 = arith.addf %105, %106 : vector<33x6xf32>
      %cst_83 = arith.constant 0.000000e+00 : f32
      %108 = vector.broadcast %cst_83 : f32 to vector<33x6xf32>
      %109 = arith.maximumf %107, %108 : vector<33x6xf32>
      %c0_84 = arith.constant 0 : index
      %110 = arith.index_cast %arg5 : i32 to index
      %c0_85 = arith.constant 0 : index
      %c0_86 = arith.constant 0 : index
      %111 = vector.load %arg4[%c0_84, %110, %c0_85, %c0_86] : memref<1x33x33x6xf32, #tpu.memory_space<vmem>>, vector<1x1x33x6xf32>
      %112 = vector.shape_cast %111 : vector<1x1x33x6xf32> to vector<33x6xf32>
      %113 = vector.shape_cast %109 : vector<33x6xf32> to vector<1x1x33x6xf32>
      tpu.vector_store %arg4[%c0_84, %110, %c0_85, %c0_86], %113 {strides = array<i32>} : memref<1x33x33x6xf32, #tpu.memory_space<vmem>>, vector<1x1x33x6xf32>,
    }
    %c33_i32_1 = arith.constant 33 : i32
    return
  }
  func.func @transform_0(%arg0: i32) -> (i32, i32, i32, i32) {
    %c0_i32 = arith.constant 0 : i32
    %c0_i32_0 = arith.constant 0 : i32
    %c0_i32_1 = arith.constant 0 : i32
    %c0_i32_2 = arith.constant 0 : i32
    return %arg0, %c0_i32, %c0_i32_0, %c0_i32_1 : i32, i32, i32, i32
  }
  func.func @transform_1(%arg0: i32) -> (i32, i32, i32) {
    %c0_i32 = arith.constant 0 : i32
    %c0_i32_0 = arith.constant 0 : i32
    %c0_i32_1 = arith.constant 0 : i32
    %c0_i32_2 = arith.constant 0 : i32
    return %c0_i32, %c0_i32_0, %c0_i32_1 : i32, i32, i32
  }
  func.func @transform_2(%arg0: i32) -> (i32, i32) {
    %c0_i32 = arith.constant 0 : i32
    %c0_i32_0 = arith.constant 0 : i32
    %c0_i32_1 = arith.constant 0 : i32
    return %c0_i32, %c0_i32_0 : i32, i32
  }
  func.func @transform_3(%arg0: i32) -> (i32, i32, i32, i32) {
    %c0_i32 = arith.constant 0 : i32
    %c0_i32_0 = arith.constant 0 : i32
    %c0_i32_1 = arith.constant 0 : i32
    %c0_i32_2 = arith.constant 0 : i32
    return %arg0, %c0_i32, %c0_i32_0, %c0_i32_1 : i32, i32, i32, i32
  }
}

module attributes {stable_mosaic.version = 11 : i64} {
  func.func @_head_kernel(%arg0: i32, %arg1: memref<2x6534xf32, #tpu.memory_space<vmem>>, %arg2: memref<6534x256xbf16, #tpu.memory_space<vmem>>, %arg3: memref<1x256xf32, #tpu.memory_space<vmem>>, %arg4: memref<1x256xf32, #tpu.memory_space<vmem>>, %arg5: memref<1x1xf32, #tpu.memory_space<vmem>>, %arg6: memref<1x6534xf32, #tpu.memory_space<vmem>>, %arg7: memref<1x1xf32, #tpu.memory_space<vmem>>, %arg8: memref<2x1xf32, #tpu.memory_space<vmem>>) attributes {dimension_semantics = [#tpu.dimension_semantics<arbitrary>], iteration_bounds = array<i64: 1>, scalar_prefetch = 0 : i64, scratch_operands = 0 : i64, tpu.core_type = #tpu.core_type<tc>, window_params = [{pipeline_mode = #tpu.pipeline_mode<synchronous>, transform_indices = @transform_0, window_bounds = array<i64: 2, 6534>}, {pipeline_mode = #tpu.pipeline_mode<synchronous>, transform_indices = @transform_1, window_bounds = array<i64: 6534, 256>}, {pipeline_mode = #tpu.pipeline_mode<synchronous>, transform_indices = @transform_2, window_bounds = array<i64: 1, 256>}, {pipeline_mode = #tpu.pipeline_mode<synchronous>, transform_indices = @transform_3, window_bounds = array<i64: 1, 256>}, {pipeline_mode = #tpu.pipeline_mode<synchronous>, transform_indices = @transform_4, window_bounds = array<i64: 1, 1>}, {pipeline_mode = #tpu.pipeline_mode<synchronous>, transform_indices = @transform_5, window_bounds = array<i64: 1, 6534>}, {pipeline_mode = #tpu.pipeline_mode<synchronous>, transform_indices = @transform_6, window_bounds = array<i64: 1, 1>}, {pipeline_mode = #tpu.pipeline_mode<synchronous>, transform_indices = @transform_7, window_bounds = array<i64: 2, 1>}]} {
    %c0 = arith.constant 0 : index
    %c0_0 = arith.constant 0 : index
    %0 = vector.load %arg1[%c0, %c0_0] : memref<2x6534xf32, #tpu.memory_space<vmem>>, vector<2x6534xf32>
    %1 = arith.truncf %0 : vector<2x6534xf32> to vector<2x6534xbf16>
    %c0_1 = arith.constant 0 : index
    %c0_2 = arith.constant 0 : index
    %2 = vector.load %arg2[%c0_1, %c0_2] : memref<6534x256xbf16, #tpu.memory_space<vmem>>, vector<6534x256xbf16>
    %cst = arith.constant dense<0.000000e+00> : vector<2x256xf32>
    %3 = tpu.matmul %1, %2, %cst {dimension_numbers = #tpu.dot_dimension_numbers<[1], [0], [0], [1], [0, 0, 1, 1], [], []>} : vector<2x6534xbf16>, vector<6534x256xbf16>, vector<2x256xf32> -> vector<2x256xf32>
    %c0_3 = arith.constant 0 : index
    %c0_4 = arith.constant 0 : index
    %4 = vector.load %arg3[%c0_3, %c0_4] : memref<1x256xf32, #tpu.memory_space<vmem>>, vector<1x256xf32>
    %5 = vector.broadcast %4 : vector<1x256xf32> to vector<2x256xf32>
    %6 = arith.addf %3, %5 : vector<2x256xf32>
    %7 = math.tanh %6 : vector<2x256xf32>
    %c0_5 = arith.constant 0 : index
    %c0_6 = arith.constant 0 : index
    %8 = vector.load %arg4[%c0_5, %c0_6] : memref<1x256xf32, #tpu.memory_space<vmem>>, vector<1x256xf32>
    %9 = vector.broadcast %8 : vector<1x256xf32> to vector<2x256xf32>
    %10 = arith.mulf %7, %9 : vector<2x256xf32>
    %cst_7 = arith.constant dense<0.000000e+00> : vector<2xf32>
    %11 = vector.multi_reduction <add>, %10, %cst_7 [1] : vector<2x256xf32> to vector<2xf32>
    %12 = vector.shape_cast %11 : vector<2xf32> to vector<2x1xf32>
    %c0_8 = arith.constant 0 : index
    %c0_9 = arith.constant 0 : index
    %13 = vector.load %arg5[%c0_8, %c0_9] : memref<1x1xf32, #tpu.memory_space<vmem>>, vector<1x1xf32>
    %14 = vector.broadcast %13 : vector<1x1xf32> to vector<2x1xf32>
    %15 = arith.addf %12, %14 : vector<2x1xf32>
    %c0_10 = arith.constant 0 : index
    %c0_11 = arith.constant 0 : index
    %16 = vector.load %arg6[%c0_10, %c0_11] : memref<1x6534xf32, #tpu.memory_space<vmem>>, vector<1x6534xf32>
    %17 = vector.broadcast %16 : vector<1x6534xf32> to vector<2x6534xf32>
    %18 = arith.mulf %0, %17 : vector<2x6534xf32>
    %cst_12 = arith.constant dense<0.000000e+00> : vector<2xf32>
    %19 = vector.multi_reduction <add>, %18, %cst_12 [1] : vector<2x6534xf32> to vector<2xf32>
    %20 = vector.shape_cast %19 : vector<2xf32> to vector<2x1xf32>
    %cst_13 = arith.constant dense<0.000000e+00> : vector<1xf32>
    %21 = vector.multi_reduction <add>, %20, %cst_13 [0] : vector<2x1xf32> to vector<1xf32>
    %22 = vector.shape_cast %21 : vector<1xf32> to vector<1x1xf32>
    %23 = vector.broadcast %22 : vector<1x1xf32> to vector<2x1xf32>
    %24 = arith.mulf %15, %23 : vector<2x1xf32>
    %c0_14 = arith.constant 0 : index
    %c0_15 = arith.constant 0 : index
    %25 = vector.load %arg7[%c0_14, %c0_15] : memref<1x1xf32, #tpu.memory_space<vmem>>, vector<1x1xf32>
    %26 = vector.broadcast %25 : vector<1x1xf32> to vector<2x1xf32>
    %27 = arith.addf %24, %26 : vector<2x1xf32>
    %28 = arith.negf %27 : vector<2x1xf32>
    %29 = math.exp %28 : vector<2x1xf32>
    %cst_16 = arith.constant 1.000000e+00 : f32
    %30 = vector.broadcast %cst_16 : f32 to vector<2x1xf32>
    %31 = arith.addf %30, %29 : vector<2x1xf32>
    %32 = arith.divf %30, %31 : vector<2x1xf32>
    %c0_17 = arith.constant 0 : index
    %c0_18 = arith.constant 0 : index
    %33 = vector.load %arg8[%c0_17, %c0_18] : memref<2x1xf32, #tpu.memory_space<vmem>>, vector<2x1xf32>
    tpu.vector_store %arg8[%c0_17, %c0_18], %32 {strides = array<i32>} : memref<2x1xf32, #tpu.memory_space<vmem>>, vector<2x1xf32>,
    return
  }
  func.func @transform_0(%arg0: i32) -> (i32, i32) {
    %c0_i32 = arith.constant 0 : i32
    %c0_i32_0 = arith.constant 0 : i32
    %c0_i32_1 = arith.constant 0 : i32
    return %c0_i32, %c0_i32_0 : i32, i32
  }
  func.func @transform_1(%arg0: i32) -> (i32, i32) {
    %c0_i32 = arith.constant 0 : i32
    %c0_i32_0 = arith.constant 0 : i32
    %c0_i32_1 = arith.constant 0 : i32
    return %c0_i32, %c0_i32_0 : i32, i32
  }
  func.func @transform_2(%arg0: i32) -> (i32, i32) {
    %c0_i32 = arith.constant 0 : i32
    %c0_i32_0 = arith.constant 0 : i32
    %c0_i32_1 = arith.constant 0 : i32
    return %c0_i32, %c0_i32_0 : i32, i32
  }
  func.func @transform_3(%arg0: i32) -> (i32, i32) {
    %c0_i32 = arith.constant 0 : i32
    %c0_i32_0 = arith.constant 0 : i32
    %c0_i32_1 = arith.constant 0 : i32
    return %c0_i32, %c0_i32_0 : i32, i32
  }
  func.func @transform_4(%arg0: i32) -> (i32, i32) {
    %c0_i32 = arith.constant 0 : i32
    %c0_i32_0 = arith.constant 0 : i32
    %c0_i32_1 = arith.constant 0 : i32
    return %c0_i32, %c0_i32_0 : i32, i32
  }
  func.func @transform_5(%arg0: i32) -> (i32, i32) {
    %c0_i32 = arith.constant 0 : i32
    %c0_i32_0 = arith.constant 0 : i32
    %c0_i32_1 = arith.constant 0 : i32
    return %c0_i32, %c0_i32_0 : i32, i32
  }
  func.func @transform_6(%arg0: i32) -> (i32, i32) {
    %c0_i32 = arith.constant 0 : i32
    %c0_i32_0 = arith.constant 0 : i32
    %c0_i32_1 = arith.constant 0 : i32
    return %c0_i32, %c0_i32_0 : i32, i32
  }
  func.func @transform_7(%arg0: i32) -> (i32, i32) {
    %c0_i32 = arith.constant 0 : i32
    %c0_i32_0 = arith.constant 0 : i32
    %c0_i32_1 = arith.constant 0 : i32
    return %c0_i32, %c0_i32_0 : i32, i32
  }
}

</mosaic_0001>

<llo_original>
// kernel: gaf_attn_net_forward.3
$region0: #{gaf_attn_net_forward.3}
  #allocation0 [shape = 'u32[]', space=smem, size = 0x4, offset = 0x4, fixed_abs, tag = 'smem constant byte address 0x4 - core index']
  #allocation1 [shape = 'u32[144,128]{1,0:T(1,128)}', space=vmem, size = 0x12000, scoped, tag = 'internal scratch']
  %s0 = inlined_call_operand.vmem [shape: bf16[2,144,72,58], index: 0, kind: input, shape index: {}]
  %s1 = inlined_call_operand.vmem [shape: bf16[6,174,48], index: 1, kind: input, shape index: {}]
  %s2 = inlined_call_operand.vmem [shape: f32[1,12], index: 2, kind: input, shape index: {}]
  %s3 = inlined_call_operand.vmem [shape: bf16[2,70,70,12], index: 3, kind: output, shape index: {}]
  %s4 = sld [smem:[#allocation0]]
  $region52: #{gaf_attn_net_forward.3} parent=0
    _
  %s6 = ssub.s32 1, %s4
  %s7 = scalar_select 0, %s6, %s4
  loop: start=0, step=1, limit=4
  $region2: #{gaf_attn_net_forward.3} parent=0 // loop_pre_header
    _
  $region3: #{gaf_attn_net_forward.3} parent=0 // loop_header
    %s9 = sphi 0, %s13
    %p10 = scmp.ge.s32.totalorder %s9, 4
    %s19 = sphi 0, %s21
    %s22 = sphi 0, %s19
    %s23 = sphi 0, %s22
    %s39 = sphi 0, %s23
    %s43 = sphi 0, %s43
    %s45 = sphi 0, %s43
    %s46 = sphi 0, %s45
    %s60 = sphi 0, %s46
    %s64 = sphi 0, %s64
    %s66 = sphi 0, %s64
    %s67 = sphi 0, %s66
    %s81 = sphi 0, %s67
    %s87 = sphi 0, %s89
    %s90 = sphi 0, %s87
    %s91 = sphi 0, %s90
    %s107 = sphi 0, %s91
  $region4: #{gaf_attn_net_forward.3} parent=0 // loop_header_branch
    %12 = sbr.rel (%p10) target = $region8
  $region5: #{gaf_attn_net_forward.3} parent=0 // loop_body
    %s14 = ssub.s32 %s9, 1
    %s15 = ssub.s32 %s9, 2
    %s16 = sadd.s32 %s9, 1
    %s17 = ssub.s32 %s9, %s16
    %p18 = scmp.eq.s32.totalorder %s17, 0
    %s20 = sadd.s32 %s19, 1
    %s21 = scalar_select %p18, %s19, %s20
    %p24 = pneg %p18
    %p25 = scmp.eq.s32.totalorder %s9, 1
    %p26 = por %p24, %p25
    %p27 = scmp.ne.s32.totalorder %s19, %s22
    %p28 = scmp.eq.s32.totalorder %s9, 0
    %p29 = por %p27, %p28
    %p30 = scmp.ne.s32.totalorder %s19, %s22
    %p31 = scmp.eq.s32.totalorder %s14, 1
    %p32 = por %p30, %p31
    %p33 = scmp.ne.s32.totalorder %s22, %s23
    %p34 = scmp.eq.s32.totalorder %s14, 0
    %p35 = por %p33, %p34
    %p36 = scmp.ne.s32.totalorder %s22, %s23
    %p37 = scmp.eq.s32.totalorder %s15, 1
    %p38 = por %p36, %p37
    %p40 = scmp.ne.s32.totalorder %s23, %s39
    %p41 = scmp.eq.s32.totalorder %s15, 0
    %p42 = por %p40, %p41
    %s44 = sadd.s32 %s43, 1
    %p47 = scmp.eq.s32.totalorder %s9, 1
    %p48 = scmp.ne.s32.totalorder %s43, %s45
    %p49 = scmp.eq.s32.totalorder %s9, 0
    %p50 = por %p48, %p49
    %p51 = scmp.ne.s32.totalorder %s43, %s45
    %p52 = scmp.eq.s32.totalorder %s14, 1
    %p53 = por %p51, %p52
    %p54 = scmp.ne.s32.totalorder %s45, %s46
    %p55 = scmp.eq.s32.totalorder %s14, 0
    %p56 = por %p54, %p55
    %p57 = scmp.ne.s32.totalorder %s45, %s46
    %p58 = scmp.eq.s32.totalorder %s15, 1
    %p59 = por %p57, %p58
    %p61 = scmp.ne.s32.totalorder %s46, %s60
    %p62 = scmp.eq.s32.totalorder %s15, 0
    %p63 = por %p61, %p62
    %s65 = sadd.s32 %s64, 1
    %p68 = scmp.eq.s32.totalorder %s9, 1
    %p69 = scmp.ne.s32.totalorder %s64, %s66
    %p70 = scmp.eq.s32.totalorder %s9, 0
    %p71 = por %p69, %p70
    %p72 = scmp.ne.s32.totalorder %s64, %s66
    %p73 = scmp.eq.s32.totalorder %s14, 1
    %p74 = por %p72, %p73
    %p75 = scmp.ne.s32.totalorder %s66, %s67
    %p76 = scmp.eq.s32.totalorder %s14, 0
    %p77 = por %p75, %p76
    %p78 = scmp.ne.s32.totalorder %s66, %s67
    %p79 = scmp.eq.s32.totalorder %s15, 1
    %p80 = por %p78, %p79
    %p82 = scmp.ne.s32.totalorder %s67, %s81
    %p83 = scmp.eq.s32.totalorder %s15, 0
    %p84 = por %p82, %p83
    %s85 = ssub.s32 %s9, %s16
    %p86 = scmp.eq.s32.totalorder %s85, 0
    %s88 = sadd.s32 %s87, 1
    %s89 = scalar_select %p86, %s87, %s88
    %p92 = pneg %p86
    %p93 = scmp.eq.s32.totalorder %s9, 1
    %p94 = por %p92, %p93
    %p95 = scmp.ne.s32.totalorder %s87, %s90
    %p96 = scmp.eq.s32.totalorder %s9, 0
    %p97 = por %p95, %p96
    %p98 = scmp.ne.s32.totalorder %s87, %s90
    %p99 = scmp.eq.s32.totalorder %s14, 1
    %p100 = por %p98, %p99
    %p101 = scmp.ne.s32.totalorder %s90, %s91
    %p102 = scmp.eq.s32.totalorder %s14, 0
    %p103 = por %p101, %p102
    %p104 = scmp.ne.s32.totalorder %s90, %s91
    %p105 = scmp.eq.s32.totalorder %s15, 1
    %p106 = por %p104, %p105
    %p108 = scmp.ne.s32.totalorder %s91, %s107
    %p109 = scmp.eq.s32.totalorder %s15, 0
    %p110 = por %p108, %p109
    %p111 = scmp.le.s32.totalorder 1, %s9
    %p112 = scmp.lt.s32.totalorder %s9, 3
    %p113 = pnand %p111, %p112
    %p114 = pneg %p113
    // Predicated region
    $region9: #{gaf_attn_net_forward.3} parent=5 // pred_check
      _
    $region10: #{gaf_attn_net_forward.3} parent=5 // pred_check_branch
      %116 = sbr.rel (%p113) target = $region12
    $region11: #{gaf_attn_net_forward.3} parent=5 // pred_region
      %s117 = ssub.s32 %s9, 1
      // Predicated region
      $region13: #{gaf_attn_net_forward.3} parent=11 // pred_check
        %p118 = pneg %p56
      $region14: #{gaf_attn_net_forward.3} parent=11 // pred_check_branch
        %120 = sbr.rel (%p118) target = $region16
      $region15: #{gaf_attn_net_forward.3} parent=11 // pred_region
        _
      $region16: #{gaf_attn_net_forward.3} parent=11 // pred_fallthru
        _
      // Predicated region
      $region17: #{gaf_attn_net_forward.3} parent=11 // pred_check
        %p121 = pneg %p77
      $region18: #{gaf_attn_net_forward.3} parent=11 // pred_check_branch
        %123 = sbr.rel (%p121) target = $region20
      $region19: #{gaf_attn_net_forward.3} parent=11 // pred_region
        _
      $region20: #{gaf_attn_net_forward.3} parent=11 // pred_fallthru
        _
    $region12: #{gaf_attn_net_forward.3} parent=5 // pred_fallthru
      _
    %p124 = scmp.lt.s32.totalorder %s9, 2
    // Predicated region
    $region21: #{gaf_attn_net_forward.3} parent=5 // pred_check
      %p125 = pneg %p124
    $region22: #{gaf_attn_net_forward.3} parent=5 // pred_check_branch
      %127 = sbr.rel (%p125) target = $region24
    $region23: #{gaf_attn_net_forward.3} parent=5 // pred_region
      // Predicated region
      $region25: #{gaf_attn_net_forward.3} parent=23 // pred_check
        %p128 = pneg %p29
      $region26: #{gaf_attn_net_forward.3} parent=23 // pred_check_branch
        %130 = sbr.rel (%p128) target = $region28
      $region27: #{gaf_attn_net_forward.3} parent=23 // pred_region
        %p131 = scmp.lt.s32.totalorder %s9, 1
        %s132 = scalar_select %p131, %s9, 1
        %s133 = smul.addr %s132, 1296
        %s134 = smul.addr %s133, 4
        %s135 = scalar_lea.vmem %s0, %s134
      $region28: #{gaf_attn_net_forward.3} parent=23 // pred_fallthru
        _
    $region24: #{gaf_attn_net_forward.3} parent=5 // pred_fallthru
      _
    %p136 = scmp.le.s32.totalorder 1, %s9
    %p137 = scmp.lt.s32.totalorder %s9, 3
    %p138 = pnand %p136, %p137
    %p139 = pneg %p138
    // Predicated region
    $region29: #{gaf_attn_net_forward.3} parent=5 // pred_check
      _
    $region30: #{gaf_attn_net_forward.3} parent=5 // pred_check_branch
      %141 = sbr.rel (%p138) target = $region32
    $region31: #{gaf_attn_net_forward.3} parent=5 // pred_region
      %s142 = ssub.s32 %s9, 1
      %p143 = scmp.lt.s32.totalorder %s14, 1
      %s144 = scalar_select %p143, %s14, 1
      %s145 = smul.addr %s144, 1296
      %s146 = smul.addr %s145, 4
      %s147 = scalar_lea.vmem %s0, %s146
      %p148 = pneg %p35
      %p149 = pneg %p32
      %p150 = pneg %p56
      %p151 = pneg %p53
      %p152 = pneg %p77
      %p153 = pneg %p74
      %p154 = pneg %p103
      %p155 = pneg %p100
      %p156 = scmp.lt.s32.totalorder %s14, 1
      %s157 = scalar_select %p156, %s14, 1
      %s158 = smul.addr %s157, 630
      %s159 = smul.addr %s158, 4
      %s160 = scalar_lea.vmem %s3, %s159
      %p161 = scmp.lt.s32.totalorder %s14, 1
      %s162 = scalar_select %p161, %s14, 1
      %s163 = smul.addr %s162, 1296
      %s164 = smul.addr %s163, 4
      %s165 = scalar_lea.vmem %s0, %s164
      %p166 = scmp.lt.s32.totalorder %s14, 1
      %s167 = scalar_select %p166, %s14, 1
      %s168 = smul.addr %s167, 630
      %s169 = smul.addr %s168, 4
      %s170 = scalar_lea.vmem %s3, %s169
      %v172 = vld [vmem:[%s2] sm:$0x1]
      loop: start=0, step=1, limit=70
      $region33: #{gaf_attn_net_forward.3} parent=31 // loop_pre_header
        _
      $region34: #{gaf_attn_net_forward.3} parent=31 // loop_header
        %s174 = sphi 0, %s178
        %p175 = scmp.ge.s32.totalorder %s174, 70
      $region35: #{gaf_attn_net_forward.3} parent=31 // loop_header_branch
        %177 = sbr.rel (%p175) target = $region39
      $region36: #{gaf_attn_net_forward.3} parent=31 // loop_body
        %s179 = smul.u32 %s174, 2
        %s180 = smul.u32 %s179, 9
        %s181 = smul.addr %s180, 4
        %s182 = scalar_lea.vmem %s165, %s181
        %v183 = vld [vmem:[%s182] sm:$0xf]
        %v184 = vld [vmem:[%s182 + $0x4] sm:$0xf]
        %v185 = vld [vmem:[%s182 + $0x8] sm:$0xf]
        %v186 = vld [vmem:[%s182 + $0xc] sm:$0xf]
        %v187 = vld [vmem:[%s182 + $0x10] sm:$0xf]
        %v188 = vld [vmem:[%s182 + $0x14] sm:$0xf]
        %v189 = vld [vmem:[%s182 + $0x18] sm:$0xf]
        %v190 = vld [vmem:[%s182 + $0x1c] sm:$0xf]
        %v191 = vld [vmem:[%s182 + $0x20] sm:$0x7]
        %v192 = vld [vmem:[%s182 + $0x20] sm:$0xf]
        %v193 = vld [vmem:[%s182] sm:$0xe]
        %v203 = vunpack.c.l.b16 %v183
        %v204 = vunpack.c.l.b16 %v184
        %v205 = vunpack.c.l.b16 %v185
        %v206 = vunpack.c.l.b16 %v186
        %v207 = vunpack.c.l.b16 %v187
        %v208 = vunpack.c.l.b16 %v188
        %v209 = vunpack.c.l.b16 %v189
        %v210 = vunpack.c.l.b16 %v190
        %v211 = vunpack.c.l.b16 %v191
        %v212 = vpack.c.b16 %v204, %v203
        %v213 = vpack.c.b16 %v206, %v205
        %v214 = vpack.c.b16 %v208, %v207
        %v215 = vpack.c.b16 %v210, %v209
        %v216 = vpack.c.b16 %v211, %v211
        %v218 = vunpack.c.l.b16 %v192
        %v219 = vpack.c.b16 %v218, %v218
        %vm220 = vsmask.f32 7424
        %v222 = vshrl.u32 %v212, 16
        %v224 = vshll.u32 %v212, 16
        %v226 = vrot.slane %v224, 1
        %v227 = vor.u32 %v222, %v226
        %v229 = vshll.u32 %v213, 16
        %v231 = vrot.slane %v229, 1
        %v232 = vsel %vm220, %v227, %v231
        %v233 = vshrl.u32 %v213, 16
        %v235 = vor.u32 %v233, %v231
        %v237 = vshll.u32 %v214, 16
        %v239 = vrot.slane %v237, 1
        %v240 = vsel %vm220, %v235, %v239
        %v241 = vshrl.u32 %v214, 16
        %v243 = vor.u32 %v241, %v239
        %v245 = vshll.u32 %v215, 16
        %v247 = vrot.slane %v245, 1
        %v248 = vsel %vm220, %v243, %v247
        %v249 = vshrl.u32 %v215, 16
        %v251 = vor.u32 %v249, %v247
        %v253 = vshll.u32 %v219, 16
        %v255 = vrot.slane %v253, 1
        %v256 = vsel %vm220, %v251, %v255
        %v257 = vshrl.u32 %v219, 16
        %v259 = vor.u32 %v257, %v255
        %260 = vrot.lane.b32.xlu0 %v232, 58
        %v261 = vpop.permute.xlu0 %260
        %262 = vrot.lane.b32.xlu0 %v240, 58
        %v263 = vpop.permute.xlu0 %262
        %264 = vrot.lane.b32.xlu0 %v248, 58
        %v265 = vpop.permute.xlu0 %264
        %266 = vrot.lane.b32.xlu0 %v256, 58
        %v267 = vpop.permute.xlu0 %266
        %268 = vrot.lane.b32.xlu0 %v259, 58
        %v269 = vpop.permute.xlu0 %268
        %v271 = vunpack.c.l.b16 %v193
        %v272 = vpack.c.b16 %v204, %v271
        %vm273 = vcmask 1046528
        %v274 = vrot.slane %v272, 1
        %v275 = vrot.slane %v213, 1
        %v276 = vsel %vm273, %v274, %v275
        %v277 = vrot.slane %v214, 1
        %v278 = vsel %vm273, %v275, %v277
        %v279 = vrot.slane %v215, 1
        %v280 = vsel %vm273, %v277, %v279
        %v281 = vrot.slane %v219, 1
        %v282 = vsel %vm273, %v279, %v281
        %283 = vrot.lane.b32.xlu0 %v276, 116
        %v284 = vpop.permute.xlu0 %283
        %285 = vrot.lane.b32.xlu0 %v278, 116
        %v286 = vpop.permute.xlu0 %285
        %287 = vrot.lane.b32.xlu0 %v280, 116
        %v288 = vpop.permute.xlu0 %287
        %289 = vrot.lane.b32.xlu0 %v282, 116
        %v290 = vpop.permute.xlu0 %289
        %291 = vrot.lane.b32.xlu0 %v281, 116
        %v292 = vpop.permute.xlu0 %291
        %vm293 = vcmask 474112
        %v295 = vsel %vm293, %v212, %v261
        %v297 = vsel %vm293, %v213, %v263
        %v299 = vsel %vm293, %v214, %v265
        %v301 = vsel %vm293, %v215, %v267
        %v304 = vsel %vm293, %v216, %v269
        %vm305 = vcmask 949248
        %v307 = vsel %vm305, %v295, %v284
        %v310 = vsel %vm305, %v297, %v286
        %v313 = vsel %vm305, %v299, %v288
        %v316 = vsel %vm305, %v301, %v290
        %v319 = vsel %vm305, %v304, %v292
        %v321 = vld [vmem:[%s1] sm:$0xf]
        %v322 = vld [vmem:[%s1 + $0x4] sm:$0xf]
        %v323 = vld [vmem:[%s1 + $0x8] sm:$0xf]
        %v324 = vld [vmem:[%s1 + $0xc] sm:$0xf]
        %v325 = vld [vmem:[%s1 + $0x10] sm:$0xf]
        %v326 = vld [vmem:[%s1 + $0x14] sm:$0xf]
        %v327 = vld [vmem:[%s1 + $0x18] sm:$0xf]
        %v328 = vld [vmem:[%s1 + $0x1c] sm:$0xf]
        %v329 = vld [vmem:[%s1 + $0x20] sm:$0xf]
        %v330 = vld [vmem:[%s1 + $0x24] sm:$0xf]
        %v331 = vld [vmem:[%s1 + $0x28] sm:$0xf]
        %v332 = vld [vmem:[%s1 + $0x2c] sm:$0xf]
        %v333 = vld [vmem:[%s1 + $0x30] sm:$0xf]
        %v334 = vld [vmem:[%s1 + $0x34] sm:$0xf]
        %v335 = vld [vmem:[%s1 + $0x38] sm:$0xf]
        %v336 = vld [vmem:[%s1 + $0x3c] sm:$0xf]
        %v337 = vld [vmem:[%s1 + $0x40] sm:$0xf]
        %v338 = vld [vmem:[%s1 + $0x44] sm:$0xf]
        %v339 = vld [vmem:[%s1 + $0x48] sm:$0xf]
        %v340 = vld [vmem:[%s1 + $0x4c] sm:$0xf]
        %v341 = vld [vmem:[%s1 + $0x50] sm:$0xf]
        %v342 = vld [vmem:[%s1 + $0x54] sm:$0x7]
        %s343 = sadd.s32 %s179, 1
        %s344 = smul.u32 %s343, 9
        %s345 = smul.addr %s344, 4
        %s346 = scalar_lea.vmem %s165, %s345
        %v347 = vld [vmem:[%s346] sm:$0xf]
        %v348 = vld [vmem:[%s346 + $0x4] sm:$0xf]
        %v349 = vld [vmem:[%s346 + $0x8] sm:$0xf]
        %v350 = vld [vmem:[%s346 + $0xc] sm:$0xf]
        %v351 = vld [vmem:[%s346 + $0x10] sm:$0xf]
        %v352 = vld [vmem:[%s346 + $0x14] sm:$0xf]
        %v353 = vld [vmem:[%s346 + $0x18] sm:$0xf]
        %v354 = vld [vmem:[%s346 + $0x1c] sm:$0xf]
        %v355 = vld [vmem:[%s346 + $0x20] sm:$0x7]
        %v356 = vld [vmem:[%s346 + $0x20] sm:$0xf]
        %v357 = vld [vmem:[%s346] sm:$0xe]
        %v367 = vunpack.c.l.b16 %v347
        %v368 = vunpack.c.l.b16 %v348
        %v369 = vunpack.c.l.b16 %v349
        %v370 = vunpack.c.l.b16 %v350
        %v371 = vunpack.c.l.b16 %v351
        %v372 = vunpack.c.l.b16 %v352
        %v373 = vunpack.c.l.b16 %v353
        %v374 = vunpack.c.l.b16 %v354
        %v375 = vunpack.c.l.b16 %v355
        %v376 = vpack.c.b16 %v368, %v367
        %v377 = vpack.c.b16 %v370, %v369
        %v378 = vpack.c.b16 %v372, %v371
        %v379 = vpack.c.b16 %v374, %v373
        %v380 = vpack.c.b16 %v375, %v375
        %v382 = vunpack.c.l.b16 %v356
        %v383 = vpack.c.b16 %v382, %v382
        %v385 = vshrl.u32 %v376, 16
        %v387 = vshll.u32 %v376, 16
        %v389 = vrot.slane %v387, 1
        %v390 = vor.u32 %v385, %v389
        %v392 = vshll.u32 %v377, 16
        %v394 = vrot.slane %v392, 1
        %v395 = vsel %vm220, %v390, %v394
        %v396 = vshrl.u32 %v377, 16
        %v398 = vor.u32 %v396, %v394
        %v400 = vshll.u32 %v378, 16
        %v402 = vrot.slane %v400, 1
        %v403 = vsel %vm220, %v398, %v402
        %v404 = vshrl.u32 %v378, 16
        %v406 = vor.u32 %v404, %v402
        %v408 = vshll.u32 %v379, 16
        %v410 = vrot.slane %v408, 1
        %v411 = vsel %vm220, %v406, %v410
        %v412 = vshrl.u32 %v379, 16
        %v414 = vor.u32 %v412, %v410
        %v416 = vshll.u32 %v383, 16
        %v418 = vrot.slane %v416, 1
        %v419 = vsel %vm220, %v414, %v418
        %v420 = vshrl.u32 %v383, 16
        %v422 = vor.u32 %v420, %v418
        %423 = vrot.lane.b32.xlu0 %v395, 58
        %v424 = vpop.permute.xlu0 %423
        %425 = vrot.lane.b32.xlu0 %v403, 58
        %v426 = vpop.permute.xlu0 %425
        %427 = vrot.lane.b32.xlu0 %v411, 58
        %v428 = vpop.permute.xlu0 %427
        %429 = vrot.lane.b32.xlu0 %v419, 58
        %v430 = vpop.permute.xlu0 %429
        %431 = vrot.lane.b32.xlu0 %v422, 58
        %v432 = vpop.permute.xlu0 %431
        %v434 = vunpack.c.l.b16 %v357
        %v435 = vpack.c.b16 %v368, %v434
        %v436 = vrot.slane %v435, 1
        %v437 = vrot.slane %v377, 1
        %v438 = vsel %vm273, %v436, %v437
        %v439 = vrot.slane %v378, 1
        %v440 = vsel %vm273, %v437, %v439
        %v441 = vrot.slane %v379, 1
        %v442 = vsel %vm273, %v439, %v441
        %v443 = vrot.slane %v383, 1
        %v444 = vsel %vm273, %v441, %v443
        %445 = vrot.lane.b32.xlu0 %v438, 116
        %v446 = vpop.permute.xlu0 %445
        %447 = vrot.lane.b32.xlu0 %v440, 116
        %v448 = vpop.permute.xlu0 %447
        %449 = vrot.lane.b32.xlu0 %v442, 116
        %v450 = vpop.permute.xlu0 %449
        %451 = vrot.lane.b32.xlu0 %v444, 116
        %v452 = vpop.permute.xlu0 %451
        %453 = vrot.lane.b32.xlu0 %v443, 116
        %v454 = vpop.permute.xlu0 %453
        %v456 = vsel %vm293, %v376, %v424
        %v458 = vsel %vm293, %v377, %v426
        %v460 = vsel %vm293, %v378, %v428
        %v462 = vsel %vm293, %v379, %v430
        %v465 = vsel %vm293, %v380, %v432
        %v467 = vsel %vm305, %v456, %v446
        %v470 = vsel %vm305, %v458, %v448
        %v473 = vsel %vm305, %v460, %v450
        %v476 = vsel %vm305, %v462, %v452
        %v479 = vsel %vm305, %v465, %v454
        %s481 = scalar_lea.vmem %s1, 88
        %v482 = vld [vmem:[%s481] sm:$0xf]
        %v483 = vld [vmem:[%s481 + $0x4] sm:$0xf]
        %v484 = vld [vmem:[%s481 + $0x8] sm:$0xf]
        %v485 = vld [vmem:[%s481 + $0xc] sm:$0xf]
        %v486 = vld [vmem:[%s481 + $0x10] sm:$0xf]
        %v487 = vld [vmem:[%s481 + $0x14] sm:$0xf]
        %v488 = vld [vmem:[%s481 + $0x18] sm:$0xf]
        %v489 = vld [vmem:[%s481 + $0x1c] sm:$0xf]
        %v490 = vld [vmem:[%s481 + $0x20] sm:$0xf]
        %v491 = vld [vmem:[%s481 + $0x24] sm:$0xf]
        %v492 = vld [vmem:[%s481 + $0x28] sm:$0xf]
        %v493 = vld [vmem:[%s481 + $0x2c] sm:$0xf]
        %v494 = vld [vmem:[%s481 + $0x30] sm:$0xf]
        %v495 = vld [vmem:[%s481 + $0x34] sm:$0xf]
        %v496 = vld [vmem:[%s481 + $0x38] sm:$0xf]
        %v497 = vld [vmem:[%s481 + $0x3c] sm:$0xf]
        %v498 = vld [vmem:[%s481 + $0x40] sm:$0xf]
        %v499 = vld [vmem:[%s481 + $0x44] sm:$0xf]
        %v500 = vld [vmem:[%s481 + $0x48] sm:$0xf]
        %v501 = vld [vmem:[%s481 + $0x4c] sm:$0xf]
        %v502 = vld [vmem:[%s481 + $0x50] sm:$0xf]
        %v503 = vld [vmem:[%s481 + $0x54] sm:$0x7]
        %v526 = vunpack.c.l.b16 %v482
        %v527 = vunpack.c.l.b16 %v483
        %v528 = vunpack.c.l.b16 %v484
        %v529 = vunpack.c.l.b16 %v485
        %v530 = vunpack.c.l.b16 %v486
        %v531 = vunpack.c.l.b16 %v487
        %v532 = vunpack.c.l.b16 %v488
        %v533 = vunpack.c.l.b16 %v489
        %v534 = vunpack.c.l.b16 %v490
        %v535 = vunpack.c.l.b16 %v491
        %v536 = vunpack.c.l.b16 %v492
        %v537 = vunpack.c.l.b16 %v493
        %v538 = vunpack.c.l.b16 %v494
        %v539 = vunpack.c.l.b16 %v495
        %v540 = vunpack.c.l.b16 %v496
        %v541 = vunpack.c.l.b16 %v497
        %v542 = vunpack.c.l.b16 %v498
        %v543 = vunpack.c.l.b16 %v499
        %v544 = vunpack.c.l.b16 %v500
        %v545 = vunpack.c.l.b16 %v501
        %v546 = vunpack.c.l.b16 %v502
        %v547 = vunpack.c.l.b16 %v503
        %v548 = vpack.c.b16 %v527, %v526
        %v549 = vpack.c.b16 %v529, %v528
        %v550 = vpack.c.b16 %v531, %v530
        %v551 = vpack.c.b16 %v533, %v532
        %v552 = vpack.c.b16 %v535, %v534
        %v553 = vpack.c.b16 %v537, %v536
        %v554 = vpack.c.b16 %v539, %v538
        %v555 = vpack.c.b16 %v541, %v540
        %v556 = vpack.c.b16 %v543, %v542
        %v557 = vpack.c.b16 %v545, %v544
        %v558 = vpack.c.b16 %v547, %v546
        %vm569 = vcmask 375808
        %v570 = vsel %vm569, %v446, 0
        %v572 = vsel %vm569, %v448, 0
        %v574 = vsel %vm569, %v450, 0
        %v576 = vsel %vm569, %v452, 0
        %v578 = vsel %vm569, %v454, 0
        %vm580 = vcmask 1046528
        %v582 = vsel %vm580, %v558, 0
        %584 = vmatprep.subr.bf16.mxu0 0
        %585 = vmatpush1.bf16.msra.mxu0 %v548
        %586 = vmatprep.subr.bf16.mxu0 0
        %587 = vmatpush1.bf16.msra.mxu0 %v549
        %588 = vmatprep.subr.bf16.mxu0 0
        %589 = vmatpush1.bf16.msra.mxu0 %v550
        %590 = vmatprep.subr.bf16.mxu0 0
        %591 = vmatpush1.bf16.msra.mxu0 %v551
        %592 = vmatprep.subr.bf16.mxu0 0
        %593 = vmatpush1.bf16.msra.mxu0 %v552
        %594 = vmatprep.subr.bf16.mxu0 0
        %595 = vmatpush1.bf16.msra.mxu0 %v553
        %596 = vmatprep.subr.bf16.mxu0 0
        %597 = vmatpush1.bf16.msra.mxu0 %v554
        %598 = vmatprep.subr.bf16.mxu0 0
        %599 = vmatpush1.bf16.msra.mxu0 %v555
        %600 = vmatprep.subr.bf16.mxu0 0
        %601 = vmatpush1.bf16.msra.mxu0 %v556
        %602 = vmatprep.subr.bf16.mxu0 0
        %603 = vmatpush1.bf16.msra.mxu0 %v557
        %604 = vmatprep.subr.bf16.mxu0 0
        %605 = vmatpush1.bf16.msra.mxu0 %v582
        %606 = vmatprep.subr.bf16.mxu0 0
        %607 = vmatpush1.bf16.msra.mxu0 0
        %608 = vmatprep.subr.bf16.mxu0 0
        %609 = vmatpush1.bf16.msra.mxu0 0
        %610 = vmatprep.subr.bf16.mxu0 0
        %611 = vmatpush1.bf16.msra.mxu0 0
        %612 = vmatprep.subr.bf16.mxu0 0
        %613 = vmatpush1.bf16.msra.mxu0 0
        %614 = vmatprep.subr.bf16.mxu0 0
        %615 = vmatpush1.bf16.msra.mxu0 0
        %616 = vmatprep.mubr.bf16.mxu0 %v570
        %617 = vmatmul.mubr.bf16.gmra.mrb[0].mxu0 %v467
        %v618 = vpop.f32.mrb[0].mxu0
        %v619 = vadd.f32 0.0, %v618
        %v620 = vpop.f32.mrb[0].mxu0
        %v621 = vpop.f32.mrb[0].mxu0
        %v622 = vadd.f32 0.0, %v621
        %v623 = vpop.f32.mrb[0].mxu0
        %624 = vmatprep.mubr.bf16.mxu0 %v572
        %625 = vmatmul.mubr.bf16.gmra.mrb[0].mxu0 %v470
        %v626 = vpop.f32.mrb[0].mxu0
        %v627 = vadd.f32 0.0, %v626
        %v628 = vpop.f32.mrb[0].mxu0
        %v629 = vpop.f32.mrb[0].mxu0
        %v630 = vadd.f32 0.0, %v629
        %v631 = vpop.f32.mrb[0].mxu0
        %632 = vmatprep.mubr.bf16.mxu0 %v574
        %633 = vmatmul.mubr.bf16.gmra.mrb[0].mxu0 %v473
        %v634 = vpop.f32.mrb[0].mxu0
        %v635 = vadd.f32 0.0, %v634
        %v636 = vpop.f32.mrb[0].mxu0
        %v637 = vpop.f32.mrb[0].mxu0
        %v638 = vadd.f32 0.0, %v637
        %v639 = vpop.f32.mrb[0].mxu0
        %640 = vmatprep.mubr.bf16.mxu0 %v576
        %641 = vmatmul.mubr.bf16.gmra.mrb[0].mxu0 %v476
        %v642 = vpop.f32.mrb[0].mxu0
        %v643 = vadd.f32 0.0, %v642
        %v644 = vpop.f32.mrb[0].mxu0
        %v645 = vpop.f32.mrb[0].mxu0
        %v646 = vadd.f32 0.0, %v645
        %v647 = vpop.f32.mrb[0].mxu0
        %648 = vmatprep.mubr.bf16.mxu0 %v578
        %649 = vmatmul.mubr.bf16.gmra.mrb[0].mxu0 %v479
        %v650 = vpop.f32.mrb[0].mxu0
        %v651 = vadd.f32 0.0, %v650
        %v652 = vpop.f32.mrb[0].mxu0
        %v653 = vpop.f32.mrb[0].mxu0
        %v654 = vpop.f32.mrb[0].mxu0
        %655 = vdwg.mxu0
        %v678 = vunpack.c.l.b16 %v321
        %v679 = vunpack.c.l.b16 %v322
        %v680 = vunpack.c.l.b16 %v323
        %v681 = vunpack.c.l.b16 %v324
        %v682 = vunpack.c.l.b16 %v325
        %v683 = vunpack.c.l.b16 %v326
        %v684 = vunpack.c.l.b16 %v327
        %v685 = vunpack.c.l.b16 %v328
        %v686 = vunpack.c.l.b16 %v329
        %v687 = vunpack.c.l.b16 %v330
        %v688 = vunpack.c.l.b16 %v331
        %v689 = vunpack.c.l.b16 %v332
        %v690 = vunpack.c.l.b16 %v333
        %v691 = vunpack.c.l.b16 %v334
        %v692 = vunpack.c.l.b16 %v335
        %v693 = vunpack.c.l.b16 %v336
        %v694 = vunpack.c.l.b16 %v337
        %v695 = vunpack.c.l.b16 %v338
        %v696 = vunpack.c.l.b16 %v339
        %v697 = vunpack.c.l.b16 %v340
        %v698 = vunpack.c.l.b16 %v341
        %v699 = vunpack.c.l.b16 %v342
        %v700 = vpack.c.b16 %v679, %v678
        %v701 = vpack.c.b16 %v681, %v680
        %v702 = vpack.c.b16 %v683, %v682
        %v703 = vpack.c.b16 %v685, %v684
        %v704 = vpack.c.b16 %v687, %v686
        %v705 = vpack.c.b16 %v689, %v688
        %v706 = vpack.c.b16 %v691, %v690
        %v707 = vpack.c.b16 %v693, %v692
        %v708 = vpack.c.b16 %v695, %v694
        %v709 = vpack.c.b16 %v697, %v696
        %v710 = vpack.c.b16 %v699, %v698
        %v721 = vsel %vm569, %v284, 0
        %v723 = vsel %vm569, %v286, 0
        %v725 = vsel %vm569, %v288, 0
        %v727 = vsel %vm569, %v290, 0
        %v729 = vsel %vm569, %v292, 0
        %v732 = vsel %vm580, %v710, 0
        %734 = vmatprep.subr.bf16.mxu0 0
        %735 = vmatpush1.bf16.msra.mxu0 %v700
        %736 = vmatprep.subr.bf16.mxu0 0
        %737 = vmatpush1.bf16.msra.mxu0 %v701
        %738 = vmatprep.subr.bf16.mxu0 0
        %739 = vmatpush1.bf16.msra.mxu0 %v702
        %740 = vmatprep.subr.bf16.mxu0 0
        %741 = vmatpush1.bf16.msra.mxu0 %v703
        %742 = vmatprep.subr.bf16.mxu0 0
        %743 = vmatpush1.bf16.msra.mxu0 %v704
        %744 = vmatprep.subr.bf16.mxu0 0
        %745 = vmatpush1.bf16.msra.mxu0 %v705
        %746 = vmatprep.subr.bf16.mxu0 0
        %747 = vmatpush1.bf16.msra.mxu0 %v706
        %748 = vmatprep.subr.bf16.mxu0 0
        %749 = vmatpush1.bf16.msra.mxu0 %v707
        %750 = vmatprep.subr.bf16.mxu0 0
        %751 = vmatpush1.bf16.msra.mxu0 %v708
        %752 = vmatprep.subr.bf16.mxu0 0
        %753 = vmatpush1.bf16.msra.mxu0 %v709
        %754 = vmatprep.subr.bf16.mxu0 0
        %755 = vmatpush1.bf16.msra.mxu0 %v732
        %756 = vmatprep.subr.bf16.mxu0 0
        %757 = vmatpush1.bf16.msra.mxu0 0
        %758 = vmatprep.subr.bf16.mxu0 0
        %759 = vmatpush1.bf16.msra.mxu0 0
        %760 = vmatprep.subr.bf16.mxu0 0
        %761 = vmatpush1.bf16.msra.mxu0 0
        %762 = vmatprep.subr.bf16.mxu0 0
        %763 = vmatpush1.bf16.msra.mxu0 0
        %764 = vmatprep.subr.bf16.mxu0 0
        %765 = vmatpush1.bf16.msra.mxu0 0
        %766 = vmatprep.mubr.bf16.mxu0 %v721
        %767 = vmatmul.mubr.bf16.gmra.mrb[0].mxu0 %v307
        %v768 = vpop.f32.mrb[0].mxu0
        %v769 = vadd.f32 %v619, %v768
        %v770 = vpop.f32.mrb[0].mxu0
        %v771 = vpop.f32.mrb[0].mxu0
        %v772 = vadd.f32 %v622, %v771
        %v773 = vpop.f32.mrb[0].mxu0
        %774 = vmatprep.mubr.bf16.mxu0 %v723
        %775 = vmatmul.mubr.bf16.gmra.mrb[0].mxu0 %v310
        %v776 = vpop.f32.mrb[0].mxu0
        %v777 = vadd.f32 %v627, %v776
        %v778 = vpop.f32.mrb[0].mxu0
        %v779 = vpop.f32.mrb[0].mxu0
        %v780 = vadd.f32 %v630, %v779
        %v781 = vpop.f32.mrb[0].mxu0
        %782 = vmatprep.mubr.bf16.mxu0 %v725
        %783 = vmatmul.mubr.bf16.gmra.mrb[0].mxu0 %v313
        %v784 = vpop.f32.mrb[0].mxu0
        %v785 = vadd.f32 %v635, %v784
        %v786 = vpop.f32.mrb[0].mxu0
        %v787 = vpop.f32.mrb[0].mxu0
        %v788 = vadd.f32 %v638, %v787
        %v789 = vpop.f32.mrb[0].mxu0
        %790 = vmatprep.mubr.bf16.mxu0 %v727
        %791 = vmatmul.mubr.bf16.gmra.mrb[0].mxu0 %v316
        %v792 = vpop.f32.mrb[0].mxu0
        %v793 = vadd.f32 %v643, %v792
        %v794 = vpop.f32.mrb[0].mxu0
        %v795 = vpop.f32.mrb[0].mxu0
        %v796 = vadd.f32 %v646, %v795
        %v797 = vpop.f32.mrb[0].mxu0
        %798 = vmatprep.mubr.bf16.mxu0 %v729
        %799 = vmatmul.mubr.bf16.gmra.mrb[0].mxu0 %v319
        %v800 = vpop.f32.mrb[0].mxu0
        %v801 = vadd.f32 %v651, %v800
        %v802 = vpop.f32.mrb[0].mxu0
        %v803 = vpop.f32.mrb[0].mxu0
        %v804 = vpop.f32.mrb[0].mxu0
        %805 = vdwg.mxu0
        %s806 = sadd.s32 %s179, 2
        %s807 = smul.u32 %s806, 9
        %s808 = smul.addr %s807, 4
        %s809 = scalar_lea.vmem %s165, %s808
        %v810 = vld [vmem:[%s809] sm:$0xf]
        %v811 = vld [vmem:[%s809 + $0x4] sm:$0xf]
        %v812 = vld [vmem:[%s809 + $0x8] sm:$0xf]
        %v813 = vld [vmem:[%s809 + $0xc] sm:$0xf]
        %v814 = vld [vmem:[%s809 + $0x10] sm:$0xf]
        %v815 = vld [vmem:[%s809 + $0x14] sm:$0xf]
        %v816 = vld [vmem:[%s809 + $0x18] sm:$0xf]
        %v817 = vld [vmem:[%s809 + $0x1c] sm:$0xf]
        %v818 = vld [vmem:[%s809 + $0x20] sm:$0x7]
        %v819 = vld [vmem:[%s809 + $0x20] sm:$0xf]
        %v820 = vld [vmem:[%s809] sm:$0xe]
        %v830 = vunpack.c.l.b16 %v810
        %v831 = vunpack.c.l.b16 %v811
        %v832 = vunpack.c.l.b16 %v812
        %v833 = vunpack.c.l.b16 %v813
        %v834 = vunpack.c.l.b16 %v814
        %v835 = vunpack.c.l.b16 %v815
        %v836 = vunpack.c.l.b16 %v816
        %v837 = vunpack.c.l.b16 %v817
        %v838 = vunpack.c.l.b16 %v818
        %v839 = vpack.c.b16 %v831, %v830
        %v840 = vpack.c.b16 %v833, %v832
        %v841 = vpack.c.b16 %v835, %v834
        %v842 = vpack.c.b16 %v837, %v836
        %v843 = vpack.c.b16 %v838, %v838
        %v845 = vunpack.c.l.b16 %v819
        %v846 = vpack.c.b16 %v845, %v845
        %v848 = vshrl.u32 %v839, 16
        %v850 = vshll.u32 %v839, 16
        %v852 = vrot.slane %v850, 1
        %v853 = vor.u32 %v848, %v852
        %v855 = vshll.u32 %v840, 16
        %v857 = vrot.slane %v855, 1
        %v858 = vsel %vm220, %v853, %v857
        %v859 = vshrl.u32 %v840, 16
        %v861 = vor.u32 %v859, %v857
        %v863 = vshll.u32 %v841, 16
        %v865 = vrot.slane %v863, 1
        %v866 = vsel %vm220, %v861, %v865
        %v867 = vshrl.u32 %v841, 16
        %v869 = vor.u32 %v867, %v865
        %v871 = vshll.u32 %v842, 16
        %v873 = vrot.slane %v871, 1
        %v874 = vsel %vm220, %v869, %v873
        %v875 = vshrl.u32 %v842, 16
        %v877 = vor.u32 %v875, %v873
        %v879 = vshll.u32 %v846, 16
        %v881 = vrot.slane %v879, 1
        %v882 = vsel %vm220, %v877, %v881
        %v883 = vshrl.u32 %v846, 16
        %v885 = vor.u32 %v883, %v881
        %886 = vrot.lane.b32.xlu0 %v858, 58
        %v887 = vpop.permute.xlu0 %886
        %888 = vrot.lane.b32.xlu0 %v866, 58
        %v889 = vpop.permute.xlu0 %888
        %890 = vrot.lane.b32.xlu0 %v874, 58
        %v891 = vpop.permute.xlu0 %890
        %892 = vrot.lane.b32.xlu0 %v882, 58
        %v893 = vpop.permute.xlu0 %892
        %894 = vrot.lane.b32.xlu0 %v885, 58
        %v895 = vpop.permute.xlu0 %894
        %v897 = vunpack.c.l.b16 %v820
        %v898 = vpack.c.b16 %v831, %v897
        %v899 = vrot.slane %v898, 1
        %v900 = vrot.slane %v840, 1
        %v901 = vsel %vm273, %v899, %v900
        %v902 = vrot.slane %v841, 1
        %v903 = vsel %vm273, %v900, %v902
        %v904 = vrot.slane %v842, 1
        %v905 = vsel %vm273, %v902, %v904
        %v906 = vrot.slane %v846, 1
        %v907 = vsel %vm273, %v904, %v906
        %908 = vrot.lane.b32.xlu0 %v901, 116
        %v909 = vpop.permute.xlu0 %908
        %910 = vrot.lane.b32.xlu0 %v903, 116
        %v911 = vpop.permute.xlu0 %910
        %912 = vrot.lane.b32.xlu0 %v905, 116
        %v913 = vpop.permute.xlu0 %912
        %914 = vrot.lane.b32.xlu0 %v907, 116
        %v915 = vpop.permute.xlu0 %914
        %916 = vrot.lane.b32.xlu0 %v906, 116
        %v917 = vpop.permute.xlu0 %916
        %v919 = vsel %vm293, %v839, %v887
        %v921 = vsel %vm293, %v840, %v889
        %v923 = vsel %vm293, %v841, %v891
        %v925 = vsel %vm293, %v842, %v893
        %v928 = vsel %vm293, %v843, %v895
        %v930 = vsel %vm305, %v919, %v909
        %v933 = vsel %vm305, %v921, %v911
        %v936 = vsel %vm305, %v923, %v913
        %v939 = vsel %vm305, %v925, %v915
        %v942 = vsel %vm305, %v928, %v917
        %s944 = scalar_lea.vmem %s1, 176
        %v945 = vld [vmem:[%s944] sm:$0xf]
        %v946 = vld [vmem:[%s944 + $0x4] sm:$0xf]
        %v947 = vld [vmem:[%s944 + $0x8] sm:$0xf]
        %v948 = vld [vmem:[%s944 + $0xc] sm:$0xf]
        %v949 = vld [vmem:[%s944 + $0x10] sm:$0xf]
        %v950 = vld [vmem:[%s944 + $0x14] sm:$0xf]
        %v951 = vld [vmem:[%s944 + $0x18] sm:$0xf]
        %v952 = vld [vmem:[%s944 + $0x1c] sm:$0xf]
        %v953 = vld [vmem:[%s944 + $0x20] sm:$0xf]
        %v954 = vld [vmem:[%s944 + $0x24] sm:$0xf]
        %v955 = vld [vmem:[%s944 + $0x28] sm:$0xf]
        %v956 = vld [vmem:[%s944 + $0x2c] sm:$0xf]
        %v957 = vld [vmem:[%s944 + $0x30] sm:$0xf]
        %v958 = vld [vmem:[%s944 + $0x34] sm:$0xf]
        %v959 = vld [vmem:[%s944 + $0x38] sm:$0xf]
        %v960 = vld [vmem:[%s944 + $0x3c] sm:$0xf]
        %v961 = vld [vmem:[%s944 + $0x40] sm:$0xf]
        %v962 = vld [vmem:[%s944 + $0x44] sm:$0xf]
        %v963 = vld [vmem:[%s944 + $0x48] sm:$0xf]
        %v964 = vld [vmem:[%s944 + $0x4c] sm:$0xf]
        %v965 = vld [vmem:[%s944 + $0x50] sm:$0xf]
        %v966 = vld [vmem:[%s944 + $0x54] sm:$0x7]
        %v989 = vunpack.c.l.b16 %v945
        %v990 = vunpack.c.l.b16 %v946
        %v991 = vunpack.c.l.b16 %v947
        %v992 = vunpack.c.l.b16 %v948
        %v993 = vunpack.c.l.b16 %v949
        %v994 = vunpack.c.l.b16 %v950
        %v995 = vunpack.c.l.b16 %v951
        %v996 = vunpack.c.l.b16 %v952
        %v997 = vunpack.c.l.b16 %v953
        %v998 = vunpack.c.l.b16 %v954
        %v999 = vunpack.c.l.b16 %v955
        %v1000 = vunpack.c.l.b16 %v956
        %v1001 = vunpack.c.l.b16 %v957
        %v1002 = vunpack.c.l.b16 %v958
        %v1003 = vunpack.c.l.b16 %v959
        %v1004 = vunpack.c.l.b16 %v960
        %v1005 = vunpack.c.l.b16 %v961
        %v1006 = vunpack.c.l.b16 %v962
        %v1007 = vunpack.c.l.b16 %v963
        %v1008 = vunpack.c.l.b16 %v964
        %v1009 = vunpack.c.l.b16 %v965
        %v1010 = vunpack.c.l.b16 %v966
        %v1011 = vpack.c.b16 %v990, %v989
        %v1012 = vpack.c.b16 %v992, %v991
        %v1013 = vpack.c.b16 %v994, %v993
        %v1014 = vpack.c.b16 %v996, %v995
        %v1015 = vpack.c.b16 %v998, %v997
        %v1016 = vpack.c.b16 %v1000, %v999
        %v1017 = vpack.c.b16 %v1002, %v1001
        %v1018 = vpack.c.b16 %v1004, %v1003
        %v1019 = vpack.c.b16 %v1006, %v1005
        %v1020 = vpack.c.b16 %v1008, %v1007
        %v1021 = vpack.c.b16 %v1010, %v1009
        %v1032 = vsel %vm569, %v909, 0
        %v1034 = vsel %vm569, %v911, 0
        %v1036 = vsel %vm569, %v913, 0
        %v1038 = vsel %vm569, %v915, 0
        %v1040 = vsel %vm569, %v917, 0
        %v1043 = vsel %vm580, %v1021, 0
        %1045 = vmatprep.subr.bf16.mxu0 0
        %1046 = vmatpush1.bf16.msra.mxu0 %v1011
        %1047 = vmatprep.subr.bf16.mxu0 0
        %1048 = vmatpush1.bf16.msra.mxu0 %v1012
        %1049 = vmatprep.subr.bf16.mxu0 0
        %1050 = vmatpush1.bf16.msra.mxu0 %v1013
        %1051 = vmatprep.subr.bf16.mxu0 0
        %1052 = vmatpush1.bf16.msra.mxu0 %v1014
        %1053 = vmatprep.subr.bf16.mxu0 0
        %1054 = vmatpush1.bf16.msra.mxu0 %v1015
        %1055 = vmatprep.subr.bf16.mxu0 0
        %1056 = vmatpush1.bf16.msra.mxu0 %v1016
        %1057 = vmatprep.subr.bf16.mxu0 0
        %1058 = vmatpush1.bf16.msra.mxu0 %v1017
        %1059 = vmatprep.subr.bf16.mxu0 0
        %1060 = vmatpush1.bf16.msra.mxu0 %v1018
        %1061 = vmatprep.subr.bf16.mxu0 0
        %1062 = vmatpush1.bf16.msra.mxu0 %v1019
        %1063 = vmatprep.subr.bf16.mxu0 0
        %1064 = vmatpush1.bf16.msra.mxu0 %v1020
        %1065 = vmatprep.subr.bf16.mxu0 0
        %1066 = vmatpush1.bf16.msra.mxu0 %v1043
        %1067 = vmatprep.subr.bf16.mxu0 0
        %1068 = vmatpush1.bf16.msra.mxu0 0
        %1069 = vmatprep.subr.bf16.mxu0 0
        %1070 = vmatpush1.bf16.msra.mxu0 0
        %1071 = vmatprep.subr.bf16.mxu0 0
        %1072 = vmatpush1.bf16.msra.mxu0 0
        %1073 = vmatprep.subr.bf16.mxu0 0
        %1074 = vmatpush1.bf16.msra.mxu0 0
        %1075 = vmatprep.subr.bf16.mxu0 0
        %1076 = vmatpush1.bf16.msra.mxu0 0
        %1077 = vmatprep.mubr.bf16.mxu0 %v1032
        %1078 = vmatmul.mubr.bf16.gmra.mrb[0].mxu0 %v930
        %v1079 = vpop.f32.mrb[0].mxu0
        %v1080 = vadd.f32 0.0, %v1079
        %v1081 = vpop.f32.mrb[0].mxu0
        %v1082 = vpop.f32.mrb[0].mxu0
        %v1083 = vadd.f32 0.0, %v1082
        %v1084 = vpop.f32.mrb[0].mxu0
        %1085 = vmatprep.mubr.bf16.mxu0 %v1034
        %1086 = vmatmul.mubr.bf16.gmra.mrb[0].mxu0 %v933
        %v1087 = vpop.f32.mrb[0].mxu0
        %v1088 = vadd.f32 0.0, %v1087
        %v1089 = vpop.f32.mrb[0].mxu0
        %v1090 = vpop.f32.mrb[0].mxu0
        %v1091 = vadd.f32 0.0, %v1090
        %v1092 = vpop.f32.mrb[0].mxu0
        %1093 = vmatprep.mubr.bf16.mxu0 %v1036
        %1094 = vmatmul.mubr.bf16.gmra.mrb[0].mxu0 %v936
        %v1095 = vpop.f32.mrb[0].mxu0
        %v1096 = vadd.f32 0.0, %v1095
        %v1097 = vpop.f32.mrb[0].mxu0
        %v1098 = vpop.f32.mrb[0].mxu0
        %v1099 = vadd.f32 0.0, %v1098
        %v1100 = vpop.f32.mrb[0].mxu0
        %1101 = vmatprep.mubr.bf16.mxu0 %v1038
        %1102 = vmatmul.mubr.bf16.gmra.mrb[0].mxu0 %v939
        %v1103 = vpop.f32.mrb[0].mxu0
        %v1104 = vadd.f32 0.0, %v1103
        %v1105 = vpop.f32.mrb[0].mxu0
        %v1106 = vpop.f32.mrb[0].mxu0
        %v1107 = vadd.f32 0.0, %v1106
        %v1108 = vpop.f32.mrb[0].mxu0
        %1109 = vmatprep.mubr.bf16.mxu0 %v1040
        %1110 = vmatmul.mubr.bf16.gmra.mrb[0].mxu0 %v942
        %v1111 = vpop.f32.mrb[0].mxu0
        %v1112 = vadd.f32 0.0, %v1111
        %v1113 = vpop.f32.mrb[0].mxu0
        %v1114 = vpop.f32.mrb[0].mxu0
        %v1115 = vpop.f32.mrb[0].mxu0
        %1116 = vdwg.mxu0
        %v1117 = vadd.f32 %v769, %v1080
        %v1118 = vadd.f32 %v772, %v1083
        %v1119 = vadd.f32 %v777, %v1088
        %v1120 = vadd.f32 %v780, %v1091
        %v1121 = vadd.f32 %v785, %v1096
        %v1122 = vadd.f32 %v788, %v1099
        %v1123 = vadd.f32 %v793, %v1104
        %v1124 = vadd.f32 %v796, %v1107
        %v1125 = vadd.f32 %v801, %v1112
        %s1126 = sadd.s32 %s179, 3
        %s1127 = smul.u32 %s1126, 9
        %s1128 = smul.addr %s1127, 4
        %s1129 = scalar_lea.vmem %s165, %s1128
        %v1130 = vld [vmem:[%s1129] sm:$0xf]
        %v1131 = vld [vmem:[%s1129 + $0x4] sm:$0xf]
        %v1132 = vld [vmem:[%s1129 + $0x8] sm:$0xf]
        %v1133 = vld [vmem:[%s1129 + $0xc] sm:$0xf]
        %v1134 = vld [vmem:[%s1129 + $0x10] sm:$0xf]
        %v1135 = vld [vmem:[%s1129 + $0x14] sm:$0xf]
        %v1136 = vld [vmem:[%s1129 + $0x18] sm:$0xf]
        %v1137 = vld [vmem:[%s1129 + $0x1c] sm:$0xf]
        %v1138 = vld [vmem:[%s1129 + $0x20] sm:$0x7]
        %v1139 = vld [vmem:[%s1129 + $0x20] sm:$0xf]
        %v1140 = vld [vmem:[%s1129] sm:$0xe]
        %v1150 = vunpack.c.l.b16 %v1130
        %v1151 = vunpack.c.l.b16 %v1131
        %v1152 = vunpack.c.l.b16 %v1132
        %v1153 = vunpack.c.l.b16 %v1133
        %v1154 = vunpack.c.l.b16 %v1134
        %v1155 = vunpack.c.l.b16 %v1135
        %v1156 = vunpack.c.l.b16 %v1136
        %v1157 = vunpack.c.l.b16 %v1137
        %v1158 = vunpack.c.l.b16 %v1138
        %v1159 = vpack.c.b16 %v1151, %v1150
        %v1160 = vpack.c.b16 %v1153, %v1152
        %v1161 = vpack.c.b16 %v1155, %v1154
        %v1162 = vpack.c.b16 %v1157, %v1156
        %v1163 = vpack.c.b16 %v1158, %v1158
        %v1165 = vunpack.c.l.b16 %v1139
        %v1166 = vpack.c.b16 %v1165, %v1165
        %v1168 = vshrl.u32 %v1159, 16
        %v1170 = vshll.u32 %v1159, 16
        %v1172 = vrot.slane %v1170, 1
        %v1173 = vor.u32 %v1168, %v1172
        %v1175 = vshll.u32 %v1160, 16
        %v1177 = vrot.slane %v1175, 1
        %v1178 = vsel %vm220, %v1173, %v1177
        %v1179 = vshrl.u32 %v1160, 16
        %v1181 = vor.u32 %v1179, %v1177
        %v1183 = vshll.u32 %v1161, 16
        %v1185 = vrot.slane %v1183, 1
        %v1186 = vsel %vm220, %v1181, %v1185
        %v1187 = vshrl.u32 %v1161, 16
        %v1189 = vor.u32 %v1187, %v1185
        %v1191 = vshll.u32 %v1162, 16
        %v1193 = vrot.slane %v1191, 1
        %v1194 = vsel %vm220, %v1189, %v1193
        %v1195 = vshrl.u32 %v1162, 16
        %v1197 = vor.u32 %v1195, %v1193
        %v1199 = vshll.u32 %v1166, 16
        %v1201 = vrot.slane %v1199, 1
        %v1202 = vsel %vm220, %v1197, %v1201
        %v1203 = vshrl.u32 %v1166, 16
        %v1205 = vor.u32 %v1203, %v1201
        %1206 = vrot.lane.b32.xlu0 %v1178, 58
        %v1207 = vpop.permute.xlu0 %1206
        %1208 = vrot.lane.b32.xlu0 %v1186, 58
        %v1209 = vpop.permute.xlu0 %1208
        %1210 = vrot.lane.b32.xlu0 %v1194, 58
        %v1211 = vpop.permute.xlu0 %1210
        %1212 = vrot.lane.b32.xlu0 %v1202, 58
        %v1213 = vpop.permute.xlu0 %1212
        %1214 = vrot.lane.b32.xlu0 %v1205, 58
        %v1215 = vpop.permute.xlu0 %1214
        %v1217 = vunpack.c.l.b16 %v1140
        %v1218 = vpack.c.b16 %v1151, %v1217
        %v1219 = vrot.slane %v1218, 1
        %v1220 = vrot.slane %v1160, 1
        %v1221 = vsel %vm273, %v1219, %v1220
        %v1222 = vrot.slane %v1161, 1
        %v1223 = vsel %vm273, %v1220, %v1222
        %v1224 = vrot.slane %v1162, 1
        %v1225 = vsel %vm273, %v1222, %v1224
        %v1226 = vrot.slane %v1166, 1
        %v1227 = vsel %vm273, %v1224, %v1226
        %1228 = vrot.lane.b32.xlu0 %v1221, 116
        %v1229 = vpop.permute.xlu0 %1228
        %1230 = vrot.lane.b32.xlu0 %v1223, 116
        %v1231 = vpop.permute.xlu0 %1230
        %1232 = vrot.lane.b32.xlu0 %v1225, 116
        %v1233 = vpop.permute.xlu0 %1232
        %1234 = vrot.lane.b32.xlu0 %v1227, 116
        %v1235 = vpop.permute.xlu0 %1234
        %1236 = vrot.lane.b32.xlu0 %v1226, 116
        %v1237 = vpop.permute.xlu0 %1236
        %v1239 = vsel %vm293, %v1159, %v1207
        %v1241 = vsel %vm293, %v1160, %v1209
        %v1243 = vsel %vm293, %v1161, %v1211
        %v1245 = vsel %vm293, %v1162, %v1213
        %v1248 = vsel %vm293, %v1163, %v1215
        %v1250 = vsel %vm305, %v1239, %v1229
        %v1253 = vsel %vm305, %v1241, %v1231
        %v1256 = vsel %vm305, %v1243, %v1233
        %v1259 = vsel %vm305, %v1245, %v1235
        %v1262 = vsel %vm305, %v1248, %v1237
        %s1264 = scalar_lea.vmem %s1, 264
        %v1265 = vld [vmem:[%s1264] sm:$0xf]
        %v1266 = vld [vmem:[%s1264 + $0x4] sm:$0xf]
        %v1267 = vld [vmem:[%s1264 + $0x8] sm:$0xf]
        %v1268 = vld [vmem:[%s1264 + $0xc] sm:$0xf]
        %v1269 = vld [vmem:[%s1264 + $0x10] sm:$0xf]
        %v1270 = vld [vmem:[%s1264 + $0x14] sm:$0xf]
        %v1271 = vld [vmem:[%s1264 + $0x18] sm:$0xf]
        %v1272 = vld [vmem:[%s1264 + $0x1c] sm:$0xf]
        %v1273 = vld [vmem:[%s1264 + $0x20] sm:$0xf]
        %v1274 = vld [vmem:[%s1264 + $0x24] sm:$0xf]
        %v1275 = vld [vmem:[%s1264 + $0x28] sm:$0xf]
        %v1276 = vld [vmem:[%s1264 + $0x2c] sm:$0xf]
        %v1277 = vld [vmem:[%s1264 + $0x30] sm:$0xf]
        %v1278 = vld [vmem:[%s1264 + $0x34] sm:$0xf]
        %v1279 = vld [vmem:[%s1264 + $0x38] sm:$0xf]
        %v1280 = vld [vmem:[%s1264 + $0x3c] sm:$0xf]
        %v1281 = vld [vmem:[%s1264 + $0x40] sm:$0xf]
        %v1282 = vld [vmem:[%s1264 + $0x44] sm:$0xf]
        %v1283 = vld [vmem:[%s1264 + $0x48] sm:$0xf]
        %v1284 = vld [vmem:[%s1264 + $0x4c] sm:$0xf]
        %v1285 = vld [vmem:[%s1264 + $0x50] sm:$0xf]
        %v1286 = vld [vmem:[%s1264 + $0x54] sm:$0x7]
        %v1309 = vunpack.c.l.b16 %v1265
        %v1310 = vunpack.c.l.b16 %v1266
        %v1311 = vunpack.c.l.b16 %v1267
        %v1312 = vunpack.c.l.b16 %v1268
        %v1313 = vunpack.c.l.b16 %v1269
        %v1314 = vunpack.c.l.b16 %v1270
        %v1315 = vunpack.c.l.b16 %v1271
        %v1316 = vunpack.c.l.b16 %v1272
        %v1317 = vunpack.c.l.b16 %v1273
        %v1318 = vunpack.c.l.b16 %v1274
        %v1319 = vunpack.c.l.b16 %v1275
        %v1320 = vunpack.c.l.b16 %v1276
        %v1321 = vunpack.c.l.b16 %v1277
        %v1322 = vunpack.c.l.b16 %v1278
        %v1323 = vunpack.c.l.b16 %v1279
        %v1324 = vunpack.c.l.b16 %v1280
        %v1325 = vunpack.c.l.b16 %v1281
        %v1326 = vunpack.c.l.b16 %v1282
        %v1327 = vunpack.c.l.b16 %v1283
        %v1328 = vunpack.c.l.b16 %v1284
        %v1329 = vunpack.c.l.b16 %v1285
        %v1330 = vunpack.c.l.b16 %v1286
        %v1331 = vpack.c.b16 %v1310, %v1309
        %v1332 = vpack.c.b16 %v1312, %v1311
        %v1333 = vpack.c.b16 %v1314, %v1313
        %v1334 = vpack.c.b16 %v1316, %v1315
        %v1335 = vpack.c.b16 %v1318, %v1317
        %v1336 = vpack.c.b16 %v1320, %v1319
        %v1337 = vpack.c.b16 %v1322, %v1321
        %v1338 = vpack.c.b16 %v1324, %v1323
        %v1339 = vpack.c.b16 %v1326, %v1325
        %v1340 = vpack.c.b16 %v1328, %v1327
        %v1341 = vpack.c.b16 %v1330, %v1329
        %v1352 = vsel %vm569, %v1229, 0
        %v1354 = vsel %vm569, %v1231, 0
        %v1356 = vsel %vm569, %v1233, 0
        %v1358 = vsel %vm569, %v1235, 0
        %v1360 = vsel %vm569, %v1237, 0
        %v1363 = vsel %vm580, %v1341, 0
        %1365 = vmatprep.subr.bf16.mxu0 0
        %1366 = vmatpush1.bf16.msra.mxu0 %v1331
        %1367 = vmatprep.subr.bf16.mxu0 0
        %1368 = vmatpush1.bf16.msra.mxu0 %v1332
        %1369 = vmatprep.subr.bf16.mxu0 0
        %1370 = vmatpush1.bf16.msra.mxu0 %v1333
        %1371 = vmatprep.subr.bf16.mxu0 0
        %1372 = vmatpush1.bf16.msra.mxu0 %v1334
        %1373 = vmatprep.subr.bf16.mxu0 0
        %1374 = vmatpush1.bf16.msra.mxu0 %v1335
        %1375 = vmatprep.subr.bf16.mxu0 0
        %1376 = vmatpush1.bf16.msra.mxu0 %v1336
        %1377 = vmatprep.subr.bf16.mxu0 0
        %1378 = vmatpush1.bf16.msra.mxu0 %v1337
        %1379 = vmatprep.subr.bf16.mxu0 0
        %1380 = vmatpush1.bf16.msra.mxu0 %v1338
        %1381 = vmatprep.subr.bf16.mxu0 0
        %1382 = vmatpush1.bf16.msra.mxu0 %v1339
        %1383 = vmatprep.subr.bf16.mxu0 0
        %1384 = vmatpush1.bf16.msra.mxu0 %v1340
        %1385 = vmatprep.subr.bf16.mxu0 0
        %1386 = vmatpush1.bf16.msra.mxu0 %v1363
        %1387 = vmatprep.subr.bf16.mxu0 0
        %1388 = vmatpush1.bf16.msra.mxu0 0
        %1389 = vmatprep.subr.bf16.mxu0 0
        %1390 = vmatpush1.bf16.msra.mxu0 0
        %1391 = vmatprep.subr.bf16.mxu0 0
        %1392 = vmatpush1.bf16.msra.mxu0 0
        %1393 = vmatprep.subr.bf16.mxu0 0
        %1394 = vmatpush1.bf16.msra.mxu0 0
        %1395 = vmatprep.subr.bf16.mxu0 0
        %1396 = vmatpush1.bf16.msra.mxu0 0
        %1397 = vmatprep.mubr.bf16.mxu0 %v1352
        %1398 = vmatmul.mubr.bf16.gmra.mrb[0].mxu0 %v1250
        %v1399 = vpop.f32.mrb[0].mxu0
        %v1400 = vadd.f32 0.0, %v1399
        %v1401 = vpop.f32.mrb[0].mxu0
        %v1402 = vpop.f32.mrb[0].mxu0
        %v1403 = vadd.f32 0.0, %v1402
        %v1404 = vpop.f32.mrb[0].mxu0
        %1405 = vmatprep.mubr.bf16.mxu0 %v1354
        %1406 = vmatmul.mubr.bf16.gmra.mrb[0].mxu0 %v1253
        %v1407 = vpop.f32.mrb[0].mxu0
        %v1408 = vadd.f32 0.0, %v1407
        %v1409 = vpop.f32.mrb[0].mxu0
        %v1410 = vpop.f32.mrb[0].mxu0
        %v1411 = vadd.f32 0.0, %v1410
        %v1412 = vpop.f32.mrb[0].mxu0
        %1413 = vmatprep.mubr.bf16.mxu0 %v1356
        %1414 = vmatmul.mubr.bf16.gmra.mrb[0].mxu0 %v1256
        %v1415 = vpop.f32.mrb[0].mxu0
        %v1416 = vadd.f32 0.0, %v1415
        %v1417 = vpop.f32.mrb[0].mxu0
        %v1418 = vpop.f32.mrb[0].mxu0
        %v1419 = vadd.f32 0.0, %v1418
        %v1420 = vpop.f32.mrb[0].mxu0
        %1421 = vmatprep.mubr.bf16.mxu0 %v1358
        %1422 = vmatmul.mubr.bf16.gmra.mrb[0].mxu0 %v1259
        %v1423 = vpop.f32.mrb[0].mxu0
        %v1424 = vadd.f32 0.0, %v1423
        %v1425 = vpop.f32.mrb[0].mxu0
        %v1426 = vpop.f32.mrb[0].mxu0
        %v1427 = vadd.f32 0.0, %v1426
        %v1428 = vpop.f32.mrb[0].mxu0
        %1429 = vmatprep.mubr.bf16.mxu0 %v1360
        %1430 = vmatmul.mubr.bf16.gmra.mrb[0].mxu0 %v1262
        %v1431 = vpop.f32.mrb[0].mxu0
        %v1432 = vadd.f32 0.0, %v1431
        %v1433 = vpop.f32.mrb[0].mxu0
        %v1434 = vpop.f32.mrb[0].mxu0
        %v1435 = vpop.f32.mrb[0].mxu0
        %1436 = vdwg.mxu0
        %v1437 = vadd.f32 %v1117, %v1400
        %v1438 = vadd.f32 %v1118, %v1403
        %v1439 = vadd.f32 %v1119, %v1408
        %v1440 = vadd.f32 %v1120, %v1411
        %v1441 = vadd.f32 %v1121, %v1416
        %v1442 = vadd.f32 %v1122, %v1419
        %v1443 = vadd.f32 %v1123, %v1424
        %v1444 = vadd.f32 %v1124, %v1427
        %v1445 = vadd.f32 %v1125, %v1432
        %s1446 = sadd.s32 %s179, 4
        %s1447 = smul.u32 %s1446, 9
        %s1448 = smul.addr %s1447, 4
        %s1449 = scalar_lea.vmem %s165, %s1448
        %v1450 = vld [vmem:[%s1449] sm:$0xf]
        %v1451 = vld [vmem:[%s1449 + $0x4] sm:$0xf]
        %v1452 = vld [vmem:[%s1449 + $0x8] sm:$0xf]
        %v1453 = vld [vmem:[%s1449 + $0xc] sm:$0xf]
        %v1454 = vld [vmem:[%s1449 + $0x10] sm:$0xf]
        %v1455 = vld [vmem:[%s1449 + $0x14] sm:$0xf]
        %v1456 = vld [vmem:[%s1449 + $0x18] sm:$0xf]
        %v1457 = vld [vmem:[%s1449 + $0x1c] sm:$0xf]
        %v1458 = vld [vmem:[%s1449 + $0x20] sm:$0x7]
        %v1459 = vld [vmem:[%s1449 + $0x20] sm:$0xf]
        %v1460 = vld [vmem:[%s1449] sm:$0xe]
        %v1470 = vunpack.c.l.b16 %v1450
        %v1471 = vunpack.c.l.b16 %v1451
        %v1472 = vunpack.c.l.b16 %v1452
        %v1473 = vunpack.c.l.b16 %v1453
        %v1474 = vunpack.c.l.b16 %v1454
        %v1475 = vunpack.c.l.b16 %v1455
        %v1476 = vunpack.c.l.b16 %v1456
        %v1477 = vunpack.c.l.b16 %v1457
        %v1478 = vunpack.c.l.b16 %v1458
        %v1479 = vpack.c.b16 %v1471, %v1470
        %v1480 = vpack.c.b16 %v1473, %v1472
        %v1481 = vpack.c.b16 %v1475, %v1474
        %v1482 = vpack.c.b16 %v1477, %v1476
        %v1483 = vpack.c.b16 %v1478, %v1478
        %v1485 = vunpack.c.l.b16 %v1459
        %v1486 = vpack.c.b16 %v1485, %v1485
        %v1488 = vshrl.u32 %v1479, 16
        %v1490 = vshll.u32 %v1479, 16
        %v1492 = vrot.slane %v1490, 1
        %v1493 = vor.u32 %v1488, %v1492
        %v1495 = vshll.u32 %v1480, 16
        %v1497 = vrot.slane %v1495, 1
        %v1498 = vsel %vm220, %v1493, %v1497
        %v1499 = vshrl.u32 %v1480, 16
        %v1501 = vor.u32 %v1499, %v1497
        %v1503 = vshll.u32 %v1481, 16
        %v1505 = vrot.slane %v1503, 1
        %v1506 = vsel %vm220, %v1501, %v1505
        %v1507 = vshrl.u32 %v1481, 16
        %v1509 = vor.u32 %v1507, %v1505
        %v1511 = vshll.u32 %v1482, 16
        %v1513 = vrot.slane %v1511, 1
        %v1514 = vsel %vm220, %v1509, %v1513
        %v1515 = vshrl.u32 %v1482, 16
        %v1517 = vor.u32 %v1515, %v1513
        %v1519 = vshll.u32 %v1486, 16
        %v1521 = vrot.slane %v1519, 1
        %v1522 = vsel %vm220, %v1517, %v1521
        %v1523 = vshrl.u32 %v1486, 16
        %v1525 = vor.u32 %v1523, %v1521
        %1526 = vrot.lane.b32.xlu0 %v1498, 58
        %v1527 = vpop.permute.xlu0 %1526
        %1528 = vrot.lane.b32.xlu0 %v1506, 58
        %v1529 = vpop.permute.xlu0 %1528
        %1530 = vrot.lane.b32.xlu0 %v1514, 58
        %v1531 = vpop.permute.xlu0 %1530
        %1532 = vrot.lane.b32.xlu0 %v1522, 58
        %v1533 = vpop.permute.xlu0 %1532
        %1534 = vrot.lane.b32.xlu0 %v1525, 58
        %v1535 = vpop.permute.xlu0 %1534
        %v1537 = vunpack.c.l.b16 %v1460
        %v1538 = vpack.c.b16 %v1471, %v1537
        %v1539 = vrot.slane %v1538, 1
        %v1540 = vrot.slane %v1480, 1
        %v1541 = vsel %vm273, %v1539, %v1540
        %v1542 = vrot.slane %v1481, 1
        %v1543 = vsel %vm273, %v1540, %v1542
        %v1544 = vrot.slane %v1482, 1
        %v1545 = vsel %vm273, %v1542, %v1544
        %v1546 = vrot.slane %v1486, 1
        %v1547 = vsel %vm273, %v1544, %v1546
        %1548 = vrot.lane.b32.xlu0 %v1541, 116
        %v1549 = vpop.permute.xlu0 %1548
        %1550 = vrot.lane.b32.xlu0 %v1543, 116
        %v1551 = vpop.permute.xlu0 %1550
        %1552 = vrot.lane.b32.xlu0 %v1545, 116
        %v1553 = vpop.permute.xlu0 %1552
        %1554 = vrot.lane.b32.xlu0 %v1547, 116
        %v1555 = vpop.permute.xlu0 %1554
        %1556 = vrot.lane.b32.xlu0 %v1546, 116
        %v1557 = vpop.permute.xlu0 %1556
        %v1559 = vsel %vm293, %v1479, %v1527
        %v1561 = vsel %vm293, %v1480, %v1529
        %v1563 = vsel %vm293, %v1481, %v1531
        %v1565 = vsel %vm293, %v1482, %v1533
        %v1568 = vsel %vm293, %v1483, %v1535
        %v1570 = vsel %vm305, %v1559, %v1549
        %v1573 = vsel %vm305, %v1561, %v1551
        %v1576 = vsel %vm305, %v1563, %v1553
        %v1579 = vsel %vm305, %v1565, %v1555
        %v1582 = vsel %vm305, %v1568, %v1557
        %s1584 = scalar_lea.vmem %s1, 352
        %v1585 = vld [vmem:[%s1584] sm:$0xf]
        %v1586 = vld [vmem:[%s1584 + $0x4] sm:$0xf]
        %v1587 = vld [vmem:[%s1584 + $0x8] sm:$0xf]
        %v1588 = vld [vmem:[%s1584 + $0xc] sm:$0xf]
        %v1589 = vld [vmem:[%s1584 + $0x10] sm:$0xf]
        %v1590 = vld [vmem:[%s1584 + $0x14] sm:$0xf]
        %v1591 = vld [vmem:[%s1584 + $0x18] sm:$0xf]
        %v1592 = vld [vmem:[%s1584 + $0x1c] sm:$0xf]
        %v1593 = vld [vmem:[%s1584 + $0x20] sm:$0xf]
        %v1594 = vld [vmem:[%s1584 + $0x24] sm:$0xf]
        %v1595 = vld [vmem:[%s1584 + $0x28] sm:$0xf]
        %v1596 = vld [vmem:[%s1584 + $0x2c] sm:$0xf]
        %v1597 = vld [vmem:[%s1584 + $0x30] sm:$0xf]
        %v1598 = vld [vmem:[%s1584 + $0x34] sm:$0xf]
        %v1599 = vld [vmem:[%s1584 + $0x38] sm:$0xf]
        %v1600 = vld [vmem:[%s1584 + $0x3c] sm:$0xf]
        %v1601 = vld [vmem:[%s1584 + $0x40] sm:$0xf]
        %v1602 = vld [vmem:[%s1584 + $0x44] sm:$0xf]
        %v1603 = vld [vmem:[%s1584 + $0x48] sm:$0xf]
        %v1604 = vld [vmem:[%s1584 + $0x4c] sm:$0xf]
        %v1605 = vld [vmem:[%s1584 + $0x50] sm:$0xf]
        %v1606 = vld [vmem:[%s1584 + $0x54] sm:$0x7]
        %v1629 = vunpack.c.l.b16 %v1585
        %v1630 = vunpack.c.l.b16 %v1586
        %v1631 = vunpack.c.l.b16 %v1587
        %v1632 = vunpack.c.l.b16 %v1588
        %v1633 = vunpack.c.l.b16 %v1589
        %v1634 = vunpack.c.l.b16 %v1590
        %v1635 = vunpack.c.l.b16 %v1591
        %v1636 = vunpack.c.l.b16 %v1592
        %v1637 = vunpack.c.l.b16 %v1593
        %v1638 = vunpack.c.l.b16 %v1594
        %v1639 = vunpack.c.l.b16 %v1595
        %v1640 = vunpack.c.l.b16 %v1596
        %v1641 = vunpack.c.l.b16 %v1597
        %v1642 = vunpack.c.l.b16 %v1598
        %v1643 = vunpack.c.l.b16 %v1599
        %v1644 = vunpack.c.l.b16 %v1600
        %v1645 = vunpack.c.l.b16 %v1601
        %v1646 = vunpack.c.l.b16 %v1602
        %v1647 = vunpack.c.l.b16 %v1603
        %v1648 = vunpack.c.l.b16 %v1604
        %v1649 = vunpack.c.l.b16 %v1605
        %v1650 = vunpack.c.l.b16 %v1606
        %v1651 = vpack.c.b16 %v1630, %v1629
        %v1652 = vpack.c.b16 %v1632, %v1631
        %v1653 = vpack.c.b16 %v1634, %v1633
        %v1654 = vpack.c.b16 %v1636, %v1635
        %v1655 = vpack.c.b16 %v1638, %v1637
        %v1656 = vpack.c.b16 %v1640, %v1639
        %v1657 = vpack.c.b16 %v1642, %v1641
        %v1658 = vpack.c.b16 %v1644, %v1643
        %v1659 = vpack.c.b16 %v1646, %v1645
        %v1660 = vpack.c.b16 %v1648, %v1647
        %v1661 = vpack.c.b16 %v1650, %v1649
        %v1672 = vsel %vm569, %v1549, 0
        %v1674 = vsel %vm569, %v1551, 0
        %v1676 = vsel %vm569, %v1553, 0
        %v1678 = vsel %vm569, %v1555, 0
        %v1680 = vsel %vm569, %v1557, 0
        %v1683 = vsel %vm580, %v1661, 0
        %1685 = vmatprep.subr.bf16.mxu0 0
        %1686 = vmatpush1.bf16.msra.mxu0 %v1651
        %1687 = vmatprep.subr.bf16.mxu0 0
        %1688 = vmatpush1.bf16.msra.mxu0 %v1652
        %1689 = vmatprep.subr.bf16.mxu0 0
        %1690 = vmatpush1.bf16.msra.mxu0 %v1653
        %1691 = vmatprep.subr.bf16.mxu0 0
        %1692 = vmatpush1.bf16.msra.mxu0 %v1654
        %1693 = vmatprep.subr.bf16.mxu0 0
        %1694 = vmatpush1.bf16.msra.mxu0 %v1655
        %1695 = vmatprep.subr.bf16.mxu0 0
        %1696 = vmatpush1.bf16.msra.mxu0 %v1656
        %1697 = vmatprep.subr.bf16.mxu0 0
        %1698 = vmatpush1.bf16.msra.mxu0 %v1657
        %1699 = vmatprep.subr.bf16.mxu0 0
        %1700 = vmatpush1.bf16.msra.mxu0 %v1658
        %1701 = vmatprep.subr.bf16.mxu0 0
        %1702 = vmatpush1.bf16.msra.mxu0 %v1659
        %1703 = vmatprep.subr.bf16.mxu0 0
        %1704 = vmatpush1.bf16.msra.mxu0 %v1660
        %1705 = vmatprep.subr.bf16.mxu0 0
        %1706 = vmatpush1.bf16.msra.mxu0 %v1683
        %1707 = vmatprep.subr.bf16.mxu0 0
        %1708 = vmatpush1.bf16.msra.mxu0 0
        %1709 = vmatprep.subr.bf16.mxu0 0
        %1710 = vmatpush1.bf16.msra.mxu0 0
        %1711 = vmatprep.subr.bf16.mxu0 0
        %1712 = vmatpush1.bf16.msra.mxu0 0
        %1713 = vmatprep.subr.bf16.mxu0 0
        %1714 = vmatpush1.bf16.msra.mxu0 0
        %1715 = vmatprep.subr.bf16.mxu0 0
        %1716 = vmatpush1.bf16.msra.mxu0 0
        %1717 = vmatprep.mubr.bf16.mxu0 %v1672
        %1718 = vmatmul.mubr.bf16.gmra.mrb[0].mxu0 %v1570
        %v1719 = vpop.f32.mrb[0].mxu0
        %v1720 = vadd.f32 0.0, %v1719
        %v1721 = vpop.f32.mrb[0].mxu0
        %v1722 = vpop.f32.mrb[0].mxu0
        %v1723 = vadd.f32 0.0, %v1722
        %v1724 = vpop.f32.mrb[0].mxu0
        %1725 = vmatprep.mubr.bf16.mxu0 %v1674
        %1726 = vmatmul.mubr.bf16.gmra.mrb[0].mxu0 %v1573
        %v1727 = vpop.f32.mrb[0].mxu0
        %v1728 = vadd.f32 0.0, %v1727
        %v1729 = vpop.f32.mrb[0].mxu0
        %v1730 = vpop.f32.mrb[0].mxu0
        %v1731 = vadd.f32 0.0, %v1730
        %v1732 = vpop.f32.mrb[0].mxu0
        %1733 = vmatprep.mubr.bf16.mxu0 %v1676
        %1734 = vmatmul.mubr.bf16.gmra.mrb[0].mxu0 %v1576
        %v1735 = vpop.f32.mrb[0].mxu0
        %v1736 = vadd.f32 0.0, %v1735
        %v1737 = vpop.f32.mrb[0].mxu0
        %v1738 = vpop.f32.mrb[0].mxu0
        %v1739 = vadd.f32 0.0, %v1738
        %v1740 = vpop.f32.mrb[0].mxu0
        %1741 = vmatprep.mubr.bf16.mxu0 %v1678
        %1742 = vmatmul.mubr.bf16.gmra.mrb[0].mxu0 %v1579
        %v1743 = vpop.f32.mrb[0].mxu0
        %v1744 = vadd.f32 0.0, %v1743
        %v1745 = vpop.f32.mrb[0].mxu0
        %v1746 = vpop.f32.mrb[0].mxu0
        %v1747 = vadd.f32 0.0, %v1746
        %v1748 = vpop.f32.mrb[0].mxu0
        %1749 = vmatprep.mubr.bf16.mxu0 %v1680
        %1750 = vmatmul.mubr.bf16.gmra.mrb[0].mxu0 %v1582
        %v1751 = vpop.f32.mrb[0].mxu0
        %v1752 = vadd.f32 0.0, %v1751
        %v1753 = vpop.f32.mrb[0].mxu0
        %v1754 = vpop.f32.mrb[0].mxu0
        %v1755 = vpop.f32.mrb[0].mxu0
        %1756 = vdwg.mxu0
        %v1757 = vadd.f32 %v1437, %v1720
        %v1758 = vadd.f32 %v1438, %v1723
        %v1759 = vadd.f32 %v1439, %v1728
        %v1760 = vadd.f32 %v1440, %v1731
        %v1761 = vadd.f32 %v1441, %v1736
        %v1762 = vadd.f32 %v1442, %v1739
        %v1763 = vadd.f32 %v1443, %v1744
        %v1764 = vadd.f32 %v1444, %v1747
        %v1765 = vadd.f32 %v1445, %v1752
        %s1766 = sadd.s32 %s179, 5
        %s1767 = smul.u32 %s1766, 9
        %s1768 = smul.addr %s1767, 4
        %s1769 = scalar_lea.vmem %s165, %s1768
        %v1770 = vld [vmem:[%s1769] sm:$0xf]
        %v1771 = vld [vmem:[%s1769 + $0x4] sm:$0xf]
        %v1772 = vld [vmem:[%s1769 + $0x8] sm:$0xf]
        %v1773 = vld [vmem:[%s1769 + $0xc] sm:$0xf]
        %v1774 = vld [vmem:[%s1769 + $0x10] sm:$0xf]
        %v1775 = vld [vmem:[%s1769 + $0x14] sm:$0xf]
        %v1776 = vld [vmem:[%s1769 + $0x18] sm:$0xf]
        %v1777 = vld [vmem:[%s1769 + $0x1c] sm:$0xf]
        %v1778 = vld [vmem:[%s1769 + $0x20] sm:$0x7]
        %v1779 = vld [vmem:[%s1769 + $0x20] sm:$0xf]
        %v1780 = vld [vmem:[%s1769] sm:$0xe]
        %v1790 = vunpack.c.l.b16 %v1770
        %v1791 = vunpack.c.l.b16 %v1771
        %v1792 = vunpack.c.l.b16 %v1772
        %v1793 = vunpack.c.l.b16 %v1773
        %v1794 = vunpack.c.l.b16 %v1774
        %v1795 = vunpack.c.l.b16 %v1775
        %v1796 = vunpack.c.l.b16 %v1776
        %v1797 = vunpack.c.l.b16 %v1777
        %v1798 = vunpack.c.l.b16 %v1778
        %v1799 = vpack.c.b16 %v1791, %v1790
        %v1800 = vpack.c.b16 %v1793, %v1792
        %v1801 = vpack.c.b16 %v1795, %v1794
        %v1802 = vpack.c.b16 %v1797, %v1796
        %v1803 = vpack.c.b16 %v1798, %v1798
        %v1805 = vunpack.c.l.b16 %v1779
        %v1806 = vpack.c.b16 %v1805, %v1805
        %v1808 = vshrl.u32 %v1799, 16
        %v1810 = vshll.u32 %v1799, 16
        %v1812 = vrot.slane %v1810, 1
        %v1813 = vor.u32 %v1808, %v1812
        %v1815 = vshll.u32 %v1800, 16
        %v1817 = vrot.slane %v1815, 1
        %v1818 = vsel %vm220, %v1813, %v1817
        %v1819 = vshrl.u32 %v1800, 16
        %v1821 = vor.u32 %v1819, %v1817
        %v1823 = vshll.u32 %v1801, 16
        %v1825 = vrot.slane %v1823, 1
        %v1826 = vsel %vm220, %v1821, %v1825
        %v1827 = vshrl.u32 %v1801, 16
        %v1829 = vor.u32 %v1827, %v1825
        %v1831 = vshll.u32 %v1802, 16
        %v1833 = vrot.slane %v1831, 1
        %v1834 = vsel %vm220, %v1829, %v1833
        %v1835 = vshrl.u32 %v1802, 16
        %v1837 = vor.u32 %v1835, %v1833
        %v1839 = vshll.u32 %v1806, 16
        %v1841 = vrot.slane %v1839, 1
        %v1842 = vsel %vm220, %v1837, %v1841
        %v1843 = vshrl.u32 %v1806, 16
        %v1845 = vor.u32 %v1843, %v1841
        %1846 = vrot.lane.b32.xlu0 %v1818, 58
        %v1847 = vpop.permute.xlu0 %1846
        %1848 = vrot.lane.b32.xlu0 %v1826, 58
        %v1849 = vpop.permute.xlu0 %1848
        %1850 = vrot.lane.b32.xlu0 %v1834, 58
        %v1851 = vpop.permute.xlu0 %1850
        %1852 = vrot.lane.b32.xlu0 %v1842, 58
        %v1853 = vpop.permute.xlu0 %1852
        %1854 = vrot.lane.b32.xlu0 %v1845, 58
        %v1855 = vpop.permute.xlu0 %1854
        %v1857 = vunpack.c.l.b16 %v1780
        %v1858 = vpack.c.b16 %v1791, %v1857
        %v1859 = vrot.slane %v1858, 1
        %v1860 = vrot.slane %v1800, 1
        %v1861 = vsel %vm273, %v1859, %v1860
        %v1862 = vrot.slane %v1801, 1
        %v1863 = vsel %vm273, %v1860, %v1862
        %v1864 = vrot.slane %v1802, 1
        %v1865 = vsel %vm273, %v1862, %v1864
        %v1866 = vrot.slane %v1806, 1
        %v1867 = vsel %vm273, %v1864, %v1866
        %1868 = vrot.lane.b32.xlu0 %v1861, 116
        %v1869 = vpop.permute.xlu0 %1868
        %1870 = vrot.lane.b32.xlu0 %v1863, 116
        %v1871 = vpop.permute.xlu0 %1870
        %1872 = vrot.lane.b32.xlu0 %v1865, 116
        %v1873 = vpop.permute.xlu0 %1872
        %1874 = vrot.lane.b32.xlu0 %v1867, 116
        %v1875 = vpop.permute.xlu0 %1874
        %1876 = vrot.lane.b32.xlu0 %v1866, 116
        %v1877 = vpop.permute.xlu0 %1876
        %v1879 = vsel %vm293, %v1799, %v1847
        %v1881 = vsel %vm293, %v1800, %v1849
        %v1883 = vsel %vm293, %v1801, %v1851
        %v1885 = vsel %vm293, %v1802, %v1853
        %v1888 = vsel %vm293, %v1803, %v1855
        %v1890 = vsel %vm305, %v1879, %v1869
        %v1893 = vsel %vm305, %v1881, %v1871
        %v1896 = vsel %vm305, %v1883, %v1873
        %v1899 = vsel %vm305, %v1885, %v1875
        %v1902 = vsel %vm305, %v1888, %v1877
        %s1904 = scalar_lea.vmem %s1, 440
        %v1905 = vld [vmem:[%s1904] sm:$0xf]
        %v1906 = vld [vmem:[%s1904 + $0x4] sm:$0xf]
        %v1907 = vld [vmem:[%s1904 + $0x8] sm:$0xf]
        %v1908 = vld [vmem:[%s1904 + $0xc] sm:$0xf]
        %v1909 = vld [vmem:[%s1904 + $0x10] sm:$0xf]
        %v1910 = vld [vmem:[%s1904 + $0x14] sm:$0xf]
        %v1911 = vld [vmem:[%s1904 + $0x18] sm:$0xf]
        %v1912 = vld [vmem:[%s1904 + $0x1c] sm:$0xf]
        %v1913 = vld [vmem:[%s1904 + $0x20] sm:$0xf]
        %v1914 = vld [vmem:[%s1904 + $0x24] sm:$0xf]
        %v1915 = vld [vmem:[%s1904 + $0x28] sm:$0xf]
        %v1916 = vld [vmem:[%s1904 + $0x2c] sm:$0xf]
        %v1917 = vld [vmem:[%s1904 + $0x30] sm:$0xf]
        %v1918 = vld [vmem:[%s1904 + $0x34] sm:$0xf]
        %v1919 = vld [vmem:[%s1904 + $0x38] sm:$0xf]
        %v1920 = vld [vmem:[%s1904 + $0x3c] sm:$0xf]
        %v1921 = vld [vmem:[%s1904 + $0x40] sm:$0xf]
        %v1922 = vld [vmem:[%s1904 + $0x44] sm:$0xf]
        %v1923 = vld [vmem:[%s1904 + $0x48] sm:$0xf]
        %v1924 = vld [vmem:[%s1904 + $0x4c] sm:$0xf]
        %v1925 = vld [vmem:[%s1904 + $0x50] sm:$0xf]
        %v1926 = vld [vmem:[%s1904 + $0x54] sm:$0x7]
        %v1949 = vunpack.c.l.b16 %v1905
        %v1950 = vunpack.c.l.b16 %v1906
        %v1951 = vunpack.c.l.b16 %v1907
        %v1952 = vunpack.c.l.b16 %v1908
        %v1953 = vunpack.c.l.b16 %v1909
        %v1954 = vunpack.c.l.b16 %v1910
        %v1955 = vunpack.c.l.b16 %v1911
        %v1956 = vunpack.c.l.b16 %v1912
        %v1957 = vunpack.c.l.b16 %v1913
        %v1958 = vunpack.c.l.b16 %v1914
        %v1959 = vunpack.c.l.b16 %v1915
        %v1960 = vunpack.c.l.b16 %v1916
        %v1961 = vunpack.c.l.b16 %v1917
        %v1962 = vunpack.c.l.b16 %v1918
        %v1963 = vunpack.c.l.b16 %v1919
        %v1964 = vunpack.c.l.b16 %v1920
        %v1965 = vunpack.c.l.b16 %v1921
        %v1966 = vunpack.c.l.b16 %v1922
        %v1967 = vunpack.c.l.b16 %v1923
        %v1968 = vunpack.c.l.b16 %v1924
        %v1969 = vunpack.c.l.b16 %v1925
        %v1970 = vunpack.c.l.b16 %v1926
        %v1971 = vpack.c.b16 %v1950, %v1949
        %v1972 = vpack.c.b16 %v1952, %v1951
        %v1973 = vpack.c.b16 %v1954, %v1953
        %v1974 = vpack.c.b16 %v1956, %v1955
        %v1975 = vpack.c.b16 %v1958, %v1957
        %v1976 = vpack.c.b16 %v1960, %v1959
        %v1977 = vpack.c.b16 %v1962, %v1961
        %v1978 = vpack.c.b16 %v1964, %v1963
        %v1979 = vpack.c.b16 %v1966, %v1965
        %v1980 = vpack.c.b16 %v1968, %v1967
        %v1981 = vpack.c.b16 %v1970, %v1969
        %v1992 = vsel %vm569, %v1869, 0
        %v1994 = vsel %vm569, %v1871, 0
        %v1996 = vsel %vm569, %v1873, 0
        %v1998 = vsel %vm569, %v1875, 0
        %v2000 = vsel %vm569, %v1877, 0
        %v2003 = vsel %vm580, %v1981, 0
        %2005 = vmatprep.subr.bf16.mxu0 0
        %2006 = vmatpush1.bf16.msra.mxu0 %v1971
        %2007 = vmatprep.subr.bf16.mxu0 0
        %2008 = vmatpush1.bf16.msra.mxu0 %v1972
        %2009 = vmatprep.subr.bf16.mxu0 0
        %2010 = vmatpush1.bf16.msra.mxu0 %v1973
        %2011 = vmatprep.subr.bf16.mxu0 0
        %2012 = vmatpush1.bf16.msra.mxu0 %v1974
        %2013 = vmatprep.subr.bf16.mxu0 0
        %2014 = vmatpush1.bf16.msra.mxu0 %v1975
        %2015 = vmatprep.subr.bf16.mxu0 0
        %2016 = vmatpush1.bf16.msra.mxu0 %v1976
        %2017 = vmatprep.subr.bf16.mxu0 0
        %2018 = vmatpush1.bf16.msra.mxu0 %v1977
        %2019 = vmatprep.subr.bf16.mxu0 0
        %2020 = vmatpush1.bf16.msra.mxu0 %v1978
        %2021 = vmatprep.subr.bf16.mxu0 0
        %2022 = vmatpush1.bf16.msra.mxu0 %v1979
        %2023 = vmatprep.subr.bf16.mxu0 0
        %2024 = vmatpush1.bf16.msra.mxu0 %v1980
        %2025 = vmatprep.subr.bf16.mxu0 0
        %2026 = vmatpush1.bf16.msra.mxu0 %v2003
        %2027 = vmatprep.subr.bf16.mxu0 0
        %2028 = vmatpush1.bf16.msra.mxu0 0
        %2029 = vmatprep.subr.bf16.mxu0 0
        %2030 = vmatpush1.bf16.msra.mxu0 0
        %2031 = vmatprep.subr.bf16.mxu0 0
        %2032 = vmatpush1.bf16.msra.mxu0 0
        %2033 = vmatprep.subr.bf16.mxu0 0
        %2034 = vmatpush1.bf16.msra.mxu0 0
        %2035 = vmatprep.subr.bf16.mxu0 0
        %2036 = vmatpush1.bf16.msra.mxu0 0
        %2037 = vmatprep.mubr.bf16.mxu0 %v1992
        %2038 = vmatmul.mubr.bf16.gmra.mrb[0].mxu0 %v1890
        %v2039 = vpop.f32.mrb[0].mxu0
        %v2040 = vadd.f32 0.0, %v2039
        %v2041 = vpop.f32.mrb[0].mxu0
        %v2042 = vpop.f32.mrb[0].mxu0
        %v2043 = vadd.f32 0.0, %v2042
        %v2044 = vpop.f32.mrb[0].mxu0
        %2045 = vmatprep.mubr.bf16.mxu0 %v1994
        %2046 = vmatmul.mubr.bf16.gmra.mrb[0].mxu0 %v1893
        %v2047 = vpop.f32.mrb[0].mxu0
        %v2048 = vadd.f32 0.0, %v2047
        %v2049 = vpop.f32.mrb[0].mxu0
        %v2050 = vpop.f32.mrb[0].mxu0
        %v2051 = vadd.f32 0.0, %v2050
        %v2052 = vpop.f32.mrb[0].mxu0
        %2053 = vmatprep.mubr.bf16.mxu0 %v1996
        %2054 = vmatmul.mubr.bf16.gmra.mrb[0].mxu0 %v1896
        %v2055 = vpop.f32.mrb[0].mxu0
        %v2056 = vadd.f32 0.0, %v2055
        %v2057 = vpop.f32.mrb[0].mxu0
        %v2058 = vpop.f32.mrb[0].mxu0
        %v2059 = vadd.f32 0.0, %v2058
        %v2060 = vpop.f32.mrb[0].mxu0
        %2061 = vmatprep.mubr.bf16.mxu0 %v1998
        %2062 = vmatmul.mubr.bf16.gmra.mrb[0].mxu0 %v1899
        %v2063 = vpop.f32.mrb[0].mxu0
        %v2064 = vadd.f32 0.0, %v2063
        %v2065 = vpop.f32.mrb[0].mxu0
        %v2066 = vpop.f32.mrb[0].mxu0
        %v2067 = vadd.f32 0.0, %v2066
        %v2068 = vpop.f32.mrb[0].mxu0
        %2069 = vmatprep.mubr.bf16.mxu0 %v2000
        %2070 = vmatmul.mubr.bf16.gmra.mrb[0].mxu0 %v1902
        %v2071 = vpop.f32.mrb[0].mxu0
        %v2072 = vadd.f32 0.0, %v2071
        %v2073 = vpop.f32.mrb[0].mxu0
        %v2074 = vpop.f32.mrb[0].mxu0
        %v2075 = vpop.f32.mrb[0].mxu0
        %2076 = vdwg.mxu0
        %v2077 = vadd.f32 %v1757, %v2040
        %v2078 = vadd.f32 %v1758, %v2043
        %v2079 = vadd.f32 %v1759, %v2048
        %v2080 = vadd.f32 %v1760, %v2051
        %v2081 = vadd.f32 %v1761, %v2056
        %v2082 = vadd.f32 %v1762, %v2059
        %v2083 = vadd.f32 %v1763, %v2064
        %v2084 = vadd.f32 %v1764, %v2067
        %v2085 = vadd.f32 %v1765, %v2072
        %2095 = vrot.lane.b32.xlu0 %v2077, 116
        %v2096 = vpop.permute.xlu0 %2095
        %2097 = vrot.lane.b32.xlu0 %v2078, 116
        %v2098 = vpop.permute.xlu0 %2097
        %2099 = vrot.lane.b32.xlu0 %v2079, 116
        %v2100 = vpop.permute.xlu0 %2099
        %2101 = vrot.lane.b32.xlu0 %v2080, 116
        %v2102 = vpop.permute.xlu0 %2101
        %2103 = vrot.lane.b32.xlu0 %v2081, 116
        %v2104 = vpop.permute.xlu0 %2103
        %2105 = vrot.lane.b32.xlu0 %v2082, 116
        %v2106 = vpop.permute.xlu0 %2105
        %2107 = vrot.lane.b32.xlu0 %v2083, 116
        %v2108 = vpop.permute.xlu0 %2107
        %2109 = vrot.lane.b32.xlu0 %v2084, 116
        %v2110 = vpop.permute.xlu0 %2109
        %2111 = vrot.lane.b32.xlu0 %v2085, 116
        %v2112 = vpop.permute.xlu0 %2111
        %v2122 = vmax.f32 %v2077, %v2096
        %v2123 = vmax.f32 %v2078, %v2098
        %v2124 = vmax.f32 %v2079, %v2100
        %v2125 = vmax.f32 %v2080, %v2102
        %v2126 = vmax.f32 %v2081, %v2104
        %v2127 = vmax.f32 %v2082, %v2106
        %v2128 = vmax.f32 %v2083, %v2108
        %v2129 = vmax.f32 %v2084, %v2110
        %v2130 = vmax.f32 %v2085, %v2112
        %2140 = vrot.lane.b32.xlu0 %v2122, 104
        %v2141 = vpop.permute.xlu0 %2140
        %2142 = vrot.lane.b32.xlu0 %v2123, 104
        %v2143 = vpop.permute.xlu0 %2142
        %2144 = vrot.lane.b32.xlu0 %v2124, 104
        %v2145 = vpop.permute.xlu0 %2144
        %2146 = vrot.lane.b32.xlu0 %v2125, 104
        %v2147 = vpop.permute.xlu0 %2146
        %2148 = vrot.lane.b32.xlu0 %v2126, 104
        %v2149 = vpop.permute.xlu0 %2148
        %2150 = vrot.lane.b32.xlu0 %v2127, 104
        %v2151 = vpop.permute.xlu0 %2150
        %2152 = vrot.lane.b32.xlu0 %v2128, 104
        %v2153 = vpop.permute.xlu0 %2152
        %2154 = vrot.lane.b32.xlu0 %v2129, 104
        %v2155 = vpop.permute.xlu0 %2154
        %2156 = vrot.lane.b32.xlu0 %v2130, 104
        %v2157 = vpop.permute.xlu0 %2156
        %v2167 = vmax.f32 %v2122, %v2141
        %v2168 = vmax.f32 %v2123, %v2143
        %v2169 = vmax.f32 %v2124, %v2145
        %v2170 = vmax.f32 %v2125, %v2147
        %v2171 = vmax.f32 %v2126, %v2149
        %v2172 = vmax.f32 %v2127, %v2151
        %v2173 = vmax.f32 %v2128, %v2153
        %v2174 = vmax.f32 %v2129, %v2155
        %v2175 = vmax.f32 %v2130, %v2157
        %v2177 = vlaneseq
        %v2178 = vshrl.u32 %v2177, 7
        %v2179 = vsub.s32 0, %v2178
        %v2180 = vrot.slane %v172, %v2179
        %v2182 = vadd.f32 %v2167, %v2180
        %v2183 = vadd.f32 %v2168, %v2180
        %v2184 = vadd.f32 %v2169, %v2180
        %v2185 = vadd.f32 %v2170, %v2180
        %v2186 = vadd.f32 %v2171, %v2180
        %v2187 = vadd.f32 %v2172, %v2180
        %v2188 = vadd.f32 %v2173, %v2180
        %v2189 = vadd.f32 %v2174, %v2180
        %v2190 = vadd.f32 %v2175, %v2180
        %v2191 = vmax.f32 %v2182, 0.0
        %v2192 = vmax.f32 %v2183, 0.0
        %v2193 = vmax.f32 %v2184, 0.0
        %v2194 = vmax.f32 %v2185, 0.0
        %v2195 = vmax.f32 %v2186, 0.0
        %v2196 = vmax.f32 %v2187, 0.0
        %v2197 = vmax.f32 %v2188, 0.0
        %v2198 = vmax.f32 %v2189, 0.0
        %v2199 = vmax.f32 %v2190, 0.0
        %v2200 = vpack.c.bf16 %v2192, %v2191
        %v2201 = vpack.c.bf16 %v2194, %v2193
        %v2202 = vpack.c.bf16 %v2196, %v2195
        %v2203 = vpack.c.bf16 %v2198, %v2197
        %v2204 = vpack.c.bf16 %v2199, %v2199
        %v2210 = vunpack.c.l.b16 %v2200
        %v2211 = vunpack.c.h.b16 %v2200
        %v2212 = vunpack.c.l.b16 %v2201
        %v2213 = vunpack.c.h.b16 %v2201
        %v2214 = vunpack.c.l.b16 %v2202
        %v2215 = vunpack.c.h.b16 %v2202
        %v2216 = vunpack.c.l.b16 %v2203
        %v2217 = vunpack.c.h.b16 %v2203
        %v2218 = vunpack.c.l.b16 %v2204
        %v2219 = vpack.c.b16 %v2210, %v2210
        %v2220 = vpack.c.b16 %v2211, %v2211
        %v2221 = vpack.c.b16 %v2212, %v2212
        %v2222 = vpack.c.b16 %v2213, %v2213
        %v2223 = vpack.c.b16 %v2214, %v2214
        %v2224 = vpack.c.b16 %v2215, %v2215
        %v2225 = vpack.c.b16 %v2216, %v2216
        %v2226 = vpack.c.b16 %v2217, %v2217
        %v2227 = vpack.c.b16 %v2218, %v2218
        %s2237 = smul.u32 %s174, 9
        %s2238 = smul.addr %s2237, 4
        %s2239 = scalar_lea.vmem %s170, %s2238
        %vm2240 = vcmask 93184
        %2241 = vst.msk [vmem:[%s2239] sm:$0xf] %vm2240, %v2219
        %2242 = vst.msk [vmem:[%s2239 + $0x4] sm:$0xf] %vm2240, %v2220
        %2243 = vst.msk [vmem:[%s2239 + $0x8] sm:$0xf] %vm2240, %v2221
        %2244 = vst.msk [vmem:[%s2239 + $0xc] sm:$0xf] %vm2240, %v2222
        %2245 = vst.msk [vmem:[%s2239 + $0x10] sm:$0xf] %vm2240, %v2223
        %2246 = vst.msk [vmem:[%s2239 + $0x14] sm:$0xf] %vm2240, %v2224
        %2247 = vst.msk [vmem:[%s2239 + $0x18] sm:$0xf] %vm2240, %v2225
        %2248 = vst.msk [vmem:[%s2239 + $0x1c] sm:$0xf] %vm2240, %v2226
        %vm2249 = vcmask 92160
        %2250 = vst.msk [vmem:[%s2239 + $0x20] sm:$0x7] %vm2249, %v2227
      $region37: #{gaf_attn_net_forward.3} parent=31 // loop_footer
        %s178 = sadd.s32 1, %s174
      $region38: #{gaf_attn_net_forward.3} parent=31 // loop_footer_branch
        %173 = sbr.rel target = $region34
      $region39: #{gaf_attn_net_forward.3} parent=31 // loop_exit
        _
      %p2251 = scmp.lt.s32.totalorder %s14, 1
      %s2252 = scalar_select %p2251, %s14, 1
      %s2253 = smul.addr %s2252, 630
      %s2254 = smul.addr %s2253, 4
      %s2255 = scalar_lea.vmem %s3, %s2254
      // Predicated region
      $region40: #{gaf_attn_net_forward.3} parent=31 // pred_check
        %p2256 = pneg %p100
      $region41: #{gaf_attn_net_forward.3} parent=31 // pred_check_branch
        %2258 = sbr.rel (%p2256) target = $region43
      $region42: #{gaf_attn_net_forward.3} parent=31 // pred_region
        _
      $region43: #{gaf_attn_net_forward.3} parent=31 // pred_fallthru
        _
    $region32: #{gaf_attn_net_forward.3} parent=5 // pred_fallthru
      _
    %p2259 = scmp.le.s32.totalorder 2, %s9
    // Predicated region
    $region44: #{gaf_attn_net_forward.3} parent=5 // pred_check
      %p2260 = pneg %p2259
    $region45: #{gaf_attn_net_forward.3} parent=5 // pred_check_branch
      %2262 = sbr.rel (%p2260) target = $region47
    $region46: #{gaf_attn_net_forward.3} parent=5 // pred_region
      %s2263 = ssub.s32 %s9, 2
      // Predicated region
      $region48: #{gaf_attn_net_forward.3} parent=46 // pred_check
        %p2264 = pneg %p106
      $region49: #{gaf_attn_net_forward.3} parent=46 // pred_check_branch
        %2266 = sbr.rel (%p2264) target = $region51
      $region50: #{gaf_attn_net_forward.3} parent=46 // pred_region
        %p2267 = scmp.lt.s32.totalorder %s15, 1
        %s2268 = scalar_select %p2267, %s15, 1
        %s2269 = smul.addr %s2268, 630
        %s2270 = smul.addr %s2269, 4
        %s2271 = scalar_lea.vmem %s3, %s2270
      $region51: #{gaf_attn_net_forward.3} parent=46 // pred_fallthru
        _
    $region47: #{gaf_attn_net_forward.3} parent=5 // pred_fallthru
      _
  $region6: #{gaf_attn_net_forward.3} parent=0 // loop_footer
    %s13 = sadd.s32 1, %s9
  $region7: #{gaf_attn_net_forward.3} parent=0 // loop_footer_branch
    %8 = sbr.rel target = $region3
  $region8: #{gaf_attn_net_forward.3} parent=0 // loop_exit
    _

// kernel: gaf_attn_net_forward.4
$region0: #{gaf_attn_net_forward.4}
  #allocation0 [shape = 'u32[]', space=smem, size = 0x4, offset = 0x4, fixed_abs, tag = 'smem constant byte address 0x4 - core index']
  #allocation1 [shape = 'u32[144,128]{1,0:T(1,128)}', space=vmem, size = 0x12000, scoped, tag = 'internal scratch']
  %s0 = inlined_call_operand.vmem [shape: bf16[2,70,35,24], index: 0, kind: input, shape index: {}]
  %s1 = inlined_call_operand.vmem [shape: bf16[6,72,24], index: 1, kind: input, shape index: {}]
  %s2 = inlined_call_operand.vmem [shape: f32[1,6], index: 2, kind: input, shape index: {}]
  %s3 = inlined_call_operand.vmem [shape: f32[2,33,33,6], index: 3, kind: output, shape index: {}]
  %s4 = sld [smem:[#allocation0]]
  $region52: #{gaf_attn_net_forward.4} parent=0
    _
  %s6 = ssub.s32 1, %s4
  %s7 = scalar_select 0, %s6, %s4
  loop: start=0, step=1, limit=4
  $region2: #{gaf_attn_net_forward.4} parent=0 // loop_pre_header
    _
  $region3: #{gaf_attn_net_forward.4} parent=0 // loop_header
    %s9 = sphi 0, %s13
    %p10 = scmp.ge.s32.totalorder %s9, 4
    %s19 = sphi 0, %s21
    %s22 = sphi 0, %s19
    %s23 = sphi 0, %s22
    %s39 = sphi 0, %s23
    %s43 = sphi 0, %s43
    %s45 = sphi 0, %s43
    %s46 = sphi 0, %s45
    %s60 = sphi 0, %s46
    %s64 = sphi 0, %s64
    %s66 = sphi 0, %s64
    %s67 = sphi 0, %s66
    %s81 = sphi 0, %s67
    %s87 = sphi 0, %s89
    %s90 = sphi 0, %s87
    %s91 = sphi 0, %s90
    %s107 = sphi 0, %s91
  $region4: #{gaf_attn_net_forward.4} parent=0 // loop_header_branch
    %12 = sbr.rel (%p10) target = $region8
  $region5: #{gaf_attn_net_forward.4} parent=0 // loop_body
    %s14 = ssub.s32 %s9, 1
    %s15 = ssub.s32 %s9, 2
    %s16 = sadd.s32 %s9, 1
    %s17 = ssub.s32 %s9, %s16
    %p18 = scmp.eq.s32.totalorder %s17, 0
    %s20 = sadd.s32 %s19, 1
    %s21 = scalar_select %p18, %s19, %s20
    %p24 = pneg %p18
    %p25 = scmp.eq.s32.totalorder %s9, 1
    %p26 = por %p24, %p25
    %p27 = scmp.ne.s32.totalorder %s19, %s22
    %p28 = scmp.eq.s32.totalorder %s9, 0
    %p29 = por %p27, %p28
    %p30 = scmp.ne.s32.totalorder %s19, %s22
    %p31 = scmp.eq.s32.totalorder %s14, 1
    %p32 = por %p30, %p31
    %p33 = scmp.ne.s32.totalorder %s22, %s23
    %p34 = scmp.eq.s32.totalorder %s14, 0
    %p35 = por %p33, %p34
    %p36 = scmp.ne.s32.totalorder %s22, %s23
    %p37 = scmp.eq.s32.totalorder %s15, 1
    %p38 = por %p36, %p37
    %p40 = scmp.ne.s32.totalorder %s23, %s39
    %p41 = scmp.eq.s32.totalorder %s15, 0
    %p42 = por %p40, %p41
    %s44 = sadd.s32 %s43, 1
    %p47 = scmp.eq.s32.totalorder %s9, 1
    %p48 = scmp.ne.s32.totalorder %s43, %s45
    %p49 = scmp.eq.s32.totalorder %s9, 0
    %p50 = por %p48, %p49
    %p51 = scmp.ne.s32.totalorder %s43, %s45
    %p52 = scmp.eq.s32.totalorder %s14, 1
    %p53 = por %p51, %p52
    %p54 = scmp.ne.s32.totalorder %s45, %s46
    %p55 = scmp.eq.s32.totalorder %s14, 0
    %p56 = por %p54, %p55
    %p57 = scmp.ne.s32.totalorder %s45, %s46
    %p58 = scmp.eq.s32.totalorder %s15, 1
    %p59 = por %p57, %p58
    %p61 = scmp.ne.s32.totalorder %s46, %s60
    %p62 = scmp.eq.s32.totalorder %s15, 0
    %p63 = por %p61, %p62
    %s65 = sadd.s32 %s64, 1
    %p68 = scmp.eq.s32.totalorder %s9, 1
    %p69 = scmp.ne.s32.totalorder %s64, %s66
    %p70 = scmp.eq.s32.totalorder %s9, 0
    %p71 = por %p69, %p70
    %p72 = scmp.ne.s32.totalorder %s64, %s66
    %p73 = scmp.eq.s32.totalorder %s14, 1
    %p74 = por %p72, %p73
    %p75 = scmp.ne.s32.totalorder %s66, %s67
    %p76 = scmp.eq.s32.totalorder %s14, 0
    %p77 = por %p75, %p76
    %p78 = scmp.ne.s32.totalorder %s66, %s67
    %p79 = scmp.eq.s32.totalorder %s15, 1
    %p80 = por %p78, %p79
    %p82 = scmp.ne.s32.totalorder %s67, %s81
    %p83 = scmp.eq.s32.totalorder %s15, 0
    %p84 = por %p82, %p83
    %s85 = ssub.s32 %s9, %s16
    %p86 = scmp.eq.s32.totalorder %s85, 0
    %s88 = sadd.s32 %s87, 1
    %s89 = scalar_select %p86, %s87, %s88
    %p92 = pneg %p86
    %p93 = scmp.eq.s32.totalorder %s9, 1
    %p94 = por %p92, %p93
    %p95 = scmp.ne.s32.totalorder %s87, %s90
    %p96 = scmp.eq.s32.totalorder %s9, 0
    %p97 = por %p95, %p96
    %p98 = scmp.ne.s32.totalorder %s87, %s90
    %p99 = scmp.eq.s32.totalorder %s14, 1
    %p100 = por %p98, %p99
    %p101 = scmp.ne.s32.totalorder %s90, %s91
    %p102 = scmp.eq.s32.totalorder %s14, 0
    %p103 = por %p101, %p102
    %p104 = scmp.ne.s32.totalorder %s90, %s91
    %p105 = scmp.eq.s32.totalorder %s15, 1
    %p106 = por %p104, %p105
    %p108 = scmp.ne.s32.totalorder %s91, %s107
    %p109 = scmp.eq.s32.totalorder %s15, 0
    %p110 = por %p108, %p109
    %p111 = scmp.le.s32.totalorder 1, %s9
    %p112 = scmp.lt.s32.totalorder %s9, 3
    %p113 = pnand %p111, %p112
    %p114 = pneg %p113
    // Predicated region
    $region9: #{gaf_attn_net_forward.4} parent=5 // pred_check
      _
    $region10: #{gaf_attn_net_forward.4} parent=5 // pred_check_branch
      %116 = sbr.rel (%p113) target = $region12
    $region11: #{gaf_attn_net_forward.4} parent=5 // pred_region
      %s117 = ssub.s32 %s9, 1
      // Predicated region
      $region13: #{gaf_attn_net_forward.4} parent=11 // pred_check
        %p118 = pneg %p56
      $region14: #{gaf_attn_net_forward.4} parent=11 // pred_check_branch
        %120 = sbr.rel (%p118) target = $region16
      $region15: #{gaf_attn_net_forward.4} parent=11 // pred_region
        _
      $region16: #{gaf_attn_net_forward.4} parent=11 // pred_fallthru
        _
      // Predicated region
      $region17: #{gaf_attn_net_forward.4} parent=11 // pred_check
        %p121 = pneg %p77
      $region18: #{gaf_attn_net_forward.4} parent=11 // pred_check_branch
        %123 = sbr.rel (%p121) target = $region20
      $region19: #{gaf_attn_net_forward.4} parent=11 // pred_region
        _
      $region20: #{gaf_attn_net_forward.4} parent=11 // pred_fallthru
        _
    $region12: #{gaf_attn_net_forward.4} parent=5 // pred_fallthru
      _
    %p124 = scmp.lt.s32.totalorder %s9, 2
    // Predicated region
    $region21: #{gaf_attn_net_forward.4} parent=5 // pred_check
      %p125 = pneg %p124
    $region22: #{gaf_attn_net_forward.4} parent=5 // pred_check_branch
      %127 = sbr.rel (%p125) target = $region24
    $region23: #{gaf_attn_net_forward.4} parent=5 // pred_region
      // Predicated region
      $region25: #{gaf_attn_net_forward.4} parent=23 // pred_check
        %p128 = pneg %p29
      $region26: #{gaf_attn_net_forward.4} parent=23 // pred_check_branch
        %130 = sbr.rel (%p128) target = $region28
      $region27: #{gaf_attn_net_forward.4} parent=23 // pred_region
        %p131 = scmp.lt.s32.totalorder %s9, 1
        %s132 = scalar_select %p131, %s9, 1
        %s133 = smul.addr %s132, 350
        %s134 = smul.addr %s133, 4
        %s135 = scalar_lea.vmem %s0, %s134
      $region28: #{gaf_attn_net_forward.4} parent=23 // pred_fallthru
        _
    $region24: #{gaf_attn_net_forward.4} parent=5 // pred_fallthru
      _
    %p136 = scmp.le.s32.totalorder 1, %s9
    %p137 = scmp.lt.s32.totalorder %s9, 3
    %p138 = pnand %p136, %p137
    %p139 = pneg %p138
    // Predicated region
    $region29: #{gaf_attn_net_forward.4} parent=5 // pred_check
      _
    $region30: #{gaf_attn_net_forward.4} parent=5 // pred_check_branch
      %141 = sbr.rel (%p138) target = $region32
    $region31: #{gaf_attn_net_forward.4} parent=5 // pred_region
      %s142 = ssub.s32 %s9, 1
      %p143 = scmp.lt.s32.totalorder %s14, 1
      %s144 = scalar_select %p143, %s14, 1
      %s145 = smul.addr %s144, 350
      %s146 = smul.addr %s145, 4
      %s147 = scalar_lea.vmem %s0, %s146
      %p148 = pneg %p35
      %p149 = pneg %p32
      %p150 = pneg %p56
      %p151 = pneg %p53
      %p152 = pneg %p77
      %p153 = pneg %p74
      %p154 = pneg %p103
      %p155 = pneg %p100
      %p156 = scmp.lt.s32.totalorder %s14, 1
      %s157 = scalar_select %p156, %s14, 1
      %s158 = smul.addr %s157, 165
      %s159 = smul.addr %s158, 8
      %s160 = scalar_lea.vmem %s3, %s159
      %p161 = scmp.lt.s32.totalorder %s14, 1
      %s162 = scalar_select %p161, %s14, 1
      %s163 = smul.addr %s162, 350
      %s164 = smul.addr %s163, 4
      %s165 = scalar_lea.vmem %s0, %s164
      %p166 = scmp.lt.s32.totalorder %s14, 1
      %s167 = scalar_select %p166, %s14, 1
      %s168 = smul.addr %s167, 165
      %s169 = smul.addr %s168, 8
      %s170 = scalar_lea.vmem %s3, %s169
      %v172 = vld [vmem:[%s2] sm:$0x1]
      loop: start=0, step=1, limit=33
      $region33: #{gaf_attn_net_forward.4} parent=31 // loop_pre_header
        _
      $region34: #{gaf_attn_net_forward.4} parent=31 // loop_header
        %s174 = sphi 0, %s178
        %p175 = scmp.ge.s32.totalorder %s174, 33
      $region35: #{gaf_attn_net_forward.4} parent=31 // loop_header_branch
        %177 = sbr.rel (%p175) target = $region39
      $region36: #{gaf_attn_net_forward.4} parent=31 // loop_body
        %s179 = smul.u32 %s174, 2
        %s180 = smul.u32 %s179, 5
        %s181 = smul.addr %s180, 4
        %s182 = scalar_lea.vmem %s165, %s181
        %v183 = vld [vmem:[%s182] sm:$0xf]
        %v184 = vld [vmem:[%s182 + $0x4] sm:$0xf]
        %v185 = vld [vmem:[%s182 + $0x8] sm:$0xf]
        %v186 = vld [vmem:[%s182 + $0xc] sm:$0xf]
        %v187 = vld [vmem:[%s182 + $0x10] sm:$0x1]
        %v188 = vld [vmem:[%s182] sm:$0xe]
        %v189 = vld [vmem:[%s182 + $0x10] sm:$0x3]
        %v195 = vunpack.c.l.b16 %v183
        %v196 = vunpack.c.l.b16 %v184
        %v197 = vunpack.c.l.b16 %v185
        %v198 = vunpack.c.l.b16 %v186
        %v199 = vunpack.c.l.b16 %v187
        %v200 = vpack.c.b16 %v196, %v195
        %v201 = vpack.c.b16 %v198, %v197
        %v202 = vpack.c.b16 %v199, %v199
        %vm203 = vsmask.f32 7424
        %v205 = vshrl.u32 %v200, 16
        %v207 = vshll.u32 %v200, 16
        %v209 = vrot.slane %v207, 1
        %v210 = vor.u32 %v205, %v209
        %v212 = vshll.u32 %v201, 16
        %v214 = vrot.slane %v212, 1
        %v215 = vsel %vm203, %v210, %v214
        %v216 = vshrl.u32 %v201, 16
        %v218 = vor.u32 %v216, %v214
        %v220 = vshll.u32 %v202, 16
        %v222 = vrot.slane %v220, 1
        %v223 = vsel %vm203, %v218, %v222
        %v224 = vshrl.u32 %v202, 16
        %226 = vrot.lane.b32.xlu0 %v215, 24
        %v227 = vpop.permute.xlu0 %226
        %228 = vrot.lane.b32.xlu0 %v223, 24
        %v229 = vpop.permute.xlu0 %228
        %230 = vrot.lane.b32.xlu0 %v224, 24
        %v231 = vpop.permute.xlu0 %230
        %v234 = vunpack.c.l.b16 %v188
        %v235 = vunpack.c.l.b16 %v189
        %v236 = vpack.c.b16 %v196, %v234
        %v237 = vpack.c.b16 %v235, %v235
        %vm238 = vcmask 1046528
        %v239 = vrot.slane %v236, 1
        %v240 = vrot.slane %v201, 1
        %v241 = vsel %vm238, %v239, %v240
        %v242 = vrot.slane %v237, 1
        %v243 = vsel %vm238, %v240, %v242
        %244 = vrot.lane.b32.xlu0 %v241, 48
        %v245 = vpop.permute.xlu0 %244
        %246 = vrot.lane.b32.xlu0 %v243, 48
        %v247 = vpop.permute.xlu0 %246
        %248 = vrot.lane.b32.xlu0 %v242, 48
        %v249 = vpop.permute.xlu0 %248
        %vm250 = vcmask 195584
        %v252 = vsel %vm250, %v200, %v227
        %v254 = vsel %vm250, %v201, %v229
        %v256 = vsel %vm250, %v202, %v231
        %vm257 = vcmask 392192
        %v259 = vsel %vm257, %v252, %v245
        %v261 = vsel %vm257, %v254, %v247
        %v263 = vsel %vm257, %v256, %v249
        %v264 = vld [vmem:[%s1] sm:$0xf]
        %v265 = vld [vmem:[%s1 + $0x4] sm:$0xf]
        %v266 = vld [vmem:[%s1 + $0x8] sm:$0xf]
        %v267 = vld [vmem:[%s1 + $0xc] sm:$0xf]
        %v268 = vld [vmem:[%s1 + $0x10] sm:$0xf]
        %v269 = vld [vmem:[%s1 + $0x14] sm:$0xf]
        %v270 = vld [vmem:[%s1 + $0x18] sm:$0xf]
        %v271 = vld [vmem:[%s1 + $0x1c] sm:$0xf]
        %v272 = vld [vmem:[%s1 + $0x20] sm:$0xf]
        %s273 = sadd.s32 %s179, 1
        %s274 = smul.u32 %s273, 5
        %s275 = smul.addr %s274, 4
        %s276 = scalar_lea.vmem %s165, %s275
        %v277 = vld [vmem:[%s276] sm:$0xf]
        %v278 = vld [vmem:[%s276 + $0x4] sm:$0xf]
        %v279 = vld [vmem:[%s276 + $0x8] sm:$0xf]
        %v280 = vld [vmem:[%s276 + $0xc] sm:$0xf]
        %v281 = vld [vmem:[%s276 + $0x10] sm:$0x1]
        %v282 = vld [vmem:[%s276] sm:$0xe]
        %v283 = vld [vmem:[%s276 + $0x10] sm:$0x3]
        %v289 = vunpack.c.l.b16 %v277
        %v290 = vunpack.c.l.b16 %v278
        %v291 = vunpack.c.l.b16 %v279
        %v292 = vunpack.c.l.b16 %v280
        %v293 = vunpack.c.l.b16 %v281
        %v294 = vpack.c.b16 %v290, %v289
        %v295 = vpack.c.b16 %v292, %v291
        %v296 = vpack.c.b16 %v293, %v293
        %v298 = vshrl.u32 %v294, 16
        %v300 = vshll.u32 %v294, 16
        %v302 = vrot.slane %v300, 1
        %v303 = vor.u32 %v298, %v302
        %v305 = vshll.u32 %v295, 16
        %v307 = vrot.slane %v305, 1
        %v308 = vsel %vm203, %v303, %v307
        %v309 = vshrl.u32 %v295, 16
        %v311 = vor.u32 %v309, %v307
        %v313 = vshll.u32 %v296, 16
        %v315 = vrot.slane %v313, 1
        %v316 = vsel %vm203, %v311, %v315
        %v317 = vshrl.u32 %v296, 16
        %319 = vrot.lane.b32.xlu0 %v308, 24
        %v320 = vpop.permute.xlu0 %319
        %321 = vrot.lane.b32.xlu0 %v316, 24
        %v322 = vpop.permute.xlu0 %321
        %323 = vrot.lane.b32.xlu0 %v317, 24
        %v324 = vpop.permute.xlu0 %323
        %v327 = vunpack.c.l.b16 %v282
        %v328 = vunpack.c.l.b16 %v283
        %v329 = vpack.c.b16 %v290, %v327
        %v330 = vpack.c.b16 %v328, %v328
        %v331 = vrot.slane %v329, 1
        %v332 = vrot.slane %v295, 1
        %v333 = vsel %vm238, %v331, %v332
        %v334 = vrot.slane %v330, 1
        %v335 = vsel %vm238, %v332, %v334
        %336 = vrot.lane.b32.xlu0 %v333, 48
        %v337 = vpop.permute.xlu0 %336
        %338 = vrot.lane.b32.xlu0 %v335, 48
        %v339 = vpop.permute.xlu0 %338
        %340 = vrot.lane.b32.xlu0 %v334, 48
        %v341 = vpop.permute.xlu0 %340
        %v343 = vsel %vm250, %v294, %v320
        %v345 = vsel %vm250, %v295, %v322
        %v347 = vsel %vm250, %v296, %v324
        %v349 = vsel %vm257, %v343, %v337
        %v351 = vsel %vm257, %v345, %v339
        %v353 = vsel %vm257, %v347, %v341
        %s354 = scalar_lea.vmem %s1, 36
        %v355 = vld [vmem:[%s354] sm:$0xf]
        %v356 = vld [vmem:[%s354 + $0x4] sm:$0xf]
        %v357 = vld [vmem:[%s354 + $0x8] sm:$0xf]
        %v358 = vld [vmem:[%s354 + $0xc] sm:$0xf]
        %v359 = vld [vmem:[%s354 + $0x10] sm:$0xf]
        %v360 = vld [vmem:[%s354 + $0x14] sm:$0xf]
        %v361 = vld [vmem:[%s354 + $0x18] sm:$0xf]
        %v362 = vld [vmem:[%s354 + $0x1c] sm:$0xf]
        %v363 = vld [vmem:[%s354 + $0x20] sm:$0xf]
        %v373 = vunpack.c.l.b16 %v355
        %v374 = vunpack.c.l.b16 %v356
        %v375 = vunpack.c.l.b16 %v357
        %v376 = vunpack.c.l.b16 %v358
        %v377 = vunpack.c.l.b16 %v359
        %v378 = vunpack.c.l.b16 %v360
        %v379 = vunpack.c.l.b16 %v361
        %v380 = vunpack.c.l.b16 %v362
        %v381 = vunpack.c.l.b16 %v363
        %v382 = vpack.c.b16 %v374, %v373
        %v383 = vpack.c.b16 %v376, %v375
        %v384 = vpack.c.b16 %v378, %v377
        %v385 = vpack.c.b16 %v380, %v379
        %v386 = vpack.c.b16 %v381, %v381
        %vm391 = vcmask 588800
        %v392 = vsel %vm391, %v349, 0
        %v394 = vsel %vm391, %v351, 0
        %v396 = vsel %vm391, %v353, 0
        %vm398 = vcmask 1043456
        %v400 = vsel %vm398, %v386, 0
        %402 = vmatprep.subr.bf16.mxu0 0
        %403 = vmatpush1.bf16.msra.mxu0 %v382
        %404 = vmatprep.subr.bf16.mxu0 0
        %405 = vmatpush1.bf16.msra.mxu0 %v383
        %406 = vmatprep.subr.bf16.mxu0 0
        %407 = vmatpush1.bf16.msra.mxu0 %v384
        %408 = vmatprep.subr.bf16.mxu0 0
        %409 = vmatpush1.bf16.msra.mxu0 %v385
        %410 = vmatprep.subr.bf16.mxu0 0
        %411 = vmatpush1.bf16.msra.mxu0 %v400
        %412 = vmatprep.subr.bf16.mxu0 0
        %413 = vmatpush1.bf16.msra.mxu0 0
        %414 = vmatprep.subr.bf16.mxu0 0
        %415 = vmatpush1.bf16.msra.mxu0 0
        %416 = vmatprep.subr.bf16.mxu0 0
        %417 = vmatpush1.bf16.msra.mxu0 0
        %418 = vmatprep.subr.bf16.mxu0 0
        %419 = vmatpush1.bf16.msra.mxu0 0
        %420 = vmatprep.subr.bf16.mxu0 0
        %421 = vmatpush1.bf16.msra.mxu0 0
        %422 = vmatprep.subr.bf16.mxu0 0
        %423 = vmatpush1.bf16.msra.mxu0 0
        %424 = vmatprep.subr.bf16.mxu0 0
        %425 = vmatpush1.bf16.msra.mxu0 0
        %426 = vmatprep.subr.bf16.mxu0 0
        %427 = vmatpush1.bf16.msra.mxu0 0
        %428 = vmatprep.subr.bf16.mxu0 0
        %429 = vmatpush1.bf16.msra.mxu0 0
        %430 = vmatprep.subr.bf16.mxu0 0
        %431 = vmatpush1.bf16.msra.mxu0 0
        %432 = vmatprep.subr.bf16.mxu0 0
        %433 = vmatpush1.bf16.msra.mxu0 0
        %434 = vmatprep.mubr.bf16.mxu0 0
        %435 = vmatmul.mubr.bf16.gmra.mrb[0].mxu0 %v392
        %v436 = vpop.f32.mrb[0].mxu0
        %v437 = vadd.f32 0.0, %v436
        %v438 = vpop.f32.mrb[0].mxu0
        %v439 = vpop.f32.mrb[0].mxu0
        %v440 = vadd.f32 0.0, %v439
        %v441 = vpop.f32.mrb[0].mxu0
        %442 = vmatprep.mubr.bf16.mxu0 0
        %443 = vmatmul.mubr.bf16.gmra.mrb[0].mxu0 %v394
        %v444 = vpop.f32.mrb[0].mxu0
        %v445 = vadd.f32 0.0, %v444
        %v446 = vpop.f32.mrb[0].mxu0
        %v447 = vpop.f32.mrb[0].mxu0
        %v448 = vadd.f32 0.0, %v447
        %v449 = vpop.f32.mrb[0].mxu0
        %450 = vmatprep.mubr.bf16.mxu0 0
        %451 = vmatmul.mubr.bf16.gmra.mrb[0].mxu0 %v396
        %v452 = vpop.f32.mrb[0].mxu0
        %v453 = vadd.f32 0.0, %v452
        %v454 = vpop.f32.mrb[0].mxu0
        %v455 = vpop.f32.mrb[0].mxu0
        %v456 = vpop.f32.mrb[0].mxu0
        %457 = vdwg.mxu0
        %v467 = vunpack.c.l.b16 %v264
        %v468 = vunpack.c.l.b16 %v265
        %v469 = vunpack.c.l.b16 %v266
        %v470 = vunpack.c.l.b16 %v267
        %v471 = vunpack.c.l.b16 %v268
        %v472 = vunpack.c.l.b16 %v269
        %v473 = vunpack.c.l.b16 %v270
        %v474 = vunpack.c.l.b16 %v271
        %v475 = vunpack.c.l.b16 %v272
        %v476 = vpack.c.b16 %v468, %v467
        %v477 = vpack.c.b16 %v470, %v469
        %v478 = vpack.c.b16 %v472, %v471
        %v479 = vpack.c.b16 %v474, %v473
        %v480 = vpack.c.b16 %v475, %v475
        %v485 = vsel %vm391, %v259, 0
        %v487 = vsel %vm391, %v261, 0
        %v489 = vsel %vm391, %v263, 0
        %v492 = vsel %vm398, %v480, 0
        %494 = vmatprep.subr.bf16.mxu0 0
        %495 = vmatpush1.bf16.msra.mxu0 %v476
        %496 = vmatprep.subr.bf16.mxu0 0
        %497 = vmatpush1.bf16.msra.mxu0 %v477
        %498 = vmatprep.subr.bf16.mxu0 0
        %499 = vmatpush1.bf16.msra.mxu0 %v478
        %500 = vmatprep.subr.bf16.mxu0 0
        %501 = vmatpush1.bf16.msra.mxu0 %v479
        %502 = vmatprep.subr.bf16.mxu0 0
        %503 = vmatpush1.bf16.msra.mxu0 %v492
        %504 = vmatprep.subr.bf16.mxu0 0
        %505 = vmatpush1.bf16.msra.mxu0 0
        %506 = vmatprep.subr.bf16.mxu0 0
        %507 = vmatpush1.bf16.msra.mxu0 0
        %508 = vmatprep.subr.bf16.mxu0 0
        %509 = vmatpush1.bf16.msra.mxu0 0
        %510 = vmatprep.subr.bf16.mxu0 0
        %511 = vmatpush1.bf16.msra.mxu0 0
        %512 = vmatprep.subr.bf16.mxu0 0
        %513 = vmatpush1.bf16.msra.mxu0 0
        %514 = vmatprep.subr.bf16.mxu0 0
        %515 = vmatpush1.bf16.msra.mxu0 0
        %516 = vmatprep.subr.bf16.mxu0 0
        %517 = vmatpush1.bf16.msra.mxu0 0
        %518 = vmatprep.subr.bf16.mxu0 0
        %519 = vmatpush1.bf16.msra.mxu0 0
        %520 = vmatprep.subr.bf16.mxu0 0
        %521 = vmatpush1.bf16.msra.mxu0 0
        %522 = vmatprep.subr.bf16.mxu0 0
        %523 = vmatpush1.bf16.msra.mxu0 0
        %524 = vmatprep.subr.bf16.mxu0 0
        %525 = vmatpush1.bf16.msra.mxu0 0
        %526 = vmatprep.mubr.bf16.mxu0 0
        %527 = vmatmul.mubr.bf16.gmra.mrb[0].mxu0 %v485
        %v528 = vpop.f32.mrb[0].mxu0
        %v529 = vadd.f32 %v437, %v528
        %v530 = vpop.f32.mrb[0].mxu0
        %v531 = vpop.f32.mrb[0].mxu0
        %v532 = vadd.f32 %v440, %v531
        %v533 = vpop.f32.mrb[0].mxu0
        %534 = vmatprep.mubr.bf16.mxu0 0
        %535 = vmatmul.mubr.bf16.gmra.mrb[0].mxu0 %v487
        %v536 = vpop.f32.mrb[0].mxu0
        %v537 = vadd.f32 %v445, %v536
        %v538 = vpop.f32.mrb[0].mxu0
        %v539 = vpop.f32.mrb[0].mxu0
        %v540 = vadd.f32 %v448, %v539
        %v541 = vpop.f32.mrb[0].mxu0
        %542 = vmatprep.mubr.bf16.mxu0 0
        %543 = vmatmul.mubr.bf16.gmra.mrb[0].mxu0 %v489
        %v544 = vpop.f32.mrb[0].mxu0
        %v545 = vadd.f32 %v453, %v544
        %v546 = vpop.f32.mrb[0].mxu0
        %v547 = vpop.f32.mrb[0].mxu0
        %v548 = vpop.f32.mrb[0].mxu0
        %549 = vdwg.mxu0
        %s550 = sadd.s32 %s179, 2
        %s551 = smul.u32 %s550, 5
        %s552 = smul.addr %s551, 4
        %s553 = scalar_lea.vmem %s165, %s552
        %v554 = vld [vmem:[%s553] sm:$0xf]
        %v555 = vld [vmem:[%s553 + $0x4] sm:$0xf]
        %v556 = vld [vmem:[%s553 + $0x8] sm:$0xf]
        %v557 = vld [vmem:[%s553 + $0xc] sm:$0xf]
        %v558 = vld [vmem:[%s553 + $0x10] sm:$0x1]
        %v559 = vld [vmem:[%s553] sm:$0xe]
        %v560 = vld [vmem:[%s553 + $0x10] sm:$0x3]
        %v566 = vunpack.c.l.b16 %v554
        %v567 = vunpack.c.l.b16 %v555
        %v568 = vunpack.c.l.b16 %v556
        %v569 = vunpack.c.l.b16 %v557
        %v570 = vunpack.c.l.b16 %v558
        %v571 = vpack.c.b16 %v567, %v566
        %v572 = vpack.c.b16 %v569, %v568
        %v573 = vpack.c.b16 %v570, %v570
        %v575 = vshrl.u32 %v571, 16
        %v577 = vshll.u32 %v571, 16
        %v579 = vrot.slane %v577, 1
        %v580 = vor.u32 %v575, %v579
        %v582 = vshll.u32 %v572, 16
        %v584 = vrot.slane %v582, 1
        %v585 = vsel %vm203, %v580, %v584
        %v586 = vshrl.u32 %v572, 16
        %v588 = vor.u32 %v586, %v584
        %v590 = vshll.u32 %v573, 16
        %v592 = vrot.slane %v590, 1
        %v593 = vsel %vm203, %v588, %v592
        %v594 = vshrl.u32 %v573, 16
        %596 = vrot.lane.b32.xlu0 %v585, 24
        %v597 = vpop.permute.xlu0 %596
        %598 = vrot.lane.b32.xlu0 %v593, 24
        %v599 = vpop.permute.xlu0 %598
        %600 = vrot.lane.b32.xlu0 %v594, 24
        %v601 = vpop.permute.xlu0 %600
        %v604 = vunpack.c.l.b16 %v559
        %v605 = vunpack.c.l.b16 %v560
        %v606 = vpack.c.b16 %v567, %v604
        %v607 = vpack.c.b16 %v605, %v605
        %v608 = vrot.slane %v606, 1
        %v609 = vrot.slane %v572, 1
        %v610 = vsel %vm238, %v608, %v609
        %v611 = vrot.slane %v607, 1
        %v612 = vsel %vm238, %v609, %v611
        %613 = vrot.lane.b32.xlu0 %v610, 48
        %v614 = vpop.permute.xlu0 %613
        %615 = vrot.lane.b32.xlu0 %v612, 48
        %v616 = vpop.permute.xlu0 %615
        %617 = vrot.lane.b32.xlu0 %v611, 48
        %v618 = vpop.permute.xlu0 %617
        %v620 = vsel %vm250, %v571, %v597
        %v622 = vsel %vm250, %v572, %v599
        %v624 = vsel %vm250, %v573, %v601
        %v626 = vsel %vm257, %v620, %v614
        %v628 = vsel %vm257, %v622, %v616
        %v630 = vsel %vm257, %v624, %v618
        %s631 = scalar_lea.vmem %s1, 72
        %v632 = vld [vmem:[%s631] sm:$0xf]
        %v633 = vld [vmem:[%s631 + $0x4] sm:$0xf]
        %v634 = vld [vmem:[%s631 + $0x8] sm:$0xf]
        %v635 = vld [vmem:[%s631 + $0xc] sm:$0xf]
        %v636 = vld [vmem:[%s631 + $0x10] sm:$0xf]
        %v637 = vld [vmem:[%s631 + $0x14] sm:$0xf]
        %v638 = vld [vmem:[%s631 + $0x18] sm:$0xf]
        %v639 = vld [vmem:[%s631 + $0x1c] sm:$0xf]
        %v640 = vld [vmem:[%s631 + $0x20] sm:$0xf]
        %v650 = vunpack.c.l.b16 %v632
        %v651 = vunpack.c.l.b16 %v633
        %v652 = vunpack.c.l.b16 %v634
        %v653 = vunpack.c.l.b16 %v635
        %v654 = vunpack.c.l.b16 %v636
        %v655 = vunpack.c.l.b16 %v637
        %v656 = vunpack.c.l.b16 %v638
        %v657 = vunpack.c.l.b16 %v639
        %v658 = vunpack.c.l.b16 %v640
        %v659 = vpack.c.b16 %v651, %v650
        %v660 = vpack.c.b16 %v653, %v652
        %v661 = vpack.c.b16 %v655, %v654
        %v662 = vpack.c.b16 %v657, %v656
        %v663 = vpack.c.b16 %v658, %v658
        %v668 = vsel %vm391, %v626, 0
        %v670 = vsel %vm391, %v628, 0
        %v672 = vsel %vm391, %v630, 0
        %v675 = vsel %vm398, %v663, 0
        %677 = vmatprep.subr.bf16.mxu0 0
        %678 = vmatpush1.bf16.msra.mxu0 %v659
        %679 = vmatprep.subr.bf16.mxu0 0
        %680 = vmatpush1.bf16.msra.mxu0 %v660
        %681 = vmatprep.subr.bf16.mxu0 0
        %682 = vmatpush1.bf16.msra.mxu0 %v661
        %683 = vmatprep.subr.bf16.mxu0 0
        %684 = vmatpush1.bf16.msra.mxu0 %v662
        %685 = vmatprep.subr.bf16.mxu0 0
        %686 = vmatpush1.bf16.msra.mxu0 %v675
        %687 = vmatprep.subr.bf16.mxu0 0
        %688 = vmatpush1.bf16.msra.mxu0 0
        %689 = vmatprep.subr.bf16.mxu0 0
        %690 = vmatpush1.bf16.msra.mxu0 0
        %691 = vmatprep.subr.bf16.mxu0 0
        %692 = vmatpush1.bf16.msra.mxu0 0
        %693 = vmatprep.subr.bf16.mxu0 0
        %694 = vmatpush1.bf16.msra.mxu0 0
        %695 = vmatprep.subr.bf16.mxu0 0
        %696 = vmatpush1.bf16.msra.mxu0 0
        %697 = vmatprep.subr.bf16.mxu0 0
        %698 = vmatpush1.bf16.msra.mxu0 0
        %699 = vmatprep.subr.bf16.mxu0 0
        %700 = vmatpush1.bf16.msra.mxu0 0
        %701 = vmatprep.subr.bf16.mxu0 0
        %702 = vmatpush1.bf16.msra.mxu0 0
        %703 = vmatprep.subr.bf16.mxu0 0
        %704 = vmatpush1.bf16.msra.mxu0 0
        %705 = vmatprep.subr.bf16.mxu0 0
        %706 = vmatpush1.bf16.msra.mxu0 0
        %707 = vmatprep.subr.bf16.mxu0 0
        %708 = vmatpush1.bf16.msra.mxu0 0
        %709 = vmatprep.mubr.bf16.mxu0 0
        %710 = vmatmul.mubr.bf16.gmra.mrb[0].mxu0 %v668
        %v711 = vpop.f32.mrb[0].mxu0
        %v712 = vadd.f32 0.0, %v711
        %v713 = vpop.f32.mrb[0].mxu0
        %v714 = vpop.f32.mrb[0].mxu0
        %v715 = vadd.f32 0.0, %v714
        %v716 = vpop.f32.mrb[0].mxu0
        %717 = vmatprep.mubr.bf16.mxu0 0
        %718 = vmatmul.mubr.bf16.gmra.mrb[0].mxu0 %v670
        %v719 = vpop.f32.mrb[0].mxu0
        %v720 = vadd.f32 0.0, %v719
        %v721 = vpop.f32.mrb[0].mxu0
        %v722 = vpop.f32.mrb[0].mxu0
        %v723 = vadd.f32 0.0, %v722
        %v724 = vpop.f32.mrb[0].mxu0
        %725 = vmatprep.mubr.bf16.mxu0 0
        %726 = vmatmul.mubr.bf16.gmra.mrb[0].mxu0 %v672
        %v727 = vpop.f32.mrb[0].mxu0
        %v728 = vadd.f32 0.0, %v727
        %v729 = vpop.f32.mrb[0].mxu0
        %v730 = vpop.f32.mrb[0].mxu0
        %v731 = vpop.f32.mrb[0].mxu0
        %732 = vdwg.mxu0
        %v733 = vadd.f32 %v529, %v712
        %v734 = vadd.f32 %v532, %v715
        %v735 = vadd.f32 %v537, %v720
        %v736 = vadd.f32 %v540, %v723
        %v737 = vadd.f32 %v545, %v728
        %s738 = sadd.s32 %s179, 3
        %s739 = smul.u32 %s738, 5
        %s740 = smul.addr %s739, 4
        %s741 = scalar_lea.vmem %s165, %s740
        %v742 = vld [vmem:[%s741] sm:$0xf]
        %v743 = vld [vmem:[%s741 + $0x4] sm:$0xf]
        %v744 = vld [vmem:[%s741 + $0x8] sm:$0xf]
        %v745 = vld [vmem:[%s741 + $0xc] sm:$0xf]
        %v746 = vld [vmem:[%s741 + $0x10] sm:$0x1]
        %v747 = vld [vmem:[%s741] sm:$0xe]
        %v748 = vld [vmem:[%s741 + $0x10] sm:$0x3]
        %v754 = vunpack.c.l.b16 %v742
        %v755 = vunpack.c.l.b16 %v743
        %v756 = vunpack.c.l.b16 %v744
        %v757 = vunpack.c.l.b16 %v745
        %v758 = vunpack.c.l.b16 %v746
        %v759 = vpack.c.b16 %v755, %v754
        %v760 = vpack.c.b16 %v757, %v756
        %v761 = vpack.c.b16 %v758, %v758
        %v763 = vshrl.u32 %v759, 16
        %v765 = vshll.u32 %v759, 16
        %v767 = vrot.slane %v765, 1
        %v768 = vor.u32 %v763, %v767
        %v770 = vshll.u32 %v760, 16
        %v772 = vrot.slane %v770, 1
        %v773 = vsel %vm203, %v768, %v772
        %v774 = vshrl.u32 %v760, 16
        %v776 = vor.u32 %v774, %v772
        %v778 = vshll.u32 %v761, 16
        %v780 = vrot.slane %v778, 1
        %v781 = vsel %vm203, %v776, %v780
        %v782 = vshrl.u32 %v761, 16
        %784 = vrot.lane.b32.xlu0 %v773, 24
        %v785 = vpop.permute.xlu0 %784
        %786 = vrot.lane.b32.xlu0 %v781, 24
        %v787 = vpop.permute.xlu0 %786
        %788 = vrot.lane.b32.xlu0 %v782, 24
        %v789 = vpop.permute.xlu0 %788
        %v792 = vunpack.c.l.b16 %v747
        %v793 = vunpack.c.l.b16 %v748
        %v794 = vpack.c.b16 %v755, %v792
        %v795 = vpack.c.b16 %v793, %v793
        %v796 = vrot.slane %v794, 1
        %v797 = vrot.slane %v760, 1
        %v798 = vsel %vm238, %v796, %v797
        %v799 = vrot.slane %v795, 1
        %v800 = vsel %vm238, %v797, %v799
        %801 = vrot.lane.b32.xlu0 %v798, 48
        %v802 = vpop.permute.xlu0 %801
        %803 = vrot.lane.b32.xlu0 %v800, 48
        %v804 = vpop.permute.xlu0 %803
        %805 = vrot.lane.b32.xlu0 %v799, 48
        %v806 = vpop.permute.xlu0 %805
        %v808 = vsel %vm250, %v759, %v785
        %v810 = vsel %vm250, %v760, %v787
        %v812 = vsel %vm250, %v761, %v789
        %v814 = vsel %vm257, %v808, %v802
        %v816 = vsel %vm257, %v810, %v804
        %v818 = vsel %vm257, %v812, %v806
        %s819 = scalar_lea.vmem %s1, 108
        %v820 = vld [vmem:[%s819] sm:$0xf]
        %v821 = vld [vmem:[%s819 + $0x4] sm:$0xf]
        %v822 = vld [vmem:[%s819 + $0x8] sm:$0xf]
        %v823 = vld [vmem:[%s819 + $0xc] sm:$0xf]
        %v824 = vld [vmem:[%s819 + $0x10] sm:$0xf]
        %v825 = vld [vmem:[%s819 + $0x14] sm:$0xf]
        %v826 = vld [vmem:[%s819 + $0x18] sm:$0xf]
        %v827 = vld [vmem:[%s819 + $0x1c] sm:$0xf]
        %v828 = vld [vmem:[%s819 + $0x20] sm:$0xf]
        %v838 = vunpack.c.l.b16 %v820
        %v839 = vunpack.c.l.b16 %v821
        %v840 = vunpack.c.l.b16 %v822
        %v841 = vunpack.c.l.b16 %v823
        %v842 = vunpack.c.l.b16 %v824
        %v843 = vunpack.c.l.b16 %v825
        %v844 = vunpack.c.l.b16 %v826
        %v845 = vunpack.c.l.b16 %v827
        %v846 = vunpack.c.l.b16 %v828
        %v847 = vpack.c.b16 %v839, %v838
        %v848 = vpack.c.b16 %v841, %v840
        %v849 = vpack.c.b16 %v843, %v842
        %v850 = vpack.c.b16 %v845, %v844
        %v851 = vpack.c.b16 %v846, %v846
        %v856 = vsel %vm391, %v814, 0
        %v858 = vsel %vm391, %v816, 0
        %v860 = vsel %vm391, %v818, 0
        %v863 = vsel %vm398, %v851, 0
        %865 = vmatprep.subr.bf16.mxu0 0
        %866 = vmatpush1.bf16.msra.mxu0 %v847
        %867 = vmatprep.subr.bf16.mxu0 0
        %868 = vmatpush1.bf16.msra.mxu0 %v848
        %869 = vmatprep.subr.bf16.mxu0 0
        %870 = vmatpush1.bf16.msra.mxu0 %v849
        %871 = vmatprep.subr.bf16.mxu0 0
        %872 = vmatpush1.bf16.msra.mxu0 %v850
        %873 = vmatprep.subr.bf16.mxu0 0
        %874 = vmatpush1.bf16.msra.mxu0 %v863
        %875 = vmatprep.subr.bf16.mxu0 0
        %876 = vmatpush1.bf16.msra.mxu0 0
        %877 = vmatprep.subr.bf16.mxu0 0
        %878 = vmatpush1.bf16.msra.mxu0 0
        %879 = vmatprep.subr.bf16.mxu0 0
        %880 = vmatpush1.bf16.msra.mxu0 0
        %881 = vmatprep.subr.bf16.mxu0 0
        %882 = vmatpush1.bf16.msra.mxu0 0
        %883 = vmatprep.subr.bf16.mxu0 0
        %884 = vmatpush1.bf16.msra.mxu0 0
        %885 = vmatprep.subr.bf16.mxu0 0
        %886 = vmatpush1.bf16.msra.mxu0 0
        %887 = vmatprep.subr.bf16.mxu0 0
        %888 = vmatpush1.bf16.msra.mxu0 0
        %889 = vmatprep.subr.bf16.mxu0 0
        %890 = vmatpush1.bf16.msra.mxu0 0
        %891 = vmatprep.subr.bf16.mxu0 0
        %892 = vmatpush1.bf16.msra.mxu0 0
        %893 = vmatprep.subr.bf16.mxu0 0
        %894 = vmatpush1.bf16.msra.mxu0 0
        %895 = vmatprep.subr.bf16.mxu0 0
        %896 = vmatpush1.bf16.msra.mxu0 0
        %897 = vmatprep.mubr.bf16.mxu0 0
        %898 = vmatmul.mubr.bf16.gmra.mrb[0].mxu0 %v856
        %v899 = vpop.f32.mrb[0].mxu0
        %v900 = vadd.f32 0.0, %v899
        %v901 = vpop.f32.mrb[0].mxu0
        %v902 = vpop.f32.mrb[0].mxu0
        %v903 = vadd.f32 0.0, %v902
        %v904 = vpop.f32.mrb[0].mxu0
        %905 = vmatprep.mubr.bf16.mxu0 0
        %906 = vmatmul.mubr.bf16.gmra.mrb[0].mxu0 %v858
        %v907 = vpop.f32.mrb[0].mxu0
        %v908 = vadd.f32 0.0, %v907
        %v909 = vpop.f32.mrb[0].mxu0
        %v910 = vpop.f32.mrb[0].mxu0
        %v911 = vadd.f32 0.0, %v910
        %v912 = vpop.f32.mrb[0].mxu0
        %913 = vmatprep.mubr.bf16.mxu0 0
        %914 = vmatmul.mubr.bf16.gmra.mrb[0].mxu0 %v860
        %v915 = vpop.f32.mrb[0].mxu0
        %v916 = vadd.f32 0.0, %v915
        %v917 = vpop.f32.mrb[0].mxu0
        %v918 = vpop.f32.mrb[0].mxu0
        %v919 = vpop.f32.mrb[0].mxu0
        %920 = vdwg.mxu0
        %v921 = vadd.f32 %v733, %v900
        %v922 = vadd.f32 %v734, %v903
        %v923 = vadd.f32 %v735, %v908
        %v924 = vadd.f32 %v736, %v911
        %v925 = vadd.f32 %v737, %v916
        %s926 = sadd.s32 %s179, 4
        %s927 = smul.u32 %s926, 5
        %s928 = smul.addr %s927, 4
        %s929 = scalar_lea.vmem %s165, %s928
        %v930 = vld [vmem:[%s929] sm:$0xf]
        %v931 = vld [vmem:[%s929 + $0x4] sm:$0xf]
        %v932 = vld [vmem:[%s929 + $0x8] sm:$0xf]
        %v933 = vld [vmem:[%s929 + $0xc] sm:$0xf]
        %v934 = vld [vmem:[%s929 + $0x10] sm:$0x1]
        %v935 = vld [vmem:[%s929] sm:$0xe]
        %v936 = vld [vmem:[%s929 + $0x10] sm:$0x3]
        %v942 = vunpack.c.l.b16 %v930
        %v943 = vunpack.c.l.b16 %v931
        %v944 = vunpack.c.l.b16 %v932
        %v945 = vunpack.c.l.b16 %v933
        %v946 = vunpack.c.l.b16 %v934
        %v947 = vpack.c.b16 %v943, %v942
        %v948 = vpack.c.b16 %v945, %v944
        %v949 = vpack.c.b16 %v946, %v946
        %v951 = vshrl.u32 %v947, 16
        %v953 = vshll.u32 %v947, 16
        %v955 = vrot.slane %v953, 1
        %v956 = vor.u32 %v951, %v955
        %v958 = vshll.u32 %v948, 16
        %v960 = vrot.slane %v958, 1
        %v961 = vsel %vm203, %v956, %v960
        %v962 = vshrl.u32 %v948, 16
        %v964 = vor.u32 %v962, %v960
        %v966 = vshll.u32 %v949, 16
        %v968 = vrot.slane %v966, 1
        %v969 = vsel %vm203, %v964, %v968
        %v970 = vshrl.u32 %v949, 16
        %972 = vrot.lane.b32.xlu0 %v961, 24
        %v973 = vpop.permute.xlu0 %972
        %974 = vrot.lane.b32.xlu0 %v969, 24
        %v975 = vpop.permute.xlu0 %974
        %976 = vrot.lane.b32.xlu0 %v970, 24
        %v977 = vpop.permute.xlu0 %976
        %v980 = vunpack.c.l.b16 %v935
        %v981 = vunpack.c.l.b16 %v936
        %v982 = vpack.c.b16 %v943, %v980
        %v983 = vpack.c.b16 %v981, %v981
        %v984 = vrot.slane %v982, 1
        %v985 = vrot.slane %v948, 1
        %v986 = vsel %vm238, %v984, %v985
        %v987 = vrot.slane %v983, 1
        %v988 = vsel %vm238, %v985, %v987
        %989 = vrot.lane.b32.xlu0 %v986, 48
        %v990 = vpop.permute.xlu0 %989
        %991 = vrot.lane.b32.xlu0 %v988, 48
        %v992 = vpop.permute.xlu0 %991
        %993 = vrot.lane.b32.xlu0 %v987, 48
        %v994 = vpop.permute.xlu0 %993
        %v996 = vsel %vm250, %v947, %v973
        %v998 = vsel %vm250, %v948, %v975
        %v1000 = vsel %vm250, %v949, %v977
        %v1002 = vsel %vm257, %v996, %v990
        %v1004 = vsel %vm257, %v998, %v992
        %v1006 = vsel %vm257, %v1000, %v994
        %s1007 = scalar_lea.vmem %s1, 144
        %v1008 = vld [vmem:[%s1007] sm:$0xf]
        %v1009 = vld [vmem:[%s1007 + $0x4] sm:$0xf]
        %v1010 = vld [vmem:[%s1007 + $0x8] sm:$0xf]
        %v1011 = vld [vmem:[%s1007 + $0xc] sm:$0xf]
        %v1012 = vld [vmem:[%s1007 + $0x10] sm:$0xf]
        %v1013 = vld [vmem:[%s1007 + $0x14] sm:$0xf]
        %v1014 = vld [vmem:[%s1007 + $0x18] sm:$0xf]
        %v1015 = vld [vmem:[%s1007 + $0x1c] sm:$0xf]
        %v1016 = vld [vmem:[%s1007 + $0x20] sm:$0xf]
        %v1026 = vunpack.c.l.b16 %v1008
        %v1027 = vunpack.c.l.b16 %v1009
        %v1028 = vunpack.c.l.b16 %v1010
        %v1029 = vunpack.c.l.b16 %v1011
        %v1030 = vunpack.c.l.b16 %v1012
        %v1031 = vunpack.c.l.b16 %v1013
        %v1032 = vunpack.c.l.b16 %v1014
        %v1033 = vunpack.c.l.b16 %v1015
        %v1034 = vunpack.c.l.b16 %v1016
        %v1035 = vpack.c.b16 %v1027, %v1026
        %v1036 = vpack.c.b16 %v1029, %v1028
        %v1037 = vpack.c.b16 %v1031, %v1030
        %v1038 = vpack.c.b16 %v1033, %v1032
        %v1039 = vpack.c.b16 %v1034, %v1034
        %v1044 = vsel %vm391, %v1002, 0
        %v1046 = vsel %vm391, %v1004, 0
        %v1048 = vsel %vm391, %v1006, 0
        %v1051 = vsel %vm398, %v1039, 0
        %1053 = vmatprep.subr.bf16.mxu0 0
        %1054 = vmatpush1.bf16.msra.mxu0 %v1035
        %1055 = vmatprep.subr.bf16.mxu0 0
        %1056 = vmatpush1.bf16.msra.mxu0 %v1036
        %1057 = vmatprep.subr.bf16.mxu0 0
        %1058 = vmatpush1.bf16.msra.mxu0 %v1037
        %1059 = vmatprep.subr.bf16.mxu0 0
        %1060 = vmatpush1.bf16.msra.mxu0 %v1038
        %1061 = vmatprep.subr.bf16.mxu0 0
        %1062 = vmatpush1.bf16.msra.mxu0 %v1051
        %1063 = vmatprep.subr.bf16.mxu0 0
        %1064 = vmatpush1.bf16.msra.mxu0 0
        %1065 = vmatprep.subr.bf16.mxu0 0
        %1066 = vmatpush1.bf16.msra.mxu0 0
        %1067 = vmatprep.subr.bf16.mxu0 0
        %1068 = vmatpush1.bf16.msra.mxu0 0
        %1069 = vmatprep.subr.bf16.mxu0 0
        %1070 = vmatpush1.bf16.msra.mxu0 0
        %1071 = vmatprep.subr.bf16.mxu0 0
        %1072 = vmatpush1.bf16.msra.mxu0 0
        %1073 = vmatprep.subr.bf16.mxu0 0
        %1074 = vmatpush1.bf16.msra.mxu0 0
        %1075 = vmatprep.subr.bf16.mxu0 0
        %1076 = vmatpush1.bf16.msra.mxu0 0
        %1077 = vmatprep.subr.bf16.mxu0 0
        %1078 = vmatpush1.bf16.msra.mxu0 0
        %1079 = vmatprep.subr.bf16.mxu0 0
        %1080 = vmatpush1.bf16.msra.mxu0 0
        %1081 = vmatprep.subr.bf16.mxu0 0
        %1082 = vmatpush1.bf16.msra.mxu0 0
        %1083 = vmatprep.subr.bf16.mxu0 0
        %1084 = vmatpush1.bf16.msra.mxu0 0
        %1085 = vmatprep.mubr.bf16.mxu0 0
        %1086 = vmatmul.mubr.bf16.gmra.mrb[0].mxu0 %v1044
        %v1087 = vpop.f32.mrb[0].mxu0
        %v1088 = vadd.f32 0.0, %v1087
        %v1089 = vpop.f32.mrb[0].mxu0
        %v1090 = vpop.f32.mrb[0].mxu0
        %v1091 = vadd.f32 0.0, %v1090
        %v1092 = vpop.f32.mrb[0].mxu0
        %1093 = vmatprep.mubr.bf16.mxu0 0
        %1094 = vmatmul.mubr.bf16.gmra.mrb[0].mxu0 %v1046
        %v1095 = vpop.f32.mrb[0].mxu0
        %v1096 = vadd.f32 0.0, %v1095
        %v1097 = vpop.f32.mrb[0].mxu0
        %v1098 = vpop.f32.mrb[0].mxu0
        %v1099 = vadd.f32 0.0, %v1098
        %v1100 = vpop.f32.mrb[0].mxu0
        %1101 = vmatprep.mubr.bf16.mxu0 0
        %1102 = vmatmul.mubr.bf16.gmra.mrb[0].mxu0 %v1048
        %v1103 = vpop.f32.mrb[0].mxu0
        %v1104 = vadd.f32 0.0, %v1103
        %v1105 = vpop.f32.mrb[0].mxu0
        %v1106 = vpop.f32.mrb[0].mxu0
        %v1107 = vpop.f32.mrb[0].mxu0
        %1108 = vdwg.mxu0
        %v1109 = vadd.f32 %v921, %v1088
        %v1110 = vadd.f32 %v922, %v1091
        %v1111 = vadd.f32 %v923, %v1096
        %v1112 = vadd.f32 %v924, %v1099
        %v1113 = vadd.f32 %v925, %v1104
        %s1114 = sadd.s32 %s179, 5
        %s1115 = smul.u32 %s1114, 5
        %s1116 = smul.addr %s1115, 4
        %s1117 = scalar_lea.vmem %s165, %s1116
        %v1118 = vld [vmem:[%s1117] sm:$0xf]
        %v1119 = vld [vmem:[%s1117 + $0x4] sm:$0xf]
        %v1120 = vld [vmem:[%s1117 + $0x8] sm:$0xf]
        %v1121 = vld [vmem:[%s1117 + $0xc] sm:$0xf]
        %v1122 = vld [vmem:[%s1117 + $0x10] sm:$0x1]
        %v1123 = vld [vmem:[%s1117] sm:$0xe]
        %v1124 = vld [vmem:[%s1117 + $0x10] sm:$0x3]
        %v1130 = vunpack.c.l.b16 %v1118
        %v1131 = vunpack.c.l.b16 %v1119
        %v1132 = vunpack.c.l.b16 %v1120
        %v1133 = vunpack.c.l.b16 %v1121
        %v1134 = vunpack.c.l.b16 %v1122
        %v1135 = vpack.c.b16 %v1131, %v1130
        %v1136 = vpack.c.b16 %v1133, %v1132
        %v1137 = vpack.c.b16 %v1134, %v1134
        %v1139 = vshrl.u32 %v1135, 16
        %v1141 = vshll.u32 %v1135, 16
        %v1143 = vrot.slane %v1141, 1
        %v1144 = vor.u32 %v1139, %v1143
        %v1146 = vshll.u32 %v1136, 16
        %v1148 = vrot.slane %v1146, 1
        %v1149 = vsel %vm203, %v1144, %v1148
        %v1150 = vshrl.u32 %v1136, 16
        %v1152 = vor.u32 %v1150, %v1148
        %v1154 = vshll.u32 %v1137, 16
        %v1156 = vrot.slane %v1154, 1
        %v1157 = vsel %vm203, %v1152, %v1156
        %v1158 = vshrl.u32 %v1137, 16
        %1160 = vrot.lane.b32.xlu0 %v1149, 24
        %v1161 = vpop.permute.xlu0 %1160
        %1162 = vrot.lane.b32.xlu0 %v1157, 24
        %v1163 = vpop.permute.xlu0 %1162
        %1164 = vrot.lane.b32.xlu0 %v1158, 24
        %v1165 = vpop.permute.xlu0 %1164
        %v1168 = vunpack.c.l.b16 %v1123
        %v1169 = vunpack.c.l.b16 %v1124
        %v1170 = vpack.c.b16 %v1131, %v1168
        %v1171 = vpack.c.b16 %v1169, %v1169
        %v1172 = vrot.slane %v1170, 1
        %v1173 = vrot.slane %v1136, 1
        %v1174 = vsel %vm238, %v1172, %v1173
        %v1175 = vrot.slane %v1171, 1
        %v1176 = vsel %vm238, %v1173, %v1175
        %1177 = vrot.lane.b32.xlu0 %v1174, 48
        %v1178 = vpop.permute.xlu0 %1177
        %1179 = vrot.lane.b32.xlu0 %v1176, 48
        %v1180 = vpop.permute.xlu0 %1179
        %1181 = vrot.lane.b32.xlu0 %v1175, 48
        %v1182 = vpop.permute.xlu0 %1181
        %v1184 = vsel %vm250, %v1135, %v1161
        %v1186 = vsel %vm250, %v1136, %v1163
        %v1188 = vsel %vm250, %v1137, %v1165
        %v1190 = vsel %vm257, %v1184, %v1178
        %v1192 = vsel %vm257, %v1186, %v1180
        %v1194 = vsel %vm257, %v1188, %v1182
        %s1195 = scalar_lea.vmem %s1, 180
        %v1196 = vld [vmem:[%s1195] sm:$0xf]
        %v1197 = vld [vmem:[%s1195 + $0x4] sm:$0xf]
        %v1198 = vld [vmem:[%s1195 + $0x8] sm:$0xf]
        %v1199 = vld [vmem:[%s1195 + $0xc] sm:$0xf]
        %v1200 = vld [vmem:[%s1195 + $0x10] sm:$0xf]
        %v1201 = vld [vmem:[%s1195 + $0x14] sm:$0xf]
        %v1202 = vld [vmem:[%s1195 + $0x18] sm:$0xf]
        %v1203 = vld [vmem:[%s1195 + $0x1c] sm:$0xf]
        %v1204 = vld [vmem:[%s1195 + $0x20] sm:$0xf]
        %v1214 = vunpack.c.l.b16 %v1196
        %v1215 = vunpack.c.l.b16 %v1197
        %v1216 = vunpack.c.l.b16 %v1198
        %v1217 = vunpack.c.l.b16 %v1199
        %v1218 = vunpack.c.l.b16 %v1200
        %v1219 = vunpack.c.l.b16 %v1201
        %v1220 = vunpack.c.l.b16 %v1202
        %v1221 = vunpack.c.l.b16 %v1203
        %v1222 = vunpack.c.l.b16 %v1204
        %v1223 = vpack.c.b16 %v1215, %v1214
        %v1224 = vpack.c.b16 %v1217, %v1216
        %v1225 = vpack.c.b16 %v1219, %v1218
        %v1226 = vpack.c.b16 %v1221, %v1220
        %v1227 = vpack.c.b16 %v1222, %v1222
        %v1232 = vsel %vm391, %v1190, 0
        %v1234 = vsel %vm391, %v1192, 0
        %v1236 = vsel %vm391, %v1194, 0
        %v1239 = vsel %vm398, %v1227, 0
        %1241 = vmatprep.subr.bf16.mxu0 0
        %1242 = vmatpush1.bf16.msra.mxu0 %v1223
        %1243 = vmatprep.subr.bf16.mxu0 0
        %1244 = vmatpush1.bf16.msra.mxu0 %v1224
        %1245 = vmatprep.subr.bf16.mxu0 0
        %1246 = vmatpush1.bf16.msra.mxu0 %v1225
        %1247 = vmatprep.subr.bf16.mxu0 0
        %1248 = vmatpush1.bf16.msra.mxu0 %v1226
        %1249 = vmatprep.subr.bf16.mxu0 0
        %1250 = vmatpush1.bf16.msra.mxu0 %v1239
        %1251 = vmatprep.subr.bf16.mxu0 0
        %1252 = vmatpush1.bf16.msra.mxu0 0
        %1253 = vmatprep.subr.bf16.mxu0 0
        %1254 = vmatpush1.bf16.msra.mxu0 0
        %1255 = vmatprep.subr.bf16.mxu0 0
        %1256 = vmatpush1.bf16.msra.mxu0 0
        %1257 = vmatprep.subr.bf16.mxu0 0
        %1258 = vmatpush1.bf16.msra.mxu0 0
        %1259 = vmatprep.subr.bf16.mxu0 0
        %1260 = vmatpush1.bf16.msra.mxu0 0
        %1261 = vmatprep.subr.bf16.mxu0 0
        %1262 = vmatpush1.bf16.msra.mxu0 0
        %1263 = vmatprep.subr.bf16.mxu0 0
        %1264 = vmatpush1.bf16.msra.mxu0 0
        %1265 = vmatprep.subr.bf16.mxu0 0
        %1266 = vmatpush1.bf16.msra.mxu0 0
        %1267 = vmatprep.subr.bf16.mxu0 0
        %1268 = vmatpush1.bf16.msra.mxu0 0
        %1269 = vmatprep.subr.bf16.mxu0 0
        %1270 = vmatpush1.bf16.msra.mxu0 0
        %1271 = vmatprep.subr.bf16.mxu0 0
        %1272 = vmatpush1.bf16.msra.mxu0 0
        %1273 = vmatprep.mubr.bf16.mxu0 0
        %1274 = vmatmul.mubr.bf16.gmra.mrb[0].mxu0 %v1232
        %v1275 = vpop.f32.mrb[0].mxu0
        %v1276 = vadd.f32 0.0, %v1275
        %v1277 = vpop.f32.mrb[0].mxu0
        %v1278 = vpop.f32.mrb[0].mxu0
        %v1279 = vadd.f32 0.0, %v1278
        %v1280 = vpop.f32.mrb[0].mxu0
        %1281 = vmatprep.mubr.bf16.mxu0 0
        %1282 = vmatmul.mubr.bf16.gmra.mrb[0].mxu0 %v1234
        %v1283 = vpop.f32.mrb[0].mxu0
        %v1284 = vadd.f32 0.0, %v1283
        %v1285 = vpop.f32.mrb[0].mxu0
        %v1286 = vpop.f32.mrb[0].mxu0
        %v1287 = vadd.f32 0.0, %v1286
        %v1288 = vpop.f32.mrb[0].mxu0
        %1289 = vmatprep.mubr.bf16.mxu0 0
        %1290 = vmatmul.mubr.bf16.gmra.mrb[0].mxu0 %v1236
        %v1291 = vpop.f32.mrb[0].mxu0
        %v1292 = vadd.f32 0.0, %v1291
        %v1293 = vpop.f32.mrb[0].mxu0
        %v1294 = vpop.f32.mrb[0].mxu0
        %v1295 = vpop.f32.mrb[0].mxu0
        %1296 = vdwg.mxu0
        %v1297 = vadd.f32 %v1109, %v1276
        %v1298 = vadd.f32 %v1110, %v1279
        %v1299 = vadd.f32 %v1111, %v1284
        %v1300 = vadd.f32 %v1112, %v1287
        %v1301 = vadd.f32 %v1113, %v1292
        %1307 = vrot.lane.b32.xlu0 %v1297, 122
        %v1308 = vpop.permute.xlu0 %1307
        %1309 = vrot.lane.b32.xlu0 %v1298, 122
        %v1310 = vpop.permute.xlu0 %1309
        %1311 = vrot.lane.b32.xlu0 %v1299, 122
        %v1312 = vpop.permute.xlu0 %1311
        %1313 = vrot.lane.b32.xlu0 %v1300, 122
        %v1314 = vpop.permute.xlu0 %1313
        %1315 = vrot.lane.b32.xlu0 %v1301, 122
        %v1316 = vpop.permute.xlu0 %1315
        %v1322 = vmax.f32 %v1297, %v1308
        %v1323 = vmax.f32 %v1298, %v1310
        %v1324 = vmax.f32 %v1299, %v1312
        %v1325 = vmax.f32 %v1300, %v1314
        %v1326 = vmax.f32 %v1301, %v1316
        %1332 = vrot.lane.b32.xlu0 %v1322, 116
        %v1333 = vpop.permute.xlu0 %1332
        %1334 = vrot.lane.b32.xlu0 %v1323, 116
        %v1335 = vpop.permute.xlu0 %1334
        %1336 = vrot.lane.b32.xlu0 %v1324, 116
        %v1337 = vpop.permute.xlu0 %1336
        %1338 = vrot.lane.b32.xlu0 %v1325, 116
        %v1339 = vpop.permute.xlu0 %1338
        %1340 = vrot.lane.b32.xlu0 %v1326, 116
        %v1341 = vpop.permute.xlu0 %1340
        %v1347 = vmax.f32 %v1322, %v1333
        %v1348 = vmax.f32 %v1323, %v1335
        %v1349 = vmax.f32 %v1324, %v1337
        %v1350 = vmax.f32 %v1325, %v1339
        %v1351 = vmax.f32 %v1326, %v1341
        %v1353 = vlaneseq
        %v1354 = vshrl.u32 %v1353, 7
        %v1355 = vsub.s32 0, %v1354
        %v1356 = vrot.slane %v172, %v1355
        %v1358 = vadd.f32 %v1347, %v1356
        %v1359 = vadd.f32 %v1348, %v1356
        %v1360 = vadd.f32 %v1349, %v1356
        %v1361 = vadd.f32 %v1350, %v1356
        %v1362 = vadd.f32 %v1351, %v1356
        %v1363 = vmax.f32 %v1358, 0.0
        %v1364 = vmax.f32 %v1359, 0.0
        %v1365 = vmax.f32 %v1360, 0.0
        %v1366 = vmax.f32 %v1361, 0.0
        %v1367 = vmax.f32 %v1362, 0.0
        %s1368 = smul.u32 %s174, 40
        %s1369 = scalar_lea.vmem %s170, %s1368
        %vm1370 = vcmask 48128
        %1371 = vst.msk [vmem:[%s1369] sm:$0xff] %vm1370, %v1363
        %1372 = vst.msk [vmem:[%s1369 + $0x8] sm:$0xff] %vm1370, %v1364
        %1373 = vst.msk [vmem:[%s1369 + $0x10] sm:$0xff] %vm1370, %v1365
        %1374 = vst.msk [vmem:[%s1369 + $0x18] sm:$0xff] %vm1370, %v1366
        %vm1375 = vcmask 40960
        %1376 = vst.msk [vmem:[%s1369 + $0x20] sm:$0x1] %vm1375, %v1367
      $region37: #{gaf_attn_net_forward.4} parent=31 // loop_footer
        %s178 = sadd.s32 1, %s174
      $region38: #{gaf_attn_net_forward.4} parent=31 // loop_footer_branch
        %173 = sbr.rel target = $region34
      $region39: #{gaf_attn_net_forward.4} parent=31 // loop_exit
        _
      %p1377 = scmp.lt.s32.totalorder %s14, 1
      %s1378 = scalar_select %p1377, %s14, 1
      %s1379 = smul.addr %s1378, 165
      %s1380 = smul.addr %s1379, 8
      %s1381 = scalar_lea.vmem %s3, %s1380
      // Predicated region
      $region40: #{gaf_attn_net_forward.4} parent=31 // pred_check
        %p1382 = pneg %p100
      $region41: #{gaf_attn_net_forward.4} parent=31 // pred_check_branch
        %1384 = sbr.rel (%p1382) target = $region43
      $region42: #{gaf_attn_net_forward.4} parent=31 // pred_region
        _
      $region43: #{gaf_attn_net_forward.4} parent=31 // pred_fallthru
        _
    $region32: #{gaf_attn_net_forward.4} parent=5 // pred_fallthru
      _
    %p1385 = scmp.le.s32.totalorder 2, %s9
    // Predicated region
    $region44: #{gaf_attn_net_forward.4} parent=5 // pred_check
      %p1386 = pneg %p1385
    $region45: #{gaf_attn_net_forward.4} parent=5 // pred_check_branch
      %1388 = sbr.rel (%p1386) target = $region47
    $region46: #{gaf_attn_net_forward.4} parent=5 // pred_region
      %s1389 = ssub.s32 %s9, 2
      // Predicated region
      $region48: #{gaf_attn_net_forward.4} parent=46 // pred_check
        %p1390 = pneg %p106
      $region49: #{gaf_attn_net_forward.4} parent=46 // pred_check_branch
        %1392 = sbr.rel (%p1390) target = $region51
      $region50: #{gaf_attn_net_forward.4} parent=46 // pred_region
        %p1393 = scmp.lt.s32.totalorder %s15, 1
        %s1394 = scalar_select %p1393, %s15, 1
        %s1395 = smul.addr %s1394, 165
        %s1396 = smul.addr %s1395, 8
        %s1397 = scalar_lea.vmem %s3, %s1396
      $region51: #{gaf_attn_net_forward.4} parent=46 // pred_fallthru
        _
    $region47: #{gaf_attn_net_forward.4} parent=5 // pred_fallthru
      _
  $region6: #{gaf_attn_net_forward.4} parent=0 // loop_footer
    %s13 = sadd.s32 1, %s9
  $region7: #{gaf_attn_net_forward.4} parent=0 // loop_footer_branch
    %8 = sbr.rel target = $region3
  $region8: #{gaf_attn_net_forward.4} parent=0 // loop_exit
    _

// kernel: gaf_attn_net_forward.5
$region0: #{gaf_attn_net_forward.5}
  #allocation0 [shape = 'u32[]', space=smem, size = 0x4, offset = 0x4, fixed_abs, tag = 'smem constant byte address 0x4 - core index']
  #allocation1 [shape = 'u32[144,128]{1,0:T(1,128)}', space=vmem, size = 0x12000, scoped, tag = 'internal scratch']
  #allocation2 [shape = 'f32[1,1]{1,0:T(1,128)S(1)}', space=vmem, size = 0x200, scoped, tag = 'scoped memory for gaf_attn_net_forward.5']
  #allocation3 [shape = 'f32[1,1]{1,0:T(1,128)S(1)}', space=vmem, size = 0x200, scoped, tag = 'scoped memory for gaf_attn_net_forward.5']
  %s0 = inlined_call_operand.vmem [shape: f32[2,6534], index: 0, kind: input, shape index: {}]
  %s1 = inlined_call_operand.vmem [shape: bf16[6534,256], index: 1, kind: input, shape index: {}]
  %s2 = inlined_call_operand.vmem [shape: f32[1,256], index: 2, kind: input, shape index: {}]
  %s3 = inlined_call_operand.vmem [shape: f32[1,256], index: 3, kind: input, shape index: {}]
  %s4 = inlined_call_operand.<no memory space> [shape: f32[1,1], index: 4, kind: input, shape index: {}]
  %s5 = inlined_call_operand.vmem [shape: f32[1,6534], index: 5, kind: input, shape index: {}]
  %s6 = inlined_call_operand.<no memory space> [shape: f32[1,1], index: 6, kind: input, shape index: {}]
  %s7 = inlined_call_operand.vmem [shape: f32[2,1], index: 7, kind: output, shape index: {}]
  %s8 = sld [smem:[#allocation0]]
  $region38: #{gaf_attn_net_forward.5} parent=0
    _
  %s10 = ssub.s32 1, %s8
  %s11 = scalar_select 0, %s10, %s8
  %v12 = vstv %s4
  %13 = vst [vmem:[#allocation2] sm:$0x1] %v12
  %v14 = vstv %s6
  %15 = vst [vmem:[#allocation3] sm:$0x1] %v14
  // Predicated region
  $region2: #{gaf_attn_net_forward.5} parent=0 // pred_check
    _
  $region3: #{gaf_attn_net_forward.5} parent=0 // pred_check_branch
    %17 = sbr.rel (0) target = $region5
  $region4: #{gaf_attn_net_forward.5} parent=0 // pred_region
    _
  $region5: #{gaf_attn_net_forward.5} parent=0 // pred_fallthru
    _
  // Predicated region
  $region6: #{gaf_attn_net_forward.5} parent=0 // pred_check
    _
  $region7: #{gaf_attn_net_forward.5} parent=0 // pred_check_branch
    %19 = sbr.rel (0) target = $region9
  $region8: #{gaf_attn_net_forward.5} parent=0 // pred_region
    _
  $region9: #{gaf_attn_net_forward.5} parent=0 // pred_fallthru
    _
  // Predicated region
  $region10: #{gaf_attn_net_forward.5} parent=0 // pred_check
    _
  $region11: #{gaf_attn_net_forward.5} parent=0 // pred_check_branch
    %21 = sbr.rel (0) target = $region13
  $region12: #{gaf_attn_net_forward.5} parent=0 // pred_region
    _
  $region13: #{gaf_attn_net_forward.5} parent=0 // pred_fallthru
    _
  // Predicated region
  $region14: #{gaf_attn_net_forward.5} parent=0 // pred_check
    _
  $region15: #{gaf_attn_net_forward.5} parent=0 // pred_check_branch
    %23 = sbr.rel (0) target = $region17
  $region16: #{gaf_attn_net_forward.5} parent=0 // pred_region
    _
  $region17: #{gaf_attn_net_forward.5} parent=0 // pred_fallthru
    _
  // Predicated region
  $region18: #{gaf_attn_net_forward.5} parent=0 // pred_check
    _
  $region19: #{gaf_attn_net_forward.5} parent=0 // pred_check_branch
    %25 = sbr.rel (0) target = $region21
  $region20: #{gaf_attn_net_forward.5} parent=0 // pred_region
    _
  $region21: #{gaf_attn_net_forward.5} parent=0 // pred_fallthru
    _
  // Predicated region
  $region22: #{gaf_attn_net_forward.5} parent=0 // pred_check
    _
  $region23: #{gaf_attn_net_forward.5} parent=0 // pred_check_branch
    %27 = sbr.rel (0) target = $region25
  $region24: #{gaf_attn_net_forward.5} parent=0 // pred_region
    _
  $region25: #{gaf_attn_net_forward.5} parent=0 // pred_fallthru
    _
  // Predicated region
  $region26: #{gaf_attn_net_forward.5} parent=0 // pred_check
    _
  $region27: #{gaf_attn_net_forward.5} parent=0 // pred_check_branch
    %29 = sbr.rel (0) target = $region29
  $region28: #{gaf_attn_net_forward.5} parent=0 // pred_region
    _
  $region29: #{gaf_attn_net_forward.5} parent=0 // pred_fallthru
    _
  %v31 = vld [vmem:[%s0] sm:$0xff]
  %v32 = vld [vmem:[%s0 + $0x8] sm:$0xff]
  %v33 = vld [vmem:[%s0 + $0x10] sm:$0xff]
  %v34 = vld [vmem:[%s0 + $0x18] sm:$0xff]
  %v35 = vld [vmem:[%s0 + $0x20] sm:$0xff]
  %v36 = vld [vmem:[%s0 + $0x28] sm:$0xff]
  %v37 = vld [vmem:[%s0 + $0x30] sm:$0xff]
  %v38 = vld [vmem:[%s0 + $0x38] sm:$0xff]
  %v39 = vld [vmem:[%s0 + $0x40] sm:$0xff]
  %v40 = vld [vmem:[%s0 + $0x48] sm:$0xff]
  %v41 = vld [vmem:[%s0 + $0x50] sm:$0xff]
  %v42 = vld [vmem:[%s0 + $0x58] sm:$0xff]
  %v43 = vld [vmem:[%s0 + $0x60] sm:$0xff]
  %v57 = vcombine.high %v31, %v31
  %v59 = vunpack.c.l.s4 1983009808
  %v60 = vunpack.c.0.s8 %v59
  %v61 = vlaneseq
  %v62 = vshrl.u32 %v61, 7
  %v63 = vsub.s32 %v60, %v62
  %v64 = vrot.slane %v31, %v63
  %v66 = vunpack.c.l.s4 1983009808
  %v67 = vunpack.c.0.s8 %v66
  %v68 = vlaneseq
  %v69 = vshrl.u32 %v68, 7
  %v70 = vsub.s32 %v67, %v69
  %v71 = vrot.slane %v57, %v70
  %v72 = vcombine.high %v64, %v64
  %v73 = vcombine.high %v71, %v71
  %v74 = vcombine.high %v32, %v32
  %v76 = vunpack.c.l.s4 1983009808
  %v77 = vunpack.c.0.s8 %v76
  %v78 = vlaneseq
  %v79 = vshrl.u32 %v78, 7
  %v80 = vsub.s32 %v77, %v79
  %v81 = vrot.slane %v32, %v80
  %v83 = vunpack.c.l.s4 1983009808
  %v84 = vunpack.c.0.s8 %v83
  %v85 = vlaneseq
  %v86 = vshrl.u32 %v85, 7
  %v87 = vsub.s32 %v84, %v86
  %v88 = vrot.slane %v74, %v87
  %v89 = vcombine.high %v81, %v81
  %v90 = vcombine.high %v88, %v88
  %v91 = vcombine.high %v33, %v33
  %v93 = vunpack.c.l.s4 1983009808
  %v94 = vunpack.c.0.s8 %v93
  %v95 = vlaneseq
  %v96 = vshrl.u32 %v95, 7
  %v97 = vsub.s32 %v94, %v96
  %v98 = vrot.slane %v33, %v97
  %v100 = vunpack.c.l.s4 1983009808
  %v101 = vunpack.c.0.s8 %v100
  %v102 = vlaneseq
  %v103 = vshrl.u32 %v102, 7
  %v104 = vsub.s32 %v101, %v103
  %v105 = vrot.slane %v91, %v104
  %v106 = vcombine.high %v98, %v98
  %v107 = vcombine.high %v105, %v105
  %v108 = vcombine.high %v34, %v34
  %v110 = vunpack.c.l.s4 1983009808
  %v111 = vunpack.c.0.s8 %v110
  %v112 = vlaneseq
  %v113 = vshrl.u32 %v112, 7
  %v114 = vsub.s32 %v111, %v113
  %v115 = vrot.slane %v34, %v114
  %v117 = vunpack.c.l.s4 1983009808
  %v118 = vunpack.c.0.s8 %v117
  %v119 = vlaneseq
  %v120 = vshrl.u32 %v119, 7
  %v121 = vsub.s32 %v118, %v120
  %v122 = vrot.slane %v108, %v121
  %v123 = vcombine.high %v115, %v115
  %v124 = vcombine.high %v122, %v122
  %v125 = vcombine.high %v35, %v35
  %v127 = vunpack.c.l.s4 1983009808
  %v128 = vunpack.c.0.s8 %v127
  %v129 = vlaneseq
  %v130 = vshrl.u32 %v129, 7
  %v131 = vsub.s32 %v128, %v130
  %v132 = vrot.slane %v35, %v131
  %v134 = vunpack.c.l.s4 1983009808
  %v135 = vunpack.c.0.s8 %v134
  %v136 = vlaneseq
  %v137 = vshrl.u32 %v136, 7
  %v138 = vsub.s32 %v135, %v137
  %v139 = vrot.slane %v125, %v138
  %v140 = vcombine.high %v132, %v132
  %v141 = vcombine.high %v139, %v139
  %v142 = vcombine.high %v36, %v36
  %v144 = vunpack.c.l.s4 1983009808
  %v145 = vunpack.c.0.s8 %v144
  %v146 = vlaneseq
  %v147 = vshrl.u32 %v146, 7
  %v148 = vsub.s32 %v145, %v147
  %v149 = vrot.slane %v36, %v148
  %v151 = vunpack.c.l.s4 1983009808
  %v152 = vunpack.c.0.s8 %v151
  %v153 = vlaneseq
  %v154 = vshrl.u32 %v153, 7
  %v155 = vsub.s32 %v152, %v154
  %v156 = vrot.slane %v142, %v155
  %v157 = vcombine.high %v149, %v149
  %v158 = vcombine.high %v156, %v156
  %v159 = vcombine.high %v37, %v37
  %v161 = vunpack.c.l.s4 1983009808
  %v162 = vunpack.c.0.s8 %v161
  %v163 = vlaneseq
  %v164 = vshrl.u32 %v163, 7
  %v165 = vsub.s32 %v162, %v164
  %v166 = vrot.slane %v37, %v165
  %v168 = vunpack.c.l.s4 1983009808
  %v169 = vunpack.c.0.s8 %v168
  %v170 = vlaneseq
  %v171 = vshrl.u32 %v170, 7
  %v172 = vsub.s32 %v169, %v171
  %v173 = vrot.slane %v159, %v172
  %v174 = vcombine.high %v166, %v166
  %v175 = vcombine.high %v173, %v173
  %v176 = vcombine.high %v38, %v38
  %v178 = vunpack.c.l.s4 1983009808
  %v179 = vunpack.c.0.s8 %v178
  %v180 = vlaneseq
  %v181 = vshrl.u32 %v180, 7
  %v182 = vsub.s32 %v179, %v181
  %v183 = vrot.slane %v38, %v182
  %v185 = vunpack.c.l.s4 1983009808
  %v186 = vunpack.c.0.s8 %v185
  %v187 = vlaneseq
  %v188 = vshrl.u32 %v187, 7
  %v189 = vsub.s32 %v186, %v188
  %v190 = vrot.slane %v176, %v189
  %v191 = vcombine.high %v183, %v183
  %v192 = vcombine.high %v190, %v190
  %v193 = vcombine.high %v39, %v39
  %v195 = vunpack.c.l.s4 1983009808
  %v196 = vunpack.c.0.s8 %v195
  %v197 = vlaneseq
  %v198 = vshrl.u32 %v197, 7
  %v199 = vsub.s32 %v196, %v198
  %v200 = vrot.slane %v39, %v199
  %v202 = vunpack.c.l.s4 1983009808
  %v203 = vunpack.c.0.s8 %v202
  %v204 = vlaneseq
  %v205 = vshrl.u32 %v204, 7
  %v206 = vsub.s32 %v203, %v205
  %v207 = vrot.slane %v193, %v206
  %v208 = vcombine.high %v200, %v200
  %v209 = vcombine.high %v207, %v207
  %v210 = vcombine.high %v40, %v40
  %v212 = vunpack.c.l.s4 1983009808
  %v213 = vunpack.c.0.s8 %v212
  %v214 = vlaneseq
  %v215 = vshrl.u32 %v214, 7
  %v216 = vsub.s32 %v213, %v215
  %v217 = vrot.slane %v40, %v216
  %v219 = vunpack.c.l.s4 1983009808
  %v220 = vunpack.c.0.s8 %v219
  %v221 = vlaneseq
  %v222 = vshrl.u32 %v221, 7
  %v223 = vsub.s32 %v220, %v222
  %v224 = vrot.slane %v210, %v223
  %v225 = vcombine.high %v217, %v217
  %v226 = vcombine.high %v224, %v224
  %v227 = vcombine.high %v41, %v41
  %v229 = vunpack.c.l.s4 1983009808
  %v230 = vunpack.c.0.s8 %v229
  %v231 = vlaneseq
  %v232 = vshrl.u32 %v231, 7
  %v233 = vsub.s32 %v230, %v232
  %v234 = vrot.slane %v41, %v233
  %v236 = vunpack.c.l.s4 1983009808
  %v237 = vunpack.c.0.s8 %v236
  %v238 = vlaneseq
  %v239 = vshrl.u32 %v238, 7
  %v240 = vsub.s32 %v237, %v239
  %v241 = vrot.slane %v227, %v240
  %v242 = vcombine.high %v234, %v234
  %v243 = vcombine.high %v241, %v241
  %v244 = vcombine.high %v42, %v42
  %v246 = vunpack.c.l.s4 1983009808
  %v247 = vunpack.c.0.s8 %v246
  %v248 = vlaneseq
  %v249 = vshrl.u32 %v248, 7
  %v250 = vsub.s32 %v247, %v249
  %v251 = vrot.slane %v42, %v250
  %v253 = vunpack.c.l.s4 1983009808
  %v254 = vunpack.c.0.s8 %v253
  %v255 = vlaneseq
  %v256 = vshrl.u32 %v255, 7
  %v257 = vsub.s32 %v254, %v256
  %v258 = vrot.slane %v244, %v257
  %v259 = vcombine.high %v251, %v251
  %v260 = vcombine.high %v258, %v258
  %v261 = vcombine.high %v43, %v43
  %v263 = vunpack.c.l.s4 1983009808
  %v264 = vunpack.c.0.s8 %v263
  %v265 = vlaneseq
  %v266 = vshrl.u32 %v265, 7
  %v267 = vsub.s32 %v264, %v266
  %v268 = vrot.slane %v43, %v267
  %v270 = vunpack.c.l.s4 1983009808
  %v271 = vunpack.c.0.s8 %v270
  %v272 = vlaneseq
  %v273 = vshrl.u32 %v272, 7
  %v274 = vsub.s32 %v271, %v273
  %v275 = vrot.slane %v261, %v274
  %v276 = vcombine.high %v268, %v268
  %v277 = vcombine.high %v275, %v275
  %v330 = vpack.c.bf16 %v64, %v64
  %v331 = vpack.c.bf16 %v72, %v72
  %v332 = vpack.c.bf16 %v71, %v71
  %v333 = vpack.c.bf16 %v73, %v73
  %v334 = vpack.c.bf16 %v81, %v81
  %v335 = vpack.c.bf16 %v89, %v89
  %v336 = vpack.c.bf16 %v88, %v88
  %v337 = vpack.c.bf16 %v90, %v90
  %v338 = vpack.c.bf16 %v98, %v98
  %v339 = vpack.c.bf16 %v106, %v106
  %v340 = vpack.c.bf16 %v105, %v105
  %v341 = vpack.c.bf16 %v107, %v107
  %v342 = vpack.c.bf16 %v115, %v115
  %v343 = vpack.c.bf16 %v123, %v123
  %v344 = vpack.c.bf16 %v122, %v122
  %v345 = vpack.c.bf16 %v124, %v124
  %v346 = vpack.c.bf16 %v132, %v132
  %v347 = vpack.c.bf16 %v140, %v140
  %v348 = vpack.c.bf16 %v139, %v139
  %v349 = vpack.c.bf16 %v141, %v141
  %v350 = vpack.c.bf16 %v149, %v149
  %v351 = vpack.c.bf16 %v157, %v157
  %v352 = vpack.c.bf16 %v156, %v156
  %v353 = vpack.c.bf16 %v158, %v158
  %v354 = vpack.c.bf16 %v166, %v166
  %v355 = vpack.c.bf16 %v174, %v174
  %v356 = vpack.c.bf16 %v173, %v173
  %v357 = vpack.c.bf16 %v175, %v175
  %v358 = vpack.c.bf16 %v183, %v183
  %v359 = vpack.c.bf16 %v191, %v191
  %v360 = vpack.c.bf16 %v190, %v190
  %v361 = vpack.c.bf16 %v192, %v192
  %v362 = vpack.c.bf16 %v200, %v200
  %v363 = vpack.c.bf16 %v208, %v208
  %v364 = vpack.c.bf16 %v207, %v207
  %v365 = vpack.c.bf16 %v209, %v209
  %v366 = vpack.c.bf16 %v217, %v217
  %v367 = vpack.c.bf16 %v225, %v225
  %v368 = vpack.c.bf16 %v224, %v224
  %v369 = vpack.c.bf16 %v226, %v226
  %v370 = vpack.c.bf16 %v234, %v234
  %v371 = vpack.c.bf16 %v242, %v242
  %v372 = vpack.c.bf16 %v241, %v241
  %v373 = vpack.c.bf16 %v243, %v243
  %v374 = vpack.c.bf16 %v251, %v251
  %v375 = vpack.c.bf16 %v259, %v259
  %v376 = vpack.c.bf16 %v258, %v258
  %v377 = vpack.c.bf16 %v260, %v260
  %v378 = vpack.c.bf16 %v268, %v268
  %v379 = vpack.c.bf16 %v276, %v276
  %v380 = vpack.c.bf16 %v275, %v275
  %v381 = vpack.c.bf16 %v277, %v277
  %v382 = vld [vmem:[%s1] sm:$0xff]
  %v383 = vld [vmem:[%s1 + $0x8] sm:$0xff]
  %v384 = vld [vmem:[%s1 + $0x10] sm:$0xff]
  %v385 = vld [vmem:[%s1 + $0x18] sm:$0xff]
  %v386 = vld [vmem:[%s1 + $0x20] sm:$0xff]
  %v387 = vld [vmem:[%s1 + $0x28] sm:$0xff]
  %v388 = vld [vmem:[%s1 + $0x30] sm:$0xff]
  %v389 = vld [vmem:[%s1 + $0x38] sm:$0xff]
  %v390 = vld [vmem:[%s1 + $0x40] sm:$0xff]
  %v391 = vld [vmem:[%s1 + $0x48] sm:$0xff]
  %v392 = vld [vmem:[%s1 + $0x50] sm:$0xff]
  %v393 = vld [vmem:[%s1 + $0x58] sm:$0xff]
  %v394 = vld [vmem:[%s1 + $0x60] sm:$0xff]
  %v395 = vld [vmem:[%s1 + $0x68] sm:$0xff]
  %v396 = vld [vmem:[%s1 + $0x70] sm:$0xff]
  %v397 = vld [vmem:[%s1 + $0x78] sm:$0xff]
  %v398 = vld [vmem:[%s1 + $0x80] sm:$0xff]
  %v399 = vld [vmem:[%s1 + $0x88] sm:$0xff]
  %v400 = vld [vmem:[%s1 + $0x90] sm:$0xff]
  %v401 = vld [vmem:[%s1 + $0x98] sm:$0xff]
  %v402 = vld [vmem:[%s1 + $0xa0] sm:$0xff]
  %v403 = vld [vmem:[%s1 + $0xa8] sm:$0xff]
  %v404 = vld [vmem:[%s1 + $0xb0] sm:$0xff]
  %v405 = vld [vmem:[%s1 + $0xb8] sm:$0xff]
  %v406 = vld [vmem:[%s1 + $0xc0] sm:$0xff]
  %v407 = vld [vmem:[%s1 + $0xc8] sm:$0xff]
  %v408 = vld [vmem:[%s1 + $0xd0] sm:$0xff]
  %v409 = vld [vmem:[%s1 + $0xd8] sm:$0xff]
  %v410 = vld [vmem:[%s1 + $0xe0] sm:$0xff]
  %v411 = vld [vmem:[%s1 + $0xe8] sm:$0xff]
  %v412 = vld [vmem:[%s1 + $0xf0] sm:$0xff]
  %v413 = vld [vmem:[%s1 + $0xf8] sm:$0xff]
  %v414 = vld [vmem:[%s1 + $0x100] sm:$0xff]
  %v415 = vld [vmem:[%s1 + $0x108] sm:$0xff]
  %v416 = vld [vmem:[%s1 + $0x110] sm:$0xff]
  %v417 = vld [vmem:[%s1 + $0x118] sm:$0xff]
  %v418 = vld [vmem:[%s1 + $0x120] sm:$0xff]
  %v419 = vld [vmem:[%s1 + $0x128] sm:$0xff]
  %v420 = vld [vmem:[%s1 + $0x130] sm:$0xff]
  %v421 = vld [vmem:[%s1 + $0x138] sm:$0xff]
  %v422 = vld [vmem:[%s1 + $0x140] sm:$0xff]
  %v423 = vld [vmem:[%s1 + $0x148] sm:$0xff]
  %v424 = vld [vmem:[%s1 + $0x150] sm:$0xff]
  %v425 = vld [vmem:[%s1 + $0x158] sm:$0xff]
  %v426 = vld [vmem:[%s1 + $0x160] sm:$0xff]
  %v427 = vld [vmem:[%s1 + $0x168] sm:$0xff]
  %v428 = vld [vmem:[%s1 + $0x170] sm:$0xff]
  %v429 = vld [vmem:[%s1 + $0x178] sm:$0xff]
  %v430 = vld [vmem:[%s1 + $0x180] sm:$0xff]
  %v431 = vld [vmem:[%s1 + $0x188] sm:$0xff]
  %v432 = vld [vmem:[%s1 + $0x190] sm:$0xff]
  %v433 = vld [vmem:[%s1 + $0x198] sm:$0xff]
  %v434 = vld [vmem:[%s1 + $0x1a0] sm:$0xff]
  %v435 = vld [vmem:[%s1 + $0x1a8] sm:$0xff]
  %v436 = vld [vmem:[%s1 + $0x1b0] sm:$0xff]
  %v437 = vld [vmem:[%s1 + $0x1b8] sm:$0xff]
  %v438 = vld [vmem:[%s1 + $0x1c0] sm:$0xff]
  %v439 = vld [vmem:[%s1 + $0x1c8] sm:$0xff]
  %v440 = vld [vmem:[%s1 + $0x1d0] sm:$0xff]
  %v441 = vld [vmem:[%s1 + $0x1d8] sm:$0xff]
  %v442 = vld [vmem:[%s1 + $0x1e0] sm:$0xff]
  %v443 = vld [vmem:[%s1 + $0x1e8] sm:$0xff]
  %v444 = vld [vmem:[%s1 + $0x1f0] sm:$0xff]
  %v445 = vld [vmem:[%s1 + $0x1f8] sm:$0xff]
  %v446 = vld [vmem:[%s1 + $0x200] sm:$0xff]
  %v447 = vld [vmem:[%s1 + $0x208] sm:$0xff]
  %v448 = vld [vmem:[%s1 + $0x210] sm:$0xff]
  %v449 = vld [vmem:[%s1 + $0x218] sm:$0xff]
  %v450 = vld [vmem:[%s1 + $0x220] sm:$0xff]
  %v451 = vld [vmem:[%s1 + $0x228] sm:$0xff]
  %v452 = vld [vmem:[%s1 + $0x230] sm:$0xff]
  %v453 = vld [vmem:[%s1 + $0x238] sm:$0xff]
  %v454 = vld [vmem:[%s1 + $0x240] sm:$0xff]
  %v455 = vld [vmem:[%s1 + $0x248] sm:$0xff]
  %v456 = vld [vmem:[%s1 + $0x250] sm:$0xff]
  %v457 = vld [vmem:[%s1 + $0x258] sm:$0xff]
  %v458 = vld [vmem:[%s1 + $0x260] sm:$0xff]
  %v459 = vld [vmem:[%s1 + $0x268] sm:$0xff]
  %v460 = vld [vmem:[%s1 + $0x270] sm:$0xff]
  %v461 = vld [vmem:[%s1 + $0x278] sm:$0xff]
  %v462 = vld [vmem:[%s1 + $0x280] sm:$0xff]
  %v463 = vld [vmem:[%s1 + $0x288] sm:$0xff]
  %v464 = vld [vmem:[%s1 + $0x290] sm:$0xff]
  %v465 = vld [vmem:[%s1 + $0x298] sm:$0xff]
  %v466 = vld [vmem:[%s1 + $0x2a0] sm:$0xff]
  %v467 = vld [vmem:[%s1 + $0x2a8] sm:$0xff]
  %v468 = vld [vmem:[%s1 + $0x2b0] sm:$0xff]
  %v469 = vld [vmem:[%s1 + $0x2b8] sm:$0xff]
  %v470 = vld [vmem:[%s1 + $0x2c0] sm:$0xff]
  %v471 = vld [vmem:[%s1 + $0x2c8] sm:$0xff]
  %v472 = vld [vmem:[%s1 + $0x2d0] sm:$0xff]
  %v473 = vld [vmem:[%s1 + $0x2d8] sm:$0xff]
  %v474 = vld [vmem:[%s1 + $0x2e0] sm:$0xff]
  %v475 = vld [vmem:[%s1 + $0x2e8] sm:$0xff]
  %v476 = vld [vmem:[%s1 + $0x2f0] sm:$0xff]
  %v477 = vld [vmem:[%s1 + $0x2f8] sm:$0xff]
  %v478 = vld [vmem:[%s1 + $0x300] sm:$0xff]
  %v479 = vld [vmem:[%s1 + $0x308] sm:$0xff]
  %v480 = vld [vmem:[%s1 + $0x310] sm:$0xff]
  %v481 = vld [vmem:[%s1 + $0x318] sm:$0xff]
  %v482 = vld [vmem:[%s1 + $0x320] sm:$0xff]
  %v483 = vld [vmem:[%s1 + $0x328] sm:$0xff]
  %v484 = vld [vmem:[%s1 + $0x330] sm:$0xff]
  %v485 = vld [vmem:[%s1 + $0x338] sm:$0xff]
  %v486 = vld [vmem:[%s1 + $0x340] sm:$0xff]
  %v487 = vld [vmem:[%s1 + $0x348] sm:$0xff]
  %v488 = vld [vmem:[%s1 + $0x350] sm:$0xff]
  %v489 = vld [vmem:[%s1 + $0x358] sm:$0xff]
  %v490 = vld [vmem:[%s1 + $0x360] sm:$0xff]
  %v491 = vld [vmem:[%s1 + $0x368] sm:$0xff]
  %v492 = vld [vmem:[%s1 + $0x370] sm:$0xff]
  %v493 = vld [vmem:[%s1 + $0x378] sm:$0xff]
  %v494 = vld [vmem:[%s1 + $0x380] sm:$0xff]
  %v495 = vld [vmem:[%s1 + $0x388] sm:$0xff]
  %v496 = vld [vmem:[%s1 + $0x390] sm:$0xff]
  %v497 = vld [vmem:[%s1 + $0x398] sm:$0xff]
  %v498 = vld [vmem:[%s1 + $0x3a0] sm:$0xff]
  %v499 = vld [vmem:[%s1 + $0x3a8] sm:$0xff]
  %v500 = vld [vmem:[%s1 + $0x3b0] sm:$0xff]
  %v501 = vld [vmem:[%s1 + $0x3b8] sm:$0xff]
  %v502 = vld [vmem:[%s1 + $0x3c0] sm:$0xff]
  %v503 = vld [vmem:[%s1 + $0x3c8] sm:$0xff]
  %v504 = vld [vmem:[%s1 + $0x3d0] sm:$0xff]
  %v505 = vld [vmem:[%s1 + $0x3d8] sm:$0xff]
  %v506 = vld [vmem:[%s1 + $0x3e0] sm:$0xff]
  %v507 = vld [vmem:[%s1 + $0x3e8] sm:$0xff]
  %v508 = vld [vmem:[%s1 + $0x3f0] sm:$0xff]
  %v509 = vld [vmem:[%s1 + $0x3f8] sm:$0xff]
  %v510 = vld [vmem:[%s1 + $0x400] sm:$0xff]
  %v511 = vld [vmem:[%s1 + $0x408] sm:$0xff]
  %v512 = vld [vmem:[%s1 + $0x410] sm:$0xff]
  %v513 = vld [vmem:[%s1 + $0x418] sm:$0xff]
  %v514 = vld [vmem:[%s1 + $0x420] sm:$0xff]
  %v515 = vld [vmem:[%s1 + $0x428] sm:$0xff]
  %v516 = vld [vmem:[%s1 + $0x430] sm:$0xff]
  %v517 = vld [vmem:[%s1 + $0x438] sm:$0xff]
  %v518 = vld [vmem:[%s1 + $0x440] sm:$0xff]
  %v519 = vld [vmem:[%s1 + $0x448] sm:$0xff]
  %v520 = vld [vmem:[%s1 + $0x450] sm:$0xff]
  %v521 = vld [vmem:[%s1 + $0x458] sm:$0xff]
  %v522 = vld [vmem:[%s1 + $0x460] sm:$0xff]
  %v523 = vld [vmem:[%s1 + $0x468] sm:$0xff]
  %v524 = vld [vmem:[%s1 + $0x470] sm:$0xff]
  %v525 = vld [vmem:[%s1 + $0x478] sm:$0xff]
  %v526 = vld [vmem:[%s1 + $0x480] sm:$0xff]
  %v527 = vld [vmem:[%s1 + $0x488] sm:$0xff]
  %v528 = vld [vmem:[%s1 + $0x490] sm:$0xff]
  %v529 = vld [vmem:[%s1 + $0x498] sm:$0xff]
  %v530 = vld [vmem:[%s1 + $0x4a0] sm:$0xff]
  %v531 = vld [vmem:[%s1 + $0x4a8] sm:$0xff]
  %v532 = vld [vmem:[%s1 + $0x4b0] sm:$0xff]
  %v533 = vld [vmem:[%s1 + $0x4b8] sm:$0xff]
  %v534 = vld [vmem:[%s1 + $0x4c0] sm:$0xff]
  %v535 = vld [vmem:[%s1 + $0x4c8] sm:$0xff]
  %v536 = vld [vmem:[%s1 + $0x4d0] sm:$0xff]
  %v537 = vld [vmem:[%s1 + $0x4d8] sm:$0xff]
  %v538 = vld [vmem:[%s1 + $0x4e0] sm:$0xff]
  %v539 = vld [vmem:[%s1 + $0x4e8] sm:$0xff]
  %v540 = vld [vmem:[%s1 + $0x4f0] sm:$0xff]
  %v541 = vld [vmem:[%s1 + $0x4f8] sm:$0xff]
  %v542 = vld [vmem:[%s1 + $0x500] sm:$0xff]
  %v543 = vld [vmem:[%s1 + $0x508] sm:$0xff]
  %v544 = vld [vmem:[%s1 + $0x510] sm:$0xff]
  %v545 = vld [vmem:[%s1 + $0x518] sm:$0xff]
  %v546 = vld [vmem:[%s1 + $0x520] sm:$0xff]
  %v547 = vld [vmem:[%s1 + $0x528] sm:$0xff]
  %v548 = vld [vmem:[%s1 + $0x530] sm:$0xff]
  %v549 = vld [vmem:[%s1 + $0x538] sm:$0xff]
  %v550 = vld [vmem:[%s1 + $0x540] sm:$0xff]
  %v551 = vld [vmem:[%s1 + $0x548] sm:$0xff]
  %v552 = vld [vmem:[%s1 + $0x550] sm:$0xff]
  %v553 = vld [vmem:[%s1 + $0x558] sm:$0xff]
  %v554 = vld [vmem:[%s1 + $0x560] sm:$0xff]
  %v555 = vld [vmem:[%s1 + $0x568] sm:$0xff]
  %v556 = vld [vmem:[%s1 + $0x570] sm:$0xff]
  %v557 = vld [vmem:[%s1 + $0x578] sm:$0xff]
  %v558 = vld [vmem:[%s1 + $0x580] sm:$0xff]
  %v559 = vld [vmem:[%s1 + $0x588] sm:$0xff]
  %v560 = vld [vmem:[%s1 + $0x590] sm:$0xff]
  %v561 = vld [vmem:[%s1 + $0x598] sm:$0xff]
  %v562 = vld [vmem:[%s1 + $0x5a0] sm:$0xff]
  %v563 = vld [vmem:[%s1 + $0x5a8] sm:$0xff]
  %v564 = vld [vmem:[%s1 + $0x5b0] sm:$0xff]
  %v565 = vld [vmem:[%s1 + $0x5b8] sm:$0xff]
  %v566 = vld [vmem:[%s1 + $0x5c0] sm:$0xff]
  %v567 = vld [vmem:[%s1 + $0x5c8] sm:$0xff]
  %v568 = vld [vmem:[%s1 + $0x5d0] sm:$0xff]
  %v569 = vld [vmem:[%s1 + $0x5d8] sm:$0xff]
  %v570 = vld [vmem:[%s1 + $0x5e0] sm:$0xff]
  %v571 = vld [vmem:[%s1 + $0x5e8] sm:$0xff]
  %v572 = vld [vmem:[%s1 + $0x5f0] sm:$0xff]
  %v573 = vld [vmem:[%s1 + $0x5f8] sm:$0xff]
  %v574 = vld [vmem:[%s1 + $0x600] sm:$0xff]
  %v575 = vld [vmem:[%s1 + $0x608] sm:$0xff]
  %v576 = vld [vmem:[%s1 + $0x610] sm:$0xff]
  %v577 = vld [vmem:[%s1 + $0x618] sm:$0xff]
  %v578 = vld [vmem:[%s1 + $0x620] sm:$0xff]
  %v579 = vld [vmem:[%s1 + $0x628] sm:$0xff]
  %v580 = vld [vmem:[%s1 + $0x630] sm:$0xff]
  %v581 = vld [vmem:[%s1 + $0x638] sm:$0xff]
  %v582 = vld [vmem:[%s1 + $0x640] sm:$0xff]
  %v583 = vld [vmem:[%s1 + $0x648] sm:$0xff]
  %v584 = vld [vmem:[%s1 + $0x650] sm:$0xff]
  %v585 = vld [vmem:[%s1 + $0x658] sm:$0xff]
  %v586 = vld [vmem:[%s1 + $0x660] sm:$0xff]
  %v587 = vld [vmem:[%s1 + $0x668] sm:$0xff]
  %v588 = vld [vmem:[%s1 + $0x670] sm:$0xff]
  %v589 = vld [vmem:[%s1 + $0x678] sm:$0xff]
  %v590 = vld [vmem:[%s1 + $0x680] sm:$0xff]
  %v591 = vld [vmem:[%s1 + $0x688] sm:$0xff]
  %v592 = vld [vmem:[%s1 + $0x690] sm:$0xff]
  %v593 = vld [vmem:[%s1 + $0x698] sm:$0xff]
  %v594 = vld [vmem:[%s1 + $0x6a0] sm:$0xff]
  %v595 = vld [vmem:[%s1 + $0x6a8] sm:$0xff]
  %v596 = vld [vmem:[%s1 + $0x6b0] sm:$0xff]
  %v597 = vld [vmem:[%s1 + $0x6b8] sm:$0xff]
  %v598 = vld [vmem:[%s1 + $0x6c0] sm:$0xff]
  %v599 = vld [vmem:[%s1 + $0x6c8] sm:$0xff]
  %v600 = vld [vmem:[%s1 + $0x6d0] sm:$0xff]
  %v601 = vld [vmem:[%s1 + $0x6d8] sm:$0xff]
  %v602 = vld [vmem:[%s1 + $0x6e0] sm:$0xff]
  %v603 = vld [vmem:[%s1 + $0x6e8] sm:$0xff]
  %v604 = vld [vmem:[%s1 + $0x6f0] sm:$0xff]
  %v605 = vld [vmem:[%s1 + $0x6f8] sm:$0xff]
  %v606 = vld [vmem:[%s1 + $0x700] sm:$0xff]
  %v607 = vld [vmem:[%s1 + $0x708] sm:$0xff]
  %v608 = vld [vmem:[%s1 + $0x710] sm:$0xff]
  %v609 = vld [vmem:[%s1 + $0x718] sm:$0xff]
  %v610 = vld [vmem:[%s1 + $0x720] sm:$0xff]
  %v611 = vld [vmem:[%s1 + $0x728] sm:$0xff]
  %v612 = vld [vmem:[%s1 + $0x730] sm:$0xff]
  %v613 = vld [vmem:[%s1 + $0x738] sm:$0xff]
  %v614 = vld [vmem:[%s1 + $0x740] sm:$0xff]
  %v615 = vld [vmem:[%s1 + $0x748] sm:$0xff]
  %v616 = vld [vmem:[%s1 + $0x750] sm:$0xff]
  %v617 = vld [vmem:[%s1 + $0x758] sm:$0xff]
  %v618 = vld [vmem:[%s1 + $0x760] sm:$0xff]
  %v619 = vld [vmem:[%s1 + $0x768] sm:$0xff]
  %v620 = vld [vmem:[%s1 + $0x770] sm:$0xff]
  %v621 = vld [vmem:[%s1 + $0x778] sm:$0xff]
  %v622 = vld [vmem:[%s1 + $0x780] sm:$0xff]
  %v623 = vld [vmem:[%s1 + $0x788] sm:$0xff]
  %v624 = vld [vmem:[%s1 + $0x790] sm:$0xff]
  %v625 = vld [vmem:[%s1 + $0x798] sm:$0xff]
  %v626 = vld [vmem:[%s1 + $0x7a0] sm:$0xff]
  %v627 = vld [vmem:[%s1 + $0x7a8] sm:$0xff]
  %v628 = vld [vmem:[%s1 + $0x7b0] sm:$0xff]
  %v629 = vld [vmem:[%s1 + $0x7b8] sm:$0xff]
  %v630 = vld [vmem:[%s1 + $0x7c0] sm:$0xff]
  %v631 = vld [vmem:[%s1 + $0x7c8] sm:$0xff]
  %v632 = vld [vmem:[%s1 + $0x7d0] sm:$0xff]
  %v633 = vld [vmem:[%s1 + $0x7d8] sm:$0xff]
  %v634 = vld [vmem:[%s1 + $0x7e0] sm:$0xff]
  %v635 = vld [vmem:[%s1 + $0x7e8] sm:$0xff]
  %v636 = vld [vmem:[%s1 + $0x7f0] sm:$0xff]
  %v637 = vld [vmem:[%s1 + $0x7f8] sm:$0xff]
  %v638 = vld [vmem:[%s1 + $0x800] sm:$0xff]
  %v639 = vld [vmem:[%s1 + $0x808] sm:$0xff]
  %v640 = vld [vmem:[%s1 + $0x810] sm:$0xff]
  %v641 = vld [vmem:[%s1 + $0x818] sm:$0xff]
  %v642 = vld [vmem:[%s1 + $0x820] sm:$0xff]
  %v643 = vld [vmem:[%s1 + $0x828] sm:$0xff]
  %v644 = vld [vmem:[%s1 + $0x830] sm:$0xff]
  %v645 = vld [vmem:[%s1 + $0x838] sm:$0xff]
  %v646 = vld [vmem:[%s1 + $0x840] sm:$0xff]
  %v647 = vld [vmem:[%s1 + $0x848] sm:$0xff]
  %v648 = vld [vmem:[%s1 + $0x850] sm:$0xff]
  %v649 = vld [vmem:[%s1 + $0x858] sm:$0xff]
  %v650 = vld [vmem:[%s1 + $0x860] sm:$0xff]
  %v651 = vld [vmem:[%s1 + $0x868] sm:$0xff]
  %v652 = vld [vmem:[%s1 + $0x870] sm:$0xff]
  %v653 = vld [vmem:[%s1 + $0x878] sm:$0xff]
  %v654 = vld [vmem:[%s1 + $0x880] sm:$0xff]
  %v655 = vld [vmem:[%s1 + $0x888] sm:$0xff]
  %v656 = vld [vmem:[%s1 + $0x890] sm:$0xff]
  %v657 = vld [vmem:[%s1 + $0x898] sm:$0xff]
  %v658 = vld [vmem:[%s1 + $0x8a0] sm:$0xff]
  %v659 = vld [vmem:[%s1 + $0x8a8] sm:$0xff]
  %v660 = vld [vmem:[%s1 + $0x8b0] sm:$0xff]
  %v661 = vld [vmem:[%s1 + $0x8b8] sm:$0xff]
  %v662 = vld [vmem:[%s1 + $0x8c0] sm:$0xff]
  %v663 = vld [vmem:[%s1 + $0x8c8] sm:$0xff]
  %v664 = vld [vmem:[%s1 + $0x8d0] sm:$0xff]
  %v665 = vld [vmem:[%s1 + $0x8d8] sm:$0xff]
  %v666 = vld [vmem:[%s1 + $0x8e0] sm:$0xff]
  %v667 = vld [vmem:[%s1 + $0x8e8] sm:$0xff]
  %v668 = vld [vmem:[%s1 + $0x8f0] sm:$0xff]
  %v669 = vld [vmem:[%s1 + $0x8f8] sm:$0xff]
  %v670 = vld [vmem:[%s1 + $0x900] sm:$0xff]
  %v671 = vld [vmem:[%s1 + $0x908] sm:$0xff]
  %v672 = vld [vmem:[%s1 + $0x910] sm:$0xff]
  %v673 = vld [vmem:[%s1 + $0x918] sm:$0xff]
  %v674 = vld [vmem:[%s1 + $0x920] sm:$0xff]
  %v675 = vld [vmem:[%s1 + $0x928] sm:$0xff]
  %v676 = vld [vmem:[%s1 + $0x930] sm:$0xff]
  %v677 = vld [vmem:[%s1 + $0x938] sm:$0xff]
  %v678 = vld [vmem:[%s1 + $0x940] sm:$0xff]
  %v679 = vld [vmem:[%s1 + $0x948] sm:$0xff]
  %v680 = vld [vmem:[%s1 + $0x950] sm:$0xff]
  %v681 = vld [vmem:[%s1 + $0x958] sm:$0xff]
  %v682 = vld [vmem:[%s1 + $0x960] sm:$0xff]
  %v683 = vld [vmem:[%s1 + $0x968] sm:$0xff]
  %v684 = vld [vmem:[%s1 + $0x970] sm:$0xff]
  %v685 = vld [vmem:[%s1 + $0x978] sm:$0xff]
  %v686 = vld [vmem:[%s1 + $0x980] sm:$0xff]
  %v687 = vld [vmem:[%s1 + $0x988] sm:$0xff]
  %v688 = vld [vmem:[%s1 + $0x990] sm:$0xff]
  %v689 = vld [vmem:[%s1 + $0x998] sm:$0xff]
  %v690 = vld [vmem:[%s1 + $0x9a0] sm:$0xff]
  %v691 = vld [vmem:[%s1 + $0x9a8] sm:$0xff]
  %v692 = vld [vmem:[%s1 + $0x9b0] sm:$0xff]
  %v693 = vld [vmem:[%s1 + $0x9b8] sm:$0xff]
  %v694 = vld [vmem:[%s1 + $0x9c0] sm:$0xff]
  %v695 = vld [vmem:[%s1 + $0x9c8] sm:$0xff]
  %v696 = vld [vmem:[%s1 + $0x9d0] sm:$0xff]
  %v697 = vld [vmem:[%s1 + $0x9d8] sm:$0xff]
  %v698 = vld [vmem:[%s1 + $0x9e0] sm:$0xff]
  %v699 = vld [vmem:[%s1 + $0x9e8] sm:$0xff]
  %v700 = vld [vmem:[%s1 + $0x9f0] sm:$0xff]
  %v701 = vld [vmem:[%s1 + $0x9f8] sm:$0xff]
  %v702 = vld [vmem:[%s1 + $0xa00] sm:$0xff]
  %v703 = vld [vmem:[%s1 + $0xa08] sm:$0xff]
  %v704 = vld [vmem:[%s1 + $0xa10] sm:$0xff]
  %v705 = vld [vmem:[%s1 + $0xa18] sm:$0xff]
  %v706 = vld [vmem:[%s1 + $0xa20] sm:$0xff]
  %v707 = vld [vmem:[%s1 + $0xa28] sm:$0xff]
  %v708 = vld [vmem:[%s1 + $0xa30] sm:$0xff]
  %v709 = vld [vmem:[%s1 + $0xa38] sm:$0xff]
  %v710 = vld [vmem:[%s1 + $0xa40] sm:$0xff]
  %v711 = vld [vmem:[%s1 + $0xa48] sm:$0xff]
  %v712 = vld [vmem:[%s1 + $0xa50] sm:$0xff]
  %v713 = vld [vmem:[%s1 + $0xa58] sm:$0xff]
  %v714 = vld [vmem:[%s1 + $0xa60] sm:$0xff]
  %v715 = vld [vmem:[%s1 + $0xa68] sm:$0xff]
  %v716 = vld [vmem:[%s1 + $0xa70] sm:$0xff]
  %v717 = vld [vmem:[%s1 + $0xa78] sm:$0xff]
  %v718 = vld [vmem:[%s1 + $0xa80] sm:$0xff]
  %v719 = vld [vmem:[%s1 + $0xa88] sm:$0xff]
  %v720 = vld [vmem:[%s1 + $0xa90] sm:$0xff]
  %v721 = vld [vmem:[%s1 + $0xa98] sm:$0xff]
  %v722 = vld [vmem:[%s1 + $0xaa0] sm:$0xff]
  %v723 = vld [vmem:[%s1 + $0xaa8] sm:$0xff]
  %v724 = vld [vmem:[%s1 + $0xab0] sm:$0xff]
  %v725 = vld [vmem:[%s1 + $0xab8] sm:$0xff]
  %v726 = vld [vmem:[%s1 + $0xac0] sm:$0xff]
  %v727 = vld [vmem:[%s1 + $0xac8] sm:$0xff]
  %v728 = vld [vmem:[%s1 + $0xad0] sm:$0xff]
  %v729 = vld [vmem:[%s1 + $0xad8] sm:$0xff]
  %v730 = vld [vmem:[%s1 + $0xae0] sm:$0xff]
  %v731 = vld [vmem:[%s1 + $0xae8] sm:$0xff]
  %v732 = vld [vmem:[%s1 + $0xaf0] sm:$0xff]
  %v733 = vld [vmem:[%s1 + $0xaf8] sm:$0xff]
  %v734 = vld [vmem:[%s1 + $0xb00] sm:$0xff]
  %v735 = vld [vmem:[%s1 + $0xb08] sm:$0xff]
  %v736 = vld [vmem:[%s1 + $0xb10] sm:$0xff]
  %v737 = vld [vmem:[%s1 + $0xb18] sm:$0xff]
  %v738 = vld [vmem:[%s1 + $0xb20] sm:$0xff]
  %v739 = vld [vmem:[%s1 + $0xb28] sm:$0xff]
  %v740 = vld [vmem:[%s1 + $0xb30] sm:$0xff]
  %v741 = vld [vmem:[%s1 + $0xb38] sm:$0xff]
  %v742 = vld [vmem:[%s1 + $0xb40] sm:$0xff]
  %v743 = vld [vmem:[%s1 + $0xb48] sm:$0xff]
  %v744 = vld [vmem:[%s1 + $0xb50] sm:$0xff]
  %v745 = vld [vmem:[%s1 + $0xb58] sm:$0xff]
  %v746 = vld [vmem:[%s1 + $0xb60] sm:$0xff]
  %v747 = vld [vmem:[%s1 + $0xb68] sm:$0xff]
  %v748 = vld [vmem:[%s1 + $0xb70] sm:$0xff]
  %v749 = vld [vmem:[%s1 + $0xb78] sm:$0xff]
  %v750 = vld [vmem:[%s1 + $0xb80] sm:$0xff]
  %v751 = vld [vmem:[%s1 + $0xb88] sm:$0xff]
  %v752 = vld [vmem:[%s1 + $0xb90] sm:$0xff]
  %v753 = vld [vmem:[%s1 + $0xb98] sm:$0xff]
  %v754 = vld [vmem:[%s1 + $0xba0] sm:$0xff]
  %v755 = vld [vmem:[%s1 + $0xba8] sm:$0xff]
  %v756 = vld [vmem:[%s1 + $0xbb0] sm:$0xff]
  %v757 = vld [vmem:[%s1 + $0xbb8] sm:$0xff]
  %v758 = vld [vmem:[%s1 + $0xbc0] sm:$0xff]
  %v759 = vld [vmem:[%s1 + $0xbc8] sm:$0xff]
  %v760 = vld [vmem:[%s1 + $0xbd0] sm:$0xff]
  %v761 = vld [vmem:[%s1 + $0xbd8] sm:$0xff]
  %v762 = vld [vmem:[%s1 + $0xbe0] sm:$0xff]
  %v763 = vld [vmem:[%s1 + $0xbe8] sm:$0xff]
  %v764 = vld [vmem:[%s1 + $0xbf0] sm:$0xff]
  %v765 = vld [vmem:[%s1 + $0xbf8] sm:$0xff]
  %v766 = vld [vmem:[%s1 + $0xc00] sm:$0xff]
  %v767 = vld [vmem:[%s1 + $0xc08] sm:$0xff]
  %v768 = vld [vmem:[%s1 + $0xc10] sm:$0xff]
  %v769 = vld [vmem:[%s1 + $0xc18] sm:$0xff]
  %v770 = vld [vmem:[%s1 + $0xc20] sm:$0xff]
  %v771 = vld [vmem:[%s1 + $0xc28] sm:$0xff]
  %v772 = vld [vmem:[%s1 + $0xc30] sm:$0xff]
  %v773 = vld [vmem:[%s1 + $0xc38] sm:$0xff]
  %v774 = vld [vmem:[%s1 + $0xc40] sm:$0xff]
  %v775 = vld [vmem:[%s1 + $0xc48] sm:$0xff]
  %v776 = vld [vmem:[%s1 + $0xc50] sm:$0xff]
  %v777 = vld [vmem:[%s1 + $0xc58] sm:$0xff]
  %v778 = vld [vmem:[%s1 + $0xc60] sm:$0xff]
  %v779 = vld [vmem:[%s1 + $0xc68] sm:$0xff]
  %v780 = vld [vmem:[%s1 + $0xc70] sm:$0xff]
  %v781 = vld [vmem:[%s1 + $0xc78] sm:$0xff]
  %v782 = vld [vmem:[%s1 + $0xc80] sm:$0xff]
  %v783 = vld [vmem:[%s1 + $0xc88] sm:$0xff]
  %v784 = vld [vmem:[%s1 + $0xc90] sm:$0xff]
  %v785 = vld [vmem:[%s1 + $0xc98] sm:$0xff]
  %v786 = vld [vmem:[%s1 + $0xca0] sm:$0xff]
  %v787 = vld [vmem:[%s1 + $0xca8] sm:$0xff]
  %v788 = vld [vmem:[%s1 + $0xcb0] sm:$0xff]
  %v789 = vld [vmem:[%s1 + $0xcb8] sm:$0xff]
  %v790 = vld [vmem:[%s1 + $0xcc0] sm:$0xff]
  %v791 = vld [vmem:[%s1 + $0xcc8] sm:$0xff]
  %v792 = vld [vmem:[%s1 + $0xcd0] sm:$0xff]
  %v793 = vld [vmem:[%s1 + $0xcd8] sm:$0xff]
  %v794 = vld [vmem:[%s1 + $0xce0] sm:$0xff]
  %v795 = vld [vmem:[%s1 + $0xce8] sm:$0xff]
  %v796 = vld [vmem:[%s1 + $0xcf0] sm:$0xff]
  %v797 = vld [vmem:[%s1 + $0xcf8] sm:$0xff]
  %v798 = vld [vmem:[%s1 + $0xd00] sm:$0xff]
  %v799 = vld [vmem:[%s1 + $0xd08] sm:$0xff]
  %v800 = vld [vmem:[%s1 + $0xd10] sm:$0xff]
  %v801 = vld [vmem:[%s1 + $0xd18] sm:$0xff]
  %v802 = vld [vmem:[%s1 + $0xd20] sm:$0xff]
  %v803 = vld [vmem:[%s1 + $0xd28] sm:$0xff]
  %v804 = vld [vmem:[%s1 + $0xd30] sm:$0xff]
  %v805 = vld [vmem:[%s1 + $0xd38] sm:$0xff]
  %v806 = vld [vmem:[%s1 + $0xd40] sm:$0xff]
  %v807 = vld [vmem:[%s1 + $0xd48] sm:$0xff]
  %v808 = vld [vmem:[%s1 + $0xd50] sm:$0xff]
  %v809 = vld [vmem:[%s1 + $0xd58] sm:$0xff]
  %v810 = vld [vmem:[%s1 + $0xd60] sm:$0xff]
  %v811 = vld [vmem:[%s1 + $0xd68] sm:$0xff]
  %v812 = vld [vmem:[%s1 + $0xd70] sm:$0xff]
  %v813 = vld [vmem:[%s1 + $0xd78] sm:$0xff]
  %v814 = vld [vmem:[%s1 + $0xd80] sm:$0xff]
  %v815 = vld [vmem:[%s1 + $0xd88] sm:$0xff]
  %v816 = vld [vmem:[%s1 + $0xd90] sm:$0xff]
  %v817 = vld [vmem:[%s1 + $0xd98] sm:$0xff]
  %v818 = vld [vmem:[%s1 + $0xda0] sm:$0xff]
  %v819 = vld [vmem:[%s1 + $0xda8] sm:$0xff]
  %v820 = vld [vmem:[%s1 + $0xdb0] sm:$0xff]
  %v821 = vld [vmem:[%s1 + $0xdb8] sm:$0xff]
  %v822 = vld [vmem:[%s1 + $0xdc0] sm:$0xff]
  %v823 = vld [vmem:[%s1 + $0xdc8] sm:$0xff]
  %v824 = vld [vmem:[%s1 + $0xdd0] sm:$0xff]
  %v825 = vld [vmem:[%s1 + $0xdd8] sm:$0xff]
  %v826 = vld [vmem:[%s1 + $0xde0] sm:$0xff]
  %v827 = vld [vmem:[%s1 + $0xde8] sm:$0xff]
  %v828 = vld [vmem:[%s1 + $0xdf0] sm:$0xff]
  %v829 = vld [vmem:[%s1 + $0xdf8] sm:$0xff]
  %v830 = vld [vmem:[%s1 + $0xe00] sm:$0xff]
  %v831 = vld [vmem:[%s1 + $0xe08] sm:$0xff]
  %v832 = vld [vmem:[%s1 + $0xe10] sm:$0xff]
  %v833 = vld [vmem:[%s1 + $0xe18] sm:$0xff]
  %v834 = vld [vmem:[%s1 + $0xe20] sm:$0xff]
  %v835 = vld [vmem:[%s1 + $0xe28] sm:$0xff]
  %v836 = vld [vmem:[%s1 + $0xe30] sm:$0xff]
  %v837 = vld [vmem:[%s1 + $0xe38] sm:$0xff]
  %v838 = vld [vmem:[%s1 + $0xe40] sm:$0xff]
  %v839 = vld [vmem:[%s1 + $0xe48] sm:$0xff]
  %v840 = vld [vmem:[%s1 + $0xe50] sm:$0xff]
  %v841 = vld [vmem:[%s1 + $0xe58] sm:$0xff]
  %v842 = vld [vmem:[%s1 + $0xe60] sm:$0xff]
  %v843 = vld [vmem:[%s1 + $0xe68] sm:$0xff]
  %v844 = vld [vmem:[%s1 + $0xe70] sm:$0xff]
  %v845 = vld [vmem:[%s1 + $0xe78] sm:$0xff]
  %v846 = vld [vmem:[%s1 + $0xe80] sm:$0xff]
  %v847 = vld [vmem:[%s1 + $0xe88] sm:$0xff]
  %v848 = vld [vmem:[%s1 + $0xe90] sm:$0xff]
  %v849 = vld [vmem:[%s1 + $0xe98] sm:$0xff]
  %v850 = vld [vmem:[%s1 + $0xea0] sm:$0xff]
  %v851 = vld [vmem:[%s1 + $0xea8] sm:$0xff]
  %v852 = vld [vmem:[%s1 + $0xeb0] sm:$0xff]
  %v853 = vld [vmem:[%s1 + $0xeb8] sm:$0xff]
  %v854 = vld [vmem:[%s1 + $0xec0] sm:$0xff]
  %v855 = vld [vmem:[%s1 + $0xec8] sm:$0xff]
  %v856 = vld [vmem:[%s1 + $0xed0] sm:$0xff]
  %v857 = vld [vmem:[%s1 + $0xed8] sm:$0xff]
  %v858 = vld [vmem:[%s1 + $0xee0] sm:$0xff]
  %v859 = vld [vmem:[%s1 + $0xee8] sm:$0xff]
  %v860 = vld [vmem:[%s1 + $0xef0] sm:$0xff]
  %v861 = vld [vmem:[%s1 + $0xef8] sm:$0xff]
  %v862 = vld [vmem:[%s1 + $0xf00] sm:$0xff]
  %v863 = vld [vmem:[%s1 + $0xf08] sm:$0xff]
  %v864 = vld [vmem:[%s1 + $0xf10] sm:$0xff]
  %v865 = vld [vmem:[%s1 + $0xf18] sm:$0xff]
  %v866 = vld [vmem:[%s1 + $0xf20] sm:$0xff]
  %v867 = vld [vmem:[%s1 + $0xf28] sm:$0xff]
  %v868 = vld [vmem:[%s1 + $0xf30] sm:$0xff]
  %v869 = vld [vmem:[%s1 + $0xf38] sm:$0xff]
  %v870 = vld [vmem:[%s1 + $0xf40] sm:$0xff]
  %v871 = vld [vmem:[%s1 + $0xf48] sm:$0xff]
  %v872 = vld [vmem:[%s1 + $0xf50] sm:$0xff]
  %v873 = vld [vmem:[%s1 + $0xf58] sm:$0xff]
  %v874 = vld [vmem:[%s1 + $0xf60] sm:$0xff]
  %v875 = vld [vmem:[%s1 + $0xf68] sm:$0xff]
  %v876 = vld [vmem:[%s1 + $0xf70] sm:$0xff]
  %v877 = vld [vmem:[%s1 + $0xf78] sm:$0xff]
  %v878 = vld [vmem:[%s1 + $0xf80] sm:$0xff]
  %v879 = vld [vmem:[%s1 + $0xf88] sm:$0xff]
  %v880 = vld [vmem:[%s1 + $0xf90] sm:$0xff]
  %v881 = vld [vmem:[%s1 + $0xf98] sm:$0xff]
  %v882 = vld [vmem:[%s1 + $0xfa0] sm:$0xff]
  %v883 = vld [vmem:[%s1 + $0xfa8] sm:$0xff]
  %v884 = vld [vmem:[%s1 + $0xfb0] sm:$0xff]
  %v885 = vld [vmem:[%s1 + $0xfb8] sm:$0xff]
  %v886 = vld [vmem:[%s1 + $0xfc0] sm:$0xff]
  %v887 = vld [vmem:[%s1 + $0xfc8] sm:$0xff]
  %v888 = vld [vmem:[%s1 + $0xfd0] sm:$0xff]
  %v889 = vld [vmem:[%s1 + $0xfd8] sm:$0xff]
  %v890 = vld [vmem:[%s1 + $0xfe0] sm:$0xff]
  %v891 = vld [vmem:[%s1 + $0xfe8] sm:$0xff]
  %v892 = vld [vmem:[%s1 + $0xff0] sm:$0xff]
  %v893 = vld [vmem:[%s1 + $0xff8] sm:$0xff]
  %v894 = vld [vmem:[%s1 + $0x1000] sm:$0xff]
  %v895 = vld [vmem:[%s1 + $0x1008] sm:$0xff]
  %v896 = vld [vmem:[%s1 + $0x1010] sm:$0xff]
  %v897 = vld [vmem:[%s1 + $0x1018] sm:$0xff]
  %v898 = vld [vmem:[%s1 + $0x1020] sm:$0xff]
  %v899 = vld [vmem:[%s1 + $0x1028] sm:$0xff]
  %v900 = vld [vmem:[%s1 + $0x1030] sm:$0xff]
  %v901 = vld [vmem:[%s1 + $0x1038] sm:$0xff]
  %v902 = vld [vmem:[%s1 + $0x1040] sm:$0xff]
  %v903 = vld [vmem:[%s1 + $0x1048] sm:$0xff]
  %v904 = vld [vmem:[%s1 + $0x1050] sm:$0xff]
  %v905 = vld [vmem:[%s1 + $0x1058] sm:$0xff]
  %v906 = vld [vmem:[%s1 + $0x1060] sm:$0xff]
  %v907 = vld [vmem:[%s1 + $0x1068] sm:$0xff]
  %v908 = vld [vmem:[%s1 + $0x1070] sm:$0xff]
  %v909 = vld [vmem:[%s1 + $0x1078] sm:$0xff]
  %v910 = vld [vmem:[%s1 + $0x1080] sm:$0xff]
  %v911 = vld [vmem:[%s1 + $0x1088] sm:$0xff]
  %v912 = vld [vmem:[%s1 + $0x1090] sm:$0xff]
  %v913 = vld [vmem:[%s1 + $0x1098] sm:$0xff]
  %v914 = vld [vmem:[%s1 + $0x10a0] sm:$0xff]
  %v915 = vld [vmem:[%s1 + $0x10a8] sm:$0xff]
  %v916 = vld [vmem:[%s1 + $0x10b0] sm:$0xff]
  %v917 = vld [vmem:[%s1 + $0x10b8] sm:$0xff]
  %v918 = vld [vmem:[%s1 + $0x10c0] sm:$0xff]
  %v919 = vld [vmem:[%s1 + $0x10c8] sm:$0xff]
  %v920 = vld [vmem:[%s1 + $0x10d0] sm:$0xff]
  %v921 = vld [vmem:[%s1 + $0x10d8] sm:$0xff]
  %v922 = vld [vmem:[%s1 + $0x10e0] sm:$0xff]
  %v923 = vld [vmem:[%s1 + $0x10e8] sm:$0xff]
  %v924 = vld [vmem:[%s1 + $0x10f0] sm:$0xff]
  %v925 = vld [vmem:[%s1 + $0x10f8] sm:$0xff]
  %v926 = vld [vmem:[%s1 + $0x1100] sm:$0xff]
  %v927 = vld [vmem:[%s1 + $0x1108] sm:$0xff]
  %v928 = vld [vmem:[%s1 + $0x1110] sm:$0xff]
  %v929 = vld [vmem:[%s1 + $0x1118] sm:$0xff]
  %v930 = vld [vmem:[%s1 + $0x1120] sm:$0xff]
  %v931 = vld [vmem:[%s1 + $0x1128] sm:$0xff]
  %v932 = vld [vmem:[%s1 + $0x1130] sm:$0xff]
  %v933 = vld [vmem:[%s1 + $0x1138] sm:$0xff]
  %v934 = vld [vmem:[%s1 + $0x1140] sm:$0xff]
  %v935 = vld [vmem:[%s1 + $0x1148] sm:$0xff]
  %v936 = vld [vmem:[%s1 + $0x1150] sm:$0xff]
  %v937 = vld [vmem:[%s1 + $0x1158] sm:$0xff]
  %v938 = vld [vmem:[%s1 + $0x1160] sm:$0xff]
  %v939 = vld [vmem:[%s1 + $0x1168] sm:$0xff]
  %v940 = vld [vmem:[%s1 + $0x1170] sm:$0xff]
  %v941 = vld [vmem:[%s1 + $0x1178] sm:$0xff]
  %v942 = vld [vmem:[%s1 + $0x1180] sm:$0xff]
  %v943 = vld [vmem:[%s1 + $0x1188] sm:$0xff]
  %v944 = vld [vmem:[%s1 + $0x1190] sm:$0xff]
  %v945 = vld [vmem:[%s1 + $0x1198] sm:$0xff]
  %v946 = vld [vmem:[%s1 + $0x11a0] sm:$0xff]
  %v947 = vld [vmem:[%s1 + $0x11a8] sm:$0xff]
  %v948 = vld [vmem:[%s1 + $0x11b0] sm:$0xff]
  %v949 = vld [vmem:[%s1 + $0x11b8] sm:$0xff]
  %v950 = vld [vmem:[%s1 + $0x11c0] sm:$0xff]
  %v951 = vld [vmem:[%s1 + $0x11c8] sm:$0xff]
  %v952 = vld [vmem:[%s1 + $0x11d0] sm:$0xff]
  %v953 = vld [vmem:[%s1 + $0x11d8] sm:$0xff]
  %v954 = vld [vmem:[%s1 + $0x11e0] sm:$0xff]
  %v955 = vld [vmem:[%s1 + $0x11e8] sm:$0xff]
  %v956 = vld [vmem:[%s1 + $0x11f0] sm:$0xff]
  %v957 = vld [vmem:[%s1 + $0x11f8] sm:$0xff]
  %v958 = vld [vmem:[%s1 + $0x1200] sm:$0xff]
  %v959 = vld [vmem:[%s1 + $0x1208] sm:$0xff]
  %v960 = vld [vmem:[%s1 + $0x1210] sm:$0xff]
  %v961 = vld [vmem:[%s1 + $0x1218] sm:$0xff]
  %v962 = vld [vmem:[%s1 + $0x1220] sm:$0xff]
  %v963 = vld [vmem:[%s1 + $0x1228] sm:$0xff]
  %v964 = vld [vmem:[%s1 + $0x1230] sm:$0xff]
  %v965 = vld [vmem:[%s1 + $0x1238] sm:$0xff]
  %v966 = vld [vmem:[%s1 + $0x1240] sm:$0xff]
  %v967 = vld [vmem:[%s1 + $0x1248] sm:$0xff]
  %v968 = vld [vmem:[%s1 + $0x1250] sm:$0xff]
  %v969 = vld [vmem:[%s1 + $0x1258] sm:$0xff]
  %v970 = vld [vmem:[%s1 + $0x1260] sm:$0xff]
  %v971 = vld [vmem:[%s1 + $0x1268] sm:$0xff]
  %v972 = vld [vmem:[%s1 + $0x1270] sm:$0xff]
  %v973 = vld [vmem:[%s1 + $0x1278] sm:$0xff]
  %v974 = vld [vmem:[%s1 + $0x1280] sm:$0xff]
  %v975 = vld [vmem:[%s1 + $0x1288] sm:$0xff]
  %v976 = vld [vmem:[%s1 + $0x1290] sm:$0xff]
  %v977 = vld [vmem:[%s1 + $0x1298] sm:$0xff]
  %v978 = vld [vmem:[%s1 + $0x12a0] sm:$0xff]
  %v979 = vld [vmem:[%s1 + $0x12a8] sm:$0xff]
  %v980 = vld [vmem:[%s1 + $0x12b0] sm:$0xff]
  %v981 = vld [vmem:[%s1 + $0x12b8] sm:$0xff]
  %v982 = vld [vmem:[%s1 + $0x12c0] sm:$0xff]
  %v983 = vld [vmem:[%s1 + $0x12c8] sm:$0xff]
  %v984 = vld [vmem:[%s1 + $0x12d0] sm:$0xff]
  %v985 = vld [vmem:[%s1 + $0x12d8] sm:$0xff]
  %v986 = vld [vmem:[%s1 + $0x12e0] sm:$0xff]
  %v987 = vld [vmem:[%s1 + $0x12e8] sm:$0xff]
  %v988 = vld [vmem:[%s1 + $0x12f0] sm:$0xff]
  %v989 = vld [vmem:[%s1 + $0x12f8] sm:$0xff]
  %v990 = vld [vmem:[%s1 + $0x1300] sm:$0xff]
  %v991 = vld [vmem:[%s1 + $0x1308] sm:$0xff]
  %v992 = vld [vmem:[%s1 + $0x1310] sm:$0xff]
  %v993 = vld [vmem:[%s1 + $0x1318] sm:$0xff]
  %v994 = vld [vmem:[%s1 + $0x1320] sm:$0xff]
  %v995 = vld [vmem:[%s1 + $0x1328] sm:$0xff]
  %v996 = vld [vmem:[%s1 + $0x1330] sm:$0xff]
  %v997 = vld [vmem:[%s1 + $0x1338] sm:$0xff]
  %v998 = vld [vmem:[%s1 + $0x1340] sm:$0xff]
  %v999 = vld [vmem:[%s1 + $0x1348] sm:$0xff]
  %v1000 = vld [vmem:[%s1 + $0x1350] sm:$0xff]
  %v1001 = vld [vmem:[%s1 + $0x1358] sm:$0xff]
  %v1002 = vld [vmem:[%s1 + $0x1360] sm:$0xff]
  %v1003 = vld [vmem:[%s1 + $0x1368] sm:$0xff]
  %v1004 = vld [vmem:[%s1 + $0x1370] sm:$0xff]
  %v1005 = vld [vmem:[%s1 + $0x1378] sm:$0xff]
  %v1006 = vld [vmem:[%s1 + $0x1380] sm:$0xff]
  %v1007 = vld [vmem:[%s1 + $0x1388] sm:$0xff]
  %v1008 = vld [vmem:[%s1 + $0x1390] sm:$0xff]
  %v1009 = vld [vmem:[%s1 + $0x1398] sm:$0xff]
  %v1010 = vld [vmem:[%s1 + $0x13a0] sm:$0xff]
  %v1011 = vld [vmem:[%s1 + $0x13a8] sm:$0xff]
  %v1012 = vld [vmem:[%s1 + $0x13b0] sm:$0xff]
  %v1013 = vld [vmem:[%s1 + $0x13b8] sm:$0xff]
  %v1014 = vld [vmem:[%s1 + $0x13c0] sm:$0xff]
  %v1015 = vld [vmem:[%s1 + $0x13c8] sm:$0xff]
  %v1016 = vld [vmem:[%s1 + $0x13d0] sm:$0xff]
  %v1017 = vld [vmem:[%s1 + $0x13d8] sm:$0xff]
  %v1018 = vld [vmem:[%s1 + $0x13e0] sm:$0xff]
  %v1019 = vld [vmem:[%s1 + $0x13e8] sm:$0xff]
  %v1020 = vld [vmem:[%s1 + $0x13f0] sm:$0xff]
  %v1021 = vld [vmem:[%s1 + $0x13f8] sm:$0xff]
  %v1022 = vld [vmem:[%s1 + $0x1400] sm:$0xff]
  %v1023 = vld [vmem:[%s1 + $0x1408] sm:$0xff]
  %v1024 = vld [vmem:[%s1 + $0x1410] sm:$0xff]
  %v1025 = vld [vmem:[%s1 + $0x1418] sm:$0xff]
  %v1026 = vld [vmem:[%s1 + $0x1420] sm:$0xff]
  %v1027 = vld [vmem:[%s1 + $0x1428] sm:$0xff]
  %v1028 = vld [vmem:[%s1 + $0x1430] sm:$0xff]
  %v1029 = vld [vmem:[%s1 + $0x1438] sm:$0xff]
  %v1030 = vld [vmem:[%s1 + $0x1440] sm:$0xff]
  %v1031 = vld [vmem:[%s1 + $0x1448] sm:$0xff]
  %v1032 = vld [vmem:[%s1 + $0x1450] sm:$0xff]
  %v1033 = vld [vmem:[%s1 + $0x1458] sm:$0xff]
  %v1034 = vld [vmem:[%s1 + $0x1460] sm:$0xff]
  %v1035 = vld [vmem:[%s1 + $0x1468] sm:$0xff]
  %v1036 = vld [vmem:[%s1 + $0x1470] sm:$0xff]
  %v1037 = vld [vmem:[%s1 + $0x1478] sm:$0xff]
  %v1038 = vld [vmem:[%s1 + $0x1480] sm:$0xff]
  %v1039 = vld [vmem:[%s1 + $0x1488] sm:$0xff]
  %v1040 = vld [vmem:[%s1 + $0x1490] sm:$0xff]
  %v1041 = vld [vmem:[%s1 + $0x1498] sm:$0xff]
  %v1042 = vld [vmem:[%s1 + $0x14a0] sm:$0xff]
  %v1043 = vld [vmem:[%s1 + $0x14a8] sm:$0xff]
  %v1044 = vld [vmem:[%s1 + $0x14b0] sm:$0xff]
  %v1045 = vld [vmem:[%s1 + $0x14b8] sm:$0xff]
  %v1046 = vld [vmem:[%s1 + $0x14c0] sm:$0xff]
  %v1047 = vld [vmem:[%s1 + $0x14c8] sm:$0xff]
  %v1048 = vld [vmem:[%s1 + $0x14d0] sm:$0xff]
  %v1049 = vld [vmem:[%s1 + $0x14d8] sm:$0xff]
  %v1050 = vld [vmem:[%s1 + $0x14e0] sm:$0xff]
  %v1051 = vld [vmem:[%s1 + $0x14e8] sm:$0xff]
  %v1052 = vld [vmem:[%s1 + $0x14f0] sm:$0xff]
  %v1053 = vld [vmem:[%s1 + $0x14f8] sm:$0xff]
  %v1054 = vld [vmem:[%s1 + $0x1500] sm:$0xff]
  %v1055 = vld [vmem:[%s1 + $0x1508] sm:$0xff]
  %v1056 = vld [vmem:[%s1 + $0x1510] sm:$0xff]
  %v1057 = vld [vmem:[%s1 + $0x1518] sm:$0xff]
  %v1058 = vld [vmem:[%s1 + $0x1520] sm:$0xff]
  %v1059 = vld [vmem:[%s1 + $0x1528] sm:$0xff]
  %v1060 = vld [vmem:[%s1 + $0x1530] sm:$0xff]
  %v1061 = vld [vmem:[%s1 + $0x1538] sm:$0xff]
  %v1062 = vld [vmem:[%s1 + $0x1540] sm:$0xff]
  %v1063 = vld [vmem:[%s1 + $0x1548] sm:$0xff]
  %v1064 = vld [vmem:[%s1 + $0x1550] sm:$0xff]
  %v1065 = vld [vmem:[%s1 + $0x1558] sm:$0xff]
  %v1066 = vld [vmem:[%s1 + $0x1560] sm:$0xff]
  %v1067 = vld [vmem:[%s1 + $0x1568] sm:$0xff]
  %v1068 = vld [vmem:[%s1 + $0x1570] sm:$0xff]
  %v1069 = vld [vmem:[%s1 + $0x1578] sm:$0xff]
  %v1070 = vld [vmem:[%s1 + $0x1580] sm:$0xff]
  %v1071 = vld [vmem:[%s1 + $0x1588] sm:$0xff]
  %v1072 = vld [vmem:[%s1 + $0x1590] sm:$0xff]
  %v1073 = vld [vmem:[%s1 + $0x1598] sm:$0xff]
  %v1074 = vld [vmem:[%s1 + $0x15a0] sm:$0xff]
  %v1075 = vld [vmem:[%s1 + $0x15a8] sm:$0xff]
  %v1076 = vld [vmem:[%s1 + $0x15b0] sm:$0xff]
  %v1077 = vld [vmem:[%s1 + $0x15b8] sm:$0xff]
  %v1078 = vld [vmem:[%s1 + $0x15c0] sm:$0xff]
  %v1079 = vld [vmem:[%s1 + $0x15c8] sm:$0xff]
  %v1080 = vld [vmem:[%s1 + $0x15d0] sm:$0xff]
  %v1081 = vld [vmem:[%s1 + $0x15d8] sm:$0xff]
  %v1082 = vld [vmem:[%s1 + $0x15e0] sm:$0xff]
  %v1083 = vld [vmem:[%s1 + $0x15e8] sm:$0xff]
  %v1084 = vld [vmem:[%s1 + $0x15f0] sm:$0xff]
  %v1085 = vld [vmem:[%s1 + $0x15f8] sm:$0xff]
  %v1086 = vld [vmem:[%s1 + $0x1600] sm:$0xff]
  %v1087 = vld [vmem:[%s1 + $0x1608] sm:$0xff]
  %v1088 = vld [vmem:[%s1 + $0x1610] sm:$0xff]
  %v1089 = vld [vmem:[%s1 + $0x1618] sm:$0xff]
  %v1090 = vld [vmem:[%s1 + $0x1620] sm:$0xff]
  %v1091 = vld [vmem:[%s1 + $0x1628] sm:$0xff]
  %v1092 = vld [vmem:[%s1 + $0x1630] sm:$0xff]
  %v1093 = vld [vmem:[%s1 + $0x1638] sm:$0xff]
  %v1094 = vld [vmem:[%s1 + $0x1640] sm:$0xff]
  %v1095 = vld [vmem:[%s1 + $0x1648] sm:$0xff]
  %v1096 = vld [vmem:[%s1 + $0x1650] sm:$0xff]
  %v1097 = vld [vmem:[%s1 + $0x1658] sm:$0xff]
  %v1098 = vld [vmem:[%s1 + $0x1660] sm:$0xff]
  %v1099 = vld [vmem:[%s1 + $0x1668] sm:$0xff]
  %v1100 = vld [vmem:[%s1 + $0x1670] sm:$0xff]
  %v1101 = vld [vmem:[%s1 + $0x1678] sm:$0xff]
  %v1102 = vld [vmem:[%s1 + $0x1680] sm:$0xff]
  %v1103 = vld [vmem:[%s1 + $0x1688] sm:$0xff]
  %v1104 = vld [vmem:[%s1 + $0x1690] sm:$0xff]
  %v1105 = vld [vmem:[%s1 + $0x1698] sm:$0xff]
  %v1106 = vld [vmem:[%s1 + $0x16a0] sm:$0xff]
  %v1107 = vld [vmem:[%s1 + $0x16a8] sm:$0xff]
  %v1108 = vld [vmem:[%s1 + $0x16b0] sm:$0xff]
  %v1109 = vld [vmem:[%s1 + $0x16b8] sm:$0xff]
  %v1110 = vld [vmem:[%s1 + $0x16c0] sm:$0xff]
  %v1111 = vld [vmem:[%s1 + $0x16c8] sm:$0xff]
  %v1112 = vld [vmem:[%s1 + $0x16d0] sm:$0xff]
  %v1113 = vld [vmem:[%s1 + $0x16d8] sm:$0xff]
  %v1114 = vld [vmem:[%s1 + $0x16e0] sm:$0xff]
  %v1115 = vld [vmem:[%s1 + $0x16e8] sm:$0xff]
  %v1116 = vld [vmem:[%s1 + $0x16f0] sm:$0xff]
  %v1117 = vld [vmem:[%s1 + $0x16f8] sm:$0xff]
  %v1118 = vld [vmem:[%s1 + $0x1700] sm:$0xff]
  %v1119 = vld [vmem:[%s1 + $0x1708] sm:$0xff]
  %v1120 = vld [vmem:[%s1 + $0x1710] sm:$0xff]
  %v1121 = vld [vmem:[%s1 + $0x1718] sm:$0xff]
  %v1122 = vld [vmem:[%s1 + $0x1720] sm:$0xff]
  %v1123 = vld [vmem:[%s1 + $0x1728] sm:$0xff]
  %v1124 = vld [vmem:[%s1 + $0x1730] sm:$0xff]
  %v1125 = vld [vmem:[%s1 + $0x1738] sm:$0xff]
  %v1126 = vld [vmem:[%s1 + $0x1740] sm:$0xff]
  %v1127 = vld [vmem:[%s1 + $0x1748] sm:$0xff]
  %v1128 = vld [vmem:[%s1 + $0x1750] sm:$0xff]
  %v1129 = vld [vmem:[%s1 + $0x1758] sm:$0xff]
  %v1130 = vld [vmem:[%s1 + $0x1760] sm:$0xff]
  %v1131 = vld [vmem:[%s1 + $0x1768] sm:$0xff]
  %v1132 = vld [vmem:[%s1 + $0x1770] sm:$0xff]
  %v1133 = vld [vmem:[%s1 + $0x1778] sm:$0xff]
  %v1134 = vld [vmem:[%s1 + $0x1780] sm:$0xff]
  %v1135 = vld [vmem:[%s1 + $0x1788] sm:$0xff]
  %v1136 = vld [vmem:[%s1 + $0x1790] sm:$0xff]
  %v1137 = vld [vmem:[%s1 + $0x1798] sm:$0xff]
  %v1138 = vld [vmem:[%s1 + $0x17a0] sm:$0xff]
  %v1139 = vld [vmem:[%s1 + $0x17a8] sm:$0xff]
  %v1140 = vld [vmem:[%s1 + $0x17b0] sm:$0xff]
  %v1141 = vld [vmem:[%s1 + $0x17b8] sm:$0xff]
  %v1142 = vld [vmem:[%s1 + $0x17c0] sm:$0xff]
  %v1143 = vld [vmem:[%s1 + $0x17c8] sm:$0xff]
  %v1144 = vld [vmem:[%s1 + $0x17d0] sm:$0xff]
  %v1145 = vld [vmem:[%s1 + $0x17d8] sm:$0xff]
  %v1146 = vld [vmem:[%s1 + $0x17e0] sm:$0xff]
  %v1147 = vld [vmem:[%s1 + $0x17e8] sm:$0xff]
  %v1148 = vld [vmem:[%s1 + $0x17f0] sm:$0xff]
  %v1149 = vld [vmem:[%s1 + $0x17f8] sm:$0xff]
  %v1150 = vld [vmem:[%s1 + $0x1800] sm:$0xff]
  %v1151 = vld [vmem:[%s1 + $0x1808] sm:$0xff]
  %v1152 = vld [vmem:[%s1 + $0x1810] sm:$0xff]
  %v1153 = vld [vmem:[%s1 + $0x1818] sm:$0xff]
  %v1154 = vld [vmem:[%s1 + $0x1820] sm:$0xff]
  %v1155 = vld [vmem:[%s1 + $0x1828] sm:$0xff]
  %v1156 = vld [vmem:[%s1 + $0x1830] sm:$0xff]
  %v1157 = vld [vmem:[%s1 + $0x1838] sm:$0xff]
  %v1158 = vld [vmem:[%s1 + $0x1840] sm:$0xff]
  %v1159 = vld [vmem:[%s1 + $0x1848] sm:$0xff]
  %v1160 = vld [vmem:[%s1 + $0x1850] sm:$0xff]
  %v1161 = vld [vmem:[%s1 + $0x1858] sm:$0xff]
  %v1162 = vld [vmem:[%s1 + $0x1860] sm:$0xff]
  %v1163 = vld [vmem:[%s1 + $0x1868] sm:$0xff]
  %v1164 = vld [vmem:[%s1 + $0x1870] sm:$0xff]
  %v1165 = vld [vmem:[%s1 + $0x1878] sm:$0xff]
  %v1166 = vld [vmem:[%s1 + $0x1880] sm:$0xff]
  %v1167 = vld [vmem:[%s1 + $0x1888] sm:$0xff]
  %v1168 = vld [vmem:[%s1 + $0x1890] sm:$0xff]
  %v1169 = vld [vmem:[%s1 + $0x1898] sm:$0xff]
  %v1170 = vld [vmem:[%s1 + $0x18a0] sm:$0xff]
  %v1171 = vld [vmem:[%s1 + $0x18a8] sm:$0xff]
  %v1172 = vld [vmem:[%s1 + $0x18b0] sm:$0xff]
  %v1173 = vld [vmem:[%s1 + $0x18b8] sm:$0xff]
  %v1174 = vld [vmem:[%s1 + $0x18c0] sm:$0xff]
  %v1175 = vld [vmem:[%s1 + $0x18c8] sm:$0xff]
  %v1176 = vld [vmem:[%s1 + $0x18d0] sm:$0xff]
  %v1177 = vld [vmem:[%s1 + $0x18d8] sm:$0xff]
  %v1178 = vld [vmem:[%s1 + $0x18e0] sm:$0xff]
  %v1179 = vld [vmem:[%s1 + $0x18e8] sm:$0xff]
  %v1180 = vld [vmem:[%s1 + $0x18f0] sm:$0xff]
  %v1181 = vld [vmem:[%s1 + $0x18f8] sm:$0xff]
  %v1182 = vld [vmem:[%s1 + $0x1900] sm:$0xff]
  %v1183 = vld [vmem:[%s1 + $0x1908] sm:$0xff]
  %v1184 = vld [vmem:[%s1 + $0x1910] sm:$0xff]
  %v1185 = vld [vmem:[%s1 + $0x1918] sm:$0xff]
  %v1186 = vld [vmem:[%s1 + $0x1920] sm:$0xff]
  %v1187 = vld [vmem:[%s1 + $0x1928] sm:$0xff]
  %v1188 = vld [vmem:[%s1 + $0x1930] sm:$0xff]
  %v1189 = vld [vmem:[%s1 + $0x1938] sm:$0xff]
  %v1190 = vld [vmem:[%s1 + $0x1940] sm:$0xff]
  %v1191 = vld [vmem:[%s1 + $0x1948] sm:$0xff]
  %v1192 = vld [vmem:[%s1 + $0x1950] sm:$0xff]
  %v1193 = vld [vmem:[%s1 + $0x1958] sm:$0xff]
  %v1194 = vld [vmem:[%s1 + $0x1960] sm:$0xff]
  %v1195 = vld [vmem:[%s1 + $0x1968] sm:$0xff]
  %v1196 = vld [vmem:[%s1 + $0x1970] sm:$0xff]
  %v1197 = vld [vmem:[%s1 + $0x1978] sm:$0xff]
  %v1198 = vld [vmem:[%s1 + $0x1980] sm:$0x77]
  %v1199 = vld [vmem:[%s2] sm:$0x3]
  %v1201 = vlaneseq
  %v1202 = vshrl.u32 %v1201, 7
  %v1203 = vsub.s32 0, %v1202
  %v1204 = vrot.slane %v1199, %v1203
  %v1205 = vlaneseq
  %v1206 = vshrl.u32 %v1205, 7
  %v1207 = vsub.s32 1, %v1206
  %v1208 = vrot.slane %v1199, %v1207
  %v2028 = vunpack.c.l.b16 %v382
  %v2029 = vunpack.c.h.b16 %v382
  %v2030 = vunpack.c.l.b16 %v383
  %v2031 = vunpack.c.h.b16 %v383
  %v2032 = vunpack.c.l.b16 %v384
  %v2033 = vunpack.c.h.b16 %v384
  %v2034 = vunpack.c.l.b16 %v385
  %v2035 = vunpack.c.h.b16 %v385
  %v2036 = vunpack.c.l.b16 %v386
  %v2037 = vunpack.c.h.b16 %v386
  %v2038 = vunpack.c.l.b16 %v387
  %v2039 = vunpack.c.h.b16 %v387
  %v2040 = vunpack.c.l.b16 %v388
  %v2041 = vunpack.c.h.b16 %v388
  %v2042 = vunpack.c.l.b16 %v389
  %v2043 = vunpack.c.h.b16 %v389
  %v2044 = vunpack.c.l.b16 %v390
  %v2045 = vunpack.c.h.b16 %v390
  %v2046 = vunpack.c.l.b16 %v391
  %v2047 = vunpack.c.h.b16 %v391
  %v2048 = vunpack.c.l.b16 %v392
  %v2049 = vunpack.c.h.b16 %v392
  %v2050 = vunpack.c.l.b16 %v393
  %v2051 = vunpack.c.h.b16 %v393
  %v2052 = vunpack.c.l.b16 %v394
  %v2053 = vunpack.c.h.b16 %v394
  %v2054 = vunpack.c.l.b16 %v395
  %v2055 = vunpack.c.h.b16 %v395
  %v2056 = vunpack.c.l.b16 %v396
  %v2057 = vunpack.c.h.b16 %v396
  %v2058 = vunpack.c.l.b16 %v397
  %v2059 = vunpack.c.h.b16 %v397
  %v2060 = vunpack.c.l.b16 %v398
  %v2061 = vunpack.c.h.b16 %v398
  %v2062 = vunpack.c.l.b16 %v399
  %v2063 = vunpack.c.h.b16 %v399
  %v2064 = vunpack.c.l.b16 %v400
  %v2065 = vunpack.c.h.b16 %v400
  %v2066 = vunpack.c.l.b16 %v401
  %v2067 = vunpack.c.h.b16 %v401
  %v2068 = vunpack.c.l.b16 %v402
  %v2069 = vunpack.c.h.b16 %v402
  %v2070 = vunpack.c.l.b16 %v403
  %v2071 = vunpack.c.h.b16 %v403
  %v2072 = vunpack.c.l.b16 %v404
  %v2073 = vunpack.c.h.b16 %v404
  %v2074 = vunpack.c.l.b16 %v405
  %v2075 = vunpack.c.h.b16 %v405
  %v2076 = vunpack.c.l.b16 %v406
  %v2077 = vunpack.c.h.b16 %v406
  %v2078 = vunpack.c.l.b16 %v407
  %v2079 = vunpack.c.h.b16 %v407
  %v2080 = vunpack.c.l.b16 %v408
  %v2081 = vunpack.c.h.b16 %v408
  %v2082 = vunpack.c.l.b16 %v409
  %v2083 = vunpack.c.h.b16 %v409
  %v2084 = vunpack.c.l.b16 %v410
  %v2085 = vunpack.c.h.b16 %v410
  %v2086 = vunpack.c.l.b16 %v411
  %v2087 = vunpack.c.h.b16 %v411
  %v2088 = vunpack.c.l.b16 %v412
  %v2089 = vunpack.c.h.b16 %v412
  %v2090 = vunpack.c.l.b16 %v413
  %v2091 = vunpack.c.h.b16 %v413
  %v2092 = vunpack.c.l.b16 %v414
  %v2093 = vunpack.c.h.b16 %v414
  %v2094 = vunpack.c.l.b16 %v415
  %v2095 = vunpack.c.h.b16 %v415
  %v2096 = vunpack.c.l.b16 %v416
  %v2097 = vunpack.c.h.b16 %v416
  %v2098 = vunpack.c.l.b16 %v417
  %v2099 = vunpack.c.h.b16 %v417
  %v2100 = vunpack.c.l.b16 %v418
  %v2101 = vunpack.c.h.b16 %v418
  %v2102 = vunpack.c.l.b16 %v419
  %v2103 = vunpack.c.h.b16 %v419
  %v2104 = vunpack.c.l.b16 %v420
  %v2105 = vunpack.c.h.b16 %v420
  %v2106 = vunpack.c.l.b16 %v421
  %v2107 = vunpack.c.h.b16 %v421
  %v2108 = vunpack.c.l.b16 %v422
  %v2109 = vunpack.c.h.b16 %v422
  %v2110 = vunpack.c.l.b16 %v423
  %v2111 = vunpack.c.h.b16 %v423
  %v2112 = vunpack.c.l.b16 %v424
  %v2113 = vunpack.c.h.b16 %v424
  %v2114 = vunpack.c.l.b16 %v425
  %v2115 = vunpack.c.h.b16 %v425
  %v2116 = vunpack.c.l.b16 %v426
  %v2117 = vunpack.c.h.b16 %v426
  %v2118 = vunpack.c.l.b16 %v427
  %v2119 = vunpack.c.h.b16 %v427
  %v2120 = vunpack.c.l.b16 %v428
  %v2121 = vunpack.c.h.b16 %v428
  %v2122 = vunpack.c.l.b16 %v429
  %v2123 = vunpack.c.h.b16 %v429
  %v2124 = vunpack.c.l.b16 %v430
  %v2125 = vunpack.c.h.b16 %v430
  %v2126 = vunpack.c.l.b16 %v431
  %v2127 = vunpack.c.h.b16 %v431
  %v2128 = vunpack.c.l.b16 %v432
  %v2129 = vunpack.c.h.b16 %v432
  %v2130 = vunpack.c.l.b16 %v433
  %v2131 = vunpack.c.h.b16 %v433
  %v2132 = vunpack.c.l.b16 %v434
  %v2133 = vunpack.c.h.b16 %v434
  %v2134 = vunpack.c.l.b16 %v435
  %v2135 = vunpack.c.h.b16 %v435
  %v2136 = vunpack.c.l.b16 %v436
  %v2137 = vunpack.c.h.b16 %v436
  %v2138 = vunpack.c.l.b16 %v437
  %v2139 = vunpack.c.h.b16 %v437
  %v2140 = vunpack.c.l.b16 %v438
  %v2141 = vunpack.c.h.b16 %v438
  %v2142 = vunpack.c.l.b16 %v439
  %v2143 = vunpack.c.h.b16 %v439
  %v2144 = vunpack.c.l.b16 %v440
  %v2145 = vunpack.c.h.b16 %v440
  %v2146 = vunpack.c.l.b16 %v441
  %v2147 = vunpack.c.h.b16 %v441
  %v2148 = vunpack.c.l.b16 %v442
  %v2149 = vunpack.c.h.b16 %v442
  %v2150 = vunpack.c.l.b16 %v443
  %v2151 = vunpack.c.h.b16 %v443
  %v2152 = vunpack.c.l.b16 %v444
  %v2153 = vunpack.c.h.b16 %v444
  %v2154 = vunpack.c.l.b16 %v445
  %v2155 = vunpack.c.h.b16 %v445
  %v2156 = vunpack.c.l.b16 %v446
  %v2157 = vunpack.c.h.b16 %v446
  %v2158 = vunpack.c.l.b16 %v447
  %v2159 = vunpack.c.h.b16 %v447
  %v2160 = vunpack.c.l.b16 %v448
  %v2161 = vunpack.c.h.b16 %v448
  %v2162 = vunpack.c.l.b16 %v449
  %v2163 = vunpack.c.h.b16 %v449
  %v2164 = vunpack.c.l.b16 %v450
  %v2165 = vunpack.c.h.b16 %v450
  %v2166 = vunpack.c.l.b16 %v451
  %v2167 = vunpack.c.h.b16 %v451
  %v2168 = vunpack.c.l.b16 %v452
  %v2169 = vunpack.c.h.b16 %v452
  %v2170 = vunpack.c.l.b16 %v453
  %v2171 = vunpack.c.h.b16 %v453
  %v2172 = vunpack.c.l.b16 %v454
  %v2173 = vunpack.c.h.b16 %v454
  %v2174 = vunpack.c.l.b16 %v455
  %v2175 = vunpack.c.h.b16 %v455
  %v2176 = vunpack.c.l.b16 %v456
  %v2177 = vunpack.c.h.b16 %v456
  %v2178 = vunpack.c.l.b16 %v457
  %v2179 = vunpack.c.h.b16 %v457
  %v2180 = vunpack.c.l.b16 %v458
  %v2181 = vunpack.c.h.b16 %v458
  %v2182 = vunpack.c.l.b16 %v459
  %v2183 = vunpack.c.h.b16 %v459
  %v2184 = vunpack.c.l.b16 %v460
  %v2185 = vunpack.c.h.b16 %v460
  %v2186 = vunpack.c.l.b16 %v461
  %v2187 = vunpack.c.h.b16 %v461
  %v2188 = vunpack.c.l.b16 %v462
  %v2189 = vunpack.c.h.b16 %v462
  %v2190 = vunpack.c.l.b16 %v463
  %v2191 = vunpack.c.h.b16 %v463
  %v2192 = vunpack.c.l.b16 %v464
  %v2193 = vunpack.c.h.b16 %v464
  %v2194 = vunpack.c.l.b16 %v465
  %v2195 = vunpack.c.h.b16 %v465
  %v2196 = vunpack.c.l.b16 %v466
  %v2197 = vunpack.c.h.b16 %v466
  %v2198 = vunpack.c.l.b16 %v467
  %v2199 = vunpack.c.h.b16 %v467
  %v2200 = vunpack.c.l.b16 %v468
  %v2201 = vunpack.c.h.b16 %v468
  %v2202 = vunpack.c.l.b16 %v469
  %v2203 = vunpack.c.h.b16 %v469
  %v2204 = vunpack.c.l.b16 %v470
  %v2205 = vunpack.c.h.b16 %v470
  %v2206 = vunpack.c.l.b16 %v471
  %v2207 = vunpack.c.h.b16 %v471
  %v2208 = vunpack.c.l.b16 %v472
  %v2209 = vunpack.c.h.b16 %v472
  %v2210 = vunpack.c.l.b16 %v473
  %v2211 = vunpack.c.h.b16 %v473
  %v2212 = vunpack.c.l.b16 %v474
  %v2213 = vunpack.c.h.b16 %v474
  %v2214 = vunpack.c.l.b16 %v475
  %v2215 = vunpack.c.h.b16 %v475
  %v2216 = vunpack.c.l.b16 %v476
  %v2217 = vunpack.c.h.b16 %v476
  %v2218 = vunpack.c.l.b16 %v477
  %v2219 = vunpack.c.h.b16 %v477
  %v2220 = vunpack.c.l.b16 %v478
  %v2221 = vunpack.c.h.b16 %v478
  %v2222 = vunpack.c.l.b16 %v479
  %v2223 = vunpack.c.h.b16 %v479
  %v2224 = vunpack.c.l.b16 %v480
  %v2225 = vunpack.c.h.b16 %v480
  %v2226 = vunpack.c.l.b16 %v481
  %v2227 = vunpack.c.h.b16 %v481
  %v2228 = vunpack.c.l.b16 %v482
  %v2229 = vunpack.c.h.b16 %v482
  %v2230 = vunpack.c.l.b16 %v483
  %v2231 = vunpack.c.h.b16 %v483
  %v2232 = vunpack.c.l.b16 %v484
  %v2233 = vunpack.c.h.b16 %v484
  %v2234 = vunpack.c.l.b16 %v485
  %v2235 = vunpack.c.h.b16 %v485
  %v2236 = vunpack.c.l.b16 %v486
  %v2237 = vunpack.c.h.b16 %v486
  %v2238 = vunpack.c.l.b16 %v487
  %v2239 = vunpack.c.h.b16 %v487
  %v2240 = vunpack.c.l.b16 %v488
  %v2241 = vunpack.c.h.b16 %v488
  %v2242 = vunpack.c.l.b16 %v489
  %v2243 = vunpack.c.h.b16 %v489
  %v2244 = vunpack.c.l.b16 %v490
  %v2245 = vunpack.c.h.b16 %v490
  %v2246 = vunpack.c.l.b16 %v491
  %v2247 = vunpack.c.h.b16 %v491
  %v2248 = vunpack.c.l.b16 %v492
  %v2249 = vunpack.c.h.b16 %v492
  %v2250 = vunpack.c.l.b16 %v493
  %v2251 = vunpack.c.h.b16 %v493
  %v2252 = vunpack.c.l.b16 %v494
  %v2253 = vunpack.c.h.b16 %v494
  %v2254 = vunpack.c.l.b16 %v495
  %v2255 = vunpack.c.h.b16 %v495
  %v2256 = vunpack.c.l.b16 %v496
  %v2257 = vunpack.c.h.b16 %v496
  %v2258 = vunpack.c.l.b16 %v497
  %v2259 = vunpack.c.h.b16 %v497
  %v2260 = vunpack.c.l.b16 %v498
  %v2261 = vunpack.c.h.b16 %v498
  %v2262 = vunpack.c.l.b16 %v499
  %v2263 = vunpack.c.h.b16 %v499
  %v2264 = vunpack.c.l.b16 %v500
  %v2265 = vunpack.c.h.b16 %v500
  %v2266 = vunpack.c.l.b16 %v501
  %v2267 = vunpack.c.h.b16 %v501
  %v2268 = vunpack.c.l.b16 %v502
  %v2269 = vunpack.c.h.b16 %v502
  %v2270 = vunpack.c.l.b16 %v503
  %v2271 = vunpack.c.h.b16 %v503
  %v2272 = vunpack.c.l.b16 %v504
  %v2273 = vunpack.c.h.b16 %v504
  %v2274 = vunpack.c.l.b16 %v505
  %v2275 = vunpack.c.h.b16 %v505
  %v2276 = vunpack.c.l.b16 %v506
  %v2277 = vunpack.c.h.b16 %v506
  %v2278 = vunpack.c.l.b16 %v507
  %v2279 = vunpack.c.h.b16 %v507
  %v2280 = vunpack.c.l.b16 %v508
  %v2281 = vunpack.c.h.b16 %v508
  %v2282 = vunpack.c.l.b16 %v509
  %v2283 = vunpack.c.h.b16 %v509
  %v2284 = vunpack.c.l.b16 %v510
  %v2285 = vunpack.c.h.b16 %v510
  %v2286 = vunpack.c.l.b16 %v511
  %v2287 = vunpack.c.h.b16 %v511
  %v2288 = vunpack.c.l.b16 %v512
  %v2289 = vunpack.c.h.b16 %v512
  %v2290 = vunpack.c.l.b16 %v513
  %v2291 = vunpack.c.h.b16 %v513
  %v2292 = vunpack.c.l.b16 %v514
  %v2293 = vunpack.c.h.b16 %v514
  %v2294 = vunpack.c.l.b16 %v515
  %v2295 = vunpack.c.h.b16 %v515
  %v2296 = vunpack.c.l.b16 %v516
  %v2297 = vunpack.c.h.b16 %v516
  %v2298 = vunpack.c.l.b16 %v517
  %v2299 = vunpack.c.h.b16 %v517
  %v2300 = vunpack.c.l.b16 %v518
  %v2301 = vunpack.c.h.b16 %v518
  %v2302 = vunpack.c.l.b16 %v519
  %v2303 = vunpack.c.h.b16 %v519
  %v2304 = vunpack.c.l.b16 %v520
  %v2305 = vunpack.c.h.b16 %v520
  %v2306 = vunpack.c.l.b16 %v521
  %v2307 = vunpack.c.h.b16 %v521
  %v2308 = vunpack.c.l.b16 %v522
  %v2309 = vunpack.c.h.b16 %v522
  %v2310 = vunpack.c.l.b16 %v523
  %v2311 = vunpack.c.h.b16 %v523
  %v2312 = vunpack.c.l.b16 %v524
  %v2313 = vunpack.c.h.b16 %v524
  %v2314 = vunpack.c.l.b16 %v525
  %v2315 = vunpack.c.h.b16 %v525
  %v2316 = vunpack.c.l.b16 %v526
  %v2317 = vunpack.c.h.b16 %v526
  %v2318 = vunpack.c.l.b16 %v527
  %v2319 = vunpack.c.h.b16 %v527
  %v2320 = vunpack.c.l.b16 %v528
  %v2321 = vunpack.c.h.b16 %v528
  %v2322 = vunpack.c.l.b16 %v529
  %v2323 = vunpack.c.h.b16 %v529
  %v2324 = vunpack.c.l.b16 %v530
  %v2325 = vunpack.c.h.b16 %v530
  %v2326 = vunpack.c.l.b16 %v531
  %v2327 = vunpack.c.h.b16 %v531
  %v2328 = vunpack.c.l.b16 %v532
  %v2329 = vunpack.c.h.b16 %v532
  %v2330 = vunpack.c.l.b16 %v533
  %v2331 = vunpack.c.h.b16 %v533
  %v2332 = vunpack.c.l.b16 %v534
  %v2333 = vunpack.c.h.b16 %v534
  %v2334 = vunpack.c.l.b16 %v535
  %v2335 = vunpack.c.h.b16 %v535
  %v2336 = vunpack.c.l.b16 %v536
  %v2337 = vunpack.c.h.b16 %v536
  %v2338 = vunpack.c.l.b16 %v537
  %v2339 = vunpack.c.h.b16 %v537
  %v2340 = vunpack.c.l.b16 %v538
  %v2341 = vunpack.c.h.b16 %v538
  %v2342 = vunpack.c.l.b16 %v539
  %v2343 = vunpack.c.h.b16 %v539
  %v2344 = vunpack.c.l.b16 %v540
  %v2345 = vunpack.c.h.b16 %v540
  %v2346 = vunpack.c.l.b16 %v541
  %v2347 = vunpack.c.h.b16 %v541
  %v2348 = vunpack.c.l.b16 %v542
  %v2349 = vunpack.c.h.b16 %v542
  %v2350 = vunpack.c.l.b16 %v543
  %v2351 = vunpack.c.h.b16 %v543
  %v2352 = vunpack.c.l.b16 %v544
  %v2353 = vunpack.c.h.b16 %v544
  %v2354 = vunpack.c.l.b16 %v545
  %v2355 = vunpack.c.h.b16 %v545
  %v2356 = vunpack.c.l.b16 %v546
  %v2357 = vunpack.c.h.b16 %v546
  %v2358 = vunpack.c.l.b16 %v547
  %v2359 = vunpack.c.h.b16 %v547
  %v2360 = vunpack.c.l.b16 %v548
  %v2361 = vunpack.c.h.b16 %v548
  %v2362 = vunpack.c.l.b16 %v549
  %v2363 = vunpack.c.h.b16 %v549
  %v2364 = vunpack.c.l.b16 %v550
  %v2365 = vunpack.c.h.b16 %v550
  %v2366 = vunpack.c.l.b16 %v551
  %v2367 = vunpack.c.h.b16 %v551
  %v2368 = vunpack.c.l.b16 %v552
  %v2369 = vunpack.c.h.b16 %v552
  %v2370 = vunpack.c.l.b16 %v553
  %v2371 = vunpack.c.h.b16 %v553
  %v2372 = vunpack.c.l.b16 %v554
  %v2373 = vunpack.c.h.b16 %v554
  %v2374 = vunpack.c.l.b16 %v555
  %v2375 = vunpack.c.h.b16 %v555
  %v2376 = vunpack.c.l.b16 %v556
  %v2377 = vunpack.c.h.b16 %v556
  %v2378 = vunpack.c.l.b16 %v557
  %v2379 = vunpack.c.h.b16 %v557
  %v2380 = vunpack.c.l.b16 %v558
  %v2381 = vunpack.c.h.b16 %v558
  %v2382 = vunpack.c.l.b16 %v559
  %v2383 = vunpack.c.h.b16 %v559
  %v2384 = vunpack.c.l.b16 %v560
  %v2385 = vunpack.c.h.b16 %v560
  %v2386 = vunpack.c.l.b16 %v561
  %v2387 = vunpack.c.h.b16 %v561
  %v2388 = vunpack.c.l.b16 %v562
  %v2389 = vunpack.c.h.b16 %v562
  %v2390 = vunpack.c.l.b16 %v563
  %v2391 = vunpack.c.h.b16 %v563
  %v2392 = vunpack.c.l.b16 %v564
  %v2393 = vunpack.c.h.b16 %v564
  %v2394 = vunpack.c.l.b16 %v565
  %v2395 = vunpack.c.h.b16 %v565
  %v2396 = vunpack.c.l.b16 %v566
  %v2397 = vunpack.c.h.b16 %v566
  %v2398 = vunpack.c.l.b16 %v567
  %v2399 = vunpack.c.h.b16 %v567
  %v2400 = vunpack.c.l.b16 %v568
  %v2401 = vunpack.c.h.b16 %v568
  %v2402 = vunpack.c.l.b16 %v569
  %v2403 = vunpack.c.h.b16 %v569
  %v2404 = vunpack.c.l.b16 %v570
  %v2405 = vunpack.c.h.b16 %v570
  %v2406 = vunpack.c.l.b16 %v571
  %v2407 = vunpack.c.h.b16 %v571
  %v2408 = vunpack.c.l.b16 %v572
  %v2409 = vunpack.c.h.b16 %v572
  %v2410 = vunpack.c.l.b16 %v573
  %v2411 = vunpack.c.h.b16 %v573
  %v2412 = vunpack.c.l.b16 %v574
  %v2413 = vunpack.c.h.b16 %v574
  %v2414 = vunpack.c.l.b16 %v575
  %v2415 = vunpack.c.h.b16 %v575
  %v2416 = vunpack.c.l.b16 %v576
  %v2417 = vunpack.c.h.b16 %v576
  %v2418 = vunpack.c.l.b16 %v577
  %v2419 = vunpack.c.h.b16 %v577
  %v2420 = vunpack.c.l.b16 %v578
  %v2421 = vunpack.c.h.b16 %v578
  %v2422 = vunpack.c.l.b16 %v579
  %v2423 = vunpack.c.h.b16 %v579
  %v2424 = vunpack.c.l.b16 %v580
  %v2425 = vunpack.c.h.b16 %v580
  %v2426 = vunpack.c.l.b16 %v581
  %v2427 = vunpack.c.h.b16 %v581
  %v2428 = vunpack.c.l.b16 %v582
  %v2429 = vunpack.c.h.b16 %v582
  %v2430 = vunpack.c.l.b16 %v583
  %v2431 = vunpack.c.h.b16 %v583
  %v2432 = vunpack.c.l.b16 %v584
  %v2433 = vunpack.c.h.b16 %v584
  %v2434 = vunpack.c.l.b16 %v585
  %v2435 = vunpack.c.h.b16 %v585
  %v2436 = vunpack.c.l.b16 %v586
  %v2437 = vunpack.c.h.b16 %v586
  %v2438 = vunpack.c.l.b16 %v587
  %v2439 = vunpack.c.h.b16 %v587
  %v2440 = vunpack.c.l.b16 %v588
  %v2441 = vunpack.c.h.b16 %v588
  %v2442 = vunpack.c.l.b16 %v589
  %v2443 = vunpack.c.h.b16 %v589
  %v2444 = vunpack.c.l.b16 %v590
  %v2445 = vunpack.c.h.b16 %v590
  %v2446 = vunpack.c.l.b16 %v591
  %v2447 = vunpack.c.h.b16 %v591
  %v2448 = vunpack.c.l.b16 %v592
  %v2449 = vunpack.c.h.b16 %v592
  %v2450 = vunpack.c.l.b16 %v593
  %v2451 = vunpack.c.h.b16 %v593
  %v2452 = vunpack.c.l.b16 %v594
  %v2453 = vunpack.c.h.b16 %v594
  %v2454 = vunpack.c.l.b16 %v595
  %v2455 = vunpack.c.h.b16 %v595
  %v2456 = vunpack.c.l.b16 %v596
  %v2457 = vunpack.c.h.b16 %v596
  %v2458 = vunpack.c.l.b16 %v597
  %v2459 = vunpack.c.h.b16 %v597
  %v2460 = vunpack.c.l.b16 %v598
  %v2461 = vunpack.c.h.b16 %v598
  %v2462 = vunpack.c.l.b16 %v599
  %v2463 = vunpack.c.h.b16 %v599
  %v2464 = vunpack.c.l.b16 %v600
  %v2465 = vunpack.c.h.b16 %v600
  %v2466 = vunpack.c.l.b16 %v601
  %v2467 = vunpack.c.h.b16 %v601
  %v2468 = vunpack.c.l.b16 %v602
  %v2469 = vunpack.c.h.b16 %v602
  %v2470 = vunpack.c.l.b16 %v603
  %v2471 = vunpack.c.h.b16 %v603
  %v2472 = vunpack.c.l.b16 %v604
  %v2473 = vunpack.c.h.b16 %v604
  %v2474 = vunpack.c.l.b16 %v605
  %v2475 = vunpack.c.h.b16 %v605
  %v2476 = vunpack.c.l.b16 %v606
  %v2477 = vunpack.c.h.b16 %v606
  %v2478 = vunpack.c.l.b16 %v607
  %v2479 = vunpack.c.h.b16 %v607
  %v2480 = vunpack.c.l.b16 %v608
  %v2481 = vunpack.c.h.b16 %v608
  %v2482 = vunpack.c.l.b16 %v609
  %v2483 = vunpack.c.h.b16 %v609
  %v2484 = vunpack.c.l.b16 %v610
  %v2485 = vunpack.c.h.b16 %v610
  %v2486 = vunpack.c.l.b16 %v611
  %v2487 = vunpack.c.h.b16 %v611
  %v2488 = vunpack.c.l.b16 %v612
  %v2489 = vunpack.c.h.b16 %v612
  %v2490 = vunpack.c.l.b16 %v613
  %v2491 = vunpack.c.h.b16 %v613
  %v2492 = vunpack.c.l.b16 %v614
  %v2493 = vunpack.c.h.b16 %v614
  %v2494 = vunpack.c.l.b16 %v615
  %v2495 = vunpack.c.h.b16 %v615
  %v2496 = vunpack.c.l.b16 %v616
  %v2497 = vunpack.c.h.b16 %v616
  %v2498 = vunpack.c.l.b16 %v617
  %v2499 = vunpack.c.h.b16 %v617
  %v2500 = vunpack.c.l.b16 %v618
  %v2501 = vunpack.c.h.b16 %v618
  %v2502 = vunpack.c.l.b16 %v619
  %v2503 = vunpack.c.h.b16 %v619
  %v2504 = vunpack.c.l.b16 %v620
  %v2505 = vunpack.c.h.b16 %v620
  %v2506 = vunpack.c.l.b16 %v621
  %v2507 = vunpack.c.h.b16 %v621
  %v2508 = vunpack.c.l.b16 %v622
  %v2509 = vunpack.c.h.b16 %v622
  %v2510 = vunpack.c.l.b16 %v623
  %v2511 = vunpack.c.h.b16 %v623
  %v2512 = vunpack.c.l.b16 %v624
  %v2513 = vunpack.c.h.b16 %v624
  %v2514 = vunpack.c.l.b16 %v625
  %v2515 = vunpack.c.h.b16 %v625
  %v2516 = vunpack.c.l.b16 %v626
  %v2517 = vunpack.c.h.b16 %v626
  %v2518 = vunpack.c.l.b16 %v627
  %v2519 = vunpack.c.h.b16 %v627
  %v2520 = vunpack.c.l.b16 %v628
  %v2521 = vunpack.c.h.b16 %v628
  %v2522 = vunpack.c.l.b16 %v629
  %v2523 = vunpack.c.h.b16 %v629
  %v2524 = vunpack.c.l.b16 %v630
  %v2525 = vunpack.c.h.b16 %v630
  %v2526 = vunpack.c.l.b16 %v631
  %v2527 = vunpack.c.h.b16 %v631
  %v2528 = vunpack.c.l.b16 %v632
  %v2529 = vunpack.c.h.b16 %v632
  %v2530 = vunpack.c.l.b16 %v633
  %v2531 = vunpack.c.h.b16 %v633
  %v2532 = vunpack.c.l.b16 %v634
  %v2533 = vunpack.c.h.b16 %v634
  %v2534 = vunpack.c.l.b16 %v635
  %v2535 = vunpack.c.h.b16 %v635
  %v2536 = vunpack.c.l.b16 %v636
  %v2537 = vunpack.c.h.b16 %v636
  %v2538 = vunpack.c.l.b16 %v637
  %v2539 = vunpack.c.h.b16 %v637
  %v2540 = vunpack.c.l.b16 %v638
  %v2541 = vunpack.c.h.b16 %v638
  %v2542 = vunpack.c.l.b16 %v639
  %v2543 = vunpack.c.h.b16 %v639
  %v2544 = vunpack.c.l.b16 %v640
  %v2545 = vunpack.c.h.b16 %v640
  %v2546 = vunpack.c.l.b16 %v641
  %v2547 = vunpack.c.h.b16 %v641
  %v2548 = vunpack.c.l.b16 %v642
  %v2549 = vunpack.c.h.b16 %v642
  %v2550 = vunpack.c.l.b16 %v643
  %v2551 = vunpack.c.h.b16 %v643
  %v2552 = vunpack.c.l.b16 %v644
  %v2553 = vunpack.c.h.b16 %v644
  %v2554 = vunpack.c.l.b16 %v645
  %v2555 = vunpack.c.h.b16 %v645
  %v2556 = vunpack.c.l.b16 %v646
  %v2557 = vunpack.c.h.b16 %v646
  %v2558 = vunpack.c.l.b16 %v647
  %v2559 = vunpack.c.h.b16 %v647
  %v2560 = vunpack.c.l.b16 %v648
  %v2561 = vunpack.c.h.b16 %v648
  %v2562 = vunpack.c.l.b16 %v649
  %v2563 = vunpack.c.h.b16 %v649
  %v2564 = vunpack.c.l.b16 %v650
  %v2565 = vunpack.c.h.b16 %v650
  %v2566 = vunpack.c.l.b16 %v651
  %v2567 = vunpack.c.h.b16 %v651
  %v2568 = vunpack.c.l.b16 %v652
  %v2569 = vunpack.c.h.b16 %v652
  %v2570 = vunpack.c.l.b16 %v653
  %v2571 = vunpack.c.h.b16 %v653
  %v2572 = vunpack.c.l.b16 %v654
  %v2573 = vunpack.c.h.b16 %v654
  %v2574 = vunpack.c.l.b16 %v655
  %v2575 = vunpack.c.h.b16 %v655
  %v2576 = vunpack.c.l.b16 %v656
  %v2577 = vunpack.c.h.b16 %v656
  %v2578 = vunpack.c.l.b16 %v657
  %v2579 = vunpack.c.h.b16 %v657
  %v2580 = vunpack.c.l.b16 %v658
  %v2581 = vunpack.c.h.b16 %v658
  %v2582 = vunpack.c.l.b16 %v659
  %v2583 = vunpack.c.h.b16 %v659
  %v2584 = vunpack.c.l.b16 %v660
  %v2585 = vunpack.c.h.b16 %v660
  %v2586 = vunpack.c.l.b16 %v661
  %v2587 = vunpack.c.h.b16 %v661
  %v2588 = vunpack.c.l.b16 %v662
  %v2589 = vunpack.c.h.b16 %v662
  %v2590 = vunpack.c.l.b16 %v663
  %v2591 = vunpack.c.h.b16 %v663
  %v2592 = vunpack.c.l.b16 %v664
  %v2593 = vunpack.c.h.b16 %v664
  %v2594 = vunpack.c.l.b16 %v665
  %v2595 = vunpack.c.h.b16 %v665
  %v2596 = vunpack.c.l.b16 %v666
  %v2597 = vunpack.c.h.b16 %v666
  %v2598 = vunpack.c.l.b16 %v667
  %v2599 = vunpack.c.h.b16 %v667
  %v2600 = vunpack.c.l.b16 %v668
  %v2601 = vunpack.c.h.b16 %v668
  %v2602 = vunpack.c.l.b16 %v669
  %v2603 = vunpack.c.h.b16 %v669
  %v2604 = vunpack.c.l.b16 %v670
  %v2605 = vunpack.c.h.b16 %v670
  %v2606 = vunpack.c.l.b16 %v671
  %v2607 = vunpack.c.h.b16 %v671
  %v2608 = vunpack.c.l.b16 %v672
  %v2609 = vunpack.c.h.b16 %v672
  %v2610 = vunpack.c.l.b16 %v673
  %v2611 = vunpack.c.h.b16 %v673
  %v2612 = vunpack.c.l.b16 %v674
  %v2613 = vunpack.c.h.b16 %v674
  %v2614 = vunpack.c.l.b16 %v675
  %v2615 = vunpack.c.h.b16 %v675
  %v2616 = vunpack.c.l.b16 %v676
  %v2617 = vunpack.c.h.b16 %v676
  %v2618 = vunpack.c.l.b16 %v677
  %v2619 = vunpack.c.h.b16 %v677
  %v2620 = vunpack.c.l.b16 %v678
  %v2621 = vunpack.c.h.b16 %v678
  %v2622 = vunpack.c.l.b16 %v679
  %v2623 = vunpack.c.h.b16 %v679
  %v2624 = vunpack.c.l.b16 %v680
  %v2625 = vunpack.c.h.b16 %v680
  %v2626 = vunpack.c.l.b16 %v681
  %v2627 = vunpack.c.h.b16 %v681
  %v2628 = vunpack.c.l.b16 %v682
  %v2629 = vunpack.c.h.b16 %v682
  %v2630 = vunpack.c.l.b16 %v683
  %v2631 = vunpack.c.h.b16 %v683
  %v2632 = vunpack.c.l.b16 %v684
  %v2633 = vunpack.c.h.b16 %v684
  %v2634 = vunpack.c.l.b16 %v685
  %v2635 = vunpack.c.h.b16 %v685
  %v2636 = vunpack.c.l.b16 %v686
  %v2637 = vunpack.c.h.b16 %v686
  %v2638 = vunpack.c.l.b16 %v687
  %v2639 = vunpack.c.h.b16 %v687
  %v2640 = vunpack.c.l.b16 %v688
  %v2641 = vunpack.c.h.b16 %v688
  %v2642 = vunpack.c.l.b16 %v689
  %v2643 = vunpack.c.h.b16 %v689
  %v2644 = vunpack.c.l.b16 %v690
  %v2645 = vunpack.c.h.b16 %v690
  %v2646 = vunpack.c.l.b16 %v691
  %v2647 = vunpack.c.h.b16 %v691
  %v2648 = vunpack.c.l.b16 %v692
  %v2649 = vunpack.c.h.b16 %v692
  %v2650 = vunpack.c.l.b16 %v693
  %v2651 = vunpack.c.h.b16 %v693
  %v2652 = vunpack.c.l.b16 %v694
  %v2653 = vunpack.c.h.b16 %v694
  %v2654 = vunpack.c.l.b16 %v695
  %v2655 = vunpack.c.h.b16 %v695
  %v2656 = vunpack.c.l.b16 %v696
  %v2657 = vunpack.c.h.b16 %v696
  %v2658 = vunpack.c.l.b16 %v697
  %v2659 = vunpack.c.h.b16 %v697
  %v2660 = vunpack.c.l.b16 %v698
  %v2661 = vunpack.c.h.b16 %v698
  %v2662 = vunpack.c.l.b16 %v699
  %v2663 = vunpack.c.h.b16 %v699
  %v2664 = vunpack.c.l.b16 %v700
  %v2665 = vunpack.c.h.b16 %v700
  %v2666 = vunpack.c.l.b16 %v701
  %v2667 = vunpack.c.h.b16 %v701
  %v2668 = vunpack.c.l.b16 %v702
  %v2669 = vunpack.c.h.b16 %v702
  %v2670 = vunpack.c.l.b16 %v703
  %v2671 = vunpack.c.h.b16 %v703
  %v2672 = vunpack.c.l.b16 %v704
  %v2673 = vunpack.c.h.b16 %v704
  %v2674 = vunpack.c.l.b16 %v705
  %v2675 = vunpack.c.h.b16 %v705
  %v2676 = vunpack.c.l.b16 %v706
  %v2677 = vunpack.c.h.b16 %v706
  %v2678 = vunpack.c.l.b16 %v707
  %v2679 = vunpack.c.h.b16 %v707
  %v2680 = vunpack.c.l.b16 %v708
  %v2681 = vunpack.c.h.b16 %v708
  %v2682 = vunpack.c.l.b16 %v709
  %v2683 = vunpack.c.h.b16 %v709
  %v2684 = vunpack.c.l.b16 %v710
  %v2685 = vunpack.c.h.b16 %v710
  %v2686 = vunpack.c.l.b16 %v711
  %v2687 = vunpack.c.h.b16 %v711
  %v2688 = vunpack.c.l.b16 %v712
  %v2689 = vunpack.c.h.b16 %v712
  %v2690 = vunpack.c.l.b16 %v713
  %v2691 = vunpack.c.h.b16 %v713
  %v2692 = vunpack.c.l.b16 %v714
  %v2693 = vunpack.c.h.b16 %v714
  %v2694 = vunpack.c.l.b16 %v715
  %v2695 = vunpack.c.h.b16 %v715
  %v2696 = vunpack.c.l.b16 %v716
  %v2697 = vunpack.c.h.b16 %v716
  %v2698 = vunpack.c.l.b16 %v717
  %v2699 = vunpack.c.h.b16 %v717
  %v2700 = vunpack.c.l.b16 %v718
  %v2701 = vunpack.c.h.b16 %v718
  %v2702 = vunpack.c.l.b16 %v719
  %v2703 = vunpack.c.h.b16 %v719
  %v2704 = vunpack.c.l.b16 %v720
  %v2705 = vunpack.c.h.b16 %v720
  %v2706 = vunpack.c.l.b16 %v721
  %v2707 = vunpack.c.h.b16 %v721
  %v2708 = vunpack.c.l.b16 %v722
  %v2709 = vunpack.c.h.b16 %v722
  %v2710 = vunpack.c.l.b16 %v723
  %v2711 = vunpack.c.h.b16 %v723
  %v2712 = vunpack.c.l.b16 %v724
  %v2713 = vunpack.c.h.b16 %v724
  %v2714 = vunpack.c.l.b16 %v725
  %v2715 = vunpack.c.h.b16 %v725
  %v2716 = vunpack.c.l.b16 %v726
  %v2717 = vunpack.c.h.b16 %v726
  %v2718 = vunpack.c.l.b16 %v727
  %v2719 = vunpack.c.h.b16 %v727
  %v2720 = vunpack.c.l.b16 %v728
  %v2721 = vunpack.c.h.b16 %v728
  %v2722 = vunpack.c.l.b16 %v729
  %v2723 = vunpack.c.h.b16 %v729
  %v2724 = vunpack.c.l.b16 %v730
  %v2725 = vunpack.c.h.b16 %v730
  %v2726 = vunpack.c.l.b16 %v731
  %v2727 = vunpack.c.h.b16 %v731
  %v2728 = vunpack.c.l.b16 %v732
  %v2729 = vunpack.c.h.b16 %v732
  %v2730 = vunpack.c.l.b16 %v733
  %v2731 = vunpack.c.h.b16 %v733
  %v2732 = vunpack.c.l.b16 %v734
  %v2733 = vunpack.c.h.b16 %v734
  %v2734 = vunpack.c.l.b16 %v735
  %v2735 = vunpack.c.h.b16 %v735
  %v2736 = vunpack.c.l.b16 %v736
  %v2737 = vunpack.c.h.b16 %v736
  %v2738 = vunpack.c.l.b16 %v737
  %v2739 = vunpack.c.h.b16 %v737
  %v2740 = vunpack.c.l.b16 %v738
  %v2741 = vunpack.c.h.b16 %v738
  %v2742 = vunpack.c.l.b16 %v739
  %v2743 = vunpack.c.h.b16 %v739
  %v2744 = vunpack.c.l.b16 %v740
  %v2745 = vunpack.c.h.b16 %v740
  %v2746 = vunpack.c.l.b16 %v741
  %v2747 = vunpack.c.h.b16 %v741
  %v2748 = vunpack.c.l.b16 %v742
  %v2749 = vunpack.c.h.b16 %v742
  %v2750 = vunpack.c.l.b16 %v743
  %v2751 = vunpack.c.h.b16 %v743
  %v2752 = vunpack.c.l.b16 %v744
  %v2753 = vunpack.c.h.b16 %v744
  %v2754 = vunpack.c.l.b16 %v745
  %v2755 = vunpack.c.h.b16 %v745
  %v2756 = vunpack.c.l.b16 %v746
  %v2757 = vunpack.c.h.b16 %v746
  %v2758 = vunpack.c.l.b16 %v747
  %v2759 = vunpack.c.h.b16 %v747
  %v2760 = vunpack.c.l.b16 %v748
  %v2761 = vunpack.c.h.b16 %v748
  %v2762 = vunpack.c.l.b16 %v749
  %v2763 = vunpack.c.h.b16 %v749
  %v2764 = vunpack.c.l.b16 %v750
  %v2765 = vunpack.c.h.b16 %v750
  %v2766 = vunpack.c.l.b16 %v751
  %v2767 = vunpack.c.h.b16 %v751
  %v2768 = vunpack.c.l.b16 %v752
  %v2769 = vunpack.c.h.b16 %v752
  %v2770 = vunpack.c.l.b16 %v753
  %v2771 = vunpack.c.h.b16 %v753
  %v2772 = vunpack.c.l.b16 %v754
  %v2773 = vunpack.c.h.b16 %v754
  %v2774 = vunpack.c.l.b16 %v755
  %v2775 = vunpack.c.h.b16 %v755
  %v2776 = vunpack.c.l.b16 %v756
  %v2777 = vunpack.c.h.b16 %v756
  %v2778 = vunpack.c.l.b16 %v757
  %v2779 = vunpack.c.h.b16 %v757
  %v2780 = vunpack.c.l.b16 %v758
  %v2781 = vunpack.c.h.b16 %v758
  %v2782 = vunpack.c.l.b16 %v759
  %v2783 = vunpack.c.h.b16 %v759
  %v2784 = vunpack.c.l.b16 %v760
  %v2785 = vunpack.c.h.b16 %v760
  %v2786 = vunpack.c.l.b16 %v761
  %v2787 = vunpack.c.h.b16 %v761
  %v2788 = vunpack.c.l.b16 %v762
  %v2789 = vunpack.c.h.b16 %v762
  %v2790 = vunpack.c.l.b16 %v763
  %v2791 = vunpack.c.h.b16 %v763
  %v2792 = vunpack.c.l.b16 %v764
  %v2793 = vunpack.c.h.b16 %v764
  %v2794 = vunpack.c.l.b16 %v765
  %v2795 = vunpack.c.h.b16 %v765
  %v2796 = vunpack.c.l.b16 %v766
  %v2797 = vunpack.c.h.b16 %v766
  %v2798 = vunpack.c.l.b16 %v767
  %v2799 = vunpack.c.h.b16 %v767
  %v2800 = vunpack.c.l.b16 %v768
  %v2801 = vunpack.c.h.b16 %v768
  %v2802 = vunpack.c.l.b16 %v769
  %v2803 = vunpack.c.h.b16 %v769
  %v2804 = vunpack.c.l.b16 %v770
  %v2805 = vunpack.c.h.b16 %v770
  %v2806 = vunpack.c.l.b16 %v771
  %v2807 = vunpack.c.h.b16 %v771
  %v2808 = vunpack.c.l.b16 %v772
  %v2809 = vunpack.c.h.b16 %v772
  %v2810 = vunpack.c.l.b16 %v773
  %v2811 = vunpack.c.h.b16 %v773
  %v2812 = vunpack.c.l.b16 %v774
  %v2813 = vunpack.c.h.b16 %v774
  %v2814 = vunpack.c.l.b16 %v775
  %v2815 = vunpack.c.h.b16 %v775
  %v2816 = vunpack.c.l.b16 %v776
  %v2817 = vunpack.c.h.b16 %v776
  %v2818 = vunpack.c.l.b16 %v777
  %v2819 = vunpack.c.h.b16 %v777
  %v2820 = vunpack.c.l.b16 %v778
  %v2821 = vunpack.c.h.b16 %v778
  %v2822 = vunpack.c.l.b16 %v779
  %v2823 = vunpack.c.h.b16 %v779
  %v2824 = vunpack.c.l.b16 %v780
  %v2825 = vunpack.c.h.b16 %v780
  %v2826 = vunpack.c.l.b16 %v781
  %v2827 = vunpack.c.h.b16 %v781
  %v2828 = vunpack.c.l.b16 %v782
  %v2829 = vunpack.c.h.b16 %v782
  %v2830 = vunpack.c.l.b16 %v783
  %v2831 = vunpack.c.h.b16 %v783
  %v2832 = vunpack.c.l.b16 %v784
  %v2833 = vunpack.c.h.b16 %v784
  %v2834 = vunpack.c.l.b16 %v785
  %v2835 = vunpack.c.h.b16 %v785
  %v2836 = vunpack.c.l.b16 %v786
  %v2837 = vunpack.c.h.b16 %v786
  %v2838 = vunpack.c.l.b16 %v787
  %v2839 = vunpack.c.h.b16 %v787
  %v2840 = vunpack.c.l.b16 %v788
  %v2841 = vunpack.c.h.b16 %v788
  %v2842 = vunpack.c.l.b16 %v789
  %v2843 = vunpack.c.h.b16 %v789
  %v2844 = vunpack.c.l.b16 %v790
  %v2845 = vunpack.c.h.b16 %v790
  %v2846 = vunpack.c.l.b16 %v791
  %v2847 = vunpack.c.h.b16 %v791
  %v2848 = vunpack.c.l.b16 %v792
  %v2849 = vunpack.c.h.b16 %v792
  %v2850 = vunpack.c.l.b16 %v793
  %v2851 = vunpack.c.h.b16 %v793
  %v2852 = vunpack.c.l.b16 %v794
  %v2853 = vunpack.c.h.b16 %v794
  %v2854 = vunpack.c.l.b16 %v795
  %v2855 = vunpack.c.h.b16 %v795
  %v2856 = vunpack.c.l.b16 %v796
  %v2857 = vunpack.c.h.b16 %v796
  %v2858 = vunpack.c.l.b16 %v797
  %v2859 = vunpack.c.h.b16 %v797
  %v2860 = vunpack.c.l.b16 %v798
  %v2861 = vunpack.c.h.b16 %v798
  %v2862 = vunpack.c.l.b16 %v799
  %v2863 = vunpack.c.h.b16 %v799
  %v2864 = vunpack.c.l.b16 %v800
  %v2865 = vunpack.c.h.b16 %v800
  %v2866 = vunpack.c.l.b16 %v801
  %v2867 = vunpack.c.h.b16 %v801
  %v2868 = vunpack.c.l.b16 %v802
  %v2869 = vunpack.c.h.b16 %v802
  %v2870 = vunpack.c.l.b16 %v803
  %v2871 = vunpack.c.h.b16 %v803
  %v2872 = vunpack.c.l.b16 %v804
  %v2873 = vunpack.c.h.b16 %v804
  %v2874 = vunpack.c.l.b16 %v805
  %v2875 = vunpack.c.h.b16 %v805
  %v2876 = vunpack.c.l.b16 %v806
  %v2877 = vunpack.c.h.b16 %v806
  %v2878 = vunpack.c.l.b16 %v807
  %v2879 = vunpack.c.h.b16 %v807
  %v2880 = vunpack.c.l.b16 %v808
  %v2881 = vunpack.c.h.b16 %v808
  %v2882 = vunpack.c.l.b16 %v809
  %v2883 = vunpack.c.h.b16 %v809
  %v2884 = vunpack.c.l.b16 %v810
  %v2885 = vunpack.c.h.b16 %v810
  %v2886 = vunpack.c.l.b16 %v811
  %v2887 = vunpack.c.h.b16 %v811
  %v2888 = vunpack.c.l.b16 %v812
  %v2889 = vunpack.c.h.b16 %v812
  %v2890 = vunpack.c.l.b16 %v813
  %v2891 = vunpack.c.h.b16 %v813
  %v2892 = vunpack.c.l.b16 %v814
  %v2893 = vunpack.c.h.b16 %v814
  %v2894 = vunpack.c.l.b16 %v815
  %v2895 = vunpack.c.h.b16 %v815
  %v2896 = vunpack.c.l.b16 %v816
  %v2897 = vunpack.c.h.b16 %v816
  %v2898 = vunpack.c.l.b16 %v817
  %v2899 = vunpack.c.h.b16 %v817
  %v2900 = vunpack.c.l.b16 %v818
  %v2901 = vunpack.c.h.b16 %v818
  %v2902 = vunpack.c.l.b16 %v819
  %v2903 = vunpack.c.h.b16 %v819
  %v2904 = vunpack.c.l.b16 %v820
  %v2905 = vunpack.c.h.b16 %v820
  %v2906 = vunpack.c.l.b16 %v821
  %v2907 = vunpack.c.h.b16 %v821
  %v2908 = vunpack.c.l.b16 %v822
  %v2909 = vunpack.c.h.b16 %v822
  %v2910 = vunpack.c.l.b16 %v823
  %v2911 = vunpack.c.h.b16 %v823
  %v2912 = vunpack.c.l.b16 %v824
  %v2913 = vunpack.c.h.b16 %v824
  %v2914 = vunpack.c.l.b16 %v825
  %v2915 = vunpack.c.h.b16 %v825
  %v2916 = vunpack.c.l.b16 %v826
  %v2917 = vunpack.c.h.b16 %v826
  %v2918 = vunpack.c.l.b16 %v827
  %v2919 = vunpack.c.h.b16 %v827
  %v2920 = vunpack.c.l.b16 %v828
  %v2921 = vunpack.c.h.b16 %v828
  %v2922 = vunpack.c.l.b16 %v829
  %v2923 = vunpack.c.h.b16 %v829
  %v2924 = vunpack.c.l.b16 %v830
  %v2925 = vunpack.c.h.b16 %v830
  %v2926 = vunpack.c.l.b16 %v831
  %v2927 = vunpack.c.h.b16 %v831
  %v2928 = vunpack.c.l.b16 %v832
  %v2929 = vunpack.c.h.b16 %v832
  %v2930 = vunpack.c.l.b16 %v833
  %v2931 = vunpack.c.h.b16 %v833
  %v2932 = vunpack.c.l.b16 %v834
  %v2933 = vunpack.c.h.b16 %v834
  %v2934 = vunpack.c.l.b16 %v835
  %v2935 = vunpack.c.h.b16 %v835
  %v2936 = vunpack.c.l.b16 %v836
  %v2937 = vunpack.c.h.b16 %v836
  %v2938 = vunpack.c.l.b16 %v837
  %v2939 = vunpack.c.h.b16 %v837
  %v2940 = vunpack.c.l.b16 %v838
  %v2941 = vunpack.c.h.b16 %v838
  %v2942 = vunpack.c.l.b16 %v839
  %v2943 = vunpack.c.h.b16 %v839
  %v2944 = vunpack.c.l.b16 %v840
  %v2945 = vunpack.c.h.b16 %v840
  %v2946 = vunpack.c.l.b16 %v841
  %v2947 = vunpack.c.h.b16 %v841
  %v2948 = vunpack.c.l.b16 %v842
  %v2949 = vunpack.c.h.b16 %v842
  %v2950 = vunpack.c.l.b16 %v843
  %v2951 = vunpack.c.h.b16 %v843
  %v2952 = vunpack.c.l.b16 %v844
  %v2953 = vunpack.c.h.b16 %v844
  %v2954 = vunpack.c.l.b16 %v845
  %v2955 = vunpack.c.h.b16 %v845
  %v2956 = vunpack.c.l.b16 %v846
  %v2957 = vunpack.c.h.b16 %v846
  %v2958 = vunpack.c.l.b16 %v847
  %v2959 = vunpack.c.h.b16 %v847
  %v2960 = vunpack.c.l.b16 %v848
  %v2961 = vunpack.c.h.b16 %v848
  %v2962 = vunpack.c.l.b16 %v849
  %v2963 = vunpack.c.h.b16 %v849
  %v2964 = vunpack.c.l.b16 %v850
  %v2965 = vunpack.c.h.b16 %v850
  %v2966 = vunpack.c.l.b16 %v851
  %v2967 = vunpack.c.h.b16 %v851
  %v2968 = vunpack.c.l.b16 %v852
  %v2969 = vunpack.c.h.b16 %v852
  %v2970 = vunpack.c.l.b16 %v853
  %v2971 = vunpack.c.h.b16 %v853
  %v2972 = vunpack.c.l.b16 %v854
  %v2973 = vunpack.c.h.b16 %v854
  %v2974 = vunpack.c.l.b16 %v855
  %v2975 = vunpack.c.h.b16 %v855
  %v2976 = vunpack.c.l.b16 %v856
  %v2977 = vunpack.c.h.b16 %v856
  %v2978 = vunpack.c.l.b16 %v857
  %v2979 = vunpack.c.h.b16 %v857
  %v2980 = vunpack.c.l.b16 %v858
  %v2981 = vunpack.c.h.b16 %v858
  %v2982 = vunpack.c.l.b16 %v859
  %v2983 = vunpack.c.h.b16 %v859
  %v2984 = vunpack.c.l.b16 %v860
  %v2985 = vunpack.c.h.b16 %v860
  %v2986 = vunpack.c.l.b16 %v861
  %v2987 = vunpack.c.h.b16 %v861
  %v2988 = vunpack.c.l.b16 %v862
  %v2989 = vunpack.c.h.b16 %v862
  %v2990 = vunpack.c.l.b16 %v863
  %v2991 = vunpack.c.h.b16 %v863
  %v2992 = vunpack.c.l.b16 %v864
  %v2993 = vunpack.c.h.b16 %v864
  %v2994 = vunpack.c.l.b16 %v865
  %v2995 = vunpack.c.h.b16 %v865
  %v2996 = vunpack.c.l.b16 %v866
  %v2997 = vunpack.c.h.b16 %v866
  %v2998 = vunpack.c.l.b16 %v867
  %v2999 = vunpack.c.h.b16 %v867
  %v3000 = vunpack.c.l.b16 %v868
  %v3001 = vunpack.c.h.b16 %v868
  %v3002 = vunpack.c.l.b16 %v869
  %v3003 = vunpack.c.h.b16 %v869
  %v3004 = vunpack.c.l.b16 %v870
  %v3005 = vunpack.c.h.b16 %v870
  %v3006 = vunpack.c.l.b16 %v871
  %v3007 = vunpack.c.h.b16 %v871
  %v3008 = vunpack.c.l.b16 %v872
  %v3009 = vunpack.c.h.b16 %v872
  %v3010 = vunpack.c.l.b16 %v873
  %v3011 = vunpack.c.h.b16 %v873
  %v3012 = vunpack.c.l.b16 %v874
  %v3013 = vunpack.c.h.b16 %v874
  %v3014 = vunpack.c.l.b16 %v875
  %v3015 = vunpack.c.h.b16 %v875
  %v3016 = vunpack.c.l.b16 %v876
  %v3017 = vunpack.c.h.b16 %v876
  %v3018 = vunpack.c.l.b16 %v877
  %v3019 = vunpack.c.h.b16 %v877
  %v3020 = vunpack.c.l.b16 %v878
  %v3021 = vunpack.c.h.b16 %v878
  %v3022 = vunpack.c.l.b16 %v879
  %v3023 = vunpack.c.h.b16 %v879
  %v3024 = vunpack.c.l.b16 %v880
  %v3025 = vunpack.c.h.b16 %v880
  %v3026 = vunpack.c.l.b16 %v881
  %v3027 = vunpack.c.h.b16 %v881
  %v3028 = vunpack.c.l.b16 %v882
  %v3029 = vunpack.c.h.b16 %v882
  %v3030 = vunpack.c.l.b16 %v883
  %v3031 = vunpack.c.h.b16 %v883
  %v3032 = vunpack.c.l.b16 %v884
  %v3033 = vunpack.c.h.b16 %v884
  %v3034 = vunpack.c.l.b16 %v885
  %v3035 = vunpack.c.h.b16 %v885
  %v3036 = vunpack.c.l.b16 %v886
  %v3037 = vunpack.c.h.b16 %v886
  %v3038 = vunpack.c.l.b16 %v887
  %v3039 = vunpack.c.h.b16 %v887
  %v3040 = vunpack.c.l.b16 %v888
  %v3041 = vunpack.c.h.b16 %v888
  %v3042 = vunpack.c.l.b16 %v889
  %v3043 = vunpack.c.h.b16 %v889
  %v3044 = vunpack.c.l.b16 %v890
  %v3045 = vunpack.c.h.b16 %v890
  %v3046 = vunpack.c.l.b16 %v891
  %v3047 = vunpack.c.h.b16 %v891
  %v3048 = vunpack.c.l.b16 %v892
  %v3049 = vunpack.c.h.b16 %v892
  %v3050 = vunpack.c.l.b16 %v893
  %v3051 = vunpack.c.h.b16 %v893
  %v3052 = vunpack.c.l.b16 %v894
  %v3053 = vunpack.c.h.b16 %v894
  %v3054 = vunpack.c.l.b16 %v895
  %v3055 = vunpack.c.h.b16 %v895
  %v3056 = vunpack.c.l.b16 %v896
  %v3057 = vunpack.c.h.b16 %v896
  %v3058 = vunpack.c.l.b16 %v897
  %v3059 = vunpack.c.h.b16 %v897
  %v3060 = vunpack.c.l.b16 %v898
  %v3061 = vunpack.c.h.b16 %v898
  %v3062 = vunpack.c.l.b16 %v899
  %v3063 = vunpack.c.h.b16 %v899
  %v3064 = vunpack.c.l.b16 %v900
  %v3065 = vunpack.c.h.b16 %v900
  %v3066 = vunpack.c.l.b16 %v901
  %v3067 = vunpack.c.h.b16 %v901
  %v3068 = vunpack.c.l.b16 %v902
  %v3069 = vunpack.c.h.b16 %v902
  %v3070 = vunpack.c.l.b16 %v903
  %v3071 = vunpack.c.h.b16 %v903
  %v3072 = vunpack.c.l.b16 %v904
  %v3073 = vunpack.c.h.b16 %v904
  %v3074 = vunpack.c.l.b16 %v905
  %v3075 = vunpack.c.h.b16 %v905
  %v3076 = vunpack.c.l.b16 %v906
  %v3077 = vunpack.c.h.b16 %v906
  %v3078 = vunpack.c.l.b16 %v907
  %v3079 = vunpack.c.h.b16 %v907
  %v3080 = vunpack.c.l.b16 %v908
  %v3081 = vunpack.c.h.b16 %v908
  %v3082 = vunpack.c.l.b16 %v909
  %v3083 = vunpack.c.h.b16 %v909
  %v3084 = vunpack.c.l.b16 %v910
  %v3085 = vunpack.c.h.b16 %v910
  %v3086 = vunpack.c.l.b16 %v911
  %v3087 = vunpack.c.h.b16 %v911
  %v3088 = vunpack.c.l.b16 %v912
  %v3089 = vunpack.c.h.b16 %v912
  %v3090 = vunpack.c.l.b16 %v913
  %v3091 = vunpack.c.h.b16 %v913
  %v3092 = vunpack.c.l.b16 %v914
  %v3093 = vunpack.c.h.b16 %v914
  %v3094 = vunpack.c.l.b16 %v915
  %v3095 = vunpack.c.h.b16 %v915
  %v3096 = vunpack.c.l.b16 %v916
  %v3097 = vunpack.c.h.b16 %v916
  %v3098 = vunpack.c.l.b16 %v917
  %v3099 = vunpack.c.h.b16 %v917
  %v3100 = vunpack.c.l.b16 %v918
  %v3101 = vunpack.c.h.b16 %v918
  %v3102 = vunpack.c.l.b16 %v919
  %v3103 = vunpack.c.h.b16 %v919
  %v3104 = vunpack.c.l.b16 %v920
  %v3105 = vunpack.c.h.b16 %v920
  %v3106 = vunpack.c.l.b16 %v921
  %v3107 = vunpack.c.h.b16 %v921
  %v3108 = vunpack.c.l.b16 %v922
  %v3109 = vunpack.c.h.b16 %v922
  %v3110 = vunpack.c.l.b16 %v923
  %v3111 = vunpack.c.h.b16 %v923
  %v3112 = vunpack.c.l.b16 %v924
  %v3113 = vunpack.c.h.b16 %v924
  %v3114 = vunpack.c.l.b16 %v925
  %v3115 = vunpack.c.h.b16 %v925
  %v3116 = vunpack.c.l.b16 %v926
  %v3117 = vunpack.c.h.b16 %v926
  %v3118 = vunpack.c.l.b16 %v927
  %v3119 = vunpack.c.h.b16 %v927
  %v3120 = vunpack.c.l.b16 %v928
  %v3121 = vunpack.c.h.b16 %v928
  %v3122 = vunpack.c.l.b16 %v929
  %v3123 = vunpack.c.h.b16 %v929
  %v3124 = vunpack.c.l.b16 %v930
  %v3125 = vunpack.c.h.b16 %v930
  %v3126 = vunpack.c.l.b16 %v931
  %v3127 = vunpack.c.h.b16 %v931
  %v3128 = vunpack.c.l.b16 %v932
  %v3129 = vunpack.c.h.b16 %v932
  %v3130 = vunpack.c.l.b16 %v933
  %v3131 = vunpack.c.h.b16 %v933
  %v3132 = vunpack.c.l.b16 %v934
  %v3133 = vunpack.c.h.b16 %v934
  %v3134 = vunpack.c.l.b16 %v935
  %v3135 = vunpack.c.h.b16 %v935
  %v3136 = vunpack.c.l.b16 %v936
  %v3137 = vunpack.c.h.b16 %v936
  %v3138 = vunpack.c.l.b16 %v937
  %v3139 = vunpack.c.h.b16 %v937
  %v3140 = vunpack.c.l.b16 %v938
  %v3141 = vunpack.c.h.b16 %v938
  %v3142 = vunpack.c.l.b16 %v939
  %v3143 = vunpack.c.h.b16 %v939
  %v3144 = vunpack.c.l.b16 %v940
  %v3145 = vunpack.c.h.b16 %v940
  %v3146 = vunpack.c.l.b16 %v941
  %v3147 = vunpack.c.h.b16 %v941
  %v3148 = vunpack.c.l.b16 %v942
  %v3149 = vunpack.c.h.b16 %v942
  %v3150 = vunpack.c.l.b16 %v943
  %v3151 = vunpack.c.h.b16 %v943
  %v3152 = vunpack.c.l.b16 %v944
  %v3153 = vunpack.c.h.b16 %v944
  %v3154 = vunpack.c.l.b16 %v945
  %v3155 = vunpack.c.h.b16 %v945
  %v3156 = vunpack.c.l.b16 %v946
  %v3157 = vunpack.c.h.b16 %v946
  %v3158 = vunpack.c.l.b16 %v947
  %v3159 = vunpack.c.h.b16 %v947
  %v3160 = vunpack.c.l.b16 %v948
  %v3161 = vunpack.c.h.b16 %v948
  %v3162 = vunpack.c.l.b16 %v949
  %v3163 = vunpack.c.h.b16 %v949
  %v3164 = vunpack.c.l.b16 %v950
  %v3165 = vunpack.c.h.b16 %v950
  %v3166 = vunpack.c.l.b16 %v951
  %v3167 = vunpack.c.h.b16 %v951
  %v3168 = vunpack.c.l.b16 %v952
  %v3169 = vunpack.c.h.b16 %v952
  %v3170 = vunpack.c.l.b16 %v953
  %v3171 = vunpack.c.h.b16 %v953
  %v3172 = vunpack.c.l.b16 %v954
  %v3173 = vunpack.c.h.b16 %v954
  %v3174 = vunpack.c.l.b16 %v955
  %v3175 = vunpack.c.h.b16 %v955
  %v3176 = vunpack.c.l.b16 %v956
  %v3177 = vunpack.c.h.b16 %v956
  %v3178 = vunpack.c.l.b16 %v957
  %v3179 = vunpack.c.h.b16 %v957
  %v3180 = vunpack.c.l.b16 %v958
  %v3181 = vunpack.c.h.b16 %v958
  %v3182 = vunpack.c.l.b16 %v959
  %v3183 = vunpack.c.h.b16 %v959
  %v3184 = vunpack.c.l.b16 %v960
  %v3185 = vunpack.c.h.b16 %v960
  %v3186 = vunpack.c.l.b16 %v961
  %v3187 = vunpack.c.h.b16 %v961
  %v3188 = vunpack.c.l.b16 %v962
  %v3189 = vunpack.c.h.b16 %v962
  %v3190 = vunpack.c.l.b16 %v963
  %v3191 = vunpack.c.h.b16 %v963
  %v3192 = vunpack.c.l.b16 %v964
  %v3193 = vunpack.c.h.b16 %v964
  %v3194 = vunpack.c.l.b16 %v965
  %v3195 = vunpack.c.h.b16 %v965
  %v3196 = vunpack.c.l.b16 %v966
  %v3197 = vunpack.c.h.b16 %v966
  %v3198 = vunpack.c.l.b16 %v967
  %v3199 = vunpack.c.h.b16 %v967
  %v3200 = vunpack.c.l.b16 %v968
  %v3201 = vunpack.c.h.b16 %v968
  %v3202 = vunpack.c.l.b16 %v969
  %v3203 = vunpack.c.h.b16 %v969
  %v3204 = vunpack.c.l.b16 %v970
  %v3205 = vunpack.c.h.b16 %v970
  %v3206 = vunpack.c.l.b16 %v971
  %v3207 = vunpack.c.h.b16 %v971
  %v3208 = vunpack.c.l.b16 %v972
  %v3209 = vunpack.c.h.b16 %v972
  %v3210 = vunpack.c.l.b16 %v973
  %v3211 = vunpack.c.h.b16 %v973
  %v3212 = vunpack.c.l.b16 %v974
  %v3213 = vunpack.c.h.b16 %v974
  %v3214 = vunpack.c.l.b16 %v975
  %v3215 = vunpack.c.h.b16 %v975
  %v3216 = vunpack.c.l.b16 %v976
  %v3217 = vunpack.c.h.b16 %v976
  %v3218 = vunpack.c.l.b16 %v977
  %v3219 = vunpack.c.h.b16 %v977
  %v3220 = vunpack.c.l.b16 %v978
  %v3221 = vunpack.c.h.b16 %v978
  %v3222 = vunpack.c.l.b16 %v979
  %v3223 = vunpack.c.h.b16 %v979
  %v3224 = vunpack.c.l.b16 %v980
  %v3225 = vunpack.c.h.b16 %v980
  %v3226 = vunpack.c.l.b16 %v981
  %v3227 = vunpack.c.h.b16 %v981
  %v3228 = vunpack.c.l.b16 %v982
  %v3229 = vunpack.c.h.b16 %v982
  %v3230 = vunpack.c.l.b16 %v983
  %v3231 = vunpack.c.h.b16 %v983
  %v3232 = vunpack.c.l.b16 %v984
  %v3233 = vunpack.c.h.b16 %v984
  %v3234 = vunpack.c.l.b16 %v985
  %v3235 = vunpack.c.h.b16 %v985
  %v3236 = vunpack.c.l.b16 %v986
  %v3237 = vunpack.c.h.b16 %v986
  %v3238 = vunpack.c.l.b16 %v987
  %v3239 = vunpack.c.h.b16 %v987
  %v3240 = vunpack.c.l.b16 %v988
  %v3241 = vunpack.c.h.b16 %v988
  %v3242 = vunpack.c.l.b16 %v989
  %v3243 = vunpack.c.h.b16 %v989
  %v3244 = vunpack.c.l.b16 %v990
  %v3245 = vunpack.c.h.b16 %v990
  %v3246 = vunpack.c.l.b16 %v991
  %v3247 = vunpack.c.h.b16 %v991
  %v3248 = vunpack.c.l.b16 %v992
  %v3249 = vunpack.c.h.b16 %v992
  %v3250 = vunpack.c.l.b16 %v993
  %v3251 = vunpack.c.h.b16 %v993
  %v3252 = vunpack.c.l.b16 %v994
  %v3253 = vunpack.c.h.b16 %v994
  %v3254 = vunpack.c.l.b16 %v995
  %v3255 = vunpack.c.h.b16 %v995
  %v3256 = vunpack.c.l.b16 %v996
  %v3257 = vunpack.c.h.b16 %v996
  %v3258 = vunpack.c.l.b16 %v997
  %v3259 = vunpack.c.h.b16 %v997
  %v3260 = vunpack.c.l.b16 %v998
  %v3261 = vunpack.c.h.b16 %v998
  %v3262 = vunpack.c.l.b16 %v999
  %v3263 = vunpack.c.h.b16 %v999
  %v3264 = vunpack.c.l.b16 %v1000
  %v3265 = vunpack.c.h.b16 %v1000
  %v3266 = vunpack.c.l.b16 %v1001
  %v3267 = vunpack.c.h.b16 %v1001
  %v3268 = vunpack.c.l.b16 %v1002
  %v3269 = vunpack.c.h.b16 %v1002
  %v3270 = vunpack.c.l.b16 %v1003
  %v3271 = vunpack.c.h.b16 %v1003
  %v3272 = vunpack.c.l.b16 %v1004
  %v3273 = vunpack.c.h.b16 %v1004
  %v3274 = vunpack.c.l.b16 %v1005
  %v3275 = vunpack.c.h.b16 %v1005
  %v3276 = vunpack.c.l.b16 %v1006
  %v3277 = vunpack.c.h.b16 %v1006
  %v3278 = vunpack.c.l.b16 %v1007
  %v3279 = vunpack.c.h.b16 %v1007
  %v3280 = vunpack.c.l.b16 %v1008
  %v3281 = vunpack.c.h.b16 %v1008
  %v3282 = vunpack.c.l.b16 %v1009
  %v3283 = vunpack.c.h.b16 %v1009
  %v3284 = vunpack.c.l.b16 %v1010
  %v3285 = vunpack.c.h.b16 %v1010
  %v3286 = vunpack.c.l.b16 %v1011
  %v3287 = vunpack.c.h.b16 %v1011
  %v3288 = vunpack.c.l.b16 %v1012
  %v3289 = vunpack.c.h.b16 %v1012
  %v3290 = vunpack.c.l.b16 %v1013
  %v3291 = vunpack.c.h.b16 %v1013
  %v3292 = vunpack.c.l.b16 %v1014
  %v3293 = vunpack.c.h.b16 %v1014
  %v3294 = vunpack.c.l.b16 %v1015
  %v3295 = vunpack.c.h.b16 %v1015
  %v3296 = vunpack.c.l.b16 %v1016
  %v3297 = vunpack.c.h.b16 %v1016
  %v3298 = vunpack.c.l.b16 %v1017
  %v3299 = vunpack.c.h.b16 %v1017
  %v3300 = vunpack.c.l.b16 %v1018
  %v3301 = vunpack.c.h.b16 %v1018
  %v3302 = vunpack.c.l.b16 %v1019
  %v3303 = vunpack.c.h.b16 %v1019
  %v3304 = vunpack.c.l.b16 %v1020
  %v3305 = vunpack.c.h.b16 %v1020
  %v3306 = vunpack.c.l.b16 %v1021
  %v3307 = vunpack.c.h.b16 %v1021
  %v3308 = vunpack.c.l.b16 %v1022
  %v3309 = vunpack.c.h.b16 %v1022
  %v3310 = vunpack.c.l.b16 %v1023
  %v3311 = vunpack.c.h.b16 %v1023
  %v3312 = vunpack.c.l.b16 %v1024
  %v3313 = vunpack.c.h.b16 %v1024
  %v3314 = vunpack.c.l.b16 %v1025
  %v3315 = vunpack.c.h.b16 %v1025
  %v3316 = vunpack.c.l.b16 %v1026
  %v3317 = vunpack.c.h.b16 %v1026
  %v3318 = vunpack.c.l.b16 %v1027
  %v3319 = vunpack.c.h.b16 %v1027
  %v3320 = vunpack.c.l.b16 %v1028
  %v3321 = vunpack.c.h.b16 %v1028
  %v3322 = vunpack.c.l.b16 %v1029
  %v3323 = vunpack.c.h.b16 %v1029
  %v3324 = vunpack.c.l.b16 %v1030
  %v3325 = vunpack.c.h.b16 %v1030
  %v3326 = vunpack.c.l.b16 %v1031
  %v3327 = vunpack.c.h.b16 %v1031
  %v3328 = vunpack.c.l.b16 %v1032
  %v3329 = vunpack.c.h.b16 %v1032
  %v3330 = vunpack.c.l.b16 %v1033
  %v3331 = vunpack.c.h.b16 %v1033
  %v3332 = vunpack.c.l.b16 %v1034
  %v3333 = vunpack.c.h.b16 %v1034
  %v3334 = vunpack.c.l.b16 %v1035
  %v3335 = vunpack.c.h.b16 %v1035
  %v3336 = vunpack.c.l.b16 %v1036
  %v3337 = vunpack.c.h.b16 %v1036
  %v3338 = vunpack.c.l.b16 %v1037
  %v3339 = vunpack.c.h.b16 %v1037
  %v3340 = vunpack.c.l.b16 %v1038
  %v3341 = vunpack.c.h.b16 %v1038
  %v3342 = vunpack.c.l.b16 %v1039
  %v3343 = vunpack.c.h.b16 %v1039
  %v3344 = vunpack.c.l.b16 %v1040
  %v3345 = vunpack.c.h.b16 %v1040
  %v3346 = vunpack.c.l.b16 %v1041
  %v3347 = vunpack.c.h.b16 %v1041
  %v3348 = vunpack.c.l.b16 %v1042
  %v3349 = vunpack.c.h.b16 %v1042
  %v3350 = vunpack.c.l.b16 %v1043
  %v3351 = vunpack.c.h.b16 %v1043
  %v3352 = vunpack.c.l.b16 %v1044
  %v3353 = vunpack.c.h.b16 %v1044
  %v3354 = vunpack.c.l.b16 %v1045
  %v3355 = vunpack.c.h.b16 %v1045
  %v3356 = vunpack.c.l.b16 %v1046
  %v3357 = vunpack.c.h.b16 %v1046
  %v3358 = vunpack.c.l.b16 %v1047
  %v3359 = vunpack.c.h.b16 %v1047
  %v3360 = vunpack.c.l.b16 %v1048
  %v3361 = vunpack.c.h.b16 %v1048
  %v3362 = vunpack.c.l.b16 %v1049
  %v3363 = vunpack.c.h.b16 %v1049
  %v3364 = vunpack.c.l.b16 %v1050
  %v3365 = vunpack.c.h.b16 %v1050
  %v3366 = vunpack.c.l.b16 %v1051
  %v3367 = vunpack.c.h.b16 %v1051
  %v3368 = vunpack.c.l.b16 %v1052
  %v3369 = vunpack.c.h.b16 %v1052
  %v3370 = vunpack.c.l.b16 %v1053
  %v3371 = vunpack.c.h.b16 %v1053
  %v3372 = vunpack.c.l.b16 %v1054
  %v3373 = vunpack.c.h.b16 %v1054
  %v3374 = vunpack.c.l.b16 %v1055
  %v3375 = vunpack.c.h.b16 %v1055
  %v3376 = vunpack.c.l.b16 %v1056
  %v3377 = vunpack.c.h.b16 %v1056
  %v3378 = vunpack.c.l.b16 %v1057
  %v3379 = vunpack.c.h.b16 %v1057
  %v3380 = vunpack.c.l.b16 %v1058
  %v3381 = vunpack.c.h.b16 %v1058
  %v3382 = vunpack.c.l.b16 %v1059
  %v3383 = vunpack.c.h.b16 %v1059
  %v3384 = vunpack.c.l.b16 %v1060
  %v3385 = vunpack.c.h.b16 %v1060
  %v3386 = vunpack.c.l.b16 %v1061
  %v3387 = vunpack.c.h.b16 %v1061
  %v3388 = vunpack.c.l.b16 %v1062
  %v3389 = vunpack.c.h.b16 %v1062
  %v3390 = vunpack.c.l.b16 %v1063
  %v3391 = vunpack.c.h.b16 %v1063
  %v3392 = vunpack.c.l.b16 %v1064
  %v3393 = vunpack.c.h.b16 %v1064
  %v3394 = vunpack.c.l.b16 %v1065
  %v3395 = vunpack.c.h.b16 %v1065
  %v3396 = vunpack.c.l.b16 %v1066
  %v3397 = vunpack.c.h.b16 %v1066
  %v3398 = vunpack.c.l.b16 %v1067
  %v3399 = vunpack.c.h.b16 %v1067
  %v3400 = vunpack.c.l.b16 %v1068
  %v3401 = vunpack.c.h.b16 %v1068
  %v3402 = vunpack.c.l.b16 %v1069
  %v3403 = vunpack.c.h.b16 %v1069
  %v3404 = vunpack.c.l.b16 %v1070
  %v3405 = vunpack.c.h.b16 %v1070
  %v3406 = vunpack.c.l.b16 %v1071
  %v3407 = vunpack.c.h.b16 %v1071
  %v3408 = vunpack.c.l.b16 %v1072
  %v3409 = vunpack.c.h.b16 %v1072
  %v3410 = vunpack.c.l.b16 %v1073
  %v3411 = vunpack.c.h.b16 %v1073
  %v3412 = vunpack.c.l.b16 %v1074
  %v3413 = vunpack.c.h.b16 %v1074
  %v3414 = vunpack.c.l.b16 %v1075
  %v3415 = vunpack.c.h.b16 %v1075
  %v3416 = vunpack.c.l.b16 %v1076
  %v3417 = vunpack.c.h.b16 %v1076
  %v3418 = vunpack.c.l.b16 %v1077
  %v3419 = vunpack.c.h.b16 %v1077
  %v3420 = vunpack.c.l.b16 %v1078
  %v3421 = vunpack.c.h.b16 %v1078
  %v3422 = vunpack.c.l.b16 %v1079
  %v3423 = vunpack.c.h.b16 %v1079
  %v3424 = vunpack.c.l.b16 %v1080
  %v3425 = vunpack.c.h.b16 %v1080
  %v3426 = vunpack.c.l.b16 %v1081
  %v3427 = vunpack.c.h.b16 %v1081
  %v3428 = vunpack.c.l.b16 %v1082
  %v3429 = vunpack.c.h.b16 %v1082
  %v3430 = vunpack.c.l.b16 %v1083
  %v3431 = vunpack.c.h.b16 %v1083
  %v3432 = vunpack.c.l.b16 %v1084
  %v3433 = vunpack.c.h.b16 %v1084
  %v3434 = vunpack.c.l.b16 %v1085
  %v3435 = vunpack.c.h.b16 %v1085
  %v3436 = vunpack.c.l.b16 %v1086
  %v3437 = vunpack.c.h.b16 %v1086
  %v3438 = vunpack.c.l.b16 %v1087
  %v3439 = vunpack.c.h.b16 %v1087
  %v3440 = vunpack.c.l.b16 %v1088
  %v3441 = vunpack.c.h.b16 %v1088
  %v3442 = vunpack.c.l.b16 %v1089
  %v3443 = vunpack.c.h.b16 %v1089
  %v3444 = vunpack.c.l.b16 %v1090
  %v3445 = vunpack.c.h.b16 %v1090
  %v3446 = vunpack.c.l.b16 %v1091
  %v3447 = vunpack.c.h.b16 %v1091
  %v3448 = vunpack.c.l.b16 %v1092
  %v3449 = vunpack.c.h.b16 %v1092
  %v3450 = vunpack.c.l.b16 %v1093
  %v3451 = vunpack.c.h.b16 %v1093
  %v3452 = vunpack.c.l.b16 %v1094
  %v3453 = vunpack.c.h.b16 %v1094
  %v3454 = vunpack.c.l.b16 %v1095
  %v3455 = vunpack.c.h.b16 %v1095
  %v3456 = vunpack.c.l.b16 %v1096
  %v3457 = vunpack.c.h.b16 %v1096
  %v3458 = vunpack.c.l.b16 %v1097
  %v3459 = vunpack.c.h.b16 %v1097
  %v3460 = vunpack.c.l.b16 %v1098
  %v3461 = vunpack.c.h.b16 %v1098
  %v3462 = vunpack.c.l.b16 %v1099
  %v3463 = vunpack.c.h.b16 %v1099
  %v3464 = vunpack.c.l.b16 %v1100
  %v3465 = vunpack.c.h.b16 %v1100
  %v3466 = vunpack.c.l.b16 %v1101
  %v3467 = vunpack.c.h.b16 %v1101
  %v3468 = vunpack.c.l.b16 %v1102
  %v3469 = vunpack.c.h.b16 %v1102
  %v3470 = vunpack.c.l.b16 %v1103
  %v3471 = vunpack.c.h.b16 %v1103
  %v3472 = vunpack.c.l.b16 %v1104
  %v3473 = vunpack.c.h.b16 %v1104
  %v3474 = vunpack.c.l.b16 %v1105
  %v3475 = vunpack.c.h.b16 %v1105
  %v3476 = vunpack.c.l.b16 %v1106
  %v3477 = vunpack.c.h.b16 %v1106
  %v3478 = vunpack.c.l.b16 %v1107
  %v3479 = vunpack.c.h.b16 %v1107
  %v3480 = vunpack.c.l.b16 %v1108
  %v3481 = vunpack.c.h.b16 %v1108
  %v3482 = vunpack.c.l.b16 %v1109
  %v3483 = vunpack.c.h.b16 %v1109
  %v3484 = vunpack.c.l.b16 %v1110
  %v3485 = vunpack.c.h.b16 %v1110
  %v3486 = vunpack.c.l.b16 %v1111
  %v3487 = vunpack.c.h.b16 %v1111
  %v3488 = vunpack.c.l.b16 %v1112
  %v3489 = vunpack.c.h.b16 %v1112
  %v3490 = vunpack.c.l.b16 %v1113
  %v3491 = vunpack.c.h.b16 %v1113
  %v3492 = vunpack.c.l.b16 %v1114
  %v3493 = vunpack.c.h.b16 %v1114
  %v3494 = vunpack.c.l.b16 %v1115
  %v3495 = vunpack.c.h.b16 %v1115
  %v3496 = vunpack.c.l.b16 %v1116
  %v3497 = vunpack.c.h.b16 %v1116
  %v3498 = vunpack.c.l.b16 %v1117
  %v3499 = vunpack.c.h.b16 %v1117
  %v3500 = vunpack.c.l.b16 %v1118
  %v3501 = vunpack.c.h.b16 %v1118
  %v3502 = vunpack.c.l.b16 %v1119
  %v3503 = vunpack.c.h.b16 %v1119
  %v3504 = vunpack.c.l.b16 %v1120
  %v3505 = vunpack.c.h.b16 %v1120
  %v3506 = vunpack.c.l.b16 %v1121
  %v3507 = vunpack.c.h.b16 %v1121
  %v3508 = vunpack.c.l.b16 %v1122
  %v3509 = vunpack.c.h.b16 %v1122
  %v3510 = vunpack.c.l.b16 %v1123
  %v3511 = vunpack.c.h.b16 %v1123
  %v3512 = vunpack.c.l.b16 %v1124
  %v3513 = vunpack.c.h.b16 %v1124
  %v3514 = vunpack.c.l.b16 %v1125
  %v3515 = vunpack.c.h.b16 %v1125
  %v3516 = vunpack.c.l.b16 %v1126
  %v3517 = vunpack.c.h.b16 %v1126
  %v3518 = vunpack.c.l.b16 %v1127
  %v3519 = vunpack.c.h.b16 %v1127
  %v3520 = vunpack.c.l.b16 %v1128
  %v3521 = vunpack.c.h.b16 %v1128
  %v3522 = vunpack.c.l.b16 %v1129
  %v3523 = vunpack.c.h.b16 %v1129
  %v3524 = vunpack.c.l.b16 %v1130
  %v3525 = vunpack.c.h.b16 %v1130
  %v3526 = vunpack.c.l.b16 %v1131
  %v3527 = vunpack.c.h.b16 %v1131
  %v3528 = vunpack.c.l.b16 %v1132
  %v3529 = vunpack.c.h.b16 %v1132
  %v3530 = vunpack.c.l.b16 %v1133
  %v3531 = vunpack.c.h.b16 %v1133
  %v3532 = vunpack.c.l.b16 %v1134
  %v3533 = vunpack.c.h.b16 %v1134
  %v3534 = vunpack.c.l.b16 %v1135
  %v3535 = vunpack.c.h.b16 %v1135
  %v3536 = vunpack.c.l.b16 %v1136
  %v3537 = vunpack.c.h.b16 %v1136
  %v3538 = vunpack.c.l.b16 %v1137
  %v3539 = vunpack.c.h.b16 %v1137
  %v3540 = vunpack.c.l.b16 %v1138
  %v3541 = vunpack.c.h.b16 %v1138
  %v3542 = vunpack.c.l.b16 %v1139
  %v3543 = vunpack.c.h.b16 %v1139
  %v3544 = vunpack.c.l.b16 %v1140
  %v3545 = vunpack.c.h.b16 %v1140
  %v3546 = vunpack.c.l.b16 %v1141
  %v3547 = vunpack.c.h.b16 %v1141
  %v3548 = vunpack.c.l.b16 %v1142
  %v3549 = vunpack.c.h.b16 %v1142
  %v3550 = vunpack.c.l.b16 %v1143
  %v3551 = vunpack.c.h.b16 %v1143
  %v3552 = vunpack.c.l.b16 %v1144
  %v3553 = vunpack.c.h.b16 %v1144
  %v3554 = vunpack.c.l.b16 %v1145
  %v3555 = vunpack.c.h.b16 %v1145
  %v3556 = vunpack.c.l.b16 %v1146
  %v3557 = vunpack.c.h.b16 %v1146
  %v3558 = vunpack.c.l.b16 %v1147
  %v3559 = vunpack.c.h.b16 %v1147
  %v3560 = vunpack.c.l.b16 %v1148
  %v3561 = vunpack.c.h.b16 %v1148
  %v3562 = vunpack.c.l.b16 %v1149
  %v3563 = vunpack.c.h.b16 %v1149
  %v3564 = vunpack.c.l.b16 %v1150
  %v3565 = vunpack.c.h.b16 %v1150
  %v3566 = vunpack.c.l.b16 %v1151
  %v3567 = vunpack.c.h.b16 %v1151
  %v3568 = vunpack.c.l.b16 %v1152
  %v3569 = vunpack.c.h.b16 %v1152
  %v3570 = vunpack.c.l.b16 %v1153
  %v3571 = vunpack.c.h.b16 %v1153
  %v3572 = vunpack.c.l.b16 %v1154
  %v3573 = vunpack.c.h.b16 %v1154
  %v3574 = vunpack.c.l.b16 %v1155
  %v3575 = vunpack.c.h.b16 %v1155
  %v3576 = vunpack.c.l.b16 %v1156
  %v3577 = vunpack.c.h.b16 %v1156
  %v3578 = vunpack.c.l.b16 %v1157
  %v3579 = vunpack.c.h.b16 %v1157
  %v3580 = vunpack.c.l.b16 %v1158
  %v3581 = vunpack.c.h.b16 %v1158
  %v3582 = vunpack.c.l.b16 %v1159
  %v3583 = vunpack.c.h.b16 %v1159
  %v3584 = vunpack.c.l.b16 %v1160
  %v3585 = vunpack.c.h.b16 %v1160
  %v3586 = vunpack.c.l.b16 %v1161
  %v3587 = vunpack.c.h.b16 %v1161
  %v3588 = vunpack.c.l.b16 %v1162
  %v3589 = vunpack.c.h.b16 %v1162
  %v3590 = vunpack.c.l.b16 %v1163
  %v3591 = vunpack.c.h.b16 %v1163
  %v3592 = vunpack.c.l.b16 %v1164
  %v3593 = vunpack.c.h.b16 %v1164
  %v3594 = vunpack.c.l.b16 %v1165
  %v3595 = vunpack.c.h.b16 %v1165
  %v3596 = vunpack.c.l.b16 %v1166
  %v3597 = vunpack.c.h.b16 %v1166
  %v3598 = vunpack.c.l.b16 %v1167
  %v3599 = vunpack.c.h.b16 %v1167
  %v3600 = vunpack.c.l.b16 %v1168
  %v3601 = vunpack.c.h.b16 %v1168
  %v3602 = vunpack.c.l.b16 %v1169
  %v3603 = vunpack.c.h.b16 %v1169
  %v3604 = vunpack.c.l.b16 %v1170
  %v3605 = vunpack.c.h.b16 %v1170
  %v3606 = vunpack.c.l.b16 %v1171
  %v3607 = vunpack.c.h.b16 %v1171
  %v3608 = vunpack.c.l.b16 %v1172
  %v3609 = vunpack.c.h.b16 %v1172
  %v3610 = vunpack.c.l.b16 %v1173
  %v3611 = vunpack.c.h.b16 %v1173
  %v3612 = vunpack.c.l.b16 %v1174
  %v3613 = vunpack.c.h.b16 %v1174
  %v3614 = vunpack.c.l.b16 %v1175
  %v3615 = vunpack.c.h.b16 %v1175
  %v3616 = vunpack.c.l.b16 %v1176
  %v3617 = vunpack.c.h.b16 %v1176
  %v3618 = vunpack.c.l.b16 %v1177
  %v3619 = vunpack.c.h.b16 %v1177
  %v3620 = vunpack.c.l.b16 %v1178
  %v3621 = vunpack.c.h.b16 %v1178
  %v3622 = vunpack.c.l.b16 %v1179
  %v3623 = vunpack.c.h.b16 %v1179
  %v3624 = vunpack.c.l.b16 %v1180
  %v3625 = vunpack.c.h.b16 %v1180
  %v3626 = vunpack.c.l.b16 %v1181
  %v3627 = vunpack.c.h.b16 %v1181
  %v3628 = vunpack.c.l.b16 %v1182
  %v3629 = vunpack.c.h.b16 %v1182
  %v3630 = vunpack.c.l.b16 %v1183
  %v3631 = vunpack.c.h.b16 %v1183
  %v3632 = vunpack.c.l.b16 %v1184
  %v3633 = vunpack.c.h.b16 %v1184
  %v3634 = vunpack.c.l.b16 %v1185
  %v3635 = vunpack.c.h.b16 %v1185
  %v3636 = vunpack.c.l.b16 %v1186
  %v3637 = vunpack.c.h.b16 %v1186
  %v3638 = vunpack.c.l.b16 %v1187
  %v3639 = vunpack.c.h.b16 %v1187
  %v3640 = vunpack.c.l.b16 %v1188
  %v3641 = vunpack.c.h.b16 %v1188
  %v3642 = vunpack.c.l.b16 %v1189
  %v3643 = vunpack.c.h.b16 %v1189
  %v3644 = vunpack.c.l.b16 %v1190
  %v3645 = vunpack.c.h.b16 %v1190
  %v3646 = vunpack.c.l.b16 %v1191
  %v3647 = vunpack.c.h.b16 %v1191
  %v3648 = vunpack.c.l.b16 %v1192
  %v3649 = vunpack.c.h.b16 %v1192
  %v3650 = vunpack.c.l.b16 %v1193
  %v3651 = vunpack.c.h.b16 %v1193
  %v3652 = vunpack.c.l.b16 %v1194
  %v3653 = vunpack.c.h.b16 %v1194
  %v3654 = vunpack.c.l.b16 %v1195
  %v3655 = vunpack.c.h.b16 %v1195
  %v3656 = vunpack.c.l.b16 %v1196
  %v3657 = vunpack.c.h.b16 %v1196
  %v3658 = vunpack.c.l.b16 %v1197
  %v3659 = vunpack.c.h.b16 %v1197
  %v3660 = vunpack.c.l.b16 %v1198
  %v3661 = vunpack.c.h.b16 %v1198
  %v3662 = vpack.c.b16 %v2030, %v2028
  %v3663 = vpack.c.b16 %v2031, %v2029
  %v3664 = vpack.c.b16 %v2034, %v2032
  %v3665 = vpack.c.b16 %v2035, %v2033
  %v3666 = vpack.c.b16 %v2038, %v2036
  %v3667 = vpack.c.b16 %v2039, %v2037
  %v3668 = vpack.c.b16 %v2042, %v2040
  %v3669 = vpack.c.b16 %v2043, %v2041
  %v3670 = vpack.c.b16 %v2046, %v2044
  %v3671 = vpack.c.b16 %v2047, %v2045
  %v3672 = vpack.c.b16 %v2050, %v2048
  %v3673 = vpack.c.b16 %v2051, %v2049
  %v3674 = vpack.c.b16 %v2054, %v2052
  %v3675 = vpack.c.b16 %v2055, %v2053
  %v3676 = vpack.c.b16 %v2058, %v2056
  %v3677 = vpack.c.b16 %v2059, %v2057
  %v3678 = vpack.c.b16 %v2062, %v2060
  %v3679 = vpack.c.b16 %v2063, %v2061
  %v3680 = vpack.c.b16 %v2066, %v2064
  %v3681 = vpack.c.b16 %v2067, %v2065
  %v3682 = vpack.c.b16 %v2070, %v2068
  %v3683 = vpack.c.b16 %v2071, %v2069
  %v3684 = vpack.c.b16 %v2074, %v2072
  %v3685 = vpack.c.b16 %v2075, %v2073
  %v3686 = vpack.c.b16 %v2078, %v2076
  %v3687 = vpack.c.b16 %v2079, %v2077
  %v3688 = vpack.c.b16 %v2082, %v2080
  %v3689 = vpack.c.b16 %v2083, %v2081
  %v3690 = vpack.c.b16 %v2086, %v2084
  %v3691 = vpack.c.b16 %v2087, %v2085
  %v3692 = vpack.c.b16 %v2090, %v2088
  %v3693 = vpack.c.b16 %v2091, %v2089
  %v3694 = vpack.c.b16 %v2094, %v2092
  %v3695 = vpack.c.b16 %v2095, %v2093
  %v3696 = vpack.c.b16 %v2098, %v2096
  %v3697 = vpack.c.b16 %v2099, %v2097
  %v3698 = vpack.c.b16 %v2102, %v2100
  %v3699 = vpack.c.b16 %v2103, %v2101
  %v3700 = vpack.c.b16 %v2106, %v2104
  %v3701 = vpack.c.b16 %v2107, %v2105
  %v3702 = vpack.c.b16 %v2110, %v2108
  %v3703 = vpack.c.b16 %v2111, %v2109
  %v3704 = vpack.c.b16 %v2114, %v2112
  %v3705 = vpack.c.b16 %v2115, %v2113
  %v3706 = vpack.c.b16 %v2118, %v2116
  %v3707 = vpack.c.b16 %v2119, %v2117
  %v3708 = vpack.c.b16 %v2122, %v2120
  %v3709 = vpack.c.b16 %v2123, %v2121
  %v3710 = vpack.c.b16 %v2126, %v2124
  %v3711 = vpack.c.b16 %v2127, %v2125
  %v3712 = vpack.c.b16 %v2130, %v2128
  %v3713 = vpack.c.b16 %v2131, %v2129
  %v3714 = vpack.c.b16 %v2134, %v2132
  %v3715 = vpack.c.b16 %v2135, %v2133
  %v3716 = vpack.c.b16 %v2138, %v2136
  %v3717 = vpack.c.b16 %v2139, %v2137
  %v3718 = vpack.c.b16 %v2142, %v2140
  %v3719 = vpack.c.b16 %v2143, %v2141
  %v3720 = vpack.c.b16 %v2146, %v2144
  %v3721 = vpack.c.b16 %v2147, %v2145
  %v3722 = vpack.c.b16 %v2150, %v2148
  %v3723 = vpack.c.b16 %v2151, %v2149
  %v3724 = vpack.c.b16 %v2154, %v2152
  %v3725 = vpack.c.b16 %v2155, %v2153
  %v3726 = vpack.c.b16 %v2158, %v2156
  %v3727 = vpack.c.b16 %v2159, %v2157
  %v3728 = vpack.c.b16 %v2162, %v2160
  %v3729 = vpack.c.b16 %v2163, %v2161
  %v3730 = vpack.c.b16 %v2166, %v2164
  %v3731 = vpack.c.b16 %v2167, %v2165
  %v3732 = vpack.c.b16 %v2170, %v2168
  %v3733 = vpack.c.b16 %v2171, %v2169
  %v3734 = vpack.c.b16 %v2174, %v2172
  %v3735 = vpack.c.b16 %v2175, %v2173
  %v3736 = vpack.c.b16 %v2178, %v2176
  %v3737 = vpack.c.b16 %v2179, %v2177
  %v3738 = vpack.c.b16 %v2182, %v2180
  %v3739 = vpack.c.b16 %v2183, %v2181
  %v3740 = vpack.c.b16 %v2186, %v2184
  %v3741 = vpack.c.b16 %v2187, %v2185
  %v3742 = vpack.c.b16 %v2190, %v2188
  %v3743 = vpack.c.b16 %v2191, %v2189
  %v3744 = vpack.c.b16 %v2194, %v2192
  %v3745 = vpack.c.b16 %v2195, %v2193
  %v3746 = vpack.c.b16 %v2198, %v2196
  %v3747 = vpack.c.b16 %v2199, %v2197
  %v3748 = vpack.c.b16 %v2202, %v2200
  %v3749 = vpack.c.b16 %v2203, %v2201
  %v3750 = vpack.c.b16 %v2206, %v2204
  %v3751 = vpack.c.b16 %v2207, %v2205
  %v3752 = vpack.c.b16 %v2210, %v2208
  %v3753 = vpack.c.b16 %v2211, %v2209
  %v3754 = vpack.c.b16 %v2214, %v2212
  %v3755 = vpack.c.b16 %v2215, %v2213
  %v3756 = vpack.c.b16 %v2218, %v2216
  %v3757 = vpack.c.b16 %v2219, %v2217
  %v3758 = vpack.c.b16 %v2222, %v2220
  %v3759 = vpack.c.b16 %v2223, %v2221
  %v3760 = vpack.c.b16 %v2226, %v2224
  %v3761 = vpack.c.b16 %v2227, %v2225
  %v3762 = vpack.c.b16 %v2230, %v2228
  %v3763 = vpack.c.b16 %v2231, %v2229
  %v3764 = vpack.c.b16 %v2234, %v2232
  %v3765 = vpack.c.b16 %v2235, %v2233
  %v3766 = vpack.c.b16 %v2238, %v2236
  %v3767 = vpack.c.b16 %v2239, %v2237
  %v3768 = vpack.c.b16 %v2242, %v2240
  %v3769 = vpack.c.b16 %v2243, %v2241
  %v3770 = vpack.c.b16 %v2246, %v2244
  %v3771 = vpack.c.b16 %v2247, %v2245
  %v3772 = vpack.c.b16 %v2250, %v2248
  %v3773 = vpack.c.b16 %v2251, %v2249
  %v3774 = vpack.c.b16 %v2254, %v2252
  %v3775 = vpack.c.b16 %v2255, %v2253
  %v3776 = vpack.c.b16 %v2258, %v2256
  %v3777 = vpack.c.b16 %v2259, %v2257
  %v3778 = vpack.c.b16 %v2262, %v2260
  %v3779 = vpack.c.b16 %v2263, %v2261
  %v3780 = vpack.c.b16 %v2266, %v2264
  %v3781 = vpack.c.b16 %v2267, %v2265
  %v3782 = vpack.c.b16 %v2270, %v2268
  %v3783 = vpack.c.b16 %v2271, %v2269
  %v3784 = vpack.c.b16 %v2274, %v2272
  %v3785 = vpack.c.b16 %v2275, %v2273
  %v3786 = vpack.c.b16 %v2278, %v2276
  %v3787 = vpack.c.b16 %v2279, %v2277
  %v3788 = vpack.c.b16 %v2282, %v2280
  %v3789 = vpack.c.b16 %v2283, %v2281
  %v3790 = vpack.c.b16 %v2286, %v2284
  %v3791 = vpack.c.b16 %v2287, %v2285
  %v3792 = vpack.c.b16 %v2290, %v2288
  %v3793 = vpack.c.b16 %v2291, %v2289
  %v3794 = vpack.c.b16 %v2294, %v2292
  %v3795 = vpack.c.b16 %v2295, %v2293
  %v3796 = vpack.c.b16 %v2298, %v2296
  %v3797 = vpack.c.b16 %v2299, %v2297
  %v3798 = vpack.c.b16 %v2302, %v2300
  %v3799 = vpack.c.b16 %v2303, %v2301
  %v3800 = vpack.c.b16 %v2306, %v2304
  %v3801 = vpack.c.b16 %v2307, %v2305
  %v3802 = vpack.c.b16 %v2310, %v2308
  %v3803 = vpack.c.b16 %v2311, %v2309
  %v3804 = vpack.c.b16 %v2314, %v2312
  %v3805 = vpack.c.b16 %v2315, %v2313
  %v3806 = vpack.c.b16 %v2318, %v2316
  %v3807 = vpack.c.b16 %v2319, %v2317
  %v3808 = vpack.c.b16 %v2322, %v2320
  %v3809 = vpack.c.b16 %v2323, %v2321
  %v3810 = vpack.c.b16 %v2326, %v2324
  %v3811 = vpack.c.b16 %v2327, %v2325
  %v3812 = vpack.c.b16 %v2330, %v2328
  %v3813 = vpack.c.b16 %v2331, %v2329
  %v3814 = vpack.c.b16 %v2334, %v2332
  %v3815 = vpack.c.b16 %v2335, %v2333
  %v3816 = vpack.c.b16 %v2338, %v2336
  %v3817 = vpack.c.b16 %v2339, %v2337
  %v3818 = vpack.c.b16 %v2342, %v2340
  %v3819 = vpack.c.b16 %v2343, %v2341
  %v3820 = vpack.c.b16 %v2346, %v2344
  %v3821 = vpack.c.b16 %v2347, %v2345
  %v3822 = vpack.c.b16 %v2350, %v2348
  %v3823 = vpack.c.b16 %v2351, %v2349
  %v3824 = vpack.c.b16 %v2354, %v2352
  %v3825 = vpack.c.b16 %v2355, %v2353
  %v3826 = vpack.c.b16 %v2358, %v2356
  %v3827 = vpack.c.b16 %v2359, %v2357
  %v3828 = vpack.c.b16 %v2362, %v2360
  %v3829 = vpack.c.b16 %v2363, %v2361
  %v3830 = vpack.c.b16 %v2366, %v2364
  %v3831 = vpack.c.b16 %v2367, %v2365
  %v3832 = vpack.c.b16 %v2370, %v2368
  %v3833 = vpack.c.b16 %v2371, %v2369
  %v3834 = vpack.c.b16 %v2374, %v2372
  %v3835 = vpack.c.b16 %v2375, %v2373
  %v3836 = vpack.c.b16 %v2378, %v2376
  %v3837 = vpack.c.b16 %v2379, %v2377
  %v3838 = vpack.c.b16 %v2382, %v2380
  %v3839 = vpack.c.b16 %v2383, %v2381
  %v3840 = vpack.c.b16 %v2386, %v2384
  %v3841 = vpack.c.b16 %v2387, %v2385
  %v3842 = vpack.c.b16 %v2390, %v2388
  %v3843 = vpack.c.b16 %v2391, %v2389
  %v3844 = vpack.c.b16 %v2394, %v2392
  %v3845 = vpack.c.b16 %v2395, %v2393
  %v3846 = vpack.c.b16 %v2398, %v2396
  %v3847 = vpack.c.b16 %v2399, %v2397
  %v3848 = vpack.c.b16 %v2402, %v2400
  %v3849 = vpack.c.b16 %v2403, %v2401
  %v3850 = vpack.c.b16 %v2406, %v2404
  %v3851 = vpack.c.b16 %v2407, %v2405
  %v3852 = vpack.c.b16 %v2410, %v2408
  %v3853 = vpack.c.b16 %v2411, %v2409
  %v3854 = vpack.c.b16 %v2414, %v2412
  %v3855 = vpack.c.b16 %v2415, %v2413
  %v3856 = vpack.c.b16 %v2418, %v2416
  %v3857 = vpack.c.b16 %v2419, %v2417
  %v3858 = vpack.c.b16 %v2422, %v2420
  %v3859 = vpack.c.b16 %v2423, %v2421
  %v3860 = vpack.c.b16 %v2426, %v2424
  %v3861 = vpack.c.b16 %v2427, %v2425
  %v3862 = vpack.c.b16 %v2430, %v2428
  %v3863 = vpack.c.b16 %v2431, %v2429
  %v3864 = vpack.c.b16 %v2434, %v2432
  %v3865 = vpack.c.b16 %v2435, %v2433
  %v3866 = vpack.c.b16 %v2438, %v2436
  %v3867 = vpack.c.b16 %v2439, %v2437
  %v3868 = vpack.c.b16 %v2442, %v2440
  %v3869 = vpack.c.b16 %v2443, %v2441
  %v3870 = vpack.c.b16 %v2446, %v2444
  %v3871 = vpack.c.b16 %v2447, %v2445
  %v3872 = vpack.c.b16 %v2450, %v2448
  %v3873 = vpack.c.b16 %v2451, %v2449
  %v3874 = vpack.c.b16 %v2454, %v2452
  %v3875 = vpack.c.b16 %v2455, %v2453
  %v3876 = vpack.c.b16 %v2458, %v2456
  %v3877 = vpack.c.b16 %v2459, %v2457
  %v3878 = vpack.c.b16 %v2462, %v2460
  %v3879 = vpack.c.b16 %v2463, %v2461
  %v3880 = vpack.c.b16 %v2466, %v2464
  %v3881 = vpack.c.b16 %v2467, %v2465
  %v3882 = vpack.c.b16 %v2470, %v2468
  %v3883 = vpack.c.b16 %v2471, %v2469
  %v3884 = vpack.c.b16 %v2474, %v2472
  %v3885 = vpack.c.b16 %v2475, %v2473
  %v3886 = vpack.c.b16 %v2478, %v2476
  %v3887 = vpack.c.b16 %v2479, %v2477
  %v3888 = vpack.c.b16 %v2482, %v2480
  %v3889 = vpack.c.b16 %v2483, %v2481
  %v3890 = vpack.c.b16 %v2486, %v2484
  %v3891 = vpack.c.b16 %v2487, %v2485
  %v3892 = vpack.c.b16 %v2490, %v2488
  %v3893 = vpack.c.b16 %v2491, %v2489
  %v3894 = vpack.c.b16 %v2494, %v2492
  %v3895 = vpack.c.b16 %v2495, %v2493
  %v3896 = vpack.c.b16 %v2498, %v2496
  %v3897 = vpack.c.b16 %v2499, %v2497
  %v3898 = vpack.c.b16 %v2502, %v2500
  %v3899 = vpack.c.b16 %v2503, %v2501
  %v3900 = vpack.c.b16 %v2506, %v2504
  %v3901 = vpack.c.b16 %v2507, %v2505
  %v3902 = vpack.c.b16 %v2510, %v2508
  %v3903 = vpack.c.b16 %v2511, %v2509
  %v3904 = vpack.c.b16 %v2514, %v2512
  %v3905 = vpack.c.b16 %v2515, %v2513
  %v3906 = vpack.c.b16 %v2518, %v2516
  %v3907 = vpack.c.b16 %v2519, %v2517
  %v3908 = vpack.c.b16 %v2522, %v2520
  %v3909 = vpack.c.b16 %v2523, %v2521
  %v3910 = vpack.c.b16 %v2526, %v2524
  %v3911 = vpack.c.b16 %v2527, %v2525
  %v3912 = vpack.c.b16 %v2530, %v2528
  %v3913 = vpack.c.b16 %v2531, %v2529
  %v3914 = vpack.c.b16 %v2534, %v2532
  %v3915 = vpack.c.b16 %v2535, %v2533
  %v3916 = vpack.c.b16 %v2538, %v2536
  %v3917 = vpack.c.b16 %v2539, %v2537
  %v3918 = vpack.c.b16 %v2542, %v2540
  %v3919 = vpack.c.b16 %v2543, %v2541
  %v3920 = vpack.c.b16 %v2546, %v2544
  %v3921 = vpack.c.b16 %v2547, %v2545
  %v3922 = vpack.c.b16 %v2550, %v2548
  %v3923 = vpack.c.b16 %v2551, %v2549
  %v3924 = vpack.c.b16 %v2554, %v2552
  %v3925 = vpack.c.b16 %v2555, %v2553
  %v3926 = vpack.c.b16 %v2558, %v2556
  %v3927 = vpack.c.b16 %v2559, %v2557
  %v3928 = vpack.c.b16 %v2562, %v2560
  %v3929 = vpack.c.b16 %v2563, %v2561
  %v3930 = vpack.c.b16 %v2566, %v2564
  %v3931 = vpack.c.b16 %v2567, %v2565
  %v3932 = vpack.c.b16 %v2570, %v2568
  %v3933 = vpack.c.b16 %v2571, %v2569
  %v3934 = vpack.c.b16 %v2574, %v2572
  %v3935 = vpack.c.b16 %v2575, %v2573
  %v3936 = vpack.c.b16 %v2578, %v2576
  %v3937 = vpack.c.b16 %v2579, %v2577
  %v3938 = vpack.c.b16 %v2582, %v2580
  %v3939 = vpack.c.b16 %v2583, %v2581
  %v3940 = vpack.c.b16 %v2586, %v2584
  %v3941 = vpack.c.b16 %v2587, %v2585
  %v3942 = vpack.c.b16 %v2590, %v2588
  %v3943 = vpack.c.b16 %v2591, %v2589
  %v3944 = vpack.c.b16 %v2594, %v2592
  %v3945 = vpack.c.b16 %v2595, %v2593
  %v3946 = vpack.c.b16 %v2598, %v2596
  %v3947 = vpack.c.b16 %v2599, %v2597
  %v3948 = vpack.c.b16 %v2602, %v2600
  %v3949 = vpack.c.b16 %v2603, %v2601
  %v3950 = vpack.c.b16 %v2606, %v2604
  %v3951 = vpack.c.b16 %v2607, %v2605
  %v3952 = vpack.c.b16 %v2610, %v2608
  %v3953 = vpack.c.b16 %v2611, %v2609
  %v3954 = vpack.c.b16 %v2614, %v2612
  %v3955 = vpack.c.b16 %v2615, %v2613
  %v3956 = vpack.c.b16 %v2618, %v2616
  %v3957 = vpack.c.b16 %v2619, %v2617
  %v3958 = vpack.c.b16 %v2622, %v2620
  %v3959 = vpack.c.b16 %v2623, %v2621
  %v3960 = vpack.c.b16 %v2626, %v2624
  %v3961 = vpack.c.b16 %v2627, %v2625
  %v3962 = vpack.c.b16 %v2630, %v2628
  %v3963 = vpack.c.b16 %v2631, %v2629
  %v3964 = vpack.c.b16 %v2634, %v2632
  %v3965 = vpack.c.b16 %v2635, %v2633
  %v3966 = vpack.c.b16 %v2638, %v2636
  %v3967 = vpack.c.b16 %v2639, %v2637
  %v3968 = vpack.c.b16 %v2642, %v2640
  %v3969 = vpack.c.b16 %v2643, %v2641
  %v3970 = vpack.c.b16 %v2646, %v2644
  %v3971 = vpack.c.b16 %v2647, %v2645
  %v3972 = vpack.c.b16 %v2650, %v2648
  %v3973 = vpack.c.b16 %v2651, %v2649
  %v3974 = vpack.c.b16 %v2654, %v2652
  %v3975 = vpack.c.b16 %v2655, %v2653
  %v3976 = vpack.c.b16 %v2658, %v2656
  %v3977 = vpack.c.b16 %v2659, %v2657
  %v3978 = vpack.c.b16 %v2662, %v2660
  %v3979 = vpack.c.b16 %v2663, %v2661
  %v3980 = vpack.c.b16 %v2666, %v2664
  %v3981 = vpack.c.b16 %v2667, %v2665
  %v3982 = vpack.c.b16 %v2670, %v2668
  %v3983 = vpack.c.b16 %v2671, %v2669
  %v3984 = vpack.c.b16 %v2674, %v2672
  %v3985 = vpack.c.b16 %v2675, %v2673
  %v3986 = vpack.c.b16 %v2678, %v2676
  %v3987 = vpack.c.b16 %v2679, %v2677
  %v3988 = vpack.c.b16 %v2682, %v2680
  %v3989 = vpack.c.b16 %v2683, %v2681
  %v3990 = vpack.c.b16 %v2686, %v2684
  %v3991 = vpack.c.b16 %v2687, %v2685
  %v3992 = vpack.c.b16 %v2690, %v2688
  %v3993 = vpack.c.b16 %v2691, %v2689
  %v3994 = vpack.c.b16 %v2694, %v2692
  %v3995 = vpack.c.b16 %v2695, %v2693
  %v3996 = vpack.c.b16 %v2698, %v2696
  %v3997 = vpack.c.b16 %v2699, %v2697
  %v3998 = vpack.c.b16 %v2702, %v2700
  %v3999 = vpack.c.b16 %v2703, %v2701
  %v4000 = vpack.c.b16 %v2706, %v2704
  %v4001 = vpack.c.b16 %v2707, %v2705
  %v4002 = vpack.c.b16 %v2710, %v2708
  %v4003 = vpack.c.b16 %v2711, %v2709
  %v4004 = vpack.c.b16 %v2714, %v2712
  %v4005 = vpack.c.b16 %v2715, %v2713
  %v4006 = vpack.c.b16 %v2718, %v2716
  %v4007 = vpack.c.b16 %v2719, %v2717
  %v4008 = vpack.c.b16 %v2722, %v2720
  %v4009 = vpack.c.b16 %v2723, %v2721
  %v4010 = vpack.c.b16 %v2726, %v2724
  %v4011 = vpack.c.b16 %v2727, %v2725
  %v4012 = vpack.c.b16 %v2730, %v2728
  %v4013 = vpack.c.b16 %v2731, %v2729
  %v4014 = vpack.c.b16 %v2734, %v2732
  %v4015 = vpack.c.b16 %v2735, %v2733
  %v4016 = vpack.c.b16 %v2738, %v2736
  %v4017 = vpack.c.b16 %v2739, %v2737
  %v4018 = vpack.c.b16 %v2742, %v2740
  %v4019 = vpack.c.b16 %v2743, %v2741
  %v4020 = vpack.c.b16 %v2746, %v2744
  %v4021 = vpack.c.b16 %v2747, %v2745
  %v4022 = vpack.c.b16 %v2750, %v2748
  %v4023 = vpack.c.b16 %v2751, %v2749
  %v4024 = vpack.c.b16 %v2754, %v2752
  %v4025 = vpack.c.b16 %v2755, %v2753
  %v4026 = vpack.c.b16 %v2758, %v2756
  %v4027 = vpack.c.b16 %v2759, %v2757
  %v4028 = vpack.c.b16 %v2762, %v2760
  %v4029 = vpack.c.b16 %v2763, %v2761
  %v4030 = vpack.c.b16 %v2766, %v2764
  %v4031 = vpack.c.b16 %v2767, %v2765
  %v4032 = vpack.c.b16 %v2770, %v2768
  %v4033 = vpack.c.b16 %v2771, %v2769
  %v4034 = vpack.c.b16 %v2774, %v2772
  %v4035 = vpack.c.b16 %v2775, %v2773
  %v4036 = vpack.c.b16 %v2778, %v2776
  %v4037 = vpack.c.b16 %v2779, %v2777
  %v4038 = vpack.c.b16 %v2782, %v2780
  %v4039 = vpack.c.b16 %v2783, %v2781
  %v4040 = vpack.c.b16 %v2786, %v2784
  %v4041 = vpack.c.b16 %v2787, %v2785
  %v4042 = vpack.c.b16 %v2790, %v2788
  %v4043 = vpack.c.b16 %v2791, %v2789
  %v4044 = vpack.c.b16 %v2794, %v2792
  %v4045 = vpack.c.b16 %v2795, %v2793
  %v4046 = vpack.c.b16 %v2798, %v2796
  %v4047 = vpack.c.b16 %v2799, %v2797
  %v4048 = vpack.c.b16 %v2802, %v2800
  %v4049 = vpack.c.b16 %v2803, %v2801
  %v4050 = vpack.c.b16 %v2806, %v2804
  %v4051 = vpack.c.b16 %v2807, %v2805
  %v4052 = vpack.c.b16 %v2810, %v2808
  %v4053 = vpack.c.b16 %v2811, %v2809
  %v4054 = vpack.c.b16 %v2814, %v2812
  %v4055 = vpack.c.b16 %v2815, %v2813
  %v4056 = vpack.c.b16 %v2818, %v2816
  %v4057 = vpack.c.b16 %v2819, %v2817
  %v4058 = vpack.c.b16 %v2822, %v2820
  %v4059 = vpack.c.b16 %v2823, %v2821
  %v4060 = vpack.c.b16 %v2826, %v2824
  %v4061 = vpack.c.b16 %v2827, %v2825
  %v4062 = vpack.c.b16 %v2830, %v2828
  %v4063 = vpack.c.b16 %v2831, %v2829
  %v4064 = vpack.c.b16 %v2834, %v2832
  %v4065 = vpack.c.b16 %v2835, %v2833
  %v4066 = vpack.c.b16 %v2838, %v2836
  %v4067 = vpack.c.b16 %v2839, %v2837
  %v4068 = vpack.c.b16 %v2842, %v2840
  %v4069 = vpack.c.b16 %v2843, %v2841
  %v4070 = vpack.c.b16 %v2846, %v2844
  %v4071 = vpack.c.b16 %v2847, %v2845
  %v4072 = vpack.c.b16 %v2850, %v2848
  %v4073 = vpack.c.b16 %v2851, %v2849
  %v4074 = vpack.c.b16 %v2854, %v2852
  %v4075 = vpack.c.b16 %v2855, %v2853
  %v4076 = vpack.c.b16 %v2858, %v2856
  %v4077 = vpack.c.b16 %v2859, %v2857
  %v4078 = vpack.c.b16 %v2862, %v2860
  %v4079 = vpack.c.b16 %v2863, %v2861
  %v4080 = vpack.c.b16 %v2866, %v2864
  %v4081 = vpack.c.b16 %v2867, %v2865
  %v4082 = vpack.c.b16 %v2870, %v2868
  %v4083 = vpack.c.b16 %v2871, %v2869
  %v4084 = vpack.c.b16 %v2874, %v2872
  %v4085 = vpack.c.b16 %v2875, %v2873
  %v4086 = vpack.c.b16 %v2878, %v2876
  %v4087 = vpack.c.b16 %v2879, %v2877
  %v4088 = vpack.c.b16 %v2882, %v2880
  %v4089 = vpack.c.b16 %v2883, %v2881
  %v4090 = vpack.c.b16 %v2886, %v2884
  %v4091 = vpack.c.b16 %v2887, %v2885
  %v4092 = vpack.c.b16 %v2890, %v2888
  %v4093 = vpack.c.b16 %v2891, %v2889
  %v4094 = vpack.c.b16 %v2894, %v2892
  %v4095 = vpack.c.b16 %v2895, %v2893
  %v4096 = vpack.c.b16 %v2898, %v2896
  %v4097 = vpack.c.b16 %v2899, %v2897
  %v4098 = vpack.c.b16 %v2902, %v2900
  %v4099 = vpack.c.b16 %v2903, %v2901
  %v4100 = vpack.c.b16 %v2906, %v2904
  %v4101 = vpack.c.b16 %v2907, %v2905
  %v4102 = vpack.c.b16 %v2910, %v2908
  %v4103 = vpack.c.b16 %v2911, %v2909
  %v4104 = vpack.c.b16 %v2914, %v2912
  %v4105 = vpack.c.b16 %v2915, %v2913
  %v4106 = vpack.c.b16 %v2918, %v2916
  %v4107 = vpack.c.b16 %v2919, %v2917
  %v4108 = vpack.c.b16 %v2922, %v2920
  %v4109 = vpack.c.b16 %v2923, %v2921
  %v4110 = vpack.c.b16 %v2926, %v2924
  %v4111 = vpack.c.b16 %v2927, %v2925
  %v4112 = vpack.c.b16 %v2930, %v2928
  %v4113 = vpack.c.b16 %v2931, %v2929
  %v4114 = vpack.c.b16 %v2934, %v2932
  %v4115 = vpack.c.b16 %v2935, %v2933
  %v4116 = vpack.c.b16 %v2938, %v2936
  %v4117 = vpack.c.b16 %v2939, %v2937
  %v4118 = vpack.c.b16 %v2942, %v2940
  %v4119 = vpack.c.b16 %v2943, %v2941
  %v4120 = vpack.c.b16 %v2946, %v2944
  %v4121 = vpack.c.b16 %v2947, %v2945
  %v4122 = vpack.c.b16 %v2950, %v2948
  %v4123 = vpack.c.b16 %v2951, %v2949
  %v4124 = vpack.c.b16 %v2954, %v2952
  %v4125 = vpack.c.b16 %v2955, %v2953
  %v4126 = vpack.c.b16 %v2958, %v2956
  %v4127 = vpack.c.b16 %v2959, %v2957
  %v4128 = vpack.c.b16 %v2962, %v2960
  %v4129 = vpack.c.b16 %v2963, %v2961
  %v4130 = vpack.c.b16 %v2966, %v2964
  %v4131 = vpack.c.b16 %v2967, %v2965
  %v4132 = vpack.c.b16 %v2970, %v2968
  %v4133 = vpack.c.b16 %v2971, %v2969
  %v4134 = vpack.c.b16 %v2974, %v2972
  %v4135 = vpack.c.b16 %v2975, %v2973
  %v4136 = vpack.c.b16 %v2978, %v2976
  %v4137 = vpack.c.b16 %v2979, %v2977
  %v4138 = vpack.c.b16 %v2982, %v2980
  %v4139 = vpack.c.b16 %v2983, %v2981
  %v4140 = vpack.c.b16 %v2986, %v2984
  %v4141 = vpack.c.b16 %v2987, %v2985
  %v4142 = vpack.c.b16 %v2990, %v2988
  %v4143 = vpack.c.b16 %v2991, %v2989
  %v4144 = vpack.c.b16 %v2994, %v2992
  %v4145 = vpack.c.b16 %v2995, %v2993
  %v4146 = vpack.c.b16 %v2998, %v2996
  %v4147 = vpack.c.b16 %v2999, %v2997
  %v4148 = vpack.c.b16 %v3002, %v3000
  %v4149 = vpack.c.b16 %v3003, %v3001
  %v4150 = vpack.c.b16 %v3006, %v3004
  %v4151 = vpack.c.b16 %v3007, %v3005
  %v4152 = vpack.c.b16 %v3010, %v3008
  %v4153 = vpack.c.b16 %v3011, %v3009
  %v4154 = vpack.c.b16 %v3014, %v3012
  %v4155 = vpack.c.b16 %v3015, %v3013
  %v4156 = vpack.c.b16 %v3018, %v3016
  %v4157 = vpack.c.b16 %v3019, %v3017
  %v4158 = vpack.c.b16 %v3022, %v3020
  %v4159 = vpack.c.b16 %v3023, %v3021
  %v4160 = vpack.c.b16 %v3026, %v3024
  %v4161 = vpack.c.b16 %v3027, %v3025
  %v4162 = vpack.c.b16 %v3030, %v3028
  %v4163 = vpack.c.b16 %v3031, %v3029
  %v4164 = vpack.c.b16 %v3034, %v3032
  %v4165 = vpack.c.b16 %v3035, %v3033
  %v4166 = vpack.c.b16 %v3038, %v3036
  %v4167 = vpack.c.b16 %v3039, %v3037
  %v4168 = vpack.c.b16 %v3042, %v3040
  %v4169 = vpack.c.b16 %v3043, %v3041
  %v4170 = vpack.c.b16 %v3046, %v3044
  %v4171 = vpack.c.b16 %v3047, %v3045
  %v4172 = vpack.c.b16 %v3050, %v3048
  %v4173 = vpack.c.b16 %v3051, %v3049
  %v4174 = vpack.c.b16 %v3054, %v3052
  %v4175 = vpack.c.b16 %v3055, %v3053
  %v4176 = vpack.c.b16 %v3058, %v3056
  %v4177 = vpack.c.b16 %v3059, %v3057
  %v4178 = vpack.c.b16 %v3062, %v3060
  %v4179 = vpack.c.b16 %v3063, %v3061
  %v4180 = vpack.c.b16 %v3066, %v3064
  %v4181 = vpack.c.b16 %v3067, %v3065
  %v4182 = vpack.c.b16 %v3070, %v3068
  %v4183 = vpack.c.b16 %v3071, %v3069
  %v4184 = vpack.c.b16 %v3074, %v3072
  %v4185 = vpack.c.b16 %v3075, %v3073
  %v4186 = vpack.c.b16 %v3078, %v3076
  %v4187 = vpack.c.b16 %v3079, %v3077
  %v4188 = vpack.c.b16 %v3082, %v3080
  %v4189 = vpack.c.b16 %v3083, %v3081
  %v4190 = vpack.c.b16 %v3086, %v3084
  %v4191 = vpack.c.b16 %v3087, %v3085
  %v4192 = vpack.c.b16 %v3090, %v3088
  %v4193 = vpack.c.b16 %v3091, %v3089
  %v4194 = vpack.c.b16 %v3094, %v3092
  %v4195 = vpack.c.b16 %v3095, %v3093
  %v4196 = vpack.c.b16 %v3098, %v3096
  %v4197 = vpack.c.b16 %v3099, %v3097
  %v4198 = vpack.c.b16 %v3102, %v3100
  %v4199 = vpack.c.b16 %v3103, %v3101
  %v4200 = vpack.c.b16 %v3106, %v3104
  %v4201 = vpack.c.b16 %v3107, %v3105
  %v4202 = vpack.c.b16 %v3110, %v3108
  %v4203 = vpack.c.b16 %v3111, %v3109
  %v4204 = vpack.c.b16 %v3114, %v3112
  %v4205 = vpack.c.b16 %v3115, %v3113
  %v4206 = vpack.c.b16 %v3118, %v3116
  %v4207 = vpack.c.b16 %v3119, %v3117
  %v4208 = vpack.c.b16 %v3122, %v3120
  %v4209 = vpack.c.b16 %v3123, %v3121
  %v4210 = vpack.c.b16 %v3126, %v3124
  %v4211 = vpack.c.b16 %v3127, %v3125
  %v4212 = vpack.c.b16 %v3130, %v3128
  %v4213 = vpack.c.b16 %v3131, %v3129
  %v4214 = vpack.c.b16 %v3134, %v3132
  %v4215 = vpack.c.b16 %v3135, %v3133
  %v4216 = vpack.c.b16 %v3138, %v3136
  %v4217 = vpack.c.b16 %v3139, %v3137
  %v4218 = vpack.c.b16 %v3142, %v3140
  %v4219 = vpack.c.b16 %v3143, %v3141
  %v4220 = vpack.c.b16 %v3146, %v3144
  %v4221 = vpack.c.b16 %v3147, %v3145
  %v4222 = vpack.c.b16 %v3150, %v3148
  %v4223 = vpack.c.b16 %v3151, %v3149
  %v4224 = vpack.c.b16 %v3154, %v3152
  %v4225 = vpack.c.b16 %v3155, %v3153
  %v4226 = vpack.c.b16 %v3158, %v3156
  %v4227 = vpack.c.b16 %v3159, %v3157
  %v4228 = vpack.c.b16 %v3162, %v3160
  %v4229 = vpack.c.b16 %v3163, %v3161
  %v4230 = vpack.c.b16 %v3166, %v3164
  %v4231 = vpack.c.b16 %v3167, %v3165
  %v4232 = vpack.c.b16 %v3170, %v3168
  %v4233 = vpack.c.b16 %v3171, %v3169
  %v4234 = vpack.c.b16 %v3174, %v3172
  %v4235 = vpack.c.b16 %v3175, %v3173
  %v4236 = vpack.c.b16 %v3178, %v3176
  %v4237 = vpack.c.b16 %v3179, %v3177
  %v4238 = vpack.c.b16 %v3182, %v3180
  %v4239 = vpack.c.b16 %v3183, %v3181
  %v4240 = vpack.c.b16 %v3186, %v3184
  %v4241 = vpack.c.b16 %v3187, %v3185
  %v4242 = vpack.c.b16 %v3190, %v3188
  %v4243 = vpack.c.b16 %v3191, %v3189
  %v4244 = vpack.c.b16 %v3194, %v3192
  %v4245 = vpack.c.b16 %v3195, %v3193
  %v4246 = vpack.c.b16 %v3198, %v3196
  %v4247 = vpack.c.b16 %v3199, %v3197
  %v4248 = vpack.c.b16 %v3202, %v3200
  %v4249 = vpack.c.b16 %v3203, %v3201
  %v4250 = vpack.c.b16 %v3206, %v3204
  %v4251 = vpack.c.b16 %v3207, %v3205
  %v4252 = vpack.c.b16 %v3210, %v3208
  %v4253 = vpack.c.b16 %v3211, %v3209
  %v4254 = vpack.c.b16 %v3214, %v3212
  %v4255 = vpack.c.b16 %v3215, %v3213
  %v4256 = vpack.c.b16 %v3218, %v3216
  %v4257 = vpack.c.b16 %v3219, %v3217
  %v4258 = vpack.c.b16 %v3222, %v3220
  %v4259 = vpack.c.b16 %v3223, %v3221
  %v4260 = vpack.c.b16 %v3226, %v3224
  %v4261 = vpack.c.b16 %v3227, %v3225
  %v4262 = vpack.c.b16 %v3230, %v3228
  %v4263 = vpack.c.b16 %v3231, %v3229
  %v4264 = vpack.c.b16 %v3234, %v3232
  %v4265 = vpack.c.b16 %v3235, %v3233
  %v4266 = vpack.c.b16 %v3238, %v3236
  %v4267 = vpack.c.b16 %v3239, %v3237
  %v4268 = vpack.c.b16 %v3242, %v3240
  %v4269 = vpack.c.b16 %v3243, %v3241
  %v4270 = vpack.c.b16 %v3246, %v3244
  %v4271 = vpack.c.b16 %v3247, %v3245
  %v4272 = vpack.c.b16 %v3250, %v3248
  %v4273 = vpack.c.b16 %v3251, %v3249
  %v4274 = vpack.c.b16 %v3254, %v3252
  %v4275 = vpack.c.b16 %v3255, %v3253
  %v4276 = vpack.c.b16 %v3258, %v3256
  %v4277 = vpack.c.b16 %v3259, %v3257
  %v4278 = vpack.c.b16 %v3262, %v3260
  %v4279 = vpack.c.b16 %v3263, %v3261
  %v4280 = vpack.c.b16 %v3266, %v3264
  %v4281 = vpack.c.b16 %v3267, %v3265
  %v4282 = vpack.c.b16 %v3270, %v3268
  %v4283 = vpack.c.b16 %v3271, %v3269
  %v4284 = vpack.c.b16 %v3274, %v3272
  %v4285 = vpack.c.b16 %v3275, %v3273
  %v4286 = vpack.c.b16 %v3278, %v3276
  %v4287 = vpack.c.b16 %v3279, %v3277
  %v4288 = vpack.c.b16 %v3282, %v3280
  %v4289 = vpack.c.b16 %v3283, %v3281
  %v4290 = vpack.c.b16 %v3286, %v3284
  %v4291 = vpack.c.b16 %v3287, %v3285
  %v4292 = vpack.c.b16 %v3290, %v3288
  %v4293 = vpack.c.b16 %v3291, %v3289
  %v4294 = vpack.c.b16 %v3294, %v3292
  %v4295 = vpack.c.b16 %v3295, %v3293
  %v4296 = vpack.c.b16 %v3298, %v3296
  %v4297 = vpack.c.b16 %v3299, %v3297
  %v4298 = vpack.c.b16 %v3302, %v3300
  %v4299 = vpack.c.b16 %v3303, %v3301
  %v4300 = vpack.c.b16 %v3306, %v3304
  %v4301 = vpack.c.b16 %v3307, %v3305
  %v4302 = vpack.c.b16 %v3310, %v3308
  %v4303 = vpack.c.b16 %v3311, %v3309
  %v4304 = vpack.c.b16 %v3314, %v3312
  %v4305 = vpack.c.b16 %v3315, %v3313
  %v4306 = vpack.c.b16 %v3318, %v3316
  %v4307 = vpack.c.b16 %v3319, %v3317
  %v4308 = vpack.c.b16 %v3322, %v3320
  %v4309 = vpack.c.b16 %v3323, %v3321
  %v4310 = vpack.c.b16 %v3326, %v3324
  %v4311 = vpack.c.b16 %v3327, %v3325
  %v4312 = vpack.c.b16 %v3330, %v3328
  %v4313 = vpack.c.b16 %v3331, %v3329
  %v4314 = vpack.c.b16 %v3334, %v3332
  %v4315 = vpack.c.b16 %v3335, %v3333
  %v4316 = vpack.c.b16 %v3338, %v3336
  %v4317 = vpack.c.b16 %v3339, %v3337
  %v4318 = vpack.c.b16 %v3342, %v3340
  %v4319 = vpack.c.b16 %v3343, %v3341
  %v4320 = vpack.c.b16 %v3346, %v3344
  %v4321 = vpack.c.b16 %v3347, %v3345
  %v4322 = vpack.c.b16 %v3350, %v3348
  %v4323 = vpack.c.b16 %v3351, %v3349
  %v4324 = vpack.c.b16 %v3354, %v3352
  %v4325 = vpack.c.b16 %v3355, %v3353
  %v4326 = vpack.c.b16 %v3358, %v3356
  %v4327 = vpack.c.b16 %v3359, %v3357
  %v4328 = vpack.c.b16 %v3362, %v3360
  %v4329 = vpack.c.b16 %v3363, %v3361
  %v4330 = vpack.c.b16 %v3366, %v3364
  %v4331 = vpack.c.b16 %v3367, %v3365
  %v4332 = vpack.c.b16 %v3370, %v3368
  %v4333 = vpack.c.b16 %v3371, %v3369
  %v4334 = vpack.c.b16 %v3374, %v3372
  %v4335 = vpack.c.b16 %v3375, %v3373
  %v4336 = vpack.c.b16 %v3378, %v3376
  %v4337 = vpack.c.b16 %v3379, %v3377
  %v4338 = vpack.c.b16 %v3382, %v3380
  %v4339 = vpack.c.b16 %v3383, %v3381
  %v4340 = vpack.c.b16 %v3386, %v3384
  %v4341 = vpack.c.b16 %v3387, %v3385
  %v4342 = vpack.c.b16 %v3390, %v3388
  %v4343 = vpack.c.b16 %v3391, %v3389
  %v4344 = vpack.c.b16 %v3394, %v3392
  %v4345 = vpack.c.b16 %v3395, %v3393
  %v4346 = vpack.c.b16 %v3398, %v3396
  %v4347 = vpack.c.b16 %v3399, %v3397
  %v4348 = vpack.c.b16 %v3402, %v3400
  %v4349 = vpack.c.b16 %v3403, %v3401
  %v4350 = vpack.c.b16 %v3406, %v3404
  %v4351 = vpack.c.b16 %v3407, %v3405
  %v4352 = vpack.c.b16 %v3410, %v3408
  %v4353 = vpack.c.b16 %v3411, %v3409
  %v4354 = vpack.c.b16 %v3414, %v3412
  %v4355 = vpack.c.b16 %v3415, %v3413
  %v4356 = vpack.c.b16 %v3418, %v3416
  %v4357 = vpack.c.b16 %v3419, %v3417
  %v4358 = vpack.c.b16 %v3422, %v3420
  %v4359 = vpack.c.b16 %v3423, %v3421
  %v4360 = vpack.c.b16 %v3426, %v3424
  %v4361 = vpack.c.b16 %v3427, %v3425
  %v4362 = vpack.c.b16 %v3430, %v3428
  %v4363 = vpack.c.b16 %v3431, %v3429
  %v4364 = vpack.c.b16 %v3434, %v3432
  %v4365 = vpack.c.b16 %v3435, %v3433
  %v4366 = vpack.c.b16 %v3438, %v3436
  %v4367 = vpack.c.b16 %v3439, %v3437
  %v4368 = vpack.c.b16 %v3442, %v3440
  %v4369 = vpack.c.b16 %v3443, %v3441
  %v4370 = vpack.c.b16 %v3446, %v3444
  %v4371 = vpack.c.b16 %v3447, %v3445
  %v4372 = vpack.c.b16 %v3450, %v3448
  %v4373 = vpack.c.b16 %v3451, %v3449
  %v4374 = vpack.c.b16 %v3454, %v3452
  %v4375 = vpack.c.b16 %v3455, %v3453
  %v4376 = vpack.c.b16 %v3458, %v3456
  %v4377 = vpack.c.b16 %v3459, %v3457
  %v4378 = vpack.c.b16 %v3462, %v3460
  %v4379 = vpack.c.b16 %v3463, %v3461
  %v4380 = vpack.c.b16 %v3466, %v3464
  %v4381 = vpack.c.b16 %v3467, %v3465
  %v4382 = vpack.c.b16 %v3470, %v3468
  %v4383 = vpack.c.b16 %v3471, %v3469
  %v4384 = vpack.c.b16 %v3474, %v3472
  %v4385 = vpack.c.b16 %v3475, %v3473
  %v4386 = vpack.c.b16 %v3478, %v3476
  %v4387 = vpack.c.b16 %v3479, %v3477
  %v4388 = vpack.c.b16 %v3482, %v3480
  %v4389 = vpack.c.b16 %v3483, %v3481
  %v4390 = vpack.c.b16 %v3486, %v3484
  %v4391 = vpack.c.b16 %v3487, %v3485
  %v4392 = vpack.c.b16 %v3490, %v3488
  %v4393 = vpack.c.b16 %v3491, %v3489
  %v4394 = vpack.c.b16 %v3494, %v3492
  %v4395 = vpack.c.b16 %v3495, %v3493
  %v4396 = vpack.c.b16 %v3498, %v3496
  %v4397 = vpack.c.b16 %v3499, %v3497
  %v4398 = vpack.c.b16 %v3502, %v3500
  %v4399 = vpack.c.b16 %v3503, %v3501
  %v4400 = vpack.c.b16 %v3506, %v3504
  %v4401 = vpack.c.b16 %v3507, %v3505
  %v4402 = vpack.c.b16 %v3510, %v3508
  %v4403 = vpack.c.b16 %v3511, %v3509
  %v4404 = vpack.c.b16 %v3514, %v3512
  %v4405 = vpack.c.b16 %v3515, %v3513
  %v4406 = vpack.c.b16 %v3518, %v3516
  %v4407 = vpack.c.b16 %v3519, %v3517
  %v4408 = vpack.c.b16 %v3522, %v3520
  %v4409 = vpack.c.b16 %v3523, %v3521
  %v4410 = vpack.c.b16 %v3526, %v3524
  %v4411 = vpack.c.b16 %v3527, %v3525
  %v4412 = vpack.c.b16 %v3530, %v3528
  %v4413 = vpack.c.b16 %v3531, %v3529
  %v4414 = vpack.c.b16 %v3534, %v3532
  %v4415 = vpack.c.b16 %v3535, %v3533
  %v4416 = vpack.c.b16 %v3538, %v3536
  %v4417 = vpack.c.b16 %v3539, %v3537
  %v4418 = vpack.c.b16 %v3542, %v3540
  %v4419 = vpack.c.b16 %v3543, %v3541
  %v4420 = vpack.c.b16 %v3546, %v3544
  %v4421 = vpack.c.b16 %v3547, %v3545
  %v4422 = vpack.c.b16 %v3550, %v3548
  %v4423 = vpack.c.b16 %v3551, %v3549
  %v4424 = vpack.c.b16 %v3554, %v3552
  %v4425 = vpack.c.b16 %v3555, %v3553
  %v4426 = vpack.c.b16 %v3558, %v3556
  %v4427 = vpack.c.b16 %v3559, %v3557
  %v4428 = vpack.c.b16 %v3562, %v3560
  %v4429 = vpack.c.b16 %v3563, %v3561
  %v4430 = vpack.c.b16 %v3566, %v3564
  %v4431 = vpack.c.b16 %v3567, %v3565
  %v4432 = vpack.c.b16 %v3570, %v3568
  %v4433 = vpack.c.b16 %v3571, %v3569
  %v4434 = vpack.c.b16 %v3574, %v3572
  %v4435 = vpack.c.b16 %v3575, %v3573
  %v4436 = vpack.c.b16 %v3578, %v3576
  %v4437 = vpack.c.b16 %v3579, %v3577
  %v4438 = vpack.c.b16 %v3582, %v3580
  %v4439 = vpack.c.b16 %v3583, %v3581
  %v4440 = vpack.c.b16 %v3586, %v3584
  %v4441 = vpack.c.b16 %v3587, %v3585
  %v4442 = vpack.c.b16 %v3590, %v3588
  %v4443 = vpack.c.b16 %v3591, %v3589
  %v4444 = vpack.c.b16 %v3594, %v3592
  %v4445 = vpack.c.b16 %v3595, %v3593
  %v4446 = vpack.c.b16 %v3598, %v3596
  %v4447 = vpack.c.b16 %v3599, %v3597
  %v4448 = vpack.c.b16 %v3602, %v3600
  %v4449 = vpack.c.b16 %v3603, %v3601
  %v4450 = vpack.c.b16 %v3606, %v3604
  %v4451 = vpack.c.b16 %v3607, %v3605
  %v4452 = vpack.c.b16 %v3610, %v3608
  %v4453 = vpack.c.b16 %v3611, %v3609
  %v4454 = vpack.c.b16 %v3614, %v3612
  %v4455 = vpack.c.b16 %v3615, %v3613
  %v4456 = vpack.c.b16 %v3618, %v3616
  %v4457 = vpack.c.b16 %v3619, %v3617
  %v4458 = vpack.c.b16 %v3622, %v3620
  %v4459 = vpack.c.b16 %v3623, %v3621
  %v4460 = vpack.c.b16 %v3626, %v3624
  %v4461 = vpack.c.b16 %v3627, %v3625
  %v4462 = vpack.c.b16 %v3630, %v3628
  %v4463 = vpack.c.b16 %v3631, %v3629
  %v4464 = vpack.c.b16 %v3634, %v3632
  %v4465 = vpack.c.b16 %v3635, %v3633
  %v4466 = vpack.c.b16 %v3638, %v3636
  %v4467 = vpack.c.b16 %v3639, %v3637
  %v4468 = vpack.c.b16 %v3642, %v3640
  %v4469 = vpack.c.b16 %v3643, %v3641
  %v4470 = vpack.c.b16 %v3646, %v3644
  %v4471 = vpack.c.b16 %v3647, %v3645
  %v4472 = vpack.c.b16 %v3650, %v3648
  %v4473 = vpack.c.b16 %v3651, %v3649
  %v4474 = vpack.c.b16 %v3654, %v3652
  %v4475 = vpack.c.b16 %v3655, %v3653
  %v4476 = vpack.c.b16 %v3658, %v3656
  %v4477 = vpack.c.b16 %v3659, %v3657
  %v4478 = vpack.c.b16 %v3660, %v3660
  %v4479 = vpack.c.b16 %v3661, %v3661
  %vm5296 = vcmask 48128
  %v5298 = vsel %vm5296, %v381, 0
  %vm5300 = vcmask 1042432
  %v5302 = vsel %vm5300, %v4478, 0
  %v5305 = vsel %vm5300, %v4479, 0
  %5307 = vmatprep.subr.bf16.mxu0 %v3663
  %5308 = vmatpush1.bf16.msra.mxu0 %v3662
  %5309 = vmatprep.subr.bf16.mxu0 %v3665
  %5310 = vmatpush1.bf16.msra.mxu0 %v3664
  %5311 = vmatprep.subr.bf16.mxu0 %v3667
  %5312 = vmatpush1.bf16.msra.mxu0 %v3666
  %5313 = vmatprep.subr.bf16.mxu0 %v3669
  %5314 = vmatpush1.bf16.msra.mxu0 %v3668
  %5315 = vmatprep.subr.bf16.mxu0 %v3671
  %5316 = vmatpush1.bf16.msra.mxu0 %v3670
  %5317 = vmatprep.subr.bf16.mxu0 %v3673
  %5318 = vmatpush1.bf16.msra.mxu0 %v3672
  %5319 = vmatprep.subr.bf16.mxu0 %v3675
  %5320 = vmatpush1.bf16.msra.mxu0 %v3674
  %5321 = vmatprep.subr.bf16.mxu0 %v3677
  %5322 = vmatpush1.bf16.msra.mxu0 %v3676
  %5323 = vmatprep.subr.bf16.mxu0 %v3679
  %5324 = vmatpush1.bf16.msra.mxu0 %v3678
  %5325 = vmatprep.subr.bf16.mxu0 %v3681
  %5326 = vmatpush1.bf16.msra.mxu0 %v3680
  %5327 = vmatprep.subr.bf16.mxu0 %v3683
  %5328 = vmatpush1.bf16.msra.mxu0 %v3682
  %5329 = vmatprep.subr.bf16.mxu0 %v3685
  %5330 = vmatpush1.bf16.msra.mxu0 %v3684
  %5331 = vmatprep.subr.bf16.mxu0 %v3687
  %5332 = vmatpush1.bf16.msra.mxu0 %v3686
  %5333 = vmatprep.subr.bf16.mxu0 %v3689
  %5334 = vmatpush1.bf16.msra.mxu0 %v3688
  %5335 = vmatprep.subr.bf16.mxu0 %v3691
  %5336 = vmatpush1.bf16.msra.mxu0 %v3690
  %5337 = vmatprep.subr.bf16.mxu0 %v3693
  %5338 = vmatpush1.bf16.msra.mxu0 %v3692
  %5339 = vmatprep.mubr.bf16.mxu0 %v331
  %5340 = vmatmul.mubr.bf16.gmra.mrb[0].mxu0 %v330
  %v5341 = vpop.f32.mrb[0].mxu0
  %v5342 = vadd.f32 %v1204, %v5341
  %v5343 = vpop.f32.mrb[0].mxu0
  %v5344 = vadd.f32 %v1208, %v5343
  %v5345 = vpop.f32.mrb[0].mxu0
  %v5346 = vpop.f32.mrb[0].mxu0
  %5347 = vdwg.mxu0
  %5348 = vmatprep.subr.bf16.mxu0 %v3695
  %5349 = vmatpush1.bf16.msra.mxu0 %v3694
  %5350 = vmatprep.subr.bf16.mxu0 %v3697
  %5351 = vmatpush1.bf16.msra.mxu0 %v3696
  %5352 = vmatprep.subr.bf16.mxu0 %v3699
  %5353 = vmatpush1.bf16.msra.mxu0 %v3698
  %5354 = vmatprep.subr.bf16.mxu0 %v3701
  %5355 = vmatpush1.bf16.msra.mxu0 %v3700
  %5356 = vmatprep.subr.bf16.mxu0 %v3703
  %5357 = vmatpush1.bf16.msra.mxu0 %v3702
  %5358 = vmatprep.subr.bf16.mxu0 %v3705
  %5359 = vmatpush1.bf16.msra.mxu0 %v3704
  %5360 = vmatprep.subr.bf16.mxu0 %v3707
  %5361 = vmatpush1.bf16.msra.mxu0 %v3706
  %5362 = vmatprep.subr.bf16.mxu0 %v3709
  %5363 = vmatpush1.bf16.msra.mxu0 %v3708
  %5364 = vmatprep.subr.bf16.mxu0 %v3711
  %5365 = vmatpush1.bf16.msra.mxu0 %v3710
  %5366 = vmatprep.subr.bf16.mxu0 %v3713
  %5367 = vmatpush1.bf16.msra.mxu0 %v3712
  %5368 = vmatprep.subr.bf16.mxu0 %v3715
  %5369 = vmatpush1.bf16.msra.mxu0 %v3714
  %5370 = vmatprep.subr.bf16.mxu0 %v3717
  %5371 = vmatpush1.bf16.msra.mxu0 %v3716
  %5372 = vmatprep.subr.bf16.mxu0 %v3719
  %5373 = vmatpush1.bf16.msra.mxu0 %v3718
  %5374 = vmatprep.subr.bf16.mxu0 %v3721
  %5375 = vmatpush1.bf16.msra.mxu0 %v3720
  %5376 = vmatprep.subr.bf16.mxu0 %v3723
  %5377 = vmatpush1.bf16.msra.mxu0 %v3722
  %5378 = vmatprep.subr.bf16.mxu0 %v3725
  %5379 = vmatpush1.bf16.msra.mxu0 %v3724
  %5380 = vmatprep.mubr.bf16.mxu0 %v333
  %5381 = vmatmul.mubr.bf16.gmra.mrb[0].mxu0 %v332
  %v5382 = vpop.f32.mrb[0].mxu0
  %v5383 = vadd.f32 %v5342, %v5382
  %v5384 = vpop.f32.mrb[0].mxu0
  %v5385 = vadd.f32 %v5344, %v5384
  %v5386 = vpop.f32.mrb[0].mxu0
  %v5387 = vpop.f32.mrb[0].mxu0
  %5388 = vdwg.mxu0
  %5389 = vmatprep.subr.bf16.mxu0 %v3727
  %5390 = vmatpush1.bf16.msra.mxu0 %v3726
  %5391 = vmatprep.subr.bf16.mxu0 %v3729
  %5392 = vmatpush1.bf16.msra.mxu0 %v3728
  %5393 = vmatprep.subr.bf16.mxu0 %v3731
  %5394 = vmatpush1.bf16.msra.mxu0 %v3730
  %5395 = vmatprep.subr.bf16.mxu0 %v3733
  %5396 = vmatpush1.bf16.msra.mxu0 %v3732
  %5397 = vmatprep.subr.bf16.mxu0 %v3735
  %5398 = vmatpush1.bf16.msra.mxu0 %v3734
  %5399 = vmatprep.subr.bf16.mxu0 %v3737
  %5400 = vmatpush1.bf16.msra.mxu0 %v3736
  %5401 = vmatprep.subr.bf16.mxu0 %v3739
  %5402 = vmatpush1.bf16.msra.mxu0 %v3738
  %5403 = vmatprep.subr.bf16.mxu0 %v3741
  %5404 = vmatpush1.bf16.msra.mxu0 %v3740
  %5405 = vmatprep.subr.bf16.mxu0 %v3743
  %5406 = vmatpush1.bf16.msra.mxu0 %v3742
  %5407 = vmatprep.subr.bf16.mxu0 %v3745
  %5408 = vmatpush1.bf16.msra.mxu0 %v3744
  %5409 = vmatprep.subr.bf16.mxu0 %v3747
  %5410 = vmatpush1.bf16.msra.mxu0 %v3746
  %5411 = vmatprep.subr.bf16.mxu0 %v3749
  %5412 = vmatpush1.bf16.msra.mxu0 %v3748
  %5413 = vmatprep.subr.bf16.mxu0 %v3751
  %5414 = vmatpush1.bf16.msra.mxu0 %v3750
  %5415 = vmatprep.subr.bf16.mxu0 %v3753
  %5416 = vmatpush1.bf16.msra.mxu0 %v3752
  %5417 = vmatprep.subr.bf16.mxu0 %v3755
  %5418 = vmatpush1.bf16.msra.mxu0 %v3754
  %5419 = vmatprep.subr.bf16.mxu0 %v3757
  %5420 = vmatpush1.bf16.msra.mxu0 %v3756
  %5421 = vmatprep.mubr.bf16.mxu0 %v335
  %5422 = vmatmul.mubr.bf16.gmra.mrb[0].mxu0 %v334
  %v5423 = vpop.f32.mrb[0].mxu0
  %v5424 = vadd.f32 %v5383, %v5423
  %v5425 = vpop.f32.mrb[0].mxu0
  %v5426 = vadd.f32 %v5385, %v5425
  %v5427 = vpop.f32.mrb[0].mxu0
  %v5428 = vpop.f32.mrb[0].mxu0
  %5429 = vdwg.mxu0
  %5430 = vmatprep.subr.bf16.mxu0 %v3759
  %5431 = vmatpush1.bf16.msra.mxu0 %v3758
  %5432 = vmatprep.subr.bf16.mxu0 %v3761
  %5433 = vmatpush1.bf16.msra.mxu0 %v3760
  %5434 = vmatprep.subr.bf16.mxu0 %v3763
  %5435 = vmatpush1.bf16.msra.mxu0 %v3762
  %5436 = vmatprep.subr.bf16.mxu0 %v3765
  %5437 = vmatpush1.bf16.msra.mxu0 %v3764
  %5438 = vmatprep.subr.bf16.mxu0 %v3767
  %5439 = vmatpush1.bf16.msra.mxu0 %v3766
  %5440 = vmatprep.subr.bf16.mxu0 %v3769
  %5441 = vmatpush1.bf16.msra.mxu0 %v3768
  %5442 = vmatprep.subr.bf16.mxu0 %v3771
  %5443 = vmatpush1.bf16.msra.mxu0 %v3770
  %5444 = vmatprep.subr.bf16.mxu0 %v3773
  %5445 = vmatpush1.bf16.msra.mxu0 %v3772
  %5446 = vmatprep.subr.bf16.mxu0 %v3775
  %5447 = vmatpush1.bf16.msra.mxu0 %v3774
  %5448 = vmatprep.subr.bf16.mxu0 %v3777
  %5449 = vmatpush1.bf16.msra.mxu0 %v3776
  %5450 = vmatprep.subr.bf16.mxu0 %v3779
  %5451 = vmatpush1.bf16.msra.mxu0 %v3778
  %5452 = vmatprep.subr.bf16.mxu0 %v3781
  %5453 = vmatpush1.bf16.msra.mxu0 %v3780
  %5454 = vmatprep.subr.bf16.mxu0 %v3783
  %5455 = vmatpush1.bf16.msra.mxu0 %v3782
  %5456 = vmatprep.subr.bf16.mxu0 %v3785
  %5457 = vmatpush1.bf16.msra.mxu0 %v3784
  %5458 = vmatprep.subr.bf16.mxu0 %v3787
  %5459 = vmatpush1.bf16.msra.mxu0 %v3786
  %5460 = vmatprep.subr.bf16.mxu0 %v3789
  %5461 = vmatpush1.bf16.msra.mxu0 %v3788
  %5462 = vmatprep.mubr.bf16.mxu0 %v337
  %5463 = vmatmul.mubr.bf16.gmra.mrb[0].mxu0 %v336
  %v5464 = vpop.f32.mrb[0].mxu0
  %v5465 = vadd.f32 %v5424, %v5464
  %v5466 = vpop.f32.mrb[0].mxu0
  %v5467 = vadd.f32 %v5426, %v5466
  %v5468 = vpop.f32.mrb[0].mxu0
  %v5469 = vpop.f32.mrb[0].mxu0
  %5470 = vdwg.mxu0
  %5471 = vmatprep.subr.bf16.mxu0 %v3791
  %5472 = vmatpush1.bf16.msra.mxu0 %v3790
  %5473 = vmatprep.subr.bf16.mxu0 %v3793
  %5474 = vmatpush1.bf16.msra.mxu0 %v3792
  %5475 = vmatprep.subr.bf16.mxu0 %v3795
  %5476 = vmatpush1.bf16.msra.mxu0 %v3794
  %5477 = vmatprep.subr.bf16.mxu0 %v3797
  %5478 = vmatpush1.bf16.msra.mxu0 %v3796
  %5479 = vmatprep.subr.bf16.mxu0 %v3799
  %5480 = vmatpush1.bf16.msra.mxu0 %v3798
  %5481 = vmatprep.subr.bf16.mxu0 %v3801
  %5482 = vmatpush1.bf16.msra.mxu0 %v3800
  %5483 = vmatprep.subr.bf16.mxu0 %v3803
  %5484 = vmatpush1.bf16.msra.mxu0 %v3802
  %5485 = vmatprep.subr.bf16.mxu0 %v3805
  %5486 = vmatpush1.bf16.msra.mxu0 %v3804
  %5487 = vmatprep.subr.bf16.mxu0 %v3807
  %5488 = vmatpush1.bf16.msra.mxu0 %v3806
  %5489 = vmatprep.subr.bf16.mxu0 %v3809
  %5490 = vmatpush1.bf16.msra.mxu0 %v3808
  %5491 = vmatprep.subr.bf16.mxu0 %v3811
  %5492 = vmatpush1.bf16.msra.mxu0 %v3810
  %5493 = vmatprep.subr.bf16.mxu0 %v3813
  %5494 = vmatpush1.bf16.msra.mxu0 %v3812
  %5495 = vmatprep.subr.bf16.mxu0 %v3815
  %5496 = vmatpush1.bf16.msra.mxu0 %v3814
  %5497 = vmatprep.subr.bf16.mxu0 %v3817
  %5498 = vmatpush1.bf16.msra.mxu0 %v3816
  %5499 = vmatprep.subr.bf16.mxu0 %v3819
  %5500 = vmatpush1.bf16.msra.mxu0 %v3818
  %5501 = vmatprep.subr.bf16.mxu0 %v3821
  %5502 = vmatpush1.bf16.msra.mxu0 %v3820
  %5503 = vmatprep.mubr.bf16.mxu0 %v339
  %5504 = vmatmul.mubr.bf16.gmra.mrb[0].mxu0 %v338
  %v5505 = vpop.f32.mrb[0].mxu0
  %v5506 = vadd.f32 %v5465, %v5505
  %v5507 = vpop.f32.mrb[0].mxu0
  %v5508 = vadd.f32 %v5467, %v5507
  %v5509 = vpop.f32.mrb[0].mxu0
  %v5510 = vpop.f32.mrb[0].mxu0
  %5511 = vdwg.mxu0
  %5512 = vmatprep.subr.bf16.mxu0 %v3823
  %5513 = vmatpush1.bf16.msra.mxu0 %v3822
  %5514 = vmatprep.subr.bf16.mxu0 %v3825
  %5515 = vmatpush1.bf16.msra.mxu0 %v3824
  %5516 = vmatprep.subr.bf16.mxu0 %v3827
  %5517 = vmatpush1.bf16.msra.mxu0 %v3826
  %5518 = vmatprep.subr.bf16.mxu0 %v3829
  %5519 = vmatpush1.bf16.msra.mxu0 %v3828
  %5520 = vmatprep.subr.bf16.mxu0 %v3831
  %5521 = vmatpush1.bf16.msra.mxu0 %v3830
  %5522 = vmatprep.subr.bf16.mxu0 %v3833
  %5523 = vmatpush1.bf16.msra.mxu0 %v3832
  %5524 = vmatprep.subr.bf16.mxu0 %v3835
  %5525 = vmatpush1.bf16.msra.mxu0 %v3834
  %5526 = vmatprep.subr.bf16.mxu0 %v3837
  %5527 = vmatpush1.bf16.msra.mxu0 %v3836
  %5528 = vmatprep.subr.bf16.mxu0 %v3839
  %5529 = vmatpush1.bf16.msra.mxu0 %v3838
  %5530 = vmatprep.subr.bf16.mxu0 %v3841
  %5531 = vmatpush1.bf16.msra.mxu0 %v3840
  %5532 = vmatprep.subr.bf16.mxu0 %v3843
  %5533 = vmatpush1.bf16.msra.mxu0 %v3842
  %5534 = vmatprep.subr.bf16.mxu0 %v3845
  %5535 = vmatpush1.bf16.msra.mxu0 %v3844
  %5536 = vmatprep.subr.bf16.mxu0 %v3847
  %5537 = vmatpush1.bf16.msra.mxu0 %v3846
  %5538 = vmatprep.subr.bf16.mxu0 %v3849
  %5539 = vmatpush1.bf16.msra.mxu0 %v3848
  %5540 = vmatprep.subr.bf16.mxu0 %v3851
  %5541 = vmatpush1.bf16.msra.mxu0 %v3850
  %5542 = vmatprep.subr.bf16.mxu0 %v3853
  %5543 = vmatpush1.bf16.msra.mxu0 %v3852
  %5544 = vmatprep.mubr.bf16.mxu0 %v341
  %5545 = vmatmul.mubr.bf16.gmra.mrb[0].mxu0 %v340
  %v5546 = vpop.f32.mrb[0].mxu0
  %v5547 = vadd.f32 %v5506, %v5546
  %v5548 = vpop.f32.mrb[0].mxu0
  %v5549 = vadd.f32 %v5508, %v5548
  %v5550 = vpop.f32.mrb[0].mxu0
  %v5551 = vpop.f32.mrb[0].mxu0
  %5552 = vdwg.mxu0
  %5553 = vmatprep.subr.bf16.mxu0 %v3855
  %5554 = vmatpush1.bf16.msra.mxu0 %v3854
  %5555 = vmatprep.subr.bf16.mxu0 %v3857
  %5556 = vmatpush1.bf16.msra.mxu0 %v3856
  %5557 = vmatprep.subr.bf16.mxu0 %v3859
  %5558 = vmatpush1.bf16.msra.mxu0 %v3858
  %5559 = vmatprep.subr.bf16.mxu0 %v3861
  %5560 = vmatpush1.bf16.msra.mxu0 %v3860
  %5561 = vmatprep.subr.bf16.mxu0 %v3863
  %5562 = vmatpush1.bf16.msra.mxu0 %v3862
  %5563 = vmatprep.subr.bf16.mxu0 %v3865
  %5564 = vmatpush1.bf16.msra.mxu0 %v3864
  %5565 = vmatprep.subr.bf16.mxu0 %v3867
  %5566 = vmatpush1.bf16.msra.mxu0 %v3866
  %5567 = vmatprep.subr.bf16.mxu0 %v3869
  %5568 = vmatpush1.bf16.msra.mxu0 %v3868
  %5569 = vmatprep.subr.bf16.mxu0 %v3871
  %5570 = vmatpush1.bf16.msra.mxu0 %v3870
  %5571 = vmatprep.subr.bf16.mxu0 %v3873
  %5572 = vmatpush1.bf16.msra.mxu0 %v3872
  %5573 = vmatprep.subr.bf16.mxu0 %v3875
  %5574 = vmatpush1.bf16.msra.mxu0 %v3874
  %5575 = vmatprep.subr.bf16.mxu0 %v3877
  %5576 = vmatpush1.bf16.msra.mxu0 %v3876
  %5577 = vmatprep.subr.bf16.mxu0 %v3879
  %5578 = vmatpush1.bf16.msra.mxu0 %v3878
  %5579 = vmatprep.subr.bf16.mxu0 %v3881
  %5580 = vmatpush1.bf16.msra.mxu0 %v3880
  %5581 = vmatprep.subr.bf16.mxu0 %v3883
  %5582 = vmatpush1.bf16.msra.mxu0 %v3882
  %5583 = vmatprep.subr.bf16.mxu0 %v3885
  %5584 = vmatpush1.bf16.msra.mxu0 %v3884
  %5585 = vmatprep.mubr.bf16.mxu0 %v343
  %5586 = vmatmul.mubr.bf16.gmra.mrb[0].mxu0 %v342
  %v5587 = vpop.f32.mrb[0].mxu0
  %v5588 = vadd.f32 %v5547, %v5587
  %v5589 = vpop.f32.mrb[0].mxu0
  %v5590 = vadd.f32 %v5549, %v5589
  %v5591 = vpop.f32.mrb[0].mxu0
  %v5592 = vpop.f32.mrb[0].mxu0
  %5593 = vdwg.mxu0
  %5594 = vmatprep.subr.bf16.mxu0 %v3887
  %5595 = vmatpush1.bf16.msra.mxu0 %v3886
  %5596 = vmatprep.subr.bf16.mxu0 %v3889
  %5597 = vmatpush1.bf16.msra.mxu0 %v3888
  %5598 = vmatprep.subr.bf16.mxu0 %v3891
  %5599 = vmatpush1.bf16.msra.mxu0 %v3890
  %5600 = vmatprep.subr.bf16.mxu0 %v3893
  %5601 = vmatpush1.bf16.msra.mxu0 %v3892
  %5602 = vmatprep.subr.bf16.mxu0 %v3895
  %5603 = vmatpush1.bf16.msra.mxu0 %v3894
  %5604 = vmatprep.subr.bf16.mxu0 %v3897
  %5605 = vmatpush1.bf16.msra.mxu0 %v3896
  %5606 = vmatprep.subr.bf16.mxu0 %v3899
  %5607 = vmatpush1.bf16.msra.mxu0 %v3898
  %5608 = vmatprep.subr.bf16.mxu0 %v3901
  %5609 = vmatpush1.bf16.msra.mxu0 %v3900
  %5610 = vmatprep.subr.bf16.mxu0 %v3903
  %5611 = vmatpush1.bf16.msra.mxu0 %v3902
  %5612 = vmatprep.subr.bf16.mxu0 %v3905
  %5613 = vmatpush1.bf16.msra.mxu0 %v3904
  %5614 = vmatprep.subr.bf16.mxu0 %v3907
  %5615 = vmatpush1.bf16.msra.mxu0 %v3906
  %5616 = vmatprep.subr.bf16.mxu0 %v3909
  %5617 = vmatpush1.bf16.msra.mxu0 %v3908
  %5618 = vmatprep.subr.bf16.mxu0 %v3911
  %5619 = vmatpush1.bf16.msra.mxu0 %v3910
  %5620 = vmatprep.subr.bf16.mxu0 %v3913
  %5621 = vmatpush1.bf16.msra.mxu0 %v3912
  %5622 = vmatprep.subr.bf16.mxu0 %v3915
  %5623 = vmatpush1.bf16.msra.mxu0 %v3914
  %5624 = vmatprep.subr.bf16.mxu0 %v3917
  %5625 = vmatpush1.bf16.msra.mxu0 %v3916
  %5626 = vmatprep.mubr.bf16.mxu0 %v345
  %5627 = vmatmul.mubr.bf16.gmra.mrb[0].mxu0 %v344
  %v5628 = vpop.f32.mrb[0].mxu0
  %v5629 = vadd.f32 %v5588, %v5628
  %v5630 = vpop.f32.mrb[0].mxu0
  %v5631 = vadd.f32 %v5590, %v5630
  %v5632 = vpop.f32.mrb[0].mxu0
  %v5633 = vpop.f32.mrb[0].mxu0
  %5634 = vdwg.mxu0
  %5635 = vmatprep.subr.bf16.mxu0 %v3919
  %5636 = vmatpush1.bf16.msra.mxu0 %v3918
  %5637 = vmatprep.subr.bf16.mxu0 %v3921
  %5638 = vmatpush1.bf16.msra.mxu0 %v3920
  %5639 = vmatprep.subr.bf16.mxu0 %v3923
  %5640 = vmatpush1.bf16.msra.mxu0 %v3922
  %5641 = vmatprep.subr.bf16.mxu0 %v3925
  %5642 = vmatpush1.bf16.msra.mxu0 %v3924
  %5643 = vmatprep.subr.bf16.mxu0 %v3927
  %5644 = vmatpush1.bf16.msra.mxu0 %v3926
  %5645 = vmatprep.subr.bf16.mxu0 %v3929
  %5646 = vmatpush1.bf16.msra.mxu0 %v3928
  %5647 = vmatprep.subr.bf16.mxu0 %v3931
  %5648 = vmatpush1.bf16.msra.mxu0 %v3930
  %5649 = vmatprep.subr.bf16.mxu0 %v3933
  %5650 = vmatpush1.bf16.msra.mxu0 %v3932
  %5651 = vmatprep.subr.bf16.mxu0 %v3935
  %5652 = vmatpush1.bf16.msra.mxu0 %v3934
  %5653 = vmatprep.subr.bf16.mxu0 %v3937
  %5654 = vmatpush1.bf16.msra.mxu0 %v3936
  %5655 = vmatprep.subr.bf16.mxu0 %v3939
  %5656 = vmatpush1.bf16.msra.mxu0 %v3938
  %5657 = vmatprep.subr.bf16.mxu0 %v3941
  %5658 = vmatpush1.bf16.msra.mxu0 %v3940
  %5659 = vmatprep.subr.bf16.mxu0 %v3943
  %5660 = vmatpush1.bf16.msra.mxu0 %v3942
  %5661 = vmatprep.subr.bf16.mxu0 %v3945
  %5662 = vmatpush1.bf16.msra.mxu0 %v3944
  %5663 = vmatprep.subr.bf16.mxu0 %v3947
  %5664 = vmatpush1.bf16.msra.mxu0 %v3946
  %5665 = vmatprep.subr.bf16.mxu0 %v3949
  %5666 = vmatpush1.bf16.msra.mxu0 %v3948
  %5667 = vmatprep.mubr.bf16.mxu0 %v347
  %5668 = vmatmul.mubr.bf16.gmra.mrb[0].mxu0 %v346
  %v5669 = vpop.f32.mrb[0].mxu0
  %v5670 = vadd.f32 %v5629, %v5669
  %v5671 = vpop.f32.mrb[0].mxu0
  %v5672 = vadd.f32 %v5631, %v5671
  %v5673 = vpop.f32.mrb[0].mxu0
  %v5674 = vpop.f32.mrb[0].mxu0
  %5675 = vdwg.mxu0
  %5676 = vmatprep.subr.bf16.mxu0 %v3951
  %5677 = vmatpush1.bf16.msra.mxu0 %v3950
  %5678 = vmatprep.subr.bf16.mxu0 %v3953
  %5679 = vmatpush1.bf16.msra.mxu0 %v3952
  %5680 = vmatprep.subr.bf16.mxu0 %v3955
  %5681 = vmatpush1.bf16.msra.mxu0 %v3954
  %5682 = vmatprep.subr.bf16.mxu0 %v3957
  %5683 = vmatpush1.bf16.msra.mxu0 %v3956
  %5684 = vmatprep.subr.bf16.mxu0 %v3959
  %5685 = vmatpush1.bf16.msra.mxu0 %v3958
  %5686 = vmatprep.subr.bf16.mxu0 %v3961
  %5687 = vmatpush1.bf16.msra.mxu0 %v3960
  %5688 = vmatprep.subr.bf16.mxu0 %v3963
  %5689 = vmatpush1.bf16.msra.mxu0 %v3962
  %5690 = vmatprep.subr.bf16.mxu0 %v3965
  %5691 = vmatpush1.bf16.msra.mxu0 %v3964
  %5692 = vmatprep.subr.bf16.mxu0 %v3967
  %5693 = vmatpush1.bf16.msra.mxu0 %v3966
  %5694 = vmatprep.subr.bf16.mxu0 %v3969
  %5695 = vmatpush1.bf16.msra.mxu0 %v3968
  %5696 = vmatprep.subr.bf16.mxu0 %v3971
  %5697 = vmatpush1.bf16.msra.mxu0 %v3970
  %5698 = vmatprep.subr.bf16.mxu0 %v3973
  %5699 = vmatpush1.bf16.msra.mxu0 %v3972
  %5700 = vmatprep.subr.bf16.mxu0 %v3975
  %5701 = vmatpush1.bf16.msra.mxu0 %v3974
  %5702 = vmatprep.subr.bf16.mxu0 %v3977
  %5703 = vmatpush1.bf16.msra.mxu0 %v3976
  %5704 = vmatprep.subr.bf16.mxu0 %v3979
  %5705 = vmatpush1.bf16.msra.mxu0 %v3978
  %5706 = vmatprep.subr.bf16.mxu0 %v3981
  %5707 = vmatpush1.bf16.msra.mxu0 %v3980
  %5708 = vmatprep.mubr.bf16.mxu0 %v349
  %5709 = vmatmul.mubr.bf16.gmra.mrb[0].mxu0 %v348
  %v5710 = vpop.f32.mrb[0].mxu0
  %v5711 = vadd.f32 %v5670, %v5710
  %v5712 = vpop.f32.mrb[0].mxu0
  %v5713 = vadd.f32 %v5672, %v5712
  %v5714 = vpop.f32.mrb[0].mxu0
  %v5715 = vpop.f32.mrb[0].mxu0
  %5716 = vdwg.mxu0
  %5717 = vmatprep.subr.bf16.mxu0 %v3983
  %5718 = vmatpush1.bf16.msra.mxu0 %v3982
  %5719 = vmatprep.subr.bf16.mxu0 %v3985
  %5720 = vmatpush1.bf16.msra.mxu0 %v3984
  %5721 = vmatprep.subr.bf16.mxu0 %v3987
  %5722 = vmatpush1.bf16.msra.mxu0 %v3986
  %5723 = vmatprep.subr.bf16.mxu0 %v3989
  %5724 = vmatpush1.bf16.msra.mxu0 %v3988
  %5725 = vmatprep.subr.bf16.mxu0 %v3991
  %5726 = vmatpush1.bf16.msra.mxu0 %v3990
  %5727 = vmatprep.subr.bf16.mxu0 %v3993
  %5728 = vmatpush1.bf16.msra.mxu0 %v3992
  %5729 = vmatprep.subr.bf16.mxu0 %v3995
  %5730 = vmatpush1.bf16.msra.mxu0 %v3994
  %5731 = vmatprep.subr.bf16.mxu0 %v3997
  %5732 = vmatpush1.bf16.msra.mxu0 %v3996
  %5733 = vmatprep.subr.bf16.mxu0 %v3999
  %5734 = vmatpush1.bf16.msra.mxu0 %v3998
  %5735 = vmatprep.subr.bf16.mxu0 %v4001
  %5736 = vmatpush1.bf16.msra.mxu0 %v4000
  %5737 = vmatprep.subr.bf16.mxu0 %v4003
  %5738 = vmatpush1.bf16.msra.mxu0 %v4002
  %5739 = vmatprep.subr.bf16.mxu0 %v4005
  %5740 = vmatpush1.bf16.msra.mxu0 %v4004
  %5741 = vmatprep.subr.bf16.mxu0 %v4007
  %5742 = vmatpush1.bf16.msra.mxu0 %v4006
  %5743 = vmatprep.subr.bf16.mxu0 %v4009
  %5744 = vmatpush1.bf16.msra.mxu0 %v4008
  %5745 = vmatprep.subr.bf16.mxu0 %v4011
  %5746 = vmatpush1.bf16.msra.mxu0 %v4010
  %5747 = vmatprep.subr.bf16.mxu0 %v4013
  %5748 = vmatpush1.bf16.msra.mxu0 %v4012
  %5749 = vmatprep.mubr.bf16.mxu0 %v351
  %5750 = vmatmul.mubr.bf16.gmra.mrb[0].mxu0 %v350
  %v5751 = vpop.f32.mrb[0].mxu0
  %v5752 = vadd.f32 %v5711, %v5751
  %v5753 = vpop.f32.mrb[0].mxu0
  %v5754 = vadd.f32 %v5713, %v5753
  %v5755 = vpop.f32.mrb[0].mxu0
  %v5756 = vpop.f32.mrb[0].mxu0
  %5757 = vdwg.mxu0
  %5758 = vmatprep.subr.bf16.mxu0 %v4015
  %5759 = vmatpush1.bf16.msra.mxu0 %v4014
  %5760 = vmatprep.subr.bf16.mxu0 %v4017
  %5761 = vmatpush1.bf16.msra.mxu0 %v4016
  %5762 = vmatprep.subr.bf16.mxu0 %v4019
  %5763 = vmatpush1.bf16.msra.mxu0 %v4018
  %5764 = vmatprep.subr.bf16.mxu0 %v4021
  %5765 = vmatpush1.bf16.msra.mxu0 %v4020
  %5766 = vmatprep.subr.bf16.mxu0 %v4023
  %5767 = vmatpush1.bf16.msra.mxu0 %v4022
  %5768 = vmatprep.subr.bf16.mxu0 %v4025
  %5769 = vmatpush1.bf16.msra.mxu0 %v4024
  %5770 = vmatprep.subr.bf16.mxu0 %v4027
  %5771 = vmatpush1.bf16.msra.mxu0 %v4026
  %5772 = vmatprep.subr.bf16.mxu0 %v4029
  %5773 = vmatpush1.bf16.msra.mxu0 %v4028
  %5774 = vmatprep.subr.bf16.mxu0 %v4031
  %5775 = vmatpush1.bf16.msra.mxu0 %v4030
  %5776 = vmatprep.subr.bf16.mxu0 %v4033
  %5777 = vmatpush1.bf16.msra.mxu0 %v4032
  %5778 = vmatprep.subr.bf16.mxu0 %v4035
  %5779 = vmatpush1.bf16.msra.mxu0 %v4034
  %5780 = vmatprep.subr.bf16.mxu0 %v4037
  %5781 = vmatpush1.bf16.msra.mxu0 %v4036
  %5782 = vmatprep.subr.bf16.mxu0 %v4039
  %5783 = vmatpush1.bf16.msra.mxu0 %v4038
  %5784 = vmatprep.subr.bf16.mxu0 %v4041
  %5785 = vmatpush1.bf16.msra.mxu0 %v4040
  %5786 = vmatprep.subr.bf16.mxu0 %v4043
  %5787 = vmatpush1.bf16.msra.mxu0 %v4042
  %5788 = vmatprep.subr.bf16.mxu0 %v4045
  %5789 = vmatpush1.bf16.msra.mxu0 %v4044
  %5790 = vmatprep.mubr.bf16.mxu0 %v353
  %5791 = vmatmul.mubr.bf16.gmra.mrb[0].mxu0 %v352
  %v5792 = vpop.f32.mrb[0].mxu0
  %v5793 = vadd.f32 %v5752, %v5792
  %v5794 = vpop.f32.mrb[0].mxu0
  %v5795 = vadd.f32 %v5754, %v5794
  %v5796 = vpop.f32.mrb[0].mxu0
  %v5797 = vpop.f32.mrb[0].mxu0
  %5798 = vdwg.mxu0
  %5799 = vmatprep.subr.bf16.mxu0 %v4047
  %5800 = vmatpush1.bf16.msra.mxu0 %v4046
  %5801 = vmatprep.subr.bf16.mxu0 %v4049
  %5802 = vmatpush1.bf16.msra.mxu0 %v4048
  %5803 = vmatprep.subr.bf16.mxu0 %v4051
  %5804 = vmatpush1.bf16.msra.mxu0 %v4050
  %5805 = vmatprep.subr.bf16.mxu0 %v4053
  %5806 = vmatpush1.bf16.msra.mxu0 %v4052
  %5807 = vmatprep.subr.bf16.mxu0 %v4055
  %5808 = vmatpush1.bf16.msra.mxu0 %v4054
  %5809 = vmatprep.subr.bf16.mxu0 %v4057
  %5810 = vmatpush1.bf16.msra.mxu0 %v4056
  %5811 = vmatprep.subr.bf16.mxu0 %v4059
  %5812 = vmatpush1.bf16.msra.mxu0 %v4058
  %5813 = vmatprep.subr.bf16.mxu0 %v4061
  %5814 = vmatpush1.bf16.msra.mxu0 %v4060
  %5815 = vmatprep.subr.bf16.mxu0 %v4063
  %5816 = vmatpush1.bf16.msra.mxu0 %v4062
  %5817 = vmatprep.subr.bf16.mxu0 %v4065
  %5818 = vmatpush1.bf16.msra.mxu0 %v4064
  %5819 = vmatprep.subr.bf16.mxu0 %v4067
  %5820 = vmatpush1.bf16.msra.mxu0 %v4066
  %5821 = vmatprep.subr.bf16.mxu0 %v4069
  %5822 = vmatpush1.bf16.msra.mxu0 %v4068
  %5823 = vmatprep.subr.bf16.mxu0 %v4071
  %5824 = vmatpush1.bf16.msra.mxu0 %v4070
  %5825 = vmatprep.subr.bf16.mxu0 %v4073
  %5826 = vmatpush1.bf16.msra.mxu0 %v4072
  %5827 = vmatprep.subr.bf16.mxu0 %v4075
  %5828 = vmatpush1.bf16.msra.mxu0 %v4074
  %5829 = vmatprep.subr.bf16.mxu0 %v4077
  %5830 = vmatpush1.bf16.msra.mxu0 %v4076
  %5831 = vmatprep.mubr.bf16.mxu0 %v355
  %5832 = vmatmul.mubr.bf16.gmra.mrb[0].mxu0 %v354
  %v5833 = vpop.f32.mrb[0].mxu0
  %v5834 = vadd.f32 %v5793, %v5833
  %v5835 = vpop.f32.mrb[0].mxu0
  %v5836 = vadd.f32 %v5795, %v5835
  %v5837 = vpop.f32.mrb[0].mxu0
  %v5838 = vpop.f32.mrb[0].mxu0
  %5839 = vdwg.mxu0
  %5840 = vmatprep.subr.bf16.mxu0 %v4079
  %5841 = vmatpush1.bf16.msra.mxu0 %v4078
  %5842 = vmatprep.subr.bf16.mxu0 %v4081
  %5843 = vmatpush1.bf16.msra.mxu0 %v4080
  %5844 = vmatprep.subr.bf16.mxu0 %v4083
  %5845 = vmatpush1.bf16.msra.mxu0 %v4082
  %5846 = vmatprep.subr.bf16.mxu0 %v4085
  %5847 = vmatpush1.bf16.msra.mxu0 %v4084
  %5848 = vmatprep.subr.bf16.mxu0 %v4087
  %5849 = vmatpush1.bf16.msra.mxu0 %v4086
  %5850 = vmatprep.subr.bf16.mxu0 %v4089
  %5851 = vmatpush1.bf16.msra.mxu0 %v4088
  %5852 = vmatprep.subr.bf16.mxu0 %v4091
  %5853 = vmatpush1.bf16.msra.mxu0 %v4090
  %5854 = vmatprep.subr.bf16.mxu0 %v4093
  %5855 = vmatpush1.bf16.msra.mxu0 %v4092
  %5856 = vmatprep.subr.bf16.mxu0 %v4095
  %5857 = vmatpush1.bf16.msra.mxu0 %v4094
  %5858 = vmatprep.subr.bf16.mxu0 %v4097
  %5859 = vmatpush1.bf16.msra.mxu0 %v4096
  %5860 = vmatprep.subr.bf16.mxu0 %v4099
  %5861 = vmatpush1.bf16.msra.mxu0 %v4098
  %5862 = vmatprep.subr.bf16.mxu0 %v4101
  %5863 = vmatpush1.bf16.msra.mxu0 %v4100
  %5864 = vmatprep.subr.bf16.mxu0 %v4103
  %5865 = vmatpush1.bf16.msra.mxu0 %v4102
  %5866 = vmatprep.subr.bf16.mxu0 %v4105
  %5867 = vmatpush1.bf16.msra.mxu0 %v4104
  %5868 = vmatprep.subr.bf16.mxu0 %v4107
  %5869 = vmatpush1.bf16.msra.mxu0 %v4106
  %5870 = vmatprep.subr.bf16.mxu0 %v4109
  %5871 = vmatpush1.bf16.msra.mxu0 %v4108
  %5872 = vmatprep.mubr.bf16.mxu0 %v357
  %5873 = vmatmul.mubr.bf16.gmra.mrb[0].mxu0 %v356
  %v5874 = vpop.f32.mrb[0].mxu0
  %v5875 = vadd.f32 %v5834, %v5874
  %v5876 = vpop.f32.mrb[0].mxu0
  %v5877 = vadd.f32 %v5836, %v5876
  %v5878 = vpop.f32.mrb[0].mxu0
  %v5879 = vpop.f32.mrb[0].mxu0
  %5880 = vdwg.mxu0
  %5881 = vmatprep.subr.bf16.mxu0 %v4111
  %5882 = vmatpush1.bf16.msra.mxu0 %v4110
  %5883 = vmatprep.subr.bf16.mxu0 %v4113
  %5884 = vmatpush1.bf16.msra.mxu0 %v4112
  %5885 = vmatprep.subr.bf16.mxu0 %v4115
  %5886 = vmatpush1.bf16.msra.mxu0 %v4114
  %5887 = vmatprep.subr.bf16.mxu0 %v4117
  %5888 = vmatpush1.bf16.msra.mxu0 %v4116
  %5889 = vmatprep.subr.bf16.mxu0 %v4119
  %5890 = vmatpush1.bf16.msra.mxu0 %v4118
  %5891 = vmatprep.subr.bf16.mxu0 %v4121
  %5892 = vmatpush1.bf16.msra.mxu0 %v4120
  %5893 = vmatprep.subr.bf16.mxu0 %v4123
  %5894 = vmatpush1.bf16.msra.mxu0 %v4122
  %5895 = vmatprep.subr.bf16.mxu0 %v4125
  %5896 = vmatpush1.bf16.msra.mxu0 %v4124
  %5897 = vmatprep.subr.bf16.mxu0 %v4127
  %5898 = vmatpush1.bf16.msra.mxu0 %v4126
  %5899 = vmatprep.subr.bf16.mxu0 %v4129
  %5900 = vmatpush1.bf16.msra.mxu0 %v4128
  %5901 = vmatprep.subr.bf16.mxu0 %v4131
  %5902 = vmatpush1.bf16.msra.mxu0 %v4130
  %5903 = vmatprep.subr.bf16.mxu0 %v4133
  %5904 = vmatpush1.bf16.msra.mxu0 %v4132
  %5905 = vmatprep.subr.bf16.mxu0 %v4135
  %5906 = vmatpush1.bf16.msra.mxu0 %v4134
  %5907 = vmatprep.subr.bf16.mxu0 %v4137
  %5908 = vmatpush1.bf16.msra.mxu0 %v4136
  %5909 = vmatprep.subr.bf16.mxu0 %v4139
  %5910 = vmatpush1.bf16.msra.mxu0 %v4138
  %5911 = vmatprep.subr.bf16.mxu0 %v4141
  %5912 = vmatpush1.bf16.msra.mxu0 %v4140
  %5913 = vmatprep.mubr.bf16.mxu0 %v359
  %5914 = vmatmul.mubr.bf16.gmra.mrb[0].mxu0 %v358
  %v5915 = vpop.f32.mrb[0].mxu0
  %v5916 = vadd.f32 %v5875, %v5915
  %v5917 = vpop.f32.mrb[0].mxu0
  %v5918 = vadd.f32 %v5877, %v5917
  %v5919 = vpop.f32.mrb[0].mxu0
  %v5920 = vpop.f32.mrb[0].mxu0
  %5921 = vdwg.mxu0
  %5922 = vmatprep.subr.bf16.mxu0 %v4143
  %5923 = vmatpush1.bf16.msra.mxu0 %v4142
  %5924 = vmatprep.subr.bf16.mxu0 %v4145
  %5925 = vmatpush1.bf16.msra.mxu0 %v4144
  %5926 = vmatprep.subr.bf16.mxu0 %v4147
  %5927 = vmatpush1.bf16.msra.mxu0 %v4146
  %5928 = vmatprep.subr.bf16.mxu0 %v4149
  %5929 = vmatpush1.bf16.msra.mxu0 %v4148
  %5930 = vmatprep.subr.bf16.mxu0 %v4151
  %5931 = vmatpush1.bf16.msra.mxu0 %v4150
  %5932 = vmatprep.subr.bf16.mxu0 %v4153
  %5933 = vmatpush1.bf16.msra.mxu0 %v4152
  %5934 = vmatprep.subr.bf16.mxu0 %v4155
  %5935 = vmatpush1.bf16.msra.mxu0 %v4154
  %5936 = vmatprep.subr.bf16.mxu0 %v4157
  %5937 = vmatpush1.bf16.msra.mxu0 %v4156
  %5938 = vmatprep.subr.bf16.mxu0 %v4159
  %5939 = vmatpush1.bf16.msra.mxu0 %v4158
  %5940 = vmatprep.subr.bf16.mxu0 %v4161
  %5941 = vmatpush1.bf16.msra.mxu0 %v4160
  %5942 = vmatprep.subr.bf16.mxu0 %v4163
  %5943 = vmatpush1.bf16.msra.mxu0 %v4162
  %5944 = vmatprep.subr.bf16.mxu0 %v4165
  %5945 = vmatpush1.bf16.msra.mxu0 %v4164
  %5946 = vmatprep.subr.bf16.mxu0 %v4167
  %5947 = vmatpush1.bf16.msra.mxu0 %v4166
  %5948 = vmatprep.subr.bf16.mxu0 %v4169
  %5949 = vmatpush1.bf16.msra.mxu0 %v4168
  %5950 = vmatprep.subr.bf16.mxu0 %v4171
  %5951 = vmatpush1.bf16.msra.mxu0 %v4170
  %5952 = vmatprep.subr.bf16.mxu0 %v4173
  %5953 = vmatpush1.bf16.msra.mxu0 %v4172
  %5954 = vmatprep.mubr.bf16.mxu0 %v361
  %5955 = vmatmul.mubr.bf16.gmra.mrb[0].mxu0 %v360
  %v5956 = vpop.f32.mrb[0].mxu0
  %v5957 = vadd.f32 %v5916, %v5956
  %v5958 = vpop.f32.mrb[0].mxu0
  %v5959 = vadd.f32 %v5918, %v5958
  %v5960 = vpop.f32.mrb[0].mxu0
  %v5961 = vpop.f32.mrb[0].mxu0
  %5962 = vdwg.mxu0
  %5963 = vmatprep.subr.bf16.mxu0 %v4175
  %5964 = vmatpush1.bf16.msra.mxu0 %v4174
  %5965 = vmatprep.subr.bf16.mxu0 %v4177
  %5966 = vmatpush1.bf16.msra.mxu0 %v4176
  %5967 = vmatprep.subr.bf16.mxu0 %v4179
  %5968 = vmatpush1.bf16.msra.mxu0 %v4178
  %5969 = vmatprep.subr.bf16.mxu0 %v4181
  %5970 = vmatpush1.bf16.msra.mxu0 %v4180
  %5971 = vmatprep.subr.bf16.mxu0 %v4183
  %5972 = vmatpush1.bf16.msra.mxu0 %v4182
  %5973 = vmatprep.subr.bf16.mxu0 %v4185
  %5974 = vmatpush1.bf16.msra.mxu0 %v4184
  %5975 = vmatprep.subr.bf16.mxu0 %v4187
  %5976 = vmatpush1.bf16.msra.mxu0 %v4186
  %5977 = vmatprep.subr.bf16.mxu0 %v4189
  %5978 = vmatpush1.bf16.msra.mxu0 %v4188
  %5979 = vmatprep.subr.bf16.mxu0 %v4191
  %5980 = vmatpush1.bf16.msra.mxu0 %v4190
  %5981 = vmatprep.subr.bf16.mxu0 %v4193
  %5982 = vmatpush1.bf16.msra.mxu0 %v4192
  %5983 = vmatprep.subr.bf16.mxu0 %v4195
  %5984 = vmatpush1.bf16.msra.mxu0 %v4194
  %5985 = vmatprep.subr.bf16.mxu0 %v4197
  %5986 = vmatpush1.bf16.msra.mxu0 %v4196
  %5987 = vmatprep.subr.bf16.mxu0 %v4199
  %5988 = vmatpush1.bf16.msra.mxu0 %v4198
  %5989 = vmatprep.subr.bf16.mxu0 %v4201
  %5990 = vmatpush1.bf16.msra.mxu0 %v4200
  %5991 = vmatprep.subr.bf16.mxu0 %v4203
  %5992 = vmatpush1.bf16.msra.mxu0 %v4202
  %5993 = vmatprep.subr.bf16.mxu0 %v4205
  %5994 = vmatpush1.bf16.msra.mxu0 %v4204
  %5995 = vmatprep.mubr.bf16.mxu0 %v363
  %5996 = vmatmul.mubr.bf16.gmra.mrb[0].mxu0 %v362
  %v5997 = vpop.f32.mrb[0].mxu0
  %v5998 = vadd.f32 %v5957, %v5997
  %v5999 = vpop.f32.mrb[0].mxu0
  %v6000 = vadd.f32 %v5959, %v5999
  %v6001 = vpop.f32.mrb[0].mxu0
  %v6002 = vpop.f32.mrb[0].mxu0
  %6003 = vdwg.mxu0
  %6004 = vmatprep.subr.bf16.mxu0 %v4207
  %6005 = vmatpush1.bf16.msra.mxu0 %v4206
  %6006 = vmatprep.subr.bf16.mxu0 %v4209
  %6007 = vmatpush1.bf16.msra.mxu0 %v4208
  %6008 = vmatprep.subr.bf16.mxu0 %v4211
  %6009 = vmatpush1.bf16.msra.mxu0 %v4210
  %6010 = vmatprep.subr.bf16.mxu0 %v4213
  %6011 = vmatpush1.bf16.msra.mxu0 %v4212
  %6012 = vmatprep.subr.bf16.mxu0 %v4215
  %6013 = vmatpush1.bf16.msra.mxu0 %v4214
  %6014 = vmatprep.subr.bf16.mxu0 %v4217
  %6015 = vmatpush1.bf16.msra.mxu0 %v4216
  %6016 = vmatprep.subr.bf16.mxu0 %v4219
  %6017 = vmatpush1.bf16.msra.mxu0 %v4218
  %6018 = vmatprep.subr.bf16.mxu0 %v4221
  %6019 = vmatpush1.bf16.msra.mxu0 %v4220
  %6020 = vmatprep.subr.bf16.mxu0 %v4223
  %6021 = vmatpush1.bf16.msra.mxu0 %v4222
  %6022 = vmatprep.subr.bf16.mxu0 %v4225
  %6023 = vmatpush1.bf16.msra.mxu0 %v4224
  %6024 = vmatprep.subr.bf16.mxu0 %v4227
  %6025 = vmatpush1.bf16.msra.mxu0 %v4226
  %6026 = vmatprep.subr.bf16.mxu0 %v4229
  %6027 = vmatpush1.bf16.msra.mxu0 %v4228
  %6028 = vmatprep.subr.bf16.mxu0 %v4231
  %6029 = vmatpush1.bf16.msra.mxu0 %v4230
  %6030 = vmatprep.subr.bf16.mxu0 %v4233
  %6031 = vmatpush1.bf16.msra.mxu0 %v4232
  %6032 = vmatprep.subr.bf16.mxu0 %v4235
  %6033 = vmatpush1.bf16.msra.mxu0 %v4234
  %6034 = vmatprep.subr.bf16.mxu0 %v4237
  %6035 = vmatpush1.bf16.msra.mxu0 %v4236
  %6036 = vmatprep.mubr.bf16.mxu0 %v365
  %6037 = vmatmul.mubr.bf16.gmra.mrb[0].mxu0 %v364
  %v6038 = vpop.f32.mrb[0].mxu0
  %v6039 = vadd.f32 %v5998, %v6038
  %v6040 = vpop.f32.mrb[0].mxu0
  %v6041 = vadd.f32 %v6000, %v6040
  %v6042 = vpop.f32.mrb[0].mxu0
  %v6043 = vpop.f32.mrb[0].mxu0
  %6044 = vdwg.mxu0
  %6045 = vmatprep.subr.bf16.mxu0 %v4239
  %6046 = vmatpush1.bf16.msra.mxu0 %v4238
  %6047 = vmatprep.subr.bf16.mxu0 %v4241
  %6048 = vmatpush1.bf16.msra.mxu0 %v4240
  %6049 = vmatprep.subr.bf16.mxu0 %v4243
  %6050 = vmatpush1.bf16.msra.mxu0 %v4242
  %6051 = vmatprep.subr.bf16.mxu0 %v4245
  %6052 = vmatpush1.bf16.msra.mxu0 %v4244
  %6053 = vmatprep.subr.bf16.mxu0 %v4247
  %6054 = vmatpush1.bf16.msra.mxu0 %v4246
  %6055 = vmatprep.subr.bf16.mxu0 %v4249
  %6056 = vmatpush1.bf16.msra.mxu0 %v4248
  %6057 = vmatprep.subr.bf16.mxu0 %v4251
  %6058 = vmatpush1.bf16.msra.mxu0 %v4250
  %6059 = vmatprep.subr.bf16.mxu0 %v4253
  %6060 = vmatpush1.bf16.msra.mxu0 %v4252
  %6061 = vmatprep.subr.bf16.mxu0 %v4255
  %6062 = vmatpush1.bf16.msra.mxu0 %v4254
  %6063 = vmatprep.subr.bf16.mxu0 %v4257
  %6064 = vmatpush1.bf16.msra.mxu0 %v4256
  %6065 = vmatprep.subr.bf16.mxu0 %v4259
  %6066 = vmatpush1.bf16.msra.mxu0 %v4258
  %6067 = vmatprep.subr.bf16.mxu0 %v4261
  %6068 = vmatpush1.bf16.msra.mxu0 %v4260
  %6069 = vmatprep.subr.bf16.mxu0 %v4263
  %6070 = vmatpush1.bf16.msra.mxu0 %v4262
  %6071 = vmatprep.subr.bf16.mxu0 %v4265
  %6072 = vmatpush1.bf16.msra.mxu0 %v4264
  %6073 = vmatprep.subr.bf16.mxu0 %v4267
  %6074 = vmatpush1.bf16.msra.mxu0 %v4266
  %6075 = vmatprep.subr.bf16.mxu0 %v4269
  %6076 = vmatpush1.bf16.msra.mxu0 %v4268
  %6077 = vmatprep.mubr.bf16.mxu0 %v367
  %6078 = vmatmul.mubr.bf16.gmra.mrb[0].mxu0 %v366
  %v6079 = vpop.f32.mrb[0].mxu0
  %v6080 = vadd.f32 %v6039, %v6079
  %v6081 = vpop.f32.mrb[0].mxu0
  %v6082 = vadd.f32 %v6041, %v6081
  %v6083 = vpop.f32.mrb[0].mxu0
  %v6084 = vpop.f32.mrb[0].mxu0
  %6085 = vdwg.mxu0
  %6086 = vmatprep.subr.bf16.mxu0 %v4271
  %6087 = vmatpush1.bf16.msra.mxu0 %v4270
  %6088 = vmatprep.subr.bf16.mxu0 %v4273
  %6089 = vmatpush1.bf16.msra.mxu0 %v4272
  %6090 = vmatprep.subr.bf16.mxu0 %v4275
  %6091 = vmatpush1.bf16.msra.mxu0 %v4274
  %6092 = vmatprep.subr.bf16.mxu0 %v4277
  %6093 = vmatpush1.bf16.msra.mxu0 %v4276
  %6094 = vmatprep.subr.bf16.mxu0 %v4279
  %6095 = vmatpush1.bf16.msra.mxu0 %v4278
  %6096 = vmatprep.subr.bf16.mxu0 %v4281
  %6097 = vmatpush1.bf16.msra.mxu0 %v4280
  %6098 = vmatprep.subr.bf16.mxu0 %v4283
  %6099 = vmatpush1.bf16.msra.mxu0 %v4282
  %6100 = vmatprep.subr.bf16.mxu0 %v4285
  %6101 = vmatpush1.bf16.msra.mxu0 %v4284
  %6102 = vmatprep.subr.bf16.mxu0 %v4287
  %6103 = vmatpush1.bf16.msra.mxu0 %v4286
  %6104 = vmatprep.subr.bf16.mxu0 %v4289
  %6105 = vmatpush1.bf16.msra.mxu0 %v4288
  %6106 = vmatprep.subr.bf16.mxu0 %v4291
  %6107 = vmatpush1.bf16.msra.mxu0 %v4290
  %6108 = vmatprep.subr.bf16.mxu0 %v4293
  %6109 = vmatpush1.bf16.msra.mxu0 %v4292
  %6110 = vmatprep.subr.bf16.mxu0 %v4295
  %6111 = vmatpush1.bf16.msra.mxu0 %v4294
  %6112 = vmatprep.subr.bf16.mxu0 %v4297
  %6113 = vmatpush1.bf16.msra.mxu0 %v4296
  %6114 = vmatprep.subr.bf16.mxu0 %v4299
  %6115 = vmatpush1.bf16.msra.mxu0 %v4298
  %6116 = vmatprep.subr.bf16.mxu0 %v4301
  %6117 = vmatpush1.bf16.msra.mxu0 %v4300
  %6118 = vmatprep.mubr.bf16.mxu0 %v369
  %6119 = vmatmul.mubr.bf16.gmra.mrb[0].mxu0 %v368
  %v6120 = vpop.f32.mrb[0].mxu0
  %v6121 = vadd.f32 %v6080, %v6120
  %v6122 = vpop.f32.mrb[0].mxu0
  %v6123 = vadd.f32 %v6082, %v6122
  %v6124 = vpop.f32.mrb[0].mxu0
  %v6125 = vpop.f32.mrb[0].mxu0
  %6126 = vdwg.mxu0
  %6127 = vmatprep.subr.bf16.mxu0 %v4303
  %6128 = vmatpush1.bf16.msra.mxu0 %v4302
  %6129 = vmatprep.subr.bf16.mxu0 %v4305
  %6130 = vmatpush1.bf16.msra.mxu0 %v4304
  %6131 = vmatprep.subr.bf16.mxu0 %v4307
  %6132 = vmatpush1.bf16.msra.mxu0 %v4306
  %6133 = vmatprep.subr.bf16.mxu0 %v4309
  %6134 = vmatpush1.bf16.msra.mxu0 %v4308
  %6135 = vmatprep.subr.bf16.mxu0 %v4311
  %6136 = vmatpush1.bf16.msra.mxu0 %v4310
  %6137 = vmatprep.subr.bf16.mxu0 %v4313
  %6138 = vmatpush1.bf16.msra.mxu0 %v4312
  %6139 = vmatprep.subr.bf16.mxu0 %v4315
  %6140 = vmatpush1.bf16.msra.mxu0 %v4314
  %6141 = vmatprep.subr.bf16.mxu0 %v4317
  %6142 = vmatpush1.bf16.msra.mxu0 %v4316
  %6143 = vmatprep.subr.bf16.mxu0 %v4319
  %6144 = vmatpush1.bf16.msra.mxu0 %v4318
  %6145 = vmatprep.subr.bf16.mxu0 %v4321
  %6146 = vmatpush1.bf16.msra.mxu0 %v4320
  %6147 = vmatprep.subr.bf16.mxu0 %v4323
  %6148 = vmatpush1.bf16.msra.mxu0 %v4322
  %6149 = vmatprep.subr.bf16.mxu0 %v4325
  %6150 = vmatpush1.bf16.msra.mxu0 %v4324
  %6151 = vmatprep.subr.bf16.mxu0 %v4327
  %6152 = vmatpush1.bf16.msra.mxu0 %v4326
  %6153 = vmatprep.subr.bf16.mxu0 %v4329
  %6154 = vmatpush1.bf16.msra.mxu0 %v4328
  %6155 = vmatprep.subr.bf16.mxu0 %v4331
  %6156 = vmatpush1.bf16.msra.mxu0 %v4330
  %6157 = vmatprep.subr.bf16.mxu0 %v4333
  %6158 = vmatpush1.bf16.msra.mxu0 %v4332
  %6159 = vmatprep.mubr.bf16.mxu0 %v371
  %6160 = vmatmul.mubr.bf16.gmra.mrb[0].mxu0 %v370
  %v6161 = vpop.f32.mrb[0].mxu0
  %v6162 = vadd.f32 %v6121, %v6161
  %v6163 = vpop.f32.mrb[0].mxu0
  %v6164 = vadd.f32 %v6123, %v6163
  %v6165 = vpop.f32.mrb[0].mxu0
  %v6166 = vpop.f32.mrb[0].mxu0
  %6167 = vdwg.mxu0
  %6168 = vmatprep.subr.bf16.mxu0 %v4335
  %6169 = vmatpush1.bf16.msra.mxu0 %v4334
  %6170 = vmatprep.subr.bf16.mxu0 %v4337
  %6171 = vmatpush1.bf16.msra.mxu0 %v4336
  %6172 = vmatprep.subr.bf16.mxu0 %v4339
  %6173 = vmatpush1.bf16.msra.mxu0 %v4338
  %6174 = vmatprep.subr.bf16.mxu0 %v4341
  %6175 = vmatpush1.bf16.msra.mxu0 %v4340
  %6176 = vmatprep.subr.bf16.mxu0 %v4343
  %6177 = vmatpush1.bf16.msra.mxu0 %v4342
  %6178 = vmatprep.subr.bf16.mxu0 %v4345
  %6179 = vmatpush1.bf16.msra.mxu0 %v4344
  %6180 = vmatprep.subr.bf16.mxu0 %v4347
  %6181 = vmatpush1.bf16.msra.mxu0 %v4346
  %6182 = vmatprep.subr.bf16.mxu0 %v4349
  %6183 = vmatpush1.bf16.msra.mxu0 %v4348
  %6184 = vmatprep.subr.bf16.mxu0 %v4351
  %6185 = vmatpush1.bf16.msra.mxu0 %v4350
  %6186 = vmatprep.subr.bf16.mxu0 %v4353
  %6187 = vmatpush1.bf16.msra.mxu0 %v4352
  %6188 = vmatprep.subr.bf16.mxu0 %v4355
  %6189 = vmatpush1.bf16.msra.mxu0 %v4354
  %6190 = vmatprep.subr.bf16.mxu0 %v4357
  %6191 = vmatpush1.bf16.msra.mxu0 %v4356
  %6192 = vmatprep.subr.bf16.mxu0 %v4359
  %6193 = vmatpush1.bf16.msra.mxu0 %v4358
  %6194 = vmatprep.subr.bf16.mxu0 %v4361
  %6195 = vmatpush1.bf16.msra.mxu0 %v4360
  %6196 = vmatprep.subr.bf16.mxu0 %v4363
  %6197 = vmatpush1.bf16.msra.mxu0 %v4362
  %6198 = vmatprep.subr.bf16.mxu0 %v4365
  %6199 = vmatpush1.bf16.msra.mxu0 %v4364
  %6200 = vmatprep.mubr.bf16.mxu0 %v373
  %6201 = vmatmul.mubr.bf16.gmra.mrb[0].mxu0 %v372
  %v6202 = vpop.f32.mrb[0].mxu0
  %v6203 = vadd.f32 %v6162, %v6202
  %v6204 = vpop.f32.mrb[0].mxu0
  %v6205 = vadd.f32 %v6164, %v6204
  %v6206 = vpop.f32.mrb[0].mxu0
  %v6207 = vpop.f32.mrb[0].mxu0
  %6208 = vdwg.mxu0
  %6209 = vmatprep.subr.bf16.mxu0 %v4367
  %6210 = vmatpush1.bf16.msra.mxu0 %v4366
  %6211 = vmatprep.subr.bf16.mxu0 %v4369
  %6212 = vmatpush1.bf16.msra.mxu0 %v4368
  %6213 = vmatprep.subr.bf16.mxu0 %v4371
  %6214 = vmatpush1.bf16.msra.mxu0 %v4370
  %6215 = vmatprep.subr.bf16.mxu0 %v4373
  %6216 = vmatpush1.bf16.msra.mxu0 %v4372
  %6217 = vmatprep.subr.bf16.mxu0 %v4375
  %6218 = vmatpush1.bf16.msra.mxu0 %v4374
  %6219 = vmatprep.subr.bf16.mxu0 %v4377
  %6220 = vmatpush1.bf16.msra.mxu0 %v4376
  %6221 = vmatprep.subr.bf16.mxu0 %v4379
  %6222 = vmatpush1.bf16.msra.mxu0 %v4378
  %6223 = vmatprep.subr.bf16.mxu0 %v4381
  %6224 = vmatpush1.bf16.msra.mxu0 %v4380
  %6225 = vmatprep.subr.bf16.mxu0 %v4383
  %6226 = vmatpush1.bf16.msra.mxu0 %v4382
  %6227 = vmatprep.subr.bf16.mxu0 %v4385
  %6228 = vmatpush1.bf16.msra.mxu0 %v4384
  %6229 = vmatprep.subr.bf16.mxu0 %v4387
  %6230 = vmatpush1.bf16.msra.mxu0 %v4386
  %6231 = vmatprep.subr.bf16.mxu0 %v4389
  %6232 = vmatpush1.bf16.msra.mxu0 %v4388
  %6233 = vmatprep.subr.bf16.mxu0 %v4391
  %6234 = vmatpush1.bf16.msra.mxu0 %v4390
  %6235 = vmatprep.subr.bf16.mxu0 %v4393
  %6236 = vmatpush1.bf16.msra.mxu0 %v4392
  %6237 = vmatprep.subr.bf16.mxu0 %v4395
  %6238 = vmatpush1.bf16.msra.mxu0 %v4394
  %6239 = vmatprep.subr.bf16.mxu0 %v4397
  %6240 = vmatpush1.bf16.msra.mxu0 %v4396
  %6241 = vmatprep.mubr.bf16.mxu0 %v375
  %6242 = vmatmul.mubr.bf16.gmra.mrb[0].mxu0 %v374
  %v6243 = vpop.f32.mrb[0].mxu0
  %v6244 = vadd.f32 %v6203, %v6243
  %v6245 = vpop.f32.mrb[0].mxu0
  %v6246 = vadd.f32 %v6205, %v6245
  %v6247 = vpop.f32.mrb[0].mxu0
  %v6248 = vpop.f32.mrb[0].mxu0
  %6249 = vdwg.mxu0
  %6250 = vmatprep.subr.bf16.mxu0 %v4399
  %6251 = vmatpush1.bf16.msra.mxu0 %v4398
  %6252 = vmatprep.subr.bf16.mxu0 %v4401
  %6253 = vmatpush1.bf16.msra.mxu0 %v4400
  %6254 = vmatprep.subr.bf16.mxu0 %v4403
  %6255 = vmatpush1.bf16.msra.mxu0 %v4402
  %6256 = vmatprep.subr.bf16.mxu0 %v4405
  %6257 = vmatpush1.bf16.msra.mxu0 %v4404
  %6258 = vmatprep.subr.bf16.mxu0 %v4407
  %6259 = vmatpush1.bf16.msra.mxu0 %v4406
  %6260 = vmatprep.subr.bf16.mxu0 %v4409
  %6261 = vmatpush1.bf16.msra.mxu0 %v4408
  %6262 = vmatprep.subr.bf16.mxu0 %v4411
  %6263 = vmatpush1.bf16.msra.mxu0 %v4410
  %6264 = vmatprep.subr.bf16.mxu0 %v4413
  %6265 = vmatpush1.bf16.msra.mxu0 %v4412
  %6266 = vmatprep.subr.bf16.mxu0 %v4415
  %6267 = vmatpush1.bf16.msra.mxu0 %v4414
  %6268 = vmatprep.subr.bf16.mxu0 %v4417
  %6269 = vmatpush1.bf16.msra.mxu0 %v4416
  %6270 = vmatprep.subr.bf16.mxu0 %v4419
  %6271 = vmatpush1.bf16.msra.mxu0 %v4418
  %6272 = vmatprep.subr.bf16.mxu0 %v4421
  %6273 = vmatpush1.bf16.msra.mxu0 %v4420
  %6274 = vmatprep.subr.bf16.mxu0 %v4423
  %6275 = vmatpush1.bf16.msra.mxu0 %v4422
  %6276 = vmatprep.subr.bf16.mxu0 %v4425
  %6277 = vmatpush1.bf16.msra.mxu0 %v4424
  %6278 = vmatprep.subr.bf16.mxu0 %v4427
  %6279 = vmatpush1.bf16.msra.mxu0 %v4426
  %6280 = vmatprep.subr.bf16.mxu0 %v4429
  %6281 = vmatpush1.bf16.msra.mxu0 %v4428
  %6282 = vmatprep.mubr.bf16.mxu0 %v377
  %6283 = vmatmul.mubr.bf16.gmra.mrb[0].mxu0 %v376
  %v6284 = vpop.f32.mrb[0].mxu0
  %v6285 = vadd.f32 %v6244, %v6284
  %v6286 = vpop.f32.mrb[0].mxu0
  %v6287 = vadd.f32 %v6246, %v6286
  %v6288 = vpop.f32.mrb[0].mxu0
  %v6289 = vpop.f32.mrb[0].mxu0
  %6290 = vdwg.mxu0
  %6291 = vmatprep.subr.bf16.mxu0 %v4431
  %6292 = vmatpush1.bf16.msra.mxu0 %v4430
  %6293 = vmatprep.subr.bf16.mxu0 %v4433
  %6294 = vmatpush1.bf16.msra.mxu0 %v4432
  %6295 = vmatprep.subr.bf16.mxu0 %v4435
  %6296 = vmatpush1.bf16.msra.mxu0 %v4434
  %6297 = vmatprep.subr.bf16.mxu0 %v4437
  %6298 = vmatpush1.bf16.msra.mxu0 %v4436
  %6299 = vmatprep.subr.bf16.mxu0 %v4439
  %6300 = vmatpush1.bf16.msra.mxu0 %v4438
  %6301 = vmatprep.subr.bf16.mxu0 %v4441
  %6302 = vmatpush1.bf16.msra.mxu0 %v4440
  %6303 = vmatprep.subr.bf16.mxu0 %v4443
  %6304 = vmatpush1.bf16.msra.mxu0 %v4442
  %6305 = vmatprep.subr.bf16.mxu0 %v4445
  %6306 = vmatpush1.bf16.msra.mxu0 %v4444
  %6307 = vmatprep.subr.bf16.mxu0 %v4447
  %6308 = vmatpush1.bf16.msra.mxu0 %v4446
  %6309 = vmatprep.subr.bf16.mxu0 %v4449
  %6310 = vmatpush1.bf16.msra.mxu0 %v4448
  %6311 = vmatprep.subr.bf16.mxu0 %v4451
  %6312 = vmatpush1.bf16.msra.mxu0 %v4450
  %6313 = vmatprep.subr.bf16.mxu0 %v4453
  %6314 = vmatpush1.bf16.msra.mxu0 %v4452
  %6315 = vmatprep.subr.bf16.mxu0 %v4455
  %6316 = vmatpush1.bf16.msra.mxu0 %v4454
  %6317 = vmatprep.subr.bf16.mxu0 %v4457
  %6318 = vmatpush1.bf16.msra.mxu0 %v4456
  %6319 = vmatprep.subr.bf16.mxu0 %v4459
  %6320 = vmatpush1.bf16.msra.mxu0 %v4458
  %6321 = vmatprep.subr.bf16.mxu0 %v4461
  %6322 = vmatpush1.bf16.msra.mxu0 %v4460
  %6323 = vmatprep.mubr.bf16.mxu0 %v379
  %6324 = vmatmul.mubr.bf16.gmra.mrb[0].mxu0 %v378
  %v6325 = vpop.f32.mrb[0].mxu0
  %v6326 = vadd.f32 %v6285, %v6325
  %v6327 = vpop.f32.mrb[0].mxu0
  %v6328 = vadd.f32 %v6287, %v6327
  %v6329 = vpop.f32.mrb[0].mxu0
  %v6330 = vpop.f32.mrb[0].mxu0
  %6331 = vdwg.mxu0
  %6332 = vmatprep.subr.bf16.mxu0 %v4463
  %6333 = vmatpush1.bf16.msra.mxu0 %v4462
  %6334 = vmatprep.subr.bf16.mxu0 %v4465
  %6335 = vmatpush1.bf16.msra.mxu0 %v4464
  %6336 = vmatprep.subr.bf16.mxu0 %v4467
  %6337 = vmatpush1.bf16.msra.mxu0 %v4466
  %6338 = vmatprep.subr.bf16.mxu0 %v4469
  %6339 = vmatpush1.bf16.msra.mxu0 %v4468
  %6340 = vmatprep.subr.bf16.mxu0 %v4471
  %6341 = vmatpush1.bf16.msra.mxu0 %v4470
  %6342 = vmatprep.subr.bf16.mxu0 %v4473
  %6343 = vmatpush1.bf16.msra.mxu0 %v4472
  %6344 = vmatprep.subr.bf16.mxu0 %v4475
  %6345 = vmatpush1.bf16.msra.mxu0 %v4474
  %6346 = vmatprep.subr.bf16.mxu0 %v4477
  %6347 = vmatpush1.bf16.msra.mxu0 %v4476
  %6348 = vmatprep.subr.bf16.mxu0 %v5305
  %6349 = vmatpush1.bf16.msra.mxu0 %v5302
  %6350 = vmatprep.subr.bf16.mxu0 0
  %6351 = vmatpush1.bf16.msra.mxu0 0
  %6352 = vmatprep.subr.bf16.mxu0 0
  %6353 = vmatpush1.bf16.msra.mxu0 0
  %6354 = vmatprep.subr.bf16.mxu0 0
  %6355 = vmatpush1.bf16.msra.mxu0 0
  %6356 = vmatprep.subr.bf16.mxu0 0
  %6357 = vmatpush1.bf16.msra.mxu0 0
  %6358 = vmatprep.subr.bf16.mxu0 0
  %6359 = vmatpush1.bf16.msra.mxu0 0
  %6360 = vmatprep.subr.bf16.mxu0 0
  %6361 = vmatpush1.bf16.msra.mxu0 0
  %6362 = vmatprep.subr.bf16.mxu0 0
  %6363 = vmatpush1.bf16.msra.mxu0 0
  %6364 = vmatprep.mubr.bf16.mxu0 %v5298
  %6365 = vmatmul.mubr.bf16.gmra.mrb[0].mxu0 %v380
  %v6366 = vpop.f32.mrb[0].mxu0
  %v6367 = vadd.f32 %v6326, %v6366
  %v6368 = vpop.f32.mrb[0].mxu0
  %v6369 = vadd.f32 %v6328, %v6368
  %v6370 = vpop.f32.mrb[0].mxu0
  %v6371 = vpop.f32.mrb[0].mxu0
  %6372 = vdwg.mxu0
  %v6373 = vtanh.pop %v6367
  %v6374 = vtanh.pop %v6369
  %v6375 = vld [vmem:[%s3] sm:$0x3]
  %v6377 = vlaneseq
  %v6378 = vshrl.u32 %v6377, 7
  %v6379 = vsub.s32 0, %v6378
  %v6380 = vrot.slane %v6375, %v6379
  %v6381 = vlaneseq
  %v6382 = vshrl.u32 %v6381, 7
  %v6383 = vsub.s32 1, %v6382
  %v6384 = vrot.slane %v6375, %v6383
  %v6387 = vmul.f32 %v6373, %v6380
  %v6388 = vmul.f32 %v6374, %v6384
  %vm6389 = vcmask 1041408
  %v6390 = vsel %vm6389, %v6387, 0.0
  %v6391 = vsel %vm6389, %v6388, 0.0
  %v6392 = vadd.f32 %v6390, %v6391
  %6393 = vadd.xlane.f32.xlu0 %v6392
  %v6394 = vpop.xlane.xlu0 %6393
  %v6395 = vld [vmem:[#allocation2] sm:$0x1]
  %v6397 = vlaneseq
  %v6398 = vshrl.u32 %v6397, 7
  %v6399 = vsub.s32 0, %v6398
  %v6400 = vrot.slane %v6395, %v6399
  %v6402 = vadd.f32 %v6394, %v6400
  %v6403 = vld [vmem:[%s5] sm:$0xff]
  %v6404 = vld [vmem:[%s5 + $0x8] sm:$0xff]
  %v6405 = vld [vmem:[%s5 + $0x10] sm:$0xff]
  %v6406 = vld [vmem:[%s5 + $0x18] sm:$0xff]
  %v6407 = vld [vmem:[%s5 + $0x20] sm:$0xff]
  %v6408 = vld [vmem:[%s5 + $0x28] sm:$0xff]
  %v6409 = vld [vmem:[%s5 + $0x30] sm:$0xf]
  %v6417 = vlaneseq
  %v6418 = vshrl.u32 %v6417, 7
  %v6419 = vsub.s32 0, %v6418
  %v6420 = vrot.slane %v6403, %v6419
  %v6421 = vlaneseq
  %v6422 = vshrl.u32 %v6421, 7
  %v6423 = vsub.s32 1, %v6422
  %v6424 = vrot.slane %v6403, %v6423
  %v6425 = vlaneseq
  %v6426 = vshrl.u32 %v6425, 7
  %v6427 = vsub.s32 2, %v6426
  %v6428 = vrot.slane %v6403, %v6427
  %v6429 = vlaneseq
  %v6430 = vshrl.u32 %v6429, 7
  %v6431 = vsub.s32 3, %v6430
  %v6432 = vrot.slane %v6403, %v6431
  %v6433 = vlaneseq
  %v6434 = vshrl.u32 %v6433, 7
  %v6435 = vsub.s32 4, %v6434
  %v6436 = vrot.slane %v6403, %v6435
  %v6437 = vlaneseq
  %v6438 = vshrl.u32 %v6437, 7
  %v6439 = vsub.s32 5, %v6438
  %v6440 = vrot.slane %v6403, %v6439
  %v6441 = vlaneseq
  %v6442 = vshrl.u32 %v6441, 7
  %v6443 = vsub.s32 6, %v6442
  %v6444 = vrot.slane %v6403, %v6443
  %v6445 = vlaneseq
  %v6446 = vshrl.u32 %v6445, 7
  %v6447 = vsub.s32 7, %v6446
  %v6448 = vrot.slane %v6403, %v6447
  %v6449 = vlaneseq
  %v6450 = vshrl.u32 %v6449, 7
  %v6451 = vsub.s32 0, %v6450
  %v6452 = vrot.slane %v6404, %v6451
  %v6453 = vlaneseq
  %v6454 = vshrl.u32 %v6453, 7
  %v6455 = vsub.s32 1, %v6454
  %v6456 = vrot.slane %v6404, %v6455
  %v6457 = vlaneseq
  %v6458 = vshrl.u32 %v6457, 7
  %v6459 = vsub.s32 2, %v6458
  %v6460 = vrot.slane %v6404, %v6459
  %v6461 = vlaneseq
  %v6462 = vshrl.u32 %v6461, 7
  %v6463 = vsub.s32 3, %v6462
  %v6464 = vrot.slane %v6404, %v6463
  %v6465 = vlaneseq
  %v6466 = vshrl.u32 %v6465, 7
  %v6467 = vsub.s32 4, %v6466
  %v6468 = vrot.slane %v6404, %v6467
  %v6469 = vlaneseq
  %v6470 = vshrl.u32 %v6469, 7
  %v6471 = vsub.s32 5, %v6470
  %v6472 = vrot.slane %v6404, %v6471
  %v6473 = vlaneseq
  %v6474 = vshrl.u32 %v6473, 7
  %v6475 = vsub.s32 6, %v6474
  %v6476 = vrot.slane %v6404, %v6475
  %v6477 = vlaneseq
  %v6478 = vshrl.u32 %v6477, 7
  %v6479 = vsub.s32 7, %v6478
  %v6480 = vrot.slane %v6404, %v6479
  %v6481 = vlaneseq
  %v6482 = vshrl.u32 %v6481, 7
  %v6483 = vsub.s32 0, %v6482
  %v6484 = vrot.slane %v6405, %v6483
  %v6485 = vlaneseq
  %v6486 = vshrl.u32 %v6485, 7
  %v6487 = vsub.s32 1, %v6486
  %v6488 = vrot.slane %v6405, %v6487
  %v6489 = vlaneseq
  %v6490 = vshrl.u32 %v6489, 7
  %v6491 = vsub.s32 2, %v6490
  %v6492 = vrot.slane %v6405, %v6491
  %v6493 = vlaneseq
  %v6494 = vshrl.u32 %v6493, 7
  %v6495 = vsub.s32 3, %v6494
  %v6496 = vrot.slane %v6405, %v6495
  %v6497 = vlaneseq
  %v6498 = vshrl.u32 %v6497, 7
  %v6499 = vsub.s32 4, %v6498
  %v6500 = vrot.slane %v6405, %v6499
  %v6501 = vlaneseq
  %v6502 = vshrl.u32 %v6501, 7
  %v6503 = vsub.s32 5, %v6502
  %v6504 = vrot.slane %v6405, %v6503
  %v6505 = vlaneseq
  %v6506 = vshrl.u32 %v6505, 7
  %v6507 = vsub.s32 6, %v6506
  %v6508 = vrot.slane %v6405, %v6507
  %v6509 = vlaneseq
  %v6510 = vshrl.u32 %v6509, 7
  %v6511 = vsub.s32 7, %v6510
  %v6512 = vrot.slane %v6405, %v6511
  %v6513 = vlaneseq
  %v6514 = vshrl.u32 %v6513, 7
  %v6515 = vsub.s32 0, %v6514
  %v6516 = vrot.slane %v6406, %v6515
  %v6517 = vlaneseq
  %v6518 = vshrl.u32 %v6517, 7
  %v6519 = vsub.s32 1, %v6518
  %v6520 = vrot.slane %v6406, %v6519
  %v6521 = vlaneseq
  %v6522 = vshrl.u32 %v6521, 7
  %v6523 = vsub.s32 2, %v6522
  %v6524 = vrot.slane %v6406, %v6523
  %v6525 = vlaneseq
  %v6526 = vshrl.u32 %v6525, 7
  %v6527 = vsub.s32 3, %v6526
  %v6528 = vrot.slane %v6406, %v6527
  %v6529 = vlaneseq
  %v6530 = vshrl.u32 %v6529, 7
  %v6531 = vsub.s32 4, %v6530
  %v6532 = vrot.slane %v6406, %v6531
  %v6533 = vlaneseq
  %v6534 = vshrl.u32 %v6533, 7
  %v6535 = vsub.s32 5, %v6534
  %v6536 = vrot.slane %v6406, %v6535
  %v6537 = vlaneseq
  %v6538 = vshrl.u32 %v6537, 7
  %v6539 = vsub.s32 6, %v6538
  %v6540 = vrot.slane %v6406, %v6539
  %v6541 = vlaneseq
  %v6542 = vshrl.u32 %v6541, 7
  %v6543 = vsub.s32 7, %v6542
  %v6544 = vrot.slane %v6406, %v6543
  %v6545 = vlaneseq
  %v6546 = vshrl.u32 %v6545, 7
  %v6547 = vsub.s32 0, %v6546
  %v6548 = vrot.slane %v6407, %v6547
  %v6549 = vlaneseq
  %v6550 = vshrl.u32 %v6549, 7
  %v6551 = vsub.s32 1, %v6550
  %v6552 = vrot.slane %v6407, %v6551
  %v6553 = vlaneseq
  %v6554 = vshrl.u32 %v6553, 7
  %v6555 = vsub.s32 2, %v6554
  %v6556 = vrot.slane %v6407, %v6555
  %v6557 = vlaneseq
  %v6558 = vshrl.u32 %v6557, 7
  %v6559 = vsub.s32 3, %v6558
  %v6560 = vrot.slane %v6407, %v6559
  %v6561 = vlaneseq
  %v6562 = vshrl.u32 %v6561, 7
  %v6563 = vsub.s32 4, %v6562
  %v6564 = vrot.slane %v6407, %v6563
  %v6565 = vlaneseq
  %v6566 = vshrl.u32 %v6565, 7
  %v6567 = vsub.s32 5, %v6566
  %v6568 = vrot.slane %v6407, %v6567
  %v6569 = vlaneseq
  %v6570 = vshrl.u32 %v6569, 7
  %v6571 = vsub.s32 6, %v6570
  %v6572 = vrot.slane %v6407, %v6571
  %v6573 = vlaneseq
  %v6574 = vshrl.u32 %v6573, 7
  %v6575 = vsub.s32 7, %v6574
  %v6576 = vrot.slane %v6407, %v6575
  %v6577 = vlaneseq
  %v6578 = vshrl.u32 %v6577, 7
  %v6579 = vsub.s32 0, %v6578
  %v6580 = vrot.slane %v6408, %v6579
  %v6581 = vlaneseq
  %v6582 = vshrl.u32 %v6581, 7
  %v6583 = vsub.s32 1, %v6582
  %v6584 = vrot.slane %v6408, %v6583
  %v6585 = vlaneseq
  %v6586 = vshrl.u32 %v6585, 7
  %v6587 = vsub.s32 2, %v6586
  %v6588 = vrot.slane %v6408, %v6587
  %v6589 = vlaneseq
  %v6590 = vshrl.u32 %v6589, 7
  %v6591 = vsub.s32 3, %v6590
  %v6592 = vrot.slane %v6408, %v6591
  %v6593 = vlaneseq
  %v6594 = vshrl.u32 %v6593, 7
  %v6595 = vsub.s32 4, %v6594
  %v6596 = vrot.slane %v6408, %v6595
  %v6597 = vlaneseq
  %v6598 = vshrl.u32 %v6597, 7
  %v6599 = vsub.s32 5, %v6598
  %v6600 = vrot.slane %v6408, %v6599
  %v6601 = vlaneseq
  %v6602 = vshrl.u32 %v6601, 7
  %v6603 = vsub.s32 6, %v6602
  %v6604 = vrot.slane %v6408, %v6603
  %v6605 = vlaneseq
  %v6606 = vshrl.u32 %v6605, 7
  %v6607 = vsub.s32 7, %v6606
  %v6608 = vrot.slane %v6408, %v6607
  %v6609 = vlaneseq
  %v6610 = vshrl.u32 %v6609, 7
  %v6611 = vsub.s32 0, %v6610
  %v6612 = vrot.slane %v6409, %v6611
  %v6613 = vlaneseq
  %v6614 = vshrl.u32 %v6613, 7
  %v6615 = vsub.s32 1, %v6614
  %v6616 = vrot.slane %v6409, %v6615
  %v6617 = vlaneseq
  %v6618 = vshrl.u32 %v6617, 7
  %v6619 = vsub.s32 2, %v6618
  %v6620 = vrot.slane %v6409, %v6619
  %v6621 = vlaneseq
  %v6622 = vshrl.u32 %v6621, 7
  %v6623 = vsub.s32 3, %v6622
  %v6624 = vrot.slane %v6409, %v6623
  %v6625 = vcombine.low %v6420, %v6424
  %v6626 = vcombine.low %v6428, %v6432
  %v6628 = vunpack.c.l.s4 1983009808
  %v6629 = vunpack.c.0.s8 %v6628
  %v6630 = vlaneseq
  %v6631 = vshrl.u32 %v6630, 7
  %v6632 = vsub.s32 %v6629, %v6631
  %v6633 = vrot.slane %v6625, %v6632
  %v6635 = vunpack.c.l.s4 1983009808
  %v6636 = vunpack.c.0.s8 %v6635
  %v6637 = vlaneseq
  %v6638 = vshrl.u32 %v6637, 7
  %v6639 = vsub.s32 %v6636, %v6638
  %v6640 = vrot.slane %v6626, %v6639
  %v6641 = vcombine.low %v6633, %v6640
  %v6642 = vcombine.low %v6436, %v6440
  %v6643 = vcombine.low %v6444, %v6448
  %v6645 = vunpack.c.l.s4 1983009808
  %v6646 = vunpack.c.0.s8 %v6645
  %v6647 = vlaneseq
  %v6648 = vshrl.u32 %v6647, 7
  %v6649 = vsub.s32 %v6646, %v6648
  %v6650 = vrot.slane %v6642, %v6649
  %v6652 = vunpack.c.l.s4 1983009808
  %v6653 = vunpack.c.0.s8 %v6652
  %v6654 = vlaneseq
  %v6655 = vshrl.u32 %v6654, 7
  %v6656 = vsub.s32 %v6653, %v6655
  %v6657 = vrot.slane %v6643, %v6656
  %v6658 = vcombine.low %v6650, %v6657
  %v6659 = vcombine.low %v6452, %v6456
  %v6660 = vcombine.low %v6460, %v6464
  %v6662 = vunpack.c.l.s4 1983009808
  %v6663 = vunpack.c.0.s8 %v6662
  %v6664 = vlaneseq
  %v6665 = vshrl.u32 %v6664, 7
  %v6666 = vsub.s32 %v6663, %v6665
  %v6667 = vrot.slane %v6659, %v6666
  %v6669 = vunpack.c.l.s4 1983009808
  %v6670 = vunpack.c.0.s8 %v6669
  %v6671 = vlaneseq
  %v6672 = vshrl.u32 %v6671, 7
  %v6673 = vsub.s32 %v6670, %v6672
  %v6674 = vrot.slane %v6660, %v6673
  %v6675 = vcombine.low %v6667, %v6674
  %v6676 = vcombine.low %v6468, %v6472
  %v6677 = vcombine.low %v6476, %v6480
  %v6679 = vunpack.c.l.s4 1983009808
  %v6680 = vunpack.c.0.s8 %v6679
  %v6681 = vlaneseq
  %v6682 = vshrl.u32 %v6681, 7
  %v6683 = vsub.s32 %v6680, %v6682
  %v6684 = vrot.slane %v6676, %v6683
  %v6686 = vunpack.c.l.s4 1983009808
  %v6687 = vunpack.c.0.s8 %v6686
  %v6688 = vlaneseq
  %v6689 = vshrl.u32 %v6688, 7
  %v6690 = vsub.s32 %v6687, %v6689
  %v6691 = vrot.slane %v6677, %v6690
  %v6692 = vcombine.low %v6684, %v6691
  %v6693 = vcombine.low %v6484, %v6488
  %v6694 = vcombine.low %v6492, %v6496
  %v6696 = vunpack.c.l.s4 1983009808
  %v6697 = vunpack.c.0.s8 %v6696
  %v6698 = vlaneseq
  %v6699 = vshrl.u32 %v6698, 7
  %v6700 = vsub.s32 %v6697, %v6699
  %v6701 = vrot.slane %v6693, %v6700
  %v6703 = vunpack.c.l.s4 1983009808
  %v6704 = vunpack.c.0.s8 %v6703
  %v6705 = vlaneseq
  %v6706 = vshrl.u32 %v6705, 7
  %v6707 = vsub.s32 %v6704, %v6706
  %v6708 = vrot.slane %v6694, %v6707
  %v6709 = vcombine.low %v6701, %v6708
  %v6710 = vcombine.low %v6500, %v6504
  %v6711 = vcombine.low %v6508, %v6512
  %v6713 = vunpack.c.l.s4 1983009808
  %v6714 = vunpack.c.0.s8 %v6713
  %v6715 = vlaneseq
  %v6716 = vshrl.u32 %v6715, 7
  %v6717 = vsub.s32 %v6714, %v6716
  %v6718 = vrot.slane %v6710, %v6717
  %v6720 = vunpack.c.l.s4 1983009808
  %v6721 = vunpack.c.0.s8 %v6720
  %v6722 = vlaneseq
  %v6723 = vshrl.u32 %v6722, 7
  %v6724 = vsub.s32 %v6721, %v6723
  %v6725 = vrot.slane %v6711, %v6724
  %v6726 = vcombine.low %v6718, %v6725
  %v6727 = vcombine.low %v6516, %v6520
  %v6728 = vcombine.low %v6524, %v6528
  %v6730 = vunpack.c.l.s4 1983009808
  %v6731 = vunpack.c.0.s8 %v6730
  %v6732 = vlaneseq
  %v6733 = vshrl.u32 %v6732, 7
  %v6734 = vsub.s32 %v6731, %v6733
  %v6735 = vrot.slane %v6727, %v6734
  %v6737 = vunpack.c.l.s4 1983009808
  %v6738 = vunpack.c.0.s8 %v6737
  %v6739 = vlaneseq
  %v6740 = vshrl.u32 %v6739, 7
  %v6741 = vsub.s32 %v6738, %v6740
  %v6742 = vrot.slane %v6728, %v6741
  %v6743 = vcombine.low %v6735, %v6742
  %v6744 = vcombine.low %v6532, %v6536
  %v6745 = vcombine.low %v6540, %v6544
  %v6747 = vunpack.c.l.s4 1983009808
  %v6748 = vunpack.c.0.s8 %v6747
  %v6749 = vlaneseq
  %v6750 = vshrl.u32 %v6749, 7
  %v6751 = vsub.s32 %v6748, %v6750
  %v6752 = vrot.slane %v6744, %v6751
  %v6754 = vunpack.c.l.s4 1983009808
  %v6755 = vunpack.c.0.s8 %v6754
  %v6756 = vlaneseq
  %v6757 = vshrl.u32 %v6756, 7
  %v6758 = vsub.s32 %v6755, %v6757
  %v6759 = vrot.slane %v6745, %v6758
  %v6760 = vcombine.low %v6752, %v6759
  %v6761 = vcombine.low %v6548, %v6552
  %v6762 = vcombine.low %v6556, %v6560
  %v6764 = vunpack.c.l.s4 1983009808
  %v6765 = vunpack.c.0.s8 %v6764
  %v6766 = vlaneseq
  %v6767 = vshrl.u32 %v6766, 7
  %v6768 = vsub.s32 %v6765, %v6767
  %v6769 = vrot.slane %v6761, %v6768
  %v6771 = vunpack.c.l.s4 1983009808
  %v6772 = vunpack.c.0.s8 %v6771
  %v6773 = vlaneseq
  %v6774 = vshrl.u32 %v6773, 7
  %v6775 = vsub.s32 %v6772, %v6774
  %v6776 = vrot.slane %v6762, %v6775
  %v6777 = vcombine.low %v6769, %v6776
  %v6778 = vcombine.low %v6564, %v6568
  %v6779 = vcombine.low %v6572, %v6576
  %v6781 = vunpack.c.l.s4 1983009808
  %v6782 = vunpack.c.0.s8 %v6781
  %v6783 = vlaneseq
  %v6784 = vshrl.u32 %v6783, 7
  %v6785 = vsub.s32 %v6782, %v6784
  %v6786 = vrot.slane %v6778, %v6785
  %v6788 = vunpack.c.l.s4 1983009808
  %v6789 = vunpack.c.0.s8 %v6788
  %v6790 = vlaneseq
  %v6791 = vshrl.u32 %v6790, 7
  %v6792 = vsub.s32 %v6789, %v6791
  %v6793 = vrot.slane %v6779, %v6792
  %v6794 = vcombine.low %v6786, %v6793
  %v6795 = vcombine.low %v6580, %v6584
  %v6796 = vcombine.low %v6588, %v6592
  %v6798 = vunpack.c.l.s4 1983009808
  %v6799 = vunpack.c.0.s8 %v6798
  %v6800 = vlaneseq
  %v6801 = vshrl.u32 %v6800, 7
  %v6802 = vsub.s32 %v6799, %v6801
  %v6803 = vrot.slane %v6795, %v6802
  %v6805 = vunpack.c.l.s4 1983009808
  %v6806 = vunpack.c.0.s8 %v6805
  %v6807 = vlaneseq
  %v6808 = vshrl.u32 %v6807, 7
  %v6809 = vsub.s32 %v6806, %v6808
  %v6810 = vrot.slane %v6796, %v6809
  %v6811 = vcombine.low %v6803, %v6810
  %v6812 = vcombine.low %v6596, %v6600
  %v6813 = vcombine.low %v6604, %v6608
  %v6815 = vunpack.c.l.s4 1983009808
  %v6816 = vunpack.c.0.s8 %v6815
  %v6817 = vlaneseq
  %v6818 = vshrl.u32 %v6817, 7
  %v6819 = vsub.s32 %v6816, %v6818
  %v6820 = vrot.slane %v6812, %v6819
  %v6822 = vunpack.c.l.s4 1983009808
  %v6823 = vunpack.c.0.s8 %v6822
  %v6824 = vlaneseq
  %v6825 = vshrl.u32 %v6824, 7
  %v6826 = vsub.s32 %v6823, %v6825
  %v6827 = vrot.slane %v6813, %v6826
  %v6828 = vcombine.low %v6820, %v6827
  %v6829 = vcombine.low %v6612, %v6616
  %v6830 = vcombine.low %v6620, %v6624
  %v6832 = vunpack.c.l.s4 1983009808
  %v6833 = vunpack.c.0.s8 %v6832
  %v6834 = vlaneseq
  %v6835 = vshrl.u32 %v6834, 7
  %v6836 = vsub.s32 %v6833, %v6835
  %v6837 = vrot.slane %v6829, %v6836
  %v6839 = vunpack.c.l.s4 1983009808
  %v6840 = vunpack.c.0.s8 %v6839
  %v6841 = vlaneseq
  %v6842 = vshrl.u32 %v6841, 7
  %v6843 = vsub.s32 %v6840, %v6842
  %v6844 = vrot.slane %v6830, %v6843
  %v6845 = vcombine.low %v6837, %v6844
  %v6859 = vmul.f32 %v31, %v6641
  %v6860 = vmul.f32 %v32, %v6658
  %v6861 = vmul.f32 %v33, %v6675
  %v6862 = vmul.f32 %v34, %v6692
  %v6863 = vmul.f32 %v35, %v6709
  %v6864 = vmul.f32 %v36, %v6726
  %v6865 = vmul.f32 %v37, %v6743
  %v6866 = vmul.f32 %v38, %v6760
  %v6867 = vmul.f32 %v39, %v6777
  %v6868 = vmul.f32 %v40, %v6794
  %v6869 = vmul.f32 %v41, %v6811
  %v6870 = vmul.f32 %v42, %v6828
  %v6871 = vmul.f32 %v43, %v6845
  %v6885 = vcombine.high %v6859, %v6859
  %v6887 = vunpack.c.l.s4 1983009808
  %v6888 = vunpack.c.0.s8 %v6887
  %v6889 = vlaneseq
  %v6890 = vshrl.u32 %v6889, 7
  %v6891 = vsub.s32 %v6888, %v6890
  %v6892 = vrot.slane %v6859, %v6891
  %v6894 = vunpack.c.l.s4 1983009808
  %v6895 = vunpack.c.0.s8 %v6894
  %v6896 = vlaneseq
  %v6897 = vshrl.u32 %v6896, 7
  %v6898 = vsub.s32 %v6895, %v6897
  %v6899 = vrot.slane %v6885, %v6898
  %v6900 = vcombine.high %v6892, %v6892
  %v6901 = vcombine.high %v6899, %v6899
  %v6902 = vcombine.high %v6860, %v6860
  %v6904 = vunpack.c.l.s4 1983009808
  %v6905 = vunpack.c.0.s8 %v6904
  %v6906 = vlaneseq
  %v6907 = vshrl.u32 %v6906, 7
  %v6908 = vsub.s32 %v6905, %v6907
  %v6909 = vrot.slane %v6860, %v6908
  %v6911 = vunpack.c.l.s4 1983009808
  %v6912 = vunpack.c.0.s8 %v6911
  %v6913 = vlaneseq
  %v6914 = vshrl.u32 %v6913, 7
  %v6915 = vsub.s32 %v6912, %v6914
  %v6916 = vrot.slane %v6902, %v6915
  %v6917 = vcombine.high %v6909, %v6909
  %v6918 = vcombine.high %v6916, %v6916
  %v6919 = vcombine.high %v6861, %v6861
  %v6921 = vunpack.c.l.s4 1983009808
  %v6922 = vunpack.c.0.s8 %v6921
  %v6923 = vlaneseq
  %v6924 = vshrl.u32 %v6923, 7
  %v6925 = vsub.s32 %v6922, %v6924
  %v6926 = vrot.slane %v6861, %v6925
  %v6928 = vunpack.c.l.s4 1983009808
  %v6929 = vunpack.c.0.s8 %v6928
  %v6930 = vlaneseq
  %v6931 = vshrl.u32 %v6930, 7
  %v6932 = vsub.s32 %v6929, %v6931
  %v6933 = vrot.slane %v6919, %v6932
  %v6934 = vcombine.high %v6926, %v6926
  %v6935 = vcombine.high %v6933, %v6933
  %v6936 = vcombine.high %v6862, %v6862
  %v6938 = vunpack.c.l.s4 1983009808
  %v6939 = vunpack.c.0.s8 %v6938
  %v6940 = vlaneseq
  %v6941 = vshrl.u32 %v6940, 7
  %v6942 = vsub.s32 %v6939, %v6941
  %v6943 = vrot.slane %v6862, %v6942
  %v6945 = vunpack.c.l.s4 1983009808
  %v6946 = vunpack.c.0.s8 %v6945
  %v6947 = vlaneseq
  %v6948 = vshrl.u32 %v6947, 7
  %v6949 = vsub.s32 %v6946, %v6948
  %v6950 = vrot.slane %v6936, %v6949
  %v6951 = vcombine.high %v6943, %v6943
  %v6952 = vcombine.high %v6950, %v6950
  %v6953 = vcombine.high %v6863, %v6863
  %v6955 = vunpack.c.l.s4 1983009808
  %v6956 = vunpack.c.0.s8 %v6955
  %v6957 = vlaneseq
  %v6958 = vshrl.u32 %v6957, 7
  %v6959 = vsub.s32 %v6956, %v6958
  %v6960 = vrot.slane %v6863, %v6959
  %v6962 = vunpack.c.l.s4 1983009808
  %v6963 = vunpack.c.0.s8 %v6962
  %v6964 = vlaneseq
  %v6965 = vshrl.u32 %v6964, 7
  %v6966 = vsub.s32 %v6963, %v6965
  %v6967 = vrot.slane %v6953, %v6966
  %v6968 = vcombine.high %v6960, %v6960
  %v6969 = vcombine.high %v6967, %v6967
  %v6970 = vcombine.high %v6864, %v6864
  %v6972 = vunpack.c.l.s4 1983009808
  %v6973 = vunpack.c.0.s8 %v6972
  %v6974 = vlaneseq
  %v6975 = vshrl.u32 %v6974, 7
  %v6976 = vsub.s32 %v6973, %v6975
  %v6977 = vrot.slane %v6864, %v6976
  %v6979 = vunpack.c.l.s4 1983009808
  %v6980 = vunpack.c.0.s8 %v6979
  %v6981 = vlaneseq
  %v6982 = vshrl.u32 %v6981, 7
  %v6983 = vsub.s32 %v6980, %v6982
  %v6984 = vrot.slane %v6970, %v6983
  %v6985 = vcombine.high %v6977, %v6977
  %v6986 = vcombine.high %v6984, %v6984
  %v6987 = vcombine.high %v6865, %v6865
  %v6989 = vunpack.c.l.s4 1983009808
  %v6990 = vunpack.c.0.s8 %v6989
  %v6991 = vlaneseq
  %v6992 = vshrl.u32 %v6991, 7
  %v6993 = vsub.s32 %v6990, %v6992
  %v6994 = vrot.slane %v6865, %v6993
  %v6996 = vunpack.c.l.s4 1983009808
  %v6997 = vunpack.c.0.s8 %v6996
  %v6998 = vlaneseq
  %v6999 = vshrl.u32 %v6998, 7
  %v7000 = vsub.s32 %v6997, %v6999
  %v7001 = vrot.slane %v6987, %v7000
  %v7002 = vcombine.high %v6994, %v6994
  %v7003 = vcombine.high %v7001, %v7001
  %v7004 = vcombine.high %v6866, %v6866
  %v7006 = vunpack.c.l.s4 1983009808
  %v7007 = vunpack.c.0.s8 %v7006
  %v7008 = vlaneseq
  %v7009 = vshrl.u32 %v7008, 7
  %v7010 = vsub.s32 %v7007, %v7009
  %v7011 = vrot.slane %v6866, %v7010
  %v7013 = vunpack.c.l.s4 1983009808
  %v7014 = vunpack.c.0.s8 %v7013
  %v7015 = vlaneseq
  %v7016 = vshrl.u32 %v7015, 7
  %v7017 = vsub.s32 %v7014, %v7016
  %v7018 = vrot.slane %v7004, %v7017
  %v7019 = vcombine.high %v7011, %v7011
  %v7020 = vcombine.high %v7018, %v7018
  %v7021 = vcombine.high %v6867, %v6867
  %v7023 = vunpack.c.l.s4 1983009808
  %v7024 = vunpack.c.0.s8 %v7023
  %v7025 = vlaneseq
  %v7026 = vshrl.u32 %v7025, 7
  %v7027 = vsub.s32 %v7024, %v7026
  %v7028 = vrot.slane %v6867, %v7027
  %v7030 = vunpack.c.l.s4 1983009808
  %v7031 = vunpack.c.0.s8 %v7030
  %v7032 = vlaneseq
  %v7033 = vshrl.u32 %v7032, 7
  %v7034 = vsub.s32 %v7031, %v7033
  %v7035 = vrot.slane %v7021, %v7034
  %v7036 = vcombine.high %v7028, %v7028
  %v7037 = vcombine.high %v7035, %v7035
  %v7038 = vcombine.high %v6868, %v6868
  %v7040 = vunpack.c.l.s4 1983009808
  %v7041 = vunpack.c.0.s8 %v7040
  %v7042 = vlaneseq
  %v7043 = vshrl.u32 %v7042, 7
  %v7044 = vsub.s32 %v7041, %v7043
  %v7045 = vrot.slane %v6868, %v7044
  %v7047 = vunpack.c.l.s4 1983009808
  %v7048 = vunpack.c.0.s8 %v7047
  %v7049 = vlaneseq
  %v7050 = vshrl.u32 %v7049, 7
  %v7051 = vsub.s32 %v7048, %v7050
  %v7052 = vrot.slane %v7038, %v7051
  %v7053 = vcombine.high %v7045, %v7045
  %v7054 = vcombine.high %v7052, %v7052
  %v7055 = vcombine.high %v6869, %v6869
  %v7057 = vunpack.c.l.s4 1983009808
  %v7058 = vunpack.c.0.s8 %v7057
  %v7059 = vlaneseq
  %v7060 = vshrl.u32 %v7059, 7
  %v7061 = vsub.s32 %v7058, %v7060
  %v7062 = vrot.slane %v6869, %v7061
  %v7064 = vunpack.c.l.s4 1983009808
  %v7065 = vunpack.c.0.s8 %v7064
  %v7066 = vlaneseq
  %v7067 = vshrl.u32 %v7066, 7
  %v7068 = vsub.s32 %v7065, %v7067
  %v7069 = vrot.slane %v7055, %v7068
  %v7070 = vcombine.high %v7062, %v7062
  %v7071 = vcombine.high %v7069, %v7069
  %v7072 = vcombine.high %v6870, %v6870
  %v7074 = vunpack.c.l.s4 1983009808
  %v7075 = vunpack.c.0.s8 %v7074
  %v7076 = vlaneseq
  %v7077 = vshrl.u32 %v7076, 7
  %v7078 = vsub.s32 %v7075, %v7077
  %v7079 = vrot.slane %v6870, %v7078
  %v7081 = vunpack.c.l.s4 1983009808
  %v7082 = vunpack.c.0.s8 %v7081
  %v7083 = vlaneseq
  %v7084 = vshrl.u32 %v7083, 7
  %v7085 = vsub.s32 %v7082, %v7084
  %v7086 = vrot.slane %v7072, %v7085
  %v7087 = vcombine.high %v7079, %v7079
  %v7088 = vcombine.high %v7086, %v7086
  %v7089 = vcombine.high %v6871, %v6871
  %v7091 = vunpack.c.l.s4 1983009808
  %v7092 = vunpack.c.0.s8 %v7091
  %v7093 = vlaneseq
  %v7094 = vshrl.u32 %v7093, 7
  %v7095 = vsub.s32 %v7092, %v7094
  %v7096 = vrot.slane %v6871, %v7095
  %v7098 = vunpack.c.l.s4 1983009808
  %v7099 = vunpack.c.0.s8 %v7098
  %v7100 = vlaneseq
  %v7101 = vshrl.u32 %v7100, 7
  %v7102 = vsub.s32 %v7099, %v7101
  %v7103 = vrot.slane %v7089, %v7102
  %v7104 = vcombine.high %v7096, %v7096
  %v7105 = vcombine.high %v7103, %v7103
  %v7158 = vsel %vm6389, %v6892, 0.0
  %v7159 = vsel %vm6389, %v6900, 0.0
  %v7160 = vadd.f32 %v7158, %v7159
  %v7161 = vsel %vm6389, %v6899, 0.0
  %v7162 = vadd.f32 %v7160, %v7161
  %v7163 = vsel %vm6389, %v6901, 0.0
  %v7164 = vadd.f32 %v7162, %v7163
  %v7165 = vsel %vm6389, %v6909, 0.0
  %v7166 = vadd.f32 %v7164, %v7165
  %v7167 = vsel %vm6389, %v6917, 0.0
  %v7168 = vadd.f32 %v7166, %v7167
  %v7169 = vsel %vm6389, %v6916, 0.0
  %v7170 = vadd.f32 %v7168, %v7169
  %v7171 = vsel %vm6389, %v6918, 0.0
  %v7172 = vadd.f32 %v7170, %v7171
  %v7173 = vsel %vm6389, %v6926, 0.0
  %v7174 = vadd.f32 %v7172, %v7173
  %v7175 = vsel %vm6389, %v6934, 0.0
  %v7176 = vadd.f32 %v7174, %v7175
  %v7177 = vsel %vm6389, %v6933, 0.0
  %v7178 = vadd.f32 %v7176, %v7177
  %v7179 = vsel %vm6389, %v6935, 0.0
  %v7180 = vadd.f32 %v7178, %v7179
  %v7181 = vsel %vm6389, %v6943, 0.0
  %v7182 = vadd.f32 %v7180, %v7181
  %v7183 = vsel %vm6389, %v6951, 0.0
  %v7184 = vadd.f32 %v7182, %v7183
  %v7185 = vsel %vm6389, %v6950, 0.0
  %v7186 = vadd.f32 %v7184, %v7185
  %v7187 = vsel %vm6389, %v6952, 0.0
  %v7188 = vadd.f32 %v7186, %v7187
  %v7189 = vsel %vm6389, %v6960, 0.0
  %v7190 = vadd.f32 %v7188, %v7189
  %v7191 = vsel %vm6389, %v6968, 0.0
  %v7192 = vadd.f32 %v7190, %v7191
  %v7193 = vsel %vm6389, %v6967, 0.0
  %v7194 = vadd.f32 %v7192, %v7193
  %v7195 = vsel %vm6389, %v6969, 0.0
  %v7196 = vadd.f32 %v7194, %v7195
  %v7197 = vsel %vm6389, %v6977, 0.0
  %v7198 = vadd.f32 %v7196, %v7197
  %v7199 = vsel %vm6389, %v6985, 0.0
  %v7200 = vadd.f32 %v7198, %v7199
  %v7201 = vsel %vm6389, %v6984, 0.0
  %v7202 = vadd.f32 %v7200, %v7201
  %v7203 = vsel %vm6389, %v6986, 0.0
  %v7204 = vadd.f32 %v7202, %v7203
  %v7205 = vsel %vm6389, %v6994, 0.0
  %v7206 = vadd.f32 %v7204, %v7205
  %v7207 = vsel %vm6389, %v7002, 0.0
  %v7208 = vadd.f32 %v7206, %v7207
  %v7209 = vsel %vm6389, %v7001, 0.0
  %v7210 = vadd.f32 %v7208, %v7209
  %v7211 = vsel %vm6389, %v7003, 0.0
  %v7212 = vadd.f32 %v7210, %v7211
  %v7213 = vsel %vm6389, %v7011, 0.0
  %v7214 = vadd.f32 %v7212, %v7213
  %v7215 = vsel %vm6389, %v7019, 0.0
  %v7216 = vadd.f32 %v7214, %v7215
  %v7217 = vsel %vm6389, %v7018, 0.0
  %v7218 = vadd.f32 %v7216, %v7217
  %v7219 = vsel %vm6389, %v7020, 0.0
  %v7220 = vadd.f32 %v7218, %v7219
  %v7221 = vsel %vm6389, %v7028, 0.0
  %v7222 = vadd.f32 %v7220, %v7221
  %v7223 = vsel %vm6389, %v7036, 0.0
  %v7224 = vadd.f32 %v7222, %v7223
  %v7225 = vsel %vm6389, %v7035, 0.0
  %v7226 = vadd.f32 %v7224, %v7225
  %v7227 = vsel %vm6389, %v7037, 0.0
  %v7228 = vadd.f32 %v7226, %v7227
  %v7229 = vsel %vm6389, %v7045, 0.0
  %v7230 = vadd.f32 %v7228, %v7229
  %v7231 = vsel %vm6389, %v7053, 0.0
  %v7232 = vadd.f32 %v7230, %v7231
  %v7233 = vsel %vm6389, %v7052, 0.0
  %v7234 = vadd.f32 %v7232, %v7233
  %v7235 = vsel %vm6389, %v7054, 0.0
  %v7236 = vadd.f32 %v7234, %v7235
  %v7237 = vsel %vm6389, %v7062, 0.0
  %v7238 = vadd.f32 %v7236, %v7237
  %v7239 = vsel %vm6389, %v7070, 0.0
  %v7240 = vadd.f32 %v7238, %v7239
  %v7241 = vsel %vm6389, %v7069, 0.0
  %v7242 = vadd.f32 %v7240, %v7241
  %v7243 = vsel %vm6389, %v7071, 0.0
  %v7244 = vadd.f32 %v7242, %v7243
  %v7245 = vsel %vm6389, %v7079, 0.0
  %v7246 = vadd.f32 %v7244, %v7245
  %v7247 = vsel %vm6389, %v7087, 0.0
  %v7248 = vadd.f32 %v7246, %v7247
  %v7249 = vsel %vm6389, %v7086, 0.0
  %v7250 = vadd.f32 %v7248, %v7249
  %v7251 = vsel %vm6389, %v7088, 0.0
  %v7252 = vadd.f32 %v7250, %v7251
  %v7253 = vsel %vm6389, %v7096, 0.0
  %v7254 = vadd.f32 %v7252, %v7253
  %v7255 = vsel %vm6389, %v7104, 0.0
  %v7256 = vadd.f32 %v7254, %v7255
  %v7257 = vsel %vm6389, %v7103, 0.0
  %v7258 = vadd.f32 %v7256, %v7257
  %vm7259 = vcmask 41984
  %v7260 = vsel %vm7259, %v7105, 0.0
  %v7261 = vadd.f32 %v7258, %v7260
  %7262 = vadd.xlane.f32.xlu0 %v7261
  %v7263 = vpop.xlane.xlu0 %7262
  %v7264 = vsel %vm6389, %v7263, 0.0
  %v7265 = vrot.slane %v7264, 4
  %v7266 = vadd.f32 %v7264, %v7265
  %v7267 = vrot.slane %v7266, 2
  %v7268 = vadd.f32 %v7266, %v7267
  %v7269 = vrot.slane %v7268, 1
  %v7270 = vadd.f32 %v7268, %v7269
  %v7271 = vmul.f32 %v6402, %v7270
  %v7272 = vld [vmem:[#allocation3] sm:$0x1]
  %v7274 = vlaneseq
  %v7275 = vshrl.u32 %v7274, 7
  %v7276 = vsub.s32 0, %v7275
  %v7277 = vrot.slane %v7272, %v7276
  %v7279 = vadd.f32 %v7271, %v7277
  %v7280 = vxor.u32 %v7279, 2147483648
  %v7281 = vmul.f32 %v7280, 1.442695
  %v7282 = vpow.pop %v7281
  %v7283 = vadd.f32 %v7282, 1.0
  %v7284 = vrcp.pop %v7283
  %v7285 = vmul.f32 1.0, %v7284
  %vm7286 = vcmask 1024
  %7287 = vst.msk [vmem:[%s7] sm:$0x3] %vm7286, %v7285
  // Predicated region
  $region30: #{gaf_attn_net_forward.5} parent=0 // pred_check
    _
  $region31: #{gaf_attn_net_forward.5} parent=0 // pred_check_branch
    %7289 = sbr.rel (0) target = $region33
  $region32: #{gaf_attn_net_forward.5} parent=0 // pred_region
    _
  $region33: #{gaf_attn_net_forward.5} parent=0 // pred_fallthru
    _
  // Predicated region
  $region34: #{gaf_attn_net_forward.5} parent=0 // pred_check
    _
  $region35: #{gaf_attn_net_forward.5} parent=0 // pred_check_branch
    %7291 = sbr.rel (0) target = $region37
  $region36: #{gaf_attn_net_forward.5} parent=0 // pred_region
    _
  $region37: #{gaf_attn_net_forward.5} parent=0 // pred_fallthru
    _

</llo_original>
